<compile_context>
chip_gen: v5e
topology: v5e:2x2
jax: 0.10.0
libtpu: 0.0.40
codegen_flags: <defaults>
</compile_context>

<pallas_src>
import functools

import jax
import jax.numpy as jnp
from jax import lax
from jax.experimental import pallas as pl
from jax.experimental.pallas import tpu as pltpu


def _round_up(x, m):
    return (x + m - 1) // m * m


# ----------------------------------------------------------------------------
# Kernel 1: fused conv stack, one image per grid step.
#
#   xr_ref[0, h, wb, wp*cin + c] = X[h, 8*wb + wp, c]     (W zero-padded to 88)
#   a1[h1*10 + wb, wp*32 + co]   = relu(conv1)[h1, 2*wb + wp, co]
#   a2[h2*9  + w2, d]            = relu(conv2)[h2, w2, d]
#   o_ref[0, h3*7 + w3, e]       = relu(conv3)[h3, w3, e]
# ----------------------------------------------------------------------------
def _conv_stack_kernel(xr_ref, w1_ref, b1_ref, w2_ref, b2_ref, w3_ref, b3_ref,
                       o_ref, a1_ref, a2_ref, *, cin):
    half = 4 * cin                      # lanes covering w-taps 0..3 (or 4..7)

    # ---- conv1: k=8, s=4, 84x84xC -> 20x20x32 (w-parity folded into lanes) --
    def conv1_row(h1, carry):
        even_parts = []                 # outputs at w1 = 2*wb      (wb = 0..9)
        odd_parts = []                  # outputs at w1 = 2*wb + 1
        for i in range(8):
            r = xr_ref[0, 4 * h1 + i, :, :]            # (11, 8*cin) f32
            even_parts.append(r[0:10, :])              # taps j = 0..7
            odd_parts.append(r[0:10, half:2 * half])   # taps j = 0..3
            odd_parts.append(r[1:11, 0:half])          # taps j = 4..7
        pe = jnp.concatenate(even_parts, axis=1)       # (10, 64*cin)
        po = jnp.concatenate(odd_parts, axis=1)        # (10, 64*cin)
        p = jnp.concatenate([pe, po], axis=0).astype(jnp.bfloat16)  # (20, 64*cin)
        o = jnp.dot(p, w1_ref[...], preferred_element_type=jnp.float32)
        o = jnp.maximum(o + b1_ref[...], 0.0)          # (20, 32) f32
        a1_ref[pl.ds(h1 * 10, 10), :] = jnp.concatenate(
            [o[0:10], o[10:20]], axis=1)               # (10, 64)
        return carry

    lax.fori_loop(0, 20, conv1_row, 0)

    # ---- conv2: k=4, s=2, 20x20x32 -> 9x9x64 --------------------------------
    for h2 in range(9):
        parts = []
        for i in range(4):
            base = (2 * h2 + i) * 10
            blk = a1_ref[base:base + 10, :]            # (10, 64) f32
            parts.append(blk[0:9, :])                  # taps j = 0, 1
            parts.append(blk[1:10, :])                 # taps j = 2, 3
        p2 = jnp.concatenate(parts, axis=1).astype(jnp.bfloat16)    # (9, 512)
        o2 = jnp.dot(p2, w2_ref[...], preferred_element_type=jnp.float32)
        a2_ref[h2 * 9:(h2 + 1) * 9, :] = jnp.maximum(o2 + b2_ref[...], 0.0)

    # ---- conv3: k=3, s=1, 9x9x64 -> 7x7x64 ----------------------------------
    for h3 in range(7):
        parts = []
        for i in range(3):
            base = (h3 + i) * 9
            blk = a2_ref[base:base + 9, :]             # (9, 64) f32
            for j in range(3):
                parts.append(blk[j:j + 7, :])
        p3 = jnp.concatenate(parts, axis=1).astype(jnp.bfloat16)    # (7, 576)
        o3 = jnp.dot(p3, w3_ref[...], preferred_element_type=jnp.float32)
        o_ref[0, h3 * 7:(h3 + 1) * 7, :] = jnp.maximum(o3 + b3_ref[...], 0.0)


def conv_stack(xr, w1, b1, w2, b2, w3, b3, *, cin):
    n = xr.shape[0]
    kernel = functools.partial(_conv_stack_kernel, cin=cin)
    return pl.pallas_call(
        kernel,
        out_shape=jax.ShapeDtypeStruct((n, 49, 64), jnp.float32),
        grid=(n,),
        in_specs=[
            pl.BlockSpec((1, 84, 11, 8 * cin), lambda b: (b, 0, 0, 0)),
            pl.BlockSpec((64 * cin, 32), lambda b: (0, 0)),
            pl.BlockSpec((1, 32), lambda b: (0, 0)),
            pl.BlockSpec((512, 64), lambda b: (0, 0)),
            pl.BlockSpec((1, 64), lambda b: (0, 0)),
            pl.BlockSpec((576, 64), lambda b: (0, 0)),
            pl.BlockSpec((1, 64), lambda b: (0, 0)),
        ],
        out_specs=pl.BlockSpec((1, 49, 64), lambda b: (b, 0, 0)),
        scratch_shapes=[
            pltpu.VMEM((200, 64), jnp.float32),   # conv1 output (parity-folded)
            pltpu.VMEM((81, 64), jnp.float32),    # conv2 output
        ],
        compiler_params=pltpu.CompilerParams(
            dimension_semantics=("parallel",),
            vmem_limit_bytes=32 * 1024 * 1024),
    )(xr, w1, b1, w2, b2, w3, b3)


# ----------------------------------------------------------------------------
# Kernel 2: fused fc1 + ReLU + fc2, M-tiled over the (padded) batch.
# Output is lane-dense (out_dim padded to 128), sliced back in the wrapper.
# ----------------------------------------------------------------------------
def _fc_kernel(x_ref, w1_ref, b1_ref, w2_ref, b2_ref, o_ref):
    x = x_ref[...].astype(jnp.bfloat16)
    h = jnp.dot(x, w1_ref[...], preferred_element_type=jnp.float32)
    h = jnp.maximum(h + b1_ref[...], 0.0).astype(jnp.bfloat16)
    y = jnp.dot(h, w2_ref[...], preferred_element_type=jnp.float32)
    o_ref[...] = y + b2_ref[...]


def fc_head(f, wf1, bf1, wf2p, bf2p):
    n, k = f.shape
    if n <= 256:
        m_pad = _round_up(n, 8)
        tm = m_pad
    else:
        tm = 256
        m_pad = _round_up(n, tm)
    if m_pad != n:
        f = jnp.pad(f, ((0, m_pad - n), (0, 0)))
    n_out = wf2p.shape[1]          # 128 (lane-dense)
    out = pl.pallas_call(
        _fc_kernel,
        out_shape=jax.ShapeDtypeStruct((m_pad, n_out), jnp.float32),
        grid=(m_pad // tm,),
        in_specs=[
            pl.BlockSpec((tm, k), lambda m: (m, 0)),
            pl.BlockSpec((k, 512), lambda m: (0, 0)),
            pl.BlockSpec((1, 512), lambda m: (0, 0)),
            pl.BlockSpec((512, n_out), lambda m: (0, 0)),
            pl.BlockSpec((1, n_out), lambda m: (0, 0)),
        ],
        out_specs=pl.BlockSpec((tm, n_out), lambda m: (m, 0)),
        compiler_params=pltpu.CompilerParams(
            dimension_semantics=("parallel",),
            vmem_limit_bytes=32 * 1024 * 1024),
    )(f, wf1, bf1, wf2p, bf2p)
    return out[:n]


# ----------------------------------------------------------------------------
# Parameters (torch-convention shapes) + one-time kernel-layout preparation.
# ----------------------------------------------------------------------------
def init_params(in_dim, out_dim, key):
    ks = jax.random.split(key, 10)

    def unif(k, shape, fan_in):
        bound = 1.0 / jnp.sqrt(fan_in)
        return jax.random.uniform(k, shape, jnp.float32, -bound, bound)

    return {
        "w1": unif(ks[0], (32, in_dim, 8, 8), in_dim * 8 * 8),
        "b1": unif(ks[1], (32,), in_dim * 8 * 8),
        "w2": unif(ks[2], (64, 32, 4, 4), 32 * 4 * 4),
        "b2": unif(ks[3], (64,), 32 * 4 * 4),
        "w3": unif(ks[4], (64, 64, 3, 3), 64 * 3 * 3),
        "b3": unif(ks[5], (64,), 64 * 3 * 3),
        "wf1": unif(ks[6], (64 * 7 * 7, 512), 64 * 7 * 7),   # (in, out)
        "bf1": unif(ks[7], (512,), 64 * 7 * 7),
        "wf2": unif(ks[8], (512, out_dim), 512),
        "bf2": unif(ks[9], (out_dim,), 512),
    }


def prepare_params(params):
    """One-time weight re-layout (hoisted out of the forward pass)."""
    out_dim = params["wf2"].shape[1]

    def conv_w(w):  # (Cout, Cin, kh, kw) -> (kh*kw*Cin, Cout) bf16, rows (i, j, c)
        co, ci, kh, kw = w.shape
        return jnp.transpose(w, (2, 3, 1, 0)).reshape(kh * kw * ci, co).astype(
            jnp.bfloat16)

    # fc1 weight rows reordered from torch flatten order (e*49 + p) to the
    # kernel's conv3 output order (p*64 + e), so no transpose is needed at runtime.
    wf1p = (params["wf1"].reshape(64, 49, 512).transpose(1, 0, 2)
            .reshape(49 * 64, 512).astype(jnp.bfloat16))

    out_pad = 128  # lane-dense fc2 output
    wf2p = jnp.zeros((512, out_pad), jnp.float32).at[:, :out_dim].set(
        params["wf2"]).astype(jnp.bfloat16)
    bf2p = jnp.zeros((1, out_pad), jnp.float32).at[0, :out_dim].set(
        params["bf2"])

    return {
        "w1": conv_w(params["w1"]), "b1": params["b1"].reshape(1, 32),
        "w2": conv_w(params["w2"]), "b2": params["b2"].reshape(1, 64),
        "w3": conv_w(params["w3"]), "b3": params["b3"].reshape(1, 64),
        "wf1": wf1p, "bf1": params["bf1"].reshape(1, 512),
        "wf2": wf2p, "bf2": bf2p,
    }


# ----------------------------------------------------------------------------
# Full forward pass.
# ----------------------------------------------------------------------------
def cnn_forward(prep, x_nchw, *, out_dim):
    n, cin, h, w = x_nchw.shape
    assert (h, w) == (84, 84), "architecture requires 84x84 inputs"

    # Input re-layout for stride-free in-kernel im2col:
    #   xr[n, h, wb, wp*cin + c] = x[n, c, h, 8*wb + wp]   (W zero-padded to 88)
    x = jnp.transpose(x_nchw.astype(jnp.float32), (0, 2, 3, 1))       # NHWC
    x = jnp.pad(x, ((0, 0), (0, 0), (0, 4), (0, 0)))                  # W -> 88
    xr = x.reshape(n, 84, 11, 8 * cin)

    o3 = conv_stack(xr, prep["w1"], prep["b1"], prep["w2"], prep["b2"],
                    prep["w3"], prep["b3"], cin=cin)                  # (N, 49, 64)

    f = o3.reshape(n, 49 * 64)    # feature order p*64 + e (wf1 is pre-permuted)
    out = fc_head(f, prep["wf1"], prep["bf1"], prep["wf2"], prep["bf2"])
    return out[:, :out_dim]


# ----------------------------------------------------------------------------
# Pure-JAX reference (same torch-convention params) for a sanity check.
# ----------------------------------------------------------------------------
def cnn_reference(params, x_nchw):
    def conv(x, w, b, stride):
        y = lax.conv_general_dilated(
            x, w, window_strides=(stride, stride), padding="VALID",
            dimension_numbers=("NCHW", "OIHW", "NCHW"))
        return jax.nn.relu(y + b[None, :, None, None])

    x = conv(x_nchw, params["w1"], params["b1"], 4)
    x = conv(x, params["w2"], params["b2"], 2)
    x = conv(x, params["w3"], params["b3"], 1)
    f = x.reshape(x.shape[0], 64 * 7 * 7)
    h = jax.nn.relu(f @ params["wf1"] + params["bf1"])
    return h @ params["wf2"] + params["bf2"]


if __name__ == "__main__":
    key = jax.random.PRNGKey(0)
    k_param, k_input = jax.random.split(key)

    in_dim = 4        # e.g. 4 stacked Atari frames
    out_dim = 6       # e.g. 6 discrete actions
    batch = 2
    x = jax.random.uniform(k_input, (batch, in_dim, 84, 84), jnp.float32)

    params = init_params(in_dim, out_dim, k_param)
    prep = prepare_params(params)     # one-time weight re-layout

    fwd = jax.jit(functools.partial(cnn_forward, out_dim=out_dim))
    out = fwd(prep, x)
    jax.block_until_ready(out)

    assert out.shape == (batch, out_dim), out.shape
    assert out.dtype == jnp.float32, out.dtype

    # Sanity check vs. the XLA reference (loose tolerance: bf16 MXU operands).
    ref = jax.jit(cnn_reference)(params, x)
    err = float(jnp.max(jnp.abs(out - ref)))
    scale = float(jnp.max(jnp.abs(ref))) + 1e-6
    assert err <= 0.02 + 0.2 * scale, (err, scale)

    print("KERNEL_OK")
</pallas_src>

<mosaic_0001>
module attributes {stable_mosaic.version = 11 : i64} {
  func.func @_conv_stack_kernel(%arg0: i32, %arg1: memref<1x84x11x32xf32, #tpu.memory_space<vmem>>, %arg2: memref<256x32xbf16, #tpu.memory_space<vmem>>, %arg3: memref<1x32xf32, #tpu.memory_space<vmem>>, %arg4: memref<512x64xbf16, #tpu.memory_space<vmem>>, %arg5: memref<1x64xf32, #tpu.memory_space<vmem>>, %arg6: memref<576x64xbf16, #tpu.memory_space<vmem>>, %arg7: memref<1x64xf32, #tpu.memory_space<vmem>>, %arg8: memref<1x49x64xf32, #tpu.memory_space<vmem>>, %arg9: memref<200x64xf32, #tpu.memory_space<vmem>>, %arg10: memref<81x64xf32, #tpu.memory_space<vmem>>) attributes {dimension_semantics = [#tpu.dimension_semantics<parallel>], iteration_bounds = array<i64: 2>, scalar_prefetch = 0 : i64, scratch_operands = 2 : i64, tpu.core_type = #tpu.core_type<tc>, window_params = [{transform_indices = @transform_0, window_bounds = array<i64: 1, 84, 11, 32>}, {pipeline_mode = #tpu.pipeline_mode<synchronous>, transform_indices = @transform_1, window_bounds = array<i64: 256, 32>}, {pipeline_mode = #tpu.pipeline_mode<synchronous>, transform_indices = @transform_2, window_bounds = array<i64: 1, 32>}, {pipeline_mode = #tpu.pipeline_mode<synchronous>, transform_indices = @transform_3, window_bounds = array<i64: 512, 64>}, {pipeline_mode = #tpu.pipeline_mode<synchronous>, transform_indices = @transform_4, window_bounds = array<i64: 1, 64>}, {pipeline_mode = #tpu.pipeline_mode<synchronous>, transform_indices = @transform_5, window_bounds = array<i64: 576, 64>}, {pipeline_mode = #tpu.pipeline_mode<synchronous>, transform_indices = @transform_6, window_bounds = array<i64: 1, 64>}, {transform_indices = @transform_7, window_bounds = array<i64: 1, 49, 64>}]} {
    %c0_i32 = arith.constant 0 : i32
    %c20_i32 = arith.constant 20 : i32
    %0 = arith.addi %c0_i32, %c20_i32 : i32
    %c1_i32 = arith.constant 1 : i32
    scf.for %arg11 = %c0_i32 to %0 step %c1_i32  : i32 {
      %c4_i32 = arith.constant 4 : i32
      %367 = arith.muli %c4_i32, %arg11 : i32
      %c0_i32_215 = arith.constant 0 : i32
      %368 = arith.addi %367, %c0_i32_215 : i32
      %c0_216 = arith.constant 0 : index
      %369 = arith.index_cast %368 : i32 to index
      %c0_217 = arith.constant 0 : index
      %c0_218 = arith.constant 0 : index
      %370 = vector.load %arg1[%c0_216, %369, %c0_217, %c0_218] : memref<1x84x11x32xf32, #tpu.memory_space<vmem>>, vector<1x1x11x32xf32>
      %371 = vector.shape_cast %370 : vector<1x1x11x32xf32> to vector<11x32xf32>
      %372 = vector.extract_strided_slice %371 {offsets = [0, 0], sizes = [10, 32], strides = [1, 1]} : vector<11x32xf32> to vector<10x32xf32>
      %373 = vector.extract_strided_slice %371 {offsets = [0, 16], sizes = [10, 16], strides = [1, 1]} : vector<11x32xf32> to vector<10x16xf32>
      %374 = vector.extract_strided_slice %371 {offsets = [1, 0], sizes = [10, 16], strides = [1, 1]} : vector<11x32xf32> to vector<10x16xf32>
      %c4_i32_219 = arith.constant 4 : i32
      %375 = arith.muli %c4_i32_219, %arg11 : i32
      %c1_i32_220 = arith.constant 1 : i32
      %376 = arith.addi %375, %c1_i32_220 : i32
      %c0_221 = arith.constant 0 : index
      %377 = arith.index_cast %376 : i32 to index
      %c0_222 = arith.constant 0 : index
      %c0_223 = arith.constant 0 : index
      %378 = vector.load %arg1[%c0_221, %377, %c0_222, %c0_223] : memref<1x84x11x32xf32, #tpu.memory_space<vmem>>, vector<1x1x11x32xf32>
      %379 = vector.shape_cast %378 : vector<1x1x11x32xf32> to vector<11x32xf32>
      %380 = vector.extract_strided_slice %379 {offsets = [0, 0], sizes = [10, 32], strides = [1, 1]} : vector<11x32xf32> to vector<10x32xf32>
      %381 = vector.extract_strided_slice %379 {offsets = [0, 16], sizes = [10, 16], strides = [1, 1]} : vector<11x32xf32> to vector<10x16xf32>
      %382 = vector.extract_strided_slice %379 {offsets = [1, 0], sizes = [10, 16], strides = [1, 1]} : vector<11x32xf32> to vector<10x16xf32>
      %c4_i32_224 = arith.constant 4 : i32
      %383 = arith.muli %c4_i32_224, %arg11 : i32
      %c2_i32 = arith.constant 2 : i32
      %384 = arith.addi %383, %c2_i32 : i32
      %c0_225 = arith.constant 0 : index
      %385 = arith.index_cast %384 : i32 to index
      %c0_226 = arith.constant 0 : index
      %c0_227 = arith.constant 0 : index
      %386 = vector.load %arg1[%c0_225, %385, %c0_226, %c0_227] : memref<1x84x11x32xf32, #tpu.memory_space<vmem>>, vector<1x1x11x32xf32>
      %387 = vector.shape_cast %386 : vector<1x1x11x32xf32> to vector<11x32xf32>
      %388 = vector.extract_strided_slice %387 {offsets = [0, 0], sizes = [10, 32], strides = [1, 1]} : vector<11x32xf32> to vector<10x32xf32>
      %389 = vector.extract_strided_slice %387 {offsets = [0, 16], sizes = [10, 16], strides = [1, 1]} : vector<11x32xf32> to vector<10x16xf32>
      %390 = vector.extract_strided_slice %387 {offsets = [1, 0], sizes = [10, 16], strides = [1, 1]} : vector<11x32xf32> to vector<10x16xf32>
      %c4_i32_228 = arith.constant 4 : i32
      %391 = arith.muli %c4_i32_228, %arg11 : i32
      %c3_i32 = arith.constant 3 : i32
      %392 = arith.addi %391, %c3_i32 : i32
      %c0_229 = arith.constant 0 : index
      %393 = arith.index_cast %392 : i32 to index
      %c0_230 = arith.constant 0 : index
      %c0_231 = arith.constant 0 : index
      %394 = vector.load %arg1[%c0_229, %393, %c0_230, %c0_231] : memref<1x84x11x32xf32, #tpu.memory_space<vmem>>, vector<1x1x11x32xf32>
      %395 = vector.shape_cast %394 : vector<1x1x11x32xf32> to vector<11x32xf32>
      %396 = vector.extract_strided_slice %395 {offsets = [0, 0], sizes = [10, 32], strides = [1, 1]} : vector<11x32xf32> to vector<10x32xf32>
      %397 = vector.extract_strided_slice %395 {offsets = [0, 16], sizes = [10, 16], strides = [1, 1]} : vector<11x32xf32> to vector<10x16xf32>
      %398 = vector.extract_strided_slice %395 {offsets = [1, 0], sizes = [10, 16], strides = [1, 1]} : vector<11x32xf32> to vector<10x16xf32>
      %c4_i32_232 = arith.constant 4 : i32
      %399 = arith.muli %c4_i32_232, %arg11 : i32
      %c4_i32_233 = arith.constant 4 : i32
      %400 = arith.addi %399, %c4_i32_233 : i32
      %c0_234 = arith.constant 0 : index
      %401 = arith.index_cast %400 : i32 to index
      %c0_235 = arith.constant 0 : index
      %c0_236 = arith.constant 0 : index
      %402 = vector.load %arg1[%c0_234, %401, %c0_235, %c0_236] : memref<1x84x11x32xf32, #tpu.memory_space<vmem>>, vector<1x1x11x32xf32>
      %403 = vector.shape_cast %402 : vector<1x1x11x32xf32> to vector<11x32xf32>
      %404 = vector.extract_strided_slice %403 {offsets = [0, 0], sizes = [10, 32], strides = [1, 1]} : vector<11x32xf32> to vector<10x32xf32>
      %405 = vector.extract_strided_slice %403 {offsets = [0, 16], sizes = [10, 16], strides = [1, 1]} : vector<11x32xf32> to vector<10x16xf32>
      %406 = vector.extract_strided_slice %403 {offsets = [1, 0], sizes = [10, 16], strides = [1, 1]} : vector<11x32xf32> to vector<10x16xf32>
      %c4_i32_237 = arith.constant 4 : i32
      %407 = arith.muli %c4_i32_237, %arg11 : i32
      %c5_i32 = arith.constant 5 : i32
      %408 = arith.addi %407, %c5_i32 : i32
      %c0_238 = arith.constant 0 : index
      %409 = arith.index_cast %408 : i32 to index
      %c0_239 = arith.constant 0 : index
      %c0_240 = arith.constant 0 : index
      %410 = vector.load %arg1[%c0_238, %409, %c0_239, %c0_240] : memref<1x84x11x32xf32, #tpu.memory_space<vmem>>, vector<1x1x11x32xf32>
      %411 = vector.shape_cast %410 : vector<1x1x11x32xf32> to vector<11x32xf32>
      %412 = vector.extract_strided_slice %411 {offsets = [0, 0], sizes = [10, 32], strides = [1, 1]} : vector<11x32xf32> to vector<10x32xf32>
      %413 = vector.extract_strided_slice %411 {offsets = [0, 16], sizes = [10, 16], strides = [1, 1]} : vector<11x32xf32> to vector<10x16xf32>
      %414 = vector.extract_strided_slice %411 {offsets = [1, 0], sizes = [10, 16], strides = [1, 1]} : vector<11x32xf32> to vector<10x16xf32>
      %c4_i32_241 = arith.constant 4 : i32
      %415 = arith.muli %c4_i32_241, %arg11 : i32
      %c6_i32 = arith.constant 6 : i32
      %416 = arith.addi %415, %c6_i32 : i32
      %c0_242 = arith.constant 0 : index
      %417 = arith.index_cast %416 : i32 to index
      %c0_243 = arith.constant 0 : index
      %c0_244 = arith.constant 0 : index
      %418 = vector.load %arg1[%c0_242, %417, %c0_243, %c0_244] : memref<1x84x11x32xf32, #tpu.memory_space<vmem>>, vector<1x1x11x32xf32>
      %419 = vector.shape_cast %418 : vector<1x1x11x32xf32> to vector<11x32xf32>
      %420 = vector.extract_strided_slice %419 {offsets = [0, 0], sizes = [10, 32], strides = [1, 1]} : vector<11x32xf32> to vector<10x32xf32>
      %421 = vector.extract_strided_slice %419 {offsets = [0, 16], sizes = [10, 16], strides = [1, 1]} : vector<11x32xf32> to vector<10x16xf32>
      %422 = vector.extract_strided_slice %419 {offsets = [1, 0], sizes = [10, 16], strides = [1, 1]} : vector<11x32xf32> to vector<10x16xf32>
      %c4_i32_245 = arith.constant 4 : i32
      %423 = arith.muli %c4_i32_245, %arg11 : i32
      %c7_i32 = arith.constant 7 : i32
      %424 = arith.addi %423, %c7_i32 : i32
      %c0_246 = arith.constant 0 : index
      %425 = arith.index_cast %424 : i32 to index
      %c0_247 = arith.constant 0 : index
      %c0_248 = arith.constant 0 : index
      %426 = vector.load %arg1[%c0_246, %425, %c0_247, %c0_248] : memref<1x84x11x32xf32, #tpu.memory_space<vmem>>, vector<1x1x11x32xf32>
      %427 = vector.shape_cast %426 : vector<1x1x11x32xf32> to vector<11x32xf32>
      %428 = vector.extract_strided_slice %427 {offsets = [0, 0], sizes = [10, 32], strides = [1, 1]} : vector<11x32xf32> to vector<10x32xf32>
      %429 = vector.extract_strided_slice %427 {offsets = [0, 16], sizes = [10, 16], strides = [1, 1]} : vector<11x32xf32> to vector<10x16xf32>
      %430 = vector.extract_strided_slice %427 {offsets = [1, 0], sizes = [10, 16], strides = [1, 1]} : vector<11x32xf32> to vector<10x16xf32>
      %431 = tpu.concatenate %372, %380, %388, %396, %404, %412, %420, %428 in 1 : vector<10x32xf32>, vector<10x32xf32>, vector<10x32xf32>, vector<10x32xf32>, vector<10x32xf32>, vector<10x32xf32>, vector<10x32xf32>, vector<10x32xf32> -> vector<10x256xf32>
      %432 = tpu.concatenate %373, %374, %381, %382, %389, %390, %397, %398, %405, %406, %413, %414, %421, %422, %429, %430 in 1 : vector<10x16xf32>, vector<10x16xf32>, vector<10x16xf32>, vector<10x16xf32>, vector<10x16xf32>, vector<10x16xf32>, vector<10x16xf32>, vector<10x16xf32>, vector<10x16xf32>, vector<10x16xf32>, vector<10x16xf32>, vector<10x16xf32>, vector<10x16xf32>, vector<10x16xf32>, vector<10x16xf32>, vector<10x16xf32> -> vector<10x256xf32>
      %433 = tpu.concatenate %431, %432 in 0 : vector<10x256xf32>, vector<10x256xf32> -> vector<20x256xf32>
      %434 = arith.truncf %433 : vector<20x256xf32> to vector<20x256xbf16>
      %c0_249 = arith.constant 0 : index
      %c0_250 = arith.constant 0 : index
      %435 = vector.load %arg2[%c0_249, %c0_250] : memref<256x32xbf16, #tpu.memory_space<vmem>>, vector<256x32xbf16>
      %cst_251 = arith.constant dense<0.000000e+00> : vector<20x32xf32>
      %436 = tpu.matmul %434, %435, %cst_251 {dimension_numbers = #tpu.dot_dimension_numbers<[1], [0], [0], [1], [0, 0, 1, 1], [], []>} : vector<20x256xbf16>, vector<256x32xbf16>, vector<20x32xf32> -> vector<20x32xf32>
      %c0_252 = arith.constant 0 : index
      %c0_253 = arith.constant 0 : index
      %437 = vector.load %arg3[%c0_252, %c0_253] : memref<1x32xf32, #tpu.memory_space<vmem>>, vector<1x32xf32>
      %438 = vector.broadcast %437 : vector<1x32xf32> to vector<20x32xf32>
      %439 = arith.addf %436, %438 : vector<20x32xf32>
      %cst_254 = arith.constant 0.000000e+00 : f32
      %440 = vector.broadcast %cst_254 : f32 to vector<20x32xf32>
      %441 = arith.maximumf %439, %440 : vector<20x32xf32>
      %442 = vector.extract_strided_slice %441 {offsets = [0, 0], sizes = [10, 32], strides = [1, 1]} : vector<20x32xf32> to vector<10x32xf32>
      %443 = vector.extract_strided_slice %441 {offsets = [10, 0], sizes = [10, 32], strides = [1, 1]} : vector<20x32xf32> to vector<10x32xf32>
      %444 = tpu.concatenate %442, %443 in 1 : vector<10x32xf32>, vector<10x32xf32> -> vector<10x64xf32>
      %c10_i32 = arith.constant 10 : i32
      %445 = arith.muli %arg11, %c10_i32 : i32
      %446 = arith.index_cast %445 : i32 to index
      %c0_255 = arith.constant 0 : index
      %447 = vector.load %arg9[%446, %c0_255] : memref<200x64xf32, #tpu.memory_space<vmem>>, vector<10x64xf32>
      tpu.vector_store %arg9[%446, %c0_255], %444 {strides = array<i32>} : memref<200x64xf32, #tpu.memory_space<vmem>>, vector<10x64xf32>,
    }
    %c20_i32_0 = arith.constant 20 : i32
    %c0 = arith.constant 0 : index
    %c0_1 = arith.constant 0 : index
    %1 = vector.load %arg9[%c0, %c0_1] : memref<200x64xf32, #tpu.memory_space<vmem>>, vector<10x64xf32>
    %2 = vector.extract_strided_slice %1 {offsets = [0, 0], sizes = [9, 64], strides = [1, 1]} : vector<10x64xf32> to vector<9x64xf32>
    %3 = vector.extract_strided_slice %1 {offsets = [1, 0], sizes = [9, 64], strides = [1, 1]} : vector<10x64xf32> to vector<9x64xf32>
    %c10 = arith.constant 10 : index
    %c0_2 = arith.constant 0 : index
    %4 = vector.load %arg9[%c10, %c0_2] : memref<200x64xf32, #tpu.memory_space<vmem>>, vector<10x64xf32>
    %5 = vector.extract_strided_slice %4 {offsets = [0, 0], sizes = [9, 64], strides = [1, 1]} : vector<10x64xf32> to vector<9x64xf32>
    %6 = vector.extract_strided_slice %4 {offsets = [1, 0], sizes = [9, 64], strides = [1, 1]} : vector<10x64xf32> to vector<9x64xf32>
    %c20 = arith.constant 20 : index
    %c0_3 = arith.constant 0 : index
    %7 = vector.load %arg9[%c20, %c0_3] : memref<200x64xf32, #tpu.memory_space<vmem>>, vector<10x64xf32>
    %8 = vector.extract_strided_slice %7 {offsets = [0, 0], sizes = [9, 64], strides = [1, 1]} : vector<10x64xf32> to vector<9x64xf32>
    %9 = vector.extract_strided_slice %7 {offsets = [1, 0], sizes = [9, 64], strides = [1, 1]} : vector<10x64xf32> to vector<9x64xf32>
    %c30 = arith.constant 30 : index
    %c0_4 = arith.constant 0 : index
    %10 = vector.load %arg9[%c30, %c0_4] : memref<200x64xf32, #tpu.memory_space<vmem>>, vector<10x64xf32>
    %11 = vector.extract_strided_slice %10 {offsets = [0, 0], sizes = [9, 64], strides = [1, 1]} : vector<10x64xf32> to vector<9x64xf32>
    %12 = vector.extract_strided_slice %10 {offsets = [1, 0], sizes = [9, 64], strides = [1, 1]} : vector<10x64xf32> to vector<9x64xf32>
    %13 = tpu.concatenate %2, %3, %5, %6, %8, %9, %11, %12 in 1 : vector<9x64xf32>, vector<9x64xf32>, vector<9x64xf32>, vector<9x64xf32>, vector<9x64xf32>, vector<9x64xf32>, vector<9x64xf32>, vector<9x64xf32> -> vector<9x512xf32>
    %14 = arith.truncf %13 : vector<9x512xf32> to vector<9x512xbf16>
    %c0_5 = arith.constant 0 : index
    %c0_6 = arith.constant 0 : index
    %15 = vector.load %arg4[%c0_5, %c0_6] : memref<512x64xbf16, #tpu.memory_space<vmem>>, vector<512x64xbf16>
    %cst = arith.constant dense<0.000000e+00> : vector<9x64xf32>
    %16 = tpu.matmul %14, %15, %cst {dimension_numbers = #tpu.dot_dimension_numbers<[1], [0], [0], [1], [0, 0, 1, 1], [], []>} : vector<9x512xbf16>, vector<512x64xbf16>, vector<9x64xf32> -> vector<9x64xf32>
    %c0_7 = arith.constant 0 : index
    %c0_8 = arith.constant 0 : index
    %17 = vector.load %arg5[%c0_7, %c0_8] : memref<1x64xf32, #tpu.memory_space<vmem>>, vector<1x64xf32>
    %18 = vector.broadcast %17 : vector<1x64xf32> to vector<9x64xf32>
    %19 = arith.addf %16, %18 : vector<9x64xf32>
    %cst_9 = arith.constant 0.000000e+00 : f32
    %20 = vector.broadcast %cst_9 : f32 to vector<9x64xf32>
    %21 = arith.maximumf %19, %20 : vector<9x64xf32>
    %c0_10 = arith.constant 0 : index
    %c0_11 = arith.constant 0 : index
    %22 = vector.load %arg10[%c0_10, %c0_11] : memref<81x64xf32, #tpu.memory_space<vmem>>, vector<9x64xf32>
    tpu.vector_store %arg10[%c0_10, %c0_11], %21 {strides = array<i32>} : memref<81x64xf32, #tpu.memory_space<vmem>>, vector<9x64xf32>,
    %c20_12 = arith.constant 20 : index
    %c0_13 = arith.constant 0 : index
    %23 = vector.load %arg9[%c20_12, %c0_13] : memref<200x64xf32, #tpu.memory_space<vmem>>, vector<10x64xf32>
    %24 = vector.extract_strided_slice %23 {offsets = [0, 0], sizes = [9, 64], strides = [1, 1]} : vector<10x64xf32> to vector<9x64xf32>
    %25 = vector.extract_strided_slice %23 {offsets = [1, 0], sizes = [9, 64], strides = [1, 1]} : vector<10x64xf32> to vector<9x64xf32>
    %c30_14 = arith.constant 30 : index
    %c0_15 = arith.constant 0 : index
    %26 = vector.load %arg9[%c30_14, %c0_15] : memref<200x64xf32, #tpu.memory_space<vmem>>, vector<10x64xf32>
    %27 = vector.extract_strided_slice %26 {offsets = [0, 0], sizes = [9, 64], strides = [1, 1]} : vector<10x64xf32> to vector<9x64xf32>
    %28 = vector.extract_strided_slice %26 {offsets = [1, 0], sizes = [9, 64], strides = [1, 1]} : vector<10x64xf32> to vector<9x64xf32>
    %c40 = arith.constant 40 : index
    %c0_16 = arith.constant 0 : index
    %29 = vector.load %arg9[%c40, %c0_16] : memref<200x64xf32, #tpu.memory_space<vmem>>, vector<10x64xf32>
    %30 = vector.extract_strided_slice %29 {offsets = [0, 0], sizes = [9, 64], strides = [1, 1]} : vector<10x64xf32> to vector<9x64xf32>
    %31 = vector.extract_strided_slice %29 {offsets = [1, 0], sizes = [9, 64], strides = [1, 1]} : vector<10x64xf32> to vector<9x64xf32>
    %c50 = arith.constant 50 : index
    %c0_17 = arith.constant 0 : index
    %32 = vector.load %arg9[%c50, %c0_17] : memref<200x64xf32, #tpu.memory_space<vmem>>, vector<10x64xf32>
    %33 = vector.extract_strided_slice %32 {offsets = [0, 0], sizes = [9, 64], strides = [1, 1]} : vector<10x64xf32> to vector<9x64xf32>
    %34 = vector.extract_strided_slice %32 {offsets = [1, 0], sizes = [9, 64], strides = [1, 1]} : vector<10x64xf32> to vector<9x64xf32>
    %35 = tpu.concatenate %24, %25, %27, %28, %30, %31, %33, %34 in 1 : vector<9x64xf32>, vector<9x64xf32>, vector<9x64xf32>, vector<9x64xf32>, vector<9x64xf32>, vector<9x64xf32>, vector<9x64xf32>, vector<9x64xf32> -> vector<9x512xf32>
    %36 = arith.truncf %35 : vector<9x512xf32> to vector<9x512xbf16>
    %c0_18 = arith.constant 0 : index
    %c0_19 = arith.constant 0 : index
    %37 = vector.load %arg4[%c0_18, %c0_19] : memref<512x64xbf16, #tpu.memory_space<vmem>>, vector<512x64xbf16>
    %cst_20 = arith.constant dense<0.000000e+00> : vector<9x64xf32>
    %38 = tpu.matmul %36, %37, %cst_20 {dimension_numbers = #tpu.dot_dimension_numbers<[1], [0], [0], [1], [0, 0, 1, 1], [], []>} : vector<9x512xbf16>, vector<512x64xbf16>, vector<9x64xf32> -> vector<9x64xf32>
    %c0_21 = arith.constant 0 : index
    %c0_22 = arith.constant 0 : index
    %39 = vector.load %arg5[%c0_21, %c0_22] : memref<1x64xf32, #tpu.memory_space<vmem>>, vector<1x64xf32>
    %40 = vector.broadcast %39 : vector<1x64xf32> to vector<9x64xf32>
    %41 = arith.addf %38, %40 : vector<9x64xf32>
    %cst_23 = arith.constant 0.000000e+00 : f32
    %42 = vector.broadcast %cst_23 : f32 to vector<9x64xf32>
    %43 = arith.maximumf %41, %42 : vector<9x64xf32>
    %c9 = arith.constant 9 : index
    %c0_24 = arith.constant 0 : index
    %44 = vector.load %arg10[%c9, %c0_24] : memref<81x64xf32, #tpu.memory_space<vmem>>, vector<9x64xf32>
    tpu.vector_store %arg10[%c9, %c0_24], %43 {strides = array<i32>} : memref<81x64xf32, #tpu.memory_space<vmem>>, vector<9x64xf32>,
    %c40_25 = arith.constant 40 : index
    %c0_26 = arith.constant 0 : index
    %45 = vector.load %arg9[%c40_25, %c0_26] : memref<200x64xf32, #tpu.memory_space<vmem>>, vector<10x64xf32>
    %46 = vector.extract_strided_slice %45 {offsets = [0, 0], sizes = [9, 64], strides = [1, 1]} : vector<10x64xf32> to vector<9x64xf32>
    %47 = vector.extract_strided_slice %45 {offsets = [1, 0], sizes = [9, 64], strides = [1, 1]} : vector<10x64xf32> to vector<9x64xf32>
    %c50_27 = arith.constant 50 : index
    %c0_28 = arith.constant 0 : index
    %48 = vector.load %arg9[%c50_27, %c0_28] : memref<200x64xf32, #tpu.memory_space<vmem>>, vector<10x64xf32>
    %49 = vector.extract_strided_slice %48 {offsets = [0, 0], sizes = [9, 64], strides = [1, 1]} : vector<10x64xf32> to vector<9x64xf32>
    %50 = vector.extract_strided_slice %48 {offsets = [1, 0], sizes = [9, 64], strides = [1, 1]} : vector<10x64xf32> to vector<9x64xf32>
    %c60 = arith.constant 60 : index
    %c0_29 = arith.constant 0 : index
    %51 = vector.load %arg9[%c60, %c0_29] : memref<200x64xf32, #tpu.memory_space<vmem>>, vector<10x64xf32>
    %52 = vector.extract_strided_slice %51 {offsets = [0, 0], sizes = [9, 64], strides = [1, 1]} : vector<10x64xf32> to vector<9x64xf32>
    %53 = vector.extract_strided_slice %51 {offsets = [1, 0], sizes = [9, 64], strides = [1, 1]} : vector<10x64xf32> to vector<9x64xf32>
    %c70 = arith.constant 70 : index
    %c0_30 = arith.constant 0 : index
    %54 = vector.load %arg9[%c70, %c0_30] : memref<200x64xf32, #tpu.memory_space<vmem>>, vector<10x64xf32>
    %55 = vector.extract_strided_slice %54 {offsets = [0, 0], sizes = [9, 64], strides = [1, 1]} : vector<10x64xf32> to vector<9x64xf32>
    %56 = vector.extract_strided_slice %54 {offsets = [1, 0], sizes = [9, 64], strides = [1, 1]} : vector<10x64xf32> to vector<9x64xf32>
    %57 = tpu.concatenate %46, %47, %49, %50, %52, %53, %55, %56 in 1 : vector<9x64xf32>, vector<9x64xf32>, vector<9x64xf32>, vector<9x64xf32>, vector<9x64xf32>, vector<9x64xf32>, vector<9x64xf32>, vector<9x64xf32> -> vector<9x512xf32>
    %58 = arith.truncf %57 : vector<9x512xf32> to vector<9x512xbf16>
    %c0_31 = arith.constant 0 : index
    %c0_32 = arith.constant 0 : index
    %59 = vector.load %arg4[%c0_31, %c0_32] : memref<512x64xbf16, #tpu.memory_space<vmem>>, vector<512x64xbf16>
    %cst_33 = arith.constant dense<0.000000e+00> : vector<9x64xf32>
    %60 = tpu.matmul %58, %59, %cst_33 {dimension_numbers = #tpu.dot_dimension_numbers<[1], [0], [0], [1], [0, 0, 1, 1], [], []>} : vector<9x512xbf16>, vector<512x64xbf16>, vector<9x64xf32> -> vector<9x64xf32>
    %c0_34 = arith.constant 0 : index
    %c0_35 = arith.constant 0 : index
    %61 = vector.load %arg5[%c0_34, %c0_35] : memref<1x64xf32, #tpu.memory_space<vmem>>, vector<1x64xf32>
    %62 = vector.broadcast %61 : vector<1x64xf32> to vector<9x64xf32>
    %63 = arith.addf %60, %62 : vector<9x64xf32>
    %cst_36 = arith.constant 0.000000e+00 : f32
    %64 = vector.broadcast %cst_36 : f32 to vector<9x64xf32>
    %65 = arith.maximumf %63, %64 : vector<9x64xf32>
    %c18 = arith.constant 18 : index
    %c0_37 = arith.constant 0 : index
    %66 = vector.load %arg10[%c18, %c0_37] : memref<81x64xf32, #tpu.memory_space<vmem>>, vector<9x64xf32>
    tpu.vector_store %arg10[%c18, %c0_37], %65 {strides = array<i32>} : memref<81x64xf32, #tpu.memory_space<vmem>>, vector<9x64xf32>,
    %c60_38 = arith.constant 60 : index
    %c0_39 = arith.constant 0 : index
    %67 = vector.load %arg9[%c60_38, %c0_39] : memref<200x64xf32, #tpu.memory_space<vmem>>, vector<10x64xf32>
    %68 = vector.extract_strided_slice %67 {offsets = [0, 0], sizes = [9, 64], strides = [1, 1]} : vector<10x64xf32> to vector<9x64xf32>
    %69 = vector.extract_strided_slice %67 {offsets = [1, 0], sizes = [9, 64], strides = [1, 1]} : vector<10x64xf32> to vector<9x64xf32>
    %c70_40 = arith.constant 70 : index
    %c0_41 = arith.constant 0 : index
    %70 = vector.load %arg9[%c70_40, %c0_41] : memref<200x64xf32, #tpu.memory_space<vmem>>, vector<10x64xf32>
    %71 = vector.extract_strided_slice %70 {offsets = [0, 0], sizes = [9, 64], strides = [1, 1]} : vector<10x64xf32> to vector<9x64xf32>
    %72 = vector.extract_strided_slice %70 {offsets = [1, 0], sizes = [9, 64], strides = [1, 1]} : vector<10x64xf32> to vector<9x64xf32>
    %c80 = arith.constant 80 : index
    %c0_42 = arith.constant 0 : index
    %73 = vector.load %arg9[%c80, %c0_42] : memref<200x64xf32, #tpu.memory_space<vmem>>, vector<10x64xf32>
    %74 = vector.extract_strided_slice %73 {offsets = [0, 0], sizes = [9, 64], strides = [1, 1]} : vector<10x64xf32> to vector<9x64xf32>
    %75 = vector.extract_strided_slice %73 {offsets = [1, 0], sizes = [9, 64], strides = [1, 1]} : vector<10x64xf32> to vector<9x64xf32>
    %c90 = arith.constant 90 : index
    %c0_43 = arith.constant 0 : index
    %76 = vector.load %arg9[%c90, %c0_43] : memref<200x64xf32, #tpu.memory_space<vmem>>, vector<10x64xf32>
    %77 = vector.extract_strided_slice %76 {offsets = [0, 0], sizes = [9, 64], strides = [1, 1]} : vector<10x64xf32> to vector<9x64xf32>
    %78 = vector.extract_strided_slice %76 {offsets = [1, 0], sizes = [9, 64], strides = [1, 1]} : vector<10x64xf32> to vector<9x64xf32>
    %79 = tpu.concatenate %68, %69, %71, %72, %74, %75, %77, %78 in 1 : vector<9x64xf32>, vector<9x64xf32>, vector<9x64xf32>, vector<9x64xf32>, vector<9x64xf32>, vector<9x64xf32>, vector<9x64xf32>, vector<9x64xf32> -> vector<9x512xf32>
    %80 = arith.truncf %79 : vector<9x512xf32> to vector<9x512xbf16>
    %c0_44 = arith.constant 0 : index
    %c0_45 = arith.constant 0 : index
    %81 = vector.load %arg4[%c0_44, %c0_45] : memref<512x64xbf16, #tpu.memory_space<vmem>>, vector<512x64xbf16>
    %cst_46 = arith.constant dense<0.000000e+00> : vector<9x64xf32>
    %82 = tpu.matmul %80, %81, %cst_46 {dimension_numbers = #tpu.dot_dimension_numbers<[1], [0], [0], [1], [0, 0, 1, 1], [], []>} : vector<9x512xbf16>, vector<512x64xbf16>, vector<9x64xf32> -> vector<9x64xf32>
    %c0_47 = arith.constant 0 : index
    %c0_48 = arith.constant 0 : index
    %83 = vector.load %arg5[%c0_47, %c0_48] : memref<1x64xf32, #tpu.memory_space<vmem>>, vector<1x64xf32>
    %84 = vector.broadcast %83 : vector<1x64xf32> to vector<9x64xf32>
    %85 = arith.addf %82, %84 : vector<9x64xf32>
    %cst_49 = arith.constant 0.000000e+00 : f32
    %86 = vector.broadcast %cst_49 : f32 to vector<9x64xf32>
    %87 = arith.maximumf %85, %86 : vector<9x64xf32>
    %c27 = arith.constant 27 : index
    %c0_50 = arith.constant 0 : index
    %88 = vector.load %arg10[%c27, %c0_50] : memref<81x64xf32, #tpu.memory_space<vmem>>, vector<9x64xf32>
    tpu.vector_store %arg10[%c27, %c0_50], %87 {strides = array<i32>} : memref<81x64xf32, #tpu.memory_space<vmem>>, vector<9x64xf32>,
    %c80_51 = arith.constant 80 : index
    %c0_52 = arith.constant 0 : index
    %89 = vector.load %arg9[%c80_51, %c0_52] : memref<200x64xf32, #tpu.memory_space<vmem>>, vector<10x64xf32>
    %90 = vector.extract_strided_slice %89 {offsets = [0, 0], sizes = [9, 64], strides = [1, 1]} : vector<10x64xf32> to vector<9x64xf32>
    %91 = vector.extract_strided_slice %89 {offsets = [1, 0], sizes = [9, 64], strides = [1, 1]} : vector<10x64xf32> to vector<9x64xf32>
    %c90_53 = arith.constant 90 : index
    %c0_54 = arith.constant 0 : index
    %92 = vector.load %arg9[%c90_53, %c0_54] : memref<200x64xf32, #tpu.memory_space<vmem>>, vector<10x64xf32>
    %93 = vector.extract_strided_slice %92 {offsets = [0, 0], sizes = [9, 64], strides = [1, 1]} : vector<10x64xf32> to vector<9x64xf32>
    %94 = vector.extract_strided_slice %92 {offsets = [1, 0], sizes = [9, 64], strides = [1, 1]} : vector<10x64xf32> to vector<9x64xf32>
    %c100 = arith.constant 100 : index
    %c0_55 = arith.constant 0 : index
    %95 = vector.load %arg9[%c100, %c0_55] : memref<200x64xf32, #tpu.memory_space<vmem>>, vector<10x64xf32>
    %96 = vector.extract_strided_slice %95 {offsets = [0, 0], sizes = [9, 64], strides = [1, 1]} : vector<10x64xf32> to vector<9x64xf32>
    %97 = vector.extract_strided_slice %95 {offsets = [1, 0], sizes = [9, 64], strides = [1, 1]} : vector<10x64xf32> to vector<9x64xf32>
    %c110 = arith.constant 110 : index
    %c0_56 = arith.constant 0 : index
    %98 = vector.load %arg9[%c110, %c0_56] : memref<200x64xf32, #tpu.memory_space<vmem>>, vector<10x64xf32>
    %99 = vector.extract_strided_slice %98 {offsets = [0, 0], sizes = [9, 64], strides = [1, 1]} : vector<10x64xf32> to vector<9x64xf32>
    %100 = vector.extract_strided_slice %98 {offsets = [1, 0], sizes = [9, 64], strides = [1, 1]} : vector<10x64xf32> to vector<9x64xf32>
    %101 = tpu.concatenate %90, %91, %93, %94, %96, %97, %99, %100 in 1 : vector<9x64xf32>, vector<9x64xf32>, vector<9x64xf32>, vector<9x64xf32>, vector<9x64xf32>, vector<9x64xf32>, vector<9x64xf32>, vector<9x64xf32> -> vector<9x512xf32>
    %102 = arith.truncf %101 : vector<9x512xf32> to vector<9x512xbf16>
    %c0_57 = arith.constant 0 : index
    %c0_58 = arith.constant 0 : index
    %103 = vector.load %arg4[%c0_57, %c0_58] : memref<512x64xbf16, #tpu.memory_space<vmem>>, vector<512x64xbf16>
    %cst_59 = arith.constant dense<0.000000e+00> : vector<9x64xf32>
    %104 = tpu.matmul %102, %103, %cst_59 {dimension_numbers = #tpu.dot_dimension_numbers<[1], [0], [0], [1], [0, 0, 1, 1], [], []>} : vector<9x512xbf16>, vector<512x64xbf16>, vector<9x64xf32> -> vector<9x64xf32>
    %c0_60 = arith.constant 0 : index
    %c0_61 = arith.constant 0 : index
    %105 = vector.load %arg5[%c0_60, %c0_61] : memref<1x64xf32, #tpu.memory_space<vmem>>, vector<1x64xf32>
    %106 = vector.broadcast %105 : vector<1x64xf32> to vector<9x64xf32>
    %107 = arith.addf %104, %106 : vector<9x64xf32>
    %cst_62 = arith.constant 0.000000e+00 : f32
    %108 = vector.broadcast %cst_62 : f32 to vector<9x64xf32>
    %109 = arith.maximumf %107, %108 : vector<9x64xf32>
    %c36 = arith.constant 36 : index
    %c0_63 = arith.constant 0 : index
    %110 = vector.load %arg10[%c36, %c0_63] : memref<81x64xf32, #tpu.memory_space<vmem>>, vector<9x64xf32>
    tpu.vector_store %arg10[%c36, %c0_63], %109 {strides = array<i32>} : memref<81x64xf32, #tpu.memory_space<vmem>>, vector<9x64xf32>,
    %c100_64 = arith.constant 100 : index
    %c0_65 = arith.constant 0 : index
    %111 = vector.load %arg9[%c100_64, %c0_65] : memref<200x64xf32, #tpu.memory_space<vmem>>, vector<10x64xf32>
    %112 = vector.extract_strided_slice %111 {offsets = [0, 0], sizes = [9, 64], strides = [1, 1]} : vector<10x64xf32> to vector<9x64xf32>
    %113 = vector.extract_strided_slice %111 {offsets = [1, 0], sizes = [9, 64], strides = [1, 1]} : vector<10x64xf32> to vector<9x64xf32>
    %c110_66 = arith.constant 110 : index
    %c0_67 = arith.constant 0 : index
    %114 = vector.load %arg9[%c110_66, %c0_67] : memref<200x64xf32, #tpu.memory_space<vmem>>, vector<10x64xf32>
    %115 = vector.extract_strided_slice %114 {offsets = [0, 0], sizes = [9, 64], strides = [1, 1]} : vector<10x64xf32> to vector<9x64xf32>
    %116 = vector.extract_strided_slice %114 {offsets = [1, 0], sizes = [9, 64], strides = [1, 1]} : vector<10x64xf32> to vector<9x64xf32>
    %c120 = arith.constant 120 : index
    %c0_68 = arith.constant 0 : index
    %117 = vector.load %arg9[%c120, %c0_68] : memref<200x64xf32, #tpu.memory_space<vmem>>, vector<10x64xf32>
    %118 = vector.extract_strided_slice %117 {offsets = [0, 0], sizes = [9, 64], strides = [1, 1]} : vector<10x64xf32> to vector<9x64xf32>
    %119 = vector.extract_strided_slice %117 {offsets = [1, 0], sizes = [9, 64], strides = [1, 1]} : vector<10x64xf32> to vector<9x64xf32>
    %c130 = arith.constant 130 : index
    %c0_69 = arith.constant 0 : index
    %120 = vector.load %arg9[%c130, %c0_69] : memref<200x64xf32, #tpu.memory_space<vmem>>, vector<10x64xf32>
    %121 = vector.extract_strided_slice %120 {offsets = [0, 0], sizes = [9, 64], strides = [1, 1]} : vector<10x64xf32> to vector<9x64xf32>
    %122 = vector.extract_strided_slice %120 {offsets = [1, 0], sizes = [9, 64], strides = [1, 1]} : vector<10x64xf32> to vector<9x64xf32>
    %123 = tpu.concatenate %112, %113, %115, %116, %118, %119, %121, %122 in 1 : vector<9x64xf32>, vector<9x64xf32>, vector<9x64xf32>, vector<9x64xf32>, vector<9x64xf32>, vector<9x64xf32>, vector<9x64xf32>, vector<9x64xf32> -> vector<9x512xf32>
    %124 = arith.truncf %123 : vector<9x512xf32> to vector<9x512xbf16>
    %c0_70 = arith.constant 0 : index
    %c0_71 = arith.constant 0 : index
    %125 = vector.load %arg4[%c0_70, %c0_71] : memref<512x64xbf16, #tpu.memory_space<vmem>>, vector<512x64xbf16>
    %cst_72 = arith.constant dense<0.000000e+00> : vector<9x64xf32>
    %126 = tpu.matmul %124, %125, %cst_72 {dimension_numbers = #tpu.dot_dimension_numbers<[1], [0], [0], [1], [0, 0, 1, 1], [], []>} : vector<9x512xbf16>, vector<512x64xbf16>, vector<9x64xf32> -> vector<9x64xf32>
    %c0_73 = arith.constant 0 : index
    %c0_74 = arith.constant 0 : index
    %127 = vector.load %arg5[%c0_73, %c0_74] : memref<1x64xf32, #tpu.memory_space<vmem>>, vector<1x64xf32>
    %128 = vector.broadcast %127 : vector<1x64xf32> to vector<9x64xf32>
    %129 = arith.addf %126, %128 : vector<9x64xf32>
    %cst_75 = arith.constant 0.000000e+00 : f32
    %130 = vector.broadcast %cst_75 : f32 to vector<9x64xf32>
    %131 = arith.maximumf %129, %130 : vector<9x64xf32>
    %c45 = arith.constant 45 : index
    %c0_76 = arith.constant 0 : index
    %132 = vector.load %arg10[%c45, %c0_76] : memref<81x64xf32, #tpu.memory_space<vmem>>, vector<9x64xf32>
    tpu.vector_store %arg10[%c45, %c0_76], %131 {strides = array<i32>} : memref<81x64xf32, #tpu.memory_space<vmem>>, vector<9x64xf32>,
    %c120_77 = arith.constant 120 : index
    %c0_78 = arith.constant 0 : index
    %133 = vector.load %arg9[%c120_77, %c0_78] : memref<200x64xf32, #tpu.memory_space<vmem>>, vector<10x64xf32>
    %134 = vector.extract_strided_slice %133 {offsets = [0, 0], sizes = [9, 64], strides = [1, 1]} : vector<10x64xf32> to vector<9x64xf32>
    %135 = vector.extract_strided_slice %133 {offsets = [1, 0], sizes = [9, 64], strides = [1, 1]} : vector<10x64xf32> to vector<9x64xf32>
    %c130_79 = arith.constant 130 : index
    %c0_80 = arith.constant 0 : index
    %136 = vector.load %arg9[%c130_79, %c0_80] : memref<200x64xf32, #tpu.memory_space<vmem>>, vector<10x64xf32>
    %137 = vector.extract_strided_slice %136 {offsets = [0, 0], sizes = [9, 64], strides = [1, 1]} : vector<10x64xf32> to vector<9x64xf32>
    %138 = vector.extract_strided_slice %136 {offsets = [1, 0], sizes = [9, 64], strides = [1, 1]} : vector<10x64xf32> to vector<9x64xf32>
    %c140 = arith.constant 140 : index
    %c0_81 = arith.constant 0 : index
    %139 = vector.load %arg9[%c140, %c0_81] : memref<200x64xf32, #tpu.memory_space<vmem>>, vector<10x64xf32>
    %140 = vector.extract_strided_slice %139 {offsets = [0, 0], sizes = [9, 64], strides = [1, 1]} : vector<10x64xf32> to vector<9x64xf32>
    %141 = vector.extract_strided_slice %139 {offsets = [1, 0], sizes = [9, 64], strides = [1, 1]} : vector<10x64xf32> to vector<9x64xf32>
    %c150 = arith.constant 150 : index
    %c0_82 = arith.constant 0 : index
    %142 = vector.load %arg9[%c150, %c0_82] : memref<200x64xf32, #tpu.memory_space<vmem>>, vector<10x64xf32>
    %143 = vector.extract_strided_slice %142 {offsets = [0, 0], sizes = [9, 64], strides = [1, 1]} : vector<10x64xf32> to vector<9x64xf32>
    %144 = vector.extract_strided_slice %142 {offsets = [1, 0], sizes = [9, 64], strides = [1, 1]} : vector<10x64xf32> to vector<9x64xf32>
    %145 = tpu.concatenate %134, %135, %137, %138, %140, %141, %143, %144 in 1 : vector<9x64xf32>, vector<9x64xf32>, vector<9x64xf32>, vector<9x64xf32>, vector<9x64xf32>, vector<9x64xf32>, vector<9x64xf32>, vector<9x64xf32> -> vector<9x512xf32>
    %146 = arith.truncf %145 : vector<9x512xf32> to vector<9x512xbf16>
    %c0_83 = arith.constant 0 : index
    %c0_84 = arith.constant 0 : index
    %147 = vector.load %arg4[%c0_83, %c0_84] : memref<512x64xbf16, #tpu.memory_space<vmem>>, vector<512x64xbf16>
    %cst_85 = arith.constant dense<0.000000e+00> : vector<9x64xf32>
    %148 = tpu.matmul %146, %147, %cst_85 {dimension_numbers = #tpu.dot_dimension_numbers<[1], [0], [0], [1], [0, 0, 1, 1], [], []>} : vector<9x512xbf16>, vector<512x64xbf16>, vector<9x64xf32> -> vector<9x64xf32>
    %c0_86 = arith.constant 0 : index
    %c0_87 = arith.constant 0 : index
    %149 = vector.load %arg5[%c0_86, %c0_87] : memref<1x64xf32, #tpu.memory_space<vmem>>, vector<1x64xf32>
    %150 = vector.broadcast %149 : vector<1x64xf32> to vector<9x64xf32>
    %151 = arith.addf %148, %150 : vector<9x64xf32>
    %cst_88 = arith.constant 0.000000e+00 : f32
    %152 = vector.broadcast %cst_88 : f32 to vector<9x64xf32>
    %153 = arith.maximumf %151, %152 : vector<9x64xf32>
    %c54 = arith.constant 54 : index
    %c0_89 = arith.constant 0 : index
    %154 = vector.load %arg10[%c54, %c0_89] : memref<81x64xf32, #tpu.memory_space<vmem>>, vector<9x64xf32>
    tpu.vector_store %arg10[%c54, %c0_89], %153 {strides = array<i32>} : memref<81x64xf32, #tpu.memory_space<vmem>>, vector<9x64xf32>,
    %c140_90 = arith.constant 140 : index
    %c0_91 = arith.constant 0 : index
    %155 = vector.load %arg9[%c140_90, %c0_91] : memref<200x64xf32, #tpu.memory_space<vmem>>, vector<10x64xf32>
    %156 = vector.extract_strided_slice %155 {offsets = [0, 0], sizes = [9, 64], strides = [1, 1]} : vector<10x64xf32> to vector<9x64xf32>
    %157 = vector.extract_strided_slice %155 {offsets = [1, 0], sizes = [9, 64], strides = [1, 1]} : vector<10x64xf32> to vector<9x64xf32>
    %c150_92 = arith.constant 150 : index
    %c0_93 = arith.constant 0 : index
    %158 = vector.load %arg9[%c150_92, %c0_93] : memref<200x64xf32, #tpu.memory_space<vmem>>, vector<10x64xf32>
    %159 = vector.extract_strided_slice %158 {offsets = [0, 0], sizes = [9, 64], strides = [1, 1]} : vector<10x64xf32> to vector<9x64xf32>
    %160 = vector.extract_strided_slice %158 {offsets = [1, 0], sizes = [9, 64], strides = [1, 1]} : vector<10x64xf32> to vector<9x64xf32>
    %c160 = arith.constant 160 : index
    %c0_94 = arith.constant 0 : index
    %161 = vector.load %arg9[%c160, %c0_94] : memref<200x64xf32, #tpu.memory_space<vmem>>, vector<10x64xf32>
    %162 = vector.extract_strided_slice %161 {offsets = [0, 0], sizes = [9, 64], strides = [1, 1]} : vector<10x64xf32> to vector<9x64xf32>
    %163 = vector.extract_strided_slice %161 {offsets = [1, 0], sizes = [9, 64], strides = [1, 1]} : vector<10x64xf32> to vector<9x64xf32>
    %c170 = arith.constant 170 : index
    %c0_95 = arith.constant 0 : index
    %164 = vector.load %arg9[%c170, %c0_95] : memref<200x64xf32, #tpu.memory_space<vmem>>, vector<10x64xf32>
    %165 = vector.extract_strided_slice %164 {offsets = [0, 0], sizes = [9, 64], strides = [1, 1]} : vector<10x64xf32> to vector<9x64xf32>
    %166 = vector.extract_strided_slice %164 {offsets = [1, 0], sizes = [9, 64], strides = [1, 1]} : vector<10x64xf32> to vector<9x64xf32>
    %167 = tpu.concatenate %156, %157, %159, %160, %162, %163, %165, %166 in 1 : vector<9x64xf32>, vector<9x64xf32>, vector<9x64xf32>, vector<9x64xf32>, vector<9x64xf32>, vector<9x64xf32>, vector<9x64xf32>, vector<9x64xf32> -> vector<9x512xf32>
    %168 = arith.truncf %167 : vector<9x512xf32> to vector<9x512xbf16>
    %c0_96 = arith.constant 0 : index
    %c0_97 = arith.constant 0 : index
    %169 = vector.load %arg4[%c0_96, %c0_97] : memref<512x64xbf16, #tpu.memory_space<vmem>>, vector<512x64xbf16>
    %cst_98 = arith.constant dense<0.000000e+00> : vector<9x64xf32>
    %170 = tpu.matmul %168, %169, %cst_98 {dimension_numbers = #tpu.dot_dimension_numbers<[1], [0], [0], [1], [0, 0, 1, 1], [], []>} : vector<9x512xbf16>, vector<512x64xbf16>, vector<9x64xf32> -> vector<9x64xf32>
    %c0_99 = arith.constant 0 : index
    %c0_100 = arith.constant 0 : index
    %171 = vector.load %arg5[%c0_99, %c0_100] : memref<1x64xf32, #tpu.memory_space<vmem>>, vector<1x64xf32>
    %172 = vector.broadcast %171 : vector<1x64xf32> to vector<9x64xf32>
    %173 = arith.addf %170, %172 : vector<9x64xf32>
    %cst_101 = arith.constant 0.000000e+00 : f32
    %174 = vector.broadcast %cst_101 : f32 to vector<9x64xf32>
    %175 = arith.maximumf %173, %174 : vector<9x64xf32>
    %c63 = arith.constant 63 : index
    %c0_102 = arith.constant 0 : index
    %176 = vector.load %arg10[%c63, %c0_102] : memref<81x64xf32, #tpu.memory_space<vmem>>, vector<9x64xf32>
    tpu.vector_store %arg10[%c63, %c0_102], %175 {strides = array<i32>} : memref<81x64xf32, #tpu.memory_space<vmem>>, vector<9x64xf32>,
    %c160_103 = arith.constant 160 : index
    %c0_104 = arith.constant 0 : index
    %177 = vector.load %arg9[%c160_103, %c0_104] : memref<200x64xf32, #tpu.memory_space<vmem>>, vector<10x64xf32>
    %178 = vector.extract_strided_slice %177 {offsets = [0, 0], sizes = [9, 64], strides = [1, 1]} : vector<10x64xf32> to vector<9x64xf32>
    %179 = vector.extract_strided_slice %177 {offsets = [1, 0], sizes = [9, 64], strides = [1, 1]} : vector<10x64xf32> to vector<9x64xf32>
    %c170_105 = arith.constant 170 : index
    %c0_106 = arith.constant 0 : index
    %180 = vector.load %arg9[%c170_105, %c0_106] : memref<200x64xf32, #tpu.memory_space<vmem>>, vector<10x64xf32>
    %181 = vector.extract_strided_slice %180 {offsets = [0, 0], sizes = [9, 64], strides = [1, 1]} : vector<10x64xf32> to vector<9x64xf32>
    %182 = vector.extract_strided_slice %180 {offsets = [1, 0], sizes = [9, 64], strides = [1, 1]} : vector<10x64xf32> to vector<9x64xf32>
    %c180 = arith.constant 180 : index
    %c0_107 = arith.constant 0 : index
    %183 = vector.load %arg9[%c180, %c0_107] : memref<200x64xf32, #tpu.memory_space<vmem>>, vector<10x64xf32>
    %184 = vector.extract_strided_slice %183 {offsets = [0, 0], sizes = [9, 64], strides = [1, 1]} : vector<10x64xf32> to vector<9x64xf32>
    %185 = vector.extract_strided_slice %183 {offsets = [1, 0], sizes = [9, 64], strides = [1, 1]} : vector<10x64xf32> to vector<9x64xf32>
    %c190 = arith.constant 190 : index
    %c0_108 = arith.constant 0 : index
    %186 = vector.load %arg9[%c190, %c0_108] : memref<200x64xf32, #tpu.memory_space<vmem>>, vector<10x64xf32>
    %187 = vector.extract_strided_slice %186 {offsets = [0, 0], sizes = [9, 64], strides = [1, 1]} : vector<10x64xf32> to vector<9x64xf32>
    %188 = vector.extract_strided_slice %186 {offsets = [1, 0], sizes = [9, 64], strides = [1, 1]} : vector<10x64xf32> to vector<9x64xf32>
    %189 = tpu.concatenate %178, %179, %181, %182, %184, %185, %187, %188 in 1 : vector<9x64xf32>, vector<9x64xf32>, vector<9x64xf32>, vector<9x64xf32>, vector<9x64xf32>, vector<9x64xf32>, vector<9x64xf32>, vector<9x64xf32> -> vector<9x512xf32>
    %190 = arith.truncf %189 : vector<9x512xf32> to vector<9x512xbf16>
    %c0_109 = arith.constant 0 : index
    %c0_110 = arith.constant 0 : index
    %191 = vector.load %arg4[%c0_109, %c0_110] : memref<512x64xbf16, #tpu.memory_space<vmem>>, vector<512x64xbf16>
    %cst_111 = arith.constant dense<0.000000e+00> : vector<9x64xf32>
    %192 = tpu.matmul %190, %191, %cst_111 {dimension_numbers = #tpu.dot_dimension_numbers<[1], [0], [0], [1], [0, 0, 1, 1], [], []>} : vector<9x512xbf16>, vector<512x64xbf16>, vector<9x64xf32> -> vector<9x64xf32>
    %c0_112 = arith.constant 0 : index
    %c0_113 = arith.constant 0 : index
    %193 = vector.load %arg5[%c0_112, %c0_113] : memref<1x64xf32, #tpu.memory_space<vmem>>, vector<1x64xf32>
    %194 = vector.broadcast %193 : vector<1x64xf32> to vector<9x64xf32>
    %195 = arith.addf %192, %194 : vector<9x64xf32>
    %cst_114 = arith.constant 0.000000e+00 : f32
    %196 = vector.broadcast %cst_114 : f32 to vector<9x64xf32>
    %197 = arith.maximumf %195, %196 : vector<9x64xf32>
    %c72 = arith.constant 72 : index
    %c0_115 = arith.constant 0 : index
    %198 = vector.load %arg10[%c72, %c0_115] : memref<81x64xf32, #tpu.memory_space<vmem>>, vector<9x64xf32>
    tpu.vector_store %arg10[%c72, %c0_115], %197 {strides = array<i32>} : memref<81x64xf32, #tpu.memory_space<vmem>>, vector<9x64xf32>,
    %c0_116 = arith.constant 0 : index
    %c0_117 = arith.constant 0 : index
    %199 = vector.load %arg10[%c0_116, %c0_117] : memref<81x64xf32, #tpu.memory_space<vmem>>, vector<9x64xf32>
    %200 = vector.extract_strided_slice %199 {offsets = [0, 0], sizes = [7, 64], strides = [1, 1]} : vector<9x64xf32> to vector<7x64xf32>
    %201 = vector.extract_strided_slice %199 {offsets = [1, 0], sizes = [7, 64], strides = [1, 1]} : vector<9x64xf32> to vector<7x64xf32>
    %202 = vector.extract_strided_slice %199 {offsets = [2, 0], sizes = [7, 64], strides = [1, 1]} : vector<9x64xf32> to vector<7x64xf32>
    %c9_118 = arith.constant 9 : index
    %c0_119 = arith.constant 0 : index
    %203 = vector.load %arg10[%c9_118, %c0_119] : memref<81x64xf32, #tpu.memory_space<vmem>>, vector<9x64xf32>
    %204 = vector.extract_strided_slice %203 {offsets = [0, 0], sizes = [7, 64], strides = [1, 1]} : vector<9x64xf32> to vector<7x64xf32>
    %205 = vector.extract_strided_slice %203 {offsets = [1, 0], sizes = [7, 64], strides = [1, 1]} : vector<9x64xf32> to vector<7x64xf32>
    %206 = vector.extract_strided_slice %203 {offsets = [2, 0], sizes = [7, 64], strides = [1, 1]} : vector<9x64xf32> to vector<7x64xf32>
    %c18_120 = arith.constant 18 : index
    %c0_121 = arith.constant 0 : index
    %207 = vector.load %arg10[%c18_120, %c0_121] : memref<81x64xf32, #tpu.memory_space<vmem>>, vector<9x64xf32>
    %208 = vector.extract_strided_slice %207 {offsets = [0, 0], sizes = [7, 64], strides = [1, 1]} : vector<9x64xf32> to vector<7x64xf32>
    %209 = vector.extract_strided_slice %207 {offsets = [1, 0], sizes = [7, 64], strides = [1, 1]} : vector<9x64xf32> to vector<7x64xf32>
    %210 = vector.extract_strided_slice %207 {offsets = [2, 0], sizes = [7, 64], strides = [1, 1]} : vector<9x64xf32> to vector<7x64xf32>
    %211 = tpu.concatenate %200, %201, %202, %204, %205, %206, %208, %209, %210 in 1 : vector<7x64xf32>, vector<7x64xf32>, vector<7x64xf32>, vector<7x64xf32>, vector<7x64xf32>, vector<7x64xf32>, vector<7x64xf32>, vector<7x64xf32>, vector<7x64xf32> -> vector<7x576xf32>
    %212 = arith.truncf %211 : vector<7x576xf32> to vector<7x576xbf16>
    %c0_122 = arith.constant 0 : index
    %c0_123 = arith.constant 0 : index
    %213 = vector.load %arg6[%c0_122, %c0_123] : memref<576x64xbf16, #tpu.memory_space<vmem>>, vector<576x64xbf16>
    %cst_124 = arith.constant dense<0.000000e+00> : vector<7x64xf32>
    %214 = tpu.matmul %212, %213, %cst_124 {dimension_numbers = #tpu.dot_dimension_numbers<[1], [0], [0], [1], [0, 0, 1, 1], [], []>} : vector<7x576xbf16>, vector<576x64xbf16>, vector<7x64xf32> -> vector<7x64xf32>
    %c0_125 = arith.constant 0 : index
    %c0_126 = arith.constant 0 : index
    %215 = vector.load %arg7[%c0_125, %c0_126] : memref<1x64xf32, #tpu.memory_space<vmem>>, vector<1x64xf32>
    %216 = vector.broadcast %215 : vector<1x64xf32> to vector<7x64xf32>
    %217 = arith.addf %214, %216 : vector<7x64xf32>
    %cst_127 = arith.constant 0.000000e+00 : f32
    %218 = vector.broadcast %cst_127 : f32 to vector<7x64xf32>
    %219 = arith.maximumf %217, %218 : vector<7x64xf32>
    %c0_128 = arith.constant 0 : index
    %c0_129 = arith.constant 0 : index
    %c0_130 = arith.constant 0 : index
    %220 = vector.load %arg8[%c0_128, %c0_129, %c0_130] : memref<1x49x64xf32, #tpu.memory_space<vmem>>, vector<1x7x64xf32>
    %221 = vector.shape_cast %220 : vector<1x7x64xf32> to vector<7x64xf32>
    %222 = vector.shape_cast %219 : vector<7x64xf32> to vector<1x7x64xf32>
    tpu.vector_store %arg8[%c0_128, %c0_129, %c0_130], %222 {strides = array<i32>} : memref<1x49x64xf32, #tpu.memory_space<vmem>>, vector<1x7x64xf32>,
    %c9_131 = arith.constant 9 : index
    %c0_132 = arith.constant 0 : index
    %223 = vector.load %arg10[%c9_131, %c0_132] : memref<81x64xf32, #tpu.memory_space<vmem>>, vector<9x64xf32>
    %224 = vector.extract_strided_slice %223 {offsets = [0, 0], sizes = [7, 64], strides = [1, 1]} : vector<9x64xf32> to vector<7x64xf32>
    %225 = vector.extract_strided_slice %223 {offsets = [1, 0], sizes = [7, 64], strides = [1, 1]} : vector<9x64xf32> to vector<7x64xf32>
    %226 = vector.extract_strided_slice %223 {offsets = [2, 0], sizes = [7, 64], strides = [1, 1]} : vector<9x64xf32> to vector<7x64xf32>
    %c18_133 = arith.constant 18 : index
    %c0_134 = arith.constant 0 : index
    %227 = vector.load %arg10[%c18_133, %c0_134] : memref<81x64xf32, #tpu.memory_space<vmem>>, vector<9x64xf32>
    %228 = vector.extract_strided_slice %227 {offsets = [0, 0], sizes = [7, 64], strides = [1, 1]} : vector<9x64xf32> to vector<7x64xf32>
    %229 = vector.extract_strided_slice %227 {offsets = [1, 0], sizes = [7, 64], strides = [1, 1]} : vector<9x64xf32> to vector<7x64xf32>
    %230 = vector.extract_strided_slice %227 {offsets = [2, 0], sizes = [7, 64], strides = [1, 1]} : vector<9x64xf32> to vector<7x64xf32>
    %c27_135 = arith.constant 27 : index
    %c0_136 = arith.constant 0 : index
    %231 = vector.load %arg10[%c27_135, %c0_136] : memref<81x64xf32, #tpu.memory_space<vmem>>, vector<9x64xf32>
    %232 = vector.extract_strided_slice %231 {offsets = [0, 0], sizes = [7, 64], strides = [1, 1]} : vector<9x64xf32> to vector<7x64xf32>
    %233 = vector.extract_strided_slice %231 {offsets = [1, 0], sizes = [7, 64], strides = [1, 1]} : vector<9x64xf32> to vector<7x64xf32>
    %234 = vector.extract_strided_slice %231 {offsets = [2, 0], sizes = [7, 64], strides = [1, 1]} : vector<9x64xf32> to vector<7x64xf32>
    %235 = tpu.concatenate %224, %225, %226, %228, %229, %230, %232, %233, %234 in 1 : vector<7x64xf32>, vector<7x64xf32>, vector<7x64xf32>, vector<7x64xf32>, vector<7x64xf32>, vector<7x64xf32>, vector<7x64xf32>, vector<7x64xf32>, vector<7x64xf32> -> vector<7x576xf32>
    %236 = arith.truncf %235 : vector<7x576xf32> to vector<7x576xbf16>
    %c0_137 = arith.constant 0 : index
    %c0_138 = arith.constant 0 : index
    %237 = vector.load %arg6[%c0_137, %c0_138] : memref<576x64xbf16, #tpu.memory_space<vmem>>, vector<576x64xbf16>
    %cst_139 = arith.constant dense<0.000000e+00> : vector<7x64xf32>
    %238 = tpu.matmul %236, %237, %cst_139 {dimension_numbers = #tpu.dot_dimension_numbers<[1], [0], [0], [1], [0, 0, 1, 1], [], []>} : vector<7x576xbf16>, vector<576x64xbf16>, vector<7x64xf32> -> vector<7x64xf32>
    %c0_140 = arith.constant 0 : index
    %c0_141 = arith.constant 0 : index
    %239 = vector.load %arg7[%c0_140, %c0_141] : memref<1x64xf32, #tpu.memory_space<vmem>>, vector<1x64xf32>
    %240 = vector.broadcast %239 : vector<1x64xf32> to vector<7x64xf32>
    %241 = arith.addf %238, %240 : vector<7x64xf32>
    %cst_142 = arith.constant 0.000000e+00 : f32
    %242 = vector.broadcast %cst_142 : f32 to vector<7x64xf32>
    %243 = arith.maximumf %241, %242 : vector<7x64xf32>
    %c0_143 = arith.constant 0 : index
    %c7 = arith.constant 7 : index
    %c0_144 = arith.constant 0 : index
    %244 = vector.load %arg8[%c0_143, %c7, %c0_144] : memref<1x49x64xf32, #tpu.memory_space<vmem>>, vector<1x7x64xf32>
    %245 = vector.shape_cast %244 : vector<1x7x64xf32> to vector<7x64xf32>
    %246 = vector.shape_cast %243 : vector<7x64xf32> to vector<1x7x64xf32>
    tpu.vector_store %arg8[%c0_143, %c7, %c0_144], %246 {strides = array<i32>} : memref<1x49x64xf32, #tpu.memory_space<vmem>>, vector<1x7x64xf32>,
    %c18_145 = arith.constant 18 : index
    %c0_146 = arith.constant 0 : index
    %247 = vector.load %arg10[%c18_145, %c0_146] : memref<81x64xf32, #tpu.memory_space<vmem>>, vector<9x64xf32>
    %248 = vector.extract_strided_slice %247 {offsets = [0, 0], sizes = [7, 64], strides = [1, 1]} : vector<9x64xf32> to vector<7x64xf32>
    %249 = vector.extract_strided_slice %247 {offsets = [1, 0], sizes = [7, 64], strides = [1, 1]} : vector<9x64xf32> to vector<7x64xf32>
    %250 = vector.extract_strided_slice %247 {offsets = [2, 0], sizes = [7, 64], strides = [1, 1]} : vector<9x64xf32> to vector<7x64xf32>
    %c27_147 = arith.constant 27 : index
    %c0_148 = arith.constant 0 : index
    %251 = vector.load %arg10[%c27_147, %c0_148] : memref<81x64xf32, #tpu.memory_space<vmem>>, vector<9x64xf32>
    %252 = vector.extract_strided_slice %251 {offsets = [0, 0], sizes = [7, 64], strides = [1, 1]} : vector<9x64xf32> to vector<7x64xf32>
    %253 = vector.extract_strided_slice %251 {offsets = [1, 0], sizes = [7, 64], strides = [1, 1]} : vector<9x64xf32> to vector<7x64xf32>
    %254 = vector.extract_strided_slice %251 {offsets = [2, 0], sizes = [7, 64], strides = [1, 1]} : vector<9x64xf32> to vector<7x64xf32>
    %c36_149 = arith.constant 36 : index
    %c0_150 = arith.constant 0 : index
    %255 = vector.load %arg10[%c36_149, %c0_150] : memref<81x64xf32, #tpu.memory_space<vmem>>, vector<9x64xf32>
    %256 = vector.extract_strided_slice %255 {offsets = [0, 0], sizes = [7, 64], strides = [1, 1]} : vector<9x64xf32> to vector<7x64xf32>
    %257 = vector.extract_strided_slice %255 {offsets = [1, 0], sizes = [7, 64], strides = [1, 1]} : vector<9x64xf32> to vector<7x64xf32>
    %258 = vector.extract_strided_slice %255 {offsets = [2, 0], sizes = [7, 64], strides = [1, 1]} : vector<9x64xf32> to vector<7x64xf32>
    %259 = tpu.concatenate %248, %249, %250, %252, %253, %254, %256, %257, %258 in 1 : vector<7x64xf32>, vector<7x64xf32>, vector<7x64xf32>, vector<7x64xf32>, vector<7x64xf32>, vector<7x64xf32>, vector<7x64xf32>, vector<7x64xf32>, vector<7x64xf32> -> vector<7x576xf32>
    %260 = arith.truncf %259 : vector<7x576xf32> to vector<7x576xbf16>
    %c0_151 = arith.constant 0 : index
    %c0_152 = arith.constant 0 : index
    %261 = vector.load %arg6[%c0_151, %c0_152] : memref<576x64xbf16, #tpu.memory_space<vmem>>, vector<576x64xbf16>
    %cst_153 = arith.constant dense<0.000000e+00> : vector<7x64xf32>
    %262 = tpu.matmul %260, %261, %cst_153 {dimension_numbers = #tpu.dot_dimension_numbers<[1], [0], [0], [1], [0, 0, 1, 1], [], []>} : vector<7x576xbf16>, vector<576x64xbf16>, vector<7x64xf32> -> vector<7x64xf32>
    %c0_154 = arith.constant 0 : index
    %c0_155 = arith.constant 0 : index
    %263 = vector.load %arg7[%c0_154, %c0_155] : memref<1x64xf32, #tpu.memory_space<vmem>>, vector<1x64xf32>
    %264 = vector.broadcast %263 : vector<1x64xf32> to vector<7x64xf32>
    %265 = arith.addf %262, %264 : vector<7x64xf32>
    %cst_156 = arith.constant 0.000000e+00 : f32
    %266 = vector.broadcast %cst_156 : f32 to vector<7x64xf32>
    %267 = arith.maximumf %265, %266 : vector<7x64xf32>
    %c0_157 = arith.constant 0 : index
    %c14 = arith.constant 14 : index
    %c0_158 = arith.constant 0 : index
    %268 = vector.load %arg8[%c0_157, %c14, %c0_158] : memref<1x49x64xf32, #tpu.memory_space<vmem>>, vector<1x7x64xf32>
    %269 = vector.shape_cast %268 : vector<1x7x64xf32> to vector<7x64xf32>
    %270 = vector.shape_cast %267 : vector<7x64xf32> to vector<1x7x64xf32>
    tpu.vector_store %arg8[%c0_157, %c14, %c0_158], %270 {strides = array<i32>} : memref<1x49x64xf32, #tpu.memory_space<vmem>>, vector<1x7x64xf32>,
    %c27_159 = arith.constant 27 : index
    %c0_160 = arith.constant 0 : index
    %271 = vector.load %arg10[%c27_159, %c0_160] : memref<81x64xf32, #tpu.memory_space<vmem>>, vector<9x64xf32>
    %272 = vector.extract_strided_slice %271 {offsets = [0, 0], sizes = [7, 64], strides = [1, 1]} : vector<9x64xf32> to vector<7x64xf32>
    %273 = vector.extract_strided_slice %271 {offsets = [1, 0], sizes = [7, 64], strides = [1, 1]} : vector<9x64xf32> to vector<7x64xf32>
    %274 = vector.extract_strided_slice %271 {offsets = [2, 0], sizes = [7, 64], strides = [1, 1]} : vector<9x64xf32> to vector<7x64xf32>
    %c36_161 = arith.constant 36 : index
    %c0_162 = arith.constant 0 : index
    %275 = vector.load %arg10[%c36_161, %c0_162] : memref<81x64xf32, #tpu.memory_space<vmem>>, vector<9x64xf32>
    %276 = vector.extract_strided_slice %275 {offsets = [0, 0], sizes = [7, 64], strides = [1, 1]} : vector<9x64xf32> to vector<7x64xf32>
    %277 = vector.extract_strided_slice %275 {offsets = [1, 0], sizes = [7, 64], strides = [1, 1]} : vector<9x64xf32> to vector<7x64xf32>
    %278 = vector.extract_strided_slice %275 {offsets = [2, 0], sizes = [7, 64], strides = [1, 1]} : vector<9x64xf32> to vector<7x64xf32>
    %c45_163 = arith.constant 45 : index
    %c0_164 = arith.constant 0 : index
    %279 = vector.load %arg10[%c45_163, %c0_164] : memref<81x64xf32, #tpu.memory_space<vmem>>, vector<9x64xf32>
    %280 = vector.extract_strided_slice %279 {offsets = [0, 0], sizes = [7, 64], strides = [1, 1]} : vector<9x64xf32> to vector<7x64xf32>
    %281 = vector.extract_strided_slice %279 {offsets = [1, 0], sizes = [7, 64], strides = [1, 1]} : vector<9x64xf32> to vector<7x64xf32>
    %282 = vector.extract_strided_slice %279 {offsets = [2, 0], sizes = [7, 64], strides = [1, 1]} : vector<9x64xf32> to vector<7x64xf32>
    %283 = tpu.concatenate %272, %273, %274, %276, %277, %278, %280, %281, %282 in 1 : vector<7x64xf32>, vector<7x64xf32>, vector<7x64xf32>, vector<7x64xf32>, vector<7x64xf32>, vector<7x64xf32>, vector<7x64xf32>, vector<7x64xf32>, vector<7x64xf32> -> vector<7x576xf32>
    %284 = arith.truncf %283 : vector<7x576xf32> to vector<7x576xbf16>
    %c0_165 = arith.constant 0 : index
    %c0_166 = arith.constant 0 : index
    %285 = vector.load %arg6[%c0_165, %c0_166] : memref<576x64xbf16, #tpu.memory_space<vmem>>, vector<576x64xbf16>
    %cst_167 = arith.constant dense<0.000000e+00> : vector<7x64xf32>
    %286 = tpu.matmul %284, %285, %cst_167 {dimension_numbers = #tpu.dot_dimension_numbers<[1], [0], [0], [1], [0, 0, 1, 1], [], []>} : vector<7x576xbf16>, vector<576x64xbf16>, vector<7x64xf32> -> vector<7x64xf32>
    %c0_168 = arith.constant 0 : index
    %c0_169 = arith.constant 0 : index
    %287 = vector.load %arg7[%c0_168, %c0_169] : memref<1x64xf32, #tpu.memory_space<vmem>>, vector<1x64xf32>
    %288 = vector.broadcast %287 : vector<1x64xf32> to vector<7x64xf32>
    %289 = arith.addf %286, %288 : vector<7x64xf32>
    %cst_170 = arith.constant 0.000000e+00 : f32
    %290 = vector.broadcast %cst_170 : f32 to vector<7x64xf32>
    %291 = arith.maximumf %289, %290 : vector<7x64xf32>
    %c0_171 = arith.constant 0 : index
    %c21 = arith.constant 21 : index
    %c0_172 = arith.constant 0 : index
    %292 = vector.load %arg8[%c0_171, %c21, %c0_172] : memref<1x49x64xf32, #tpu.memory_space<vmem>>, vector<1x7x64xf32>
    %293 = vector.shape_cast %292 : vector<1x7x64xf32> to vector<7x64xf32>
    %294 = vector.shape_cast %291 : vector<7x64xf32> to vector<1x7x64xf32>
    tpu.vector_store %arg8[%c0_171, %c21, %c0_172], %294 {strides = array<i32>} : memref<1x49x64xf32, #tpu.memory_space<vmem>>, vector<1x7x64xf32>,
    %c36_173 = arith.constant 36 : index
    %c0_174 = arith.constant 0 : index
    %295 = vector.load %arg10[%c36_173, %c0_174] : memref<81x64xf32, #tpu.memory_space<vmem>>, vector<9x64xf32>
    %296 = vector.extract_strided_slice %295 {offsets = [0, 0], sizes = [7, 64], strides = [1, 1]} : vector<9x64xf32> to vector<7x64xf32>
    %297 = vector.extract_strided_slice %295 {offsets = [1, 0], sizes = [7, 64], strides = [1, 1]} : vector<9x64xf32> to vector<7x64xf32>
    %298 = vector.extract_strided_slice %295 {offsets = [2, 0], sizes = [7, 64], strides = [1, 1]} : vector<9x64xf32> to vector<7x64xf32>
    %c45_175 = arith.constant 45 : index
    %c0_176 = arith.constant 0 : index
    %299 = vector.load %arg10[%c45_175, %c0_176] : memref<81x64xf32, #tpu.memory_space<vmem>>, vector<9x64xf32>
    %300 = vector.extract_strided_slice %299 {offsets = [0, 0], sizes = [7, 64], strides = [1, 1]} : vector<9x64xf32> to vector<7x64xf32>
    %301 = vector.extract_strided_slice %299 {offsets = [1, 0], sizes = [7, 64], strides = [1, 1]} : vector<9x64xf32> to vector<7x64xf32>
    %302 = vector.extract_strided_slice %299 {offsets = [2, 0], sizes = [7, 64], strides = [1, 1]} : vector<9x64xf32> to vector<7x64xf32>
    %c54_177 = arith.constant 54 : index
    %c0_178 = arith.constant 0 : index
    %303 = vector.load %arg10[%c54_177, %c0_178] : memref<81x64xf32, #tpu.memory_space<vmem>>, vector<9x64xf32>
    %304 = vector.extract_strided_slice %303 {offsets = [0, 0], sizes = [7, 64], strides = [1, 1]} : vector<9x64xf32> to vector<7x64xf32>
    %305 = vector.extract_strided_slice %303 {offsets = [1, 0], sizes = [7, 64], strides = [1, 1]} : vector<9x64xf32> to vector<7x64xf32>
    %306 = vector.extract_strided_slice %303 {offsets = [2, 0], sizes = [7, 64], strides = [1, 1]} : vector<9x64xf32> to vector<7x64xf32>
    %307 = tpu.concatenate %296, %297, %298, %300, %301, %302, %304, %305, %306 in 1 : vector<7x64xf32>, vector<7x64xf32>, vector<7x64xf32>, vector<7x64xf32>, vector<7x64xf32>, vector<7x64xf32>, vector<7x64xf32>, vector<7x64xf32>, vector<7x64xf32> -> vector<7x576xf32>
    %308 = arith.truncf %307 : vector<7x576xf32> to vector<7x576xbf16>
    %c0_179 = arith.constant 0 : index
    %c0_180 = arith.constant 0 : index
    %309 = vector.load %arg6[%c0_179, %c0_180] : memref<576x64xbf16, #tpu.memory_space<vmem>>, vector<576x64xbf16>
    %cst_181 = arith.constant dense<0.000000e+00> : vector<7x64xf32>
    %310 = tpu.matmul %308, %309, %cst_181 {dimension_numbers = #tpu.dot_dimension_numbers<[1], [0], [0], [1], [0, 0, 1, 1], [], []>} : vector<7x576xbf16>, vector<576x64xbf16>, vector<7x64xf32> -> vector<7x64xf32>
    %c0_182 = arith.constant 0 : index
    %c0_183 = arith.constant 0 : index
    %311 = vector.load %arg7[%c0_182, %c0_183] : memref<1x64xf32, #tpu.memory_space<vmem>>, vector<1x64xf32>
    %312 = vector.broadcast %311 : vector<1x64xf32> to vector<7x64xf32>
    %313 = arith.addf %310, %312 : vector<7x64xf32>
    %cst_184 = arith.constant 0.000000e+00 : f32
    %314 = vector.broadcast %cst_184 : f32 to vector<7x64xf32>
    %315 = arith.maximumf %313, %314 : vector<7x64xf32>
    %c0_185 = arith.constant 0 : index
    %c28 = arith.constant 28 : index
    %c0_186 = arith.constant 0 : index
    %316 = vector.load %arg8[%c0_185, %c28, %c0_186] : memref<1x49x64xf32, #tpu.memory_space<vmem>>, vector<1x7x64xf32>
    %317 = vector.shape_cast %316 : vector<1x7x64xf32> to vector<7x64xf32>
    %318 = vector.shape_cast %315 : vector<7x64xf32> to vector<1x7x64xf32>
    tpu.vector_store %arg8[%c0_185, %c28, %c0_186], %318 {strides = array<i32>} : memref<1x49x64xf32, #tpu.memory_space<vmem>>, vector<1x7x64xf32>,
    %c45_187 = arith.constant 45 : index
    %c0_188 = arith.constant 0 : index
    %319 = vector.load %arg10[%c45_187, %c0_188] : memref<81x64xf32, #tpu.memory_space<vmem>>, vector<9x64xf32>
    %320 = vector.extract_strided_slice %319 {offsets = [0, 0], sizes = [7, 64], strides = [1, 1]} : vector<9x64xf32> to vector<7x64xf32>
    %321 = vector.extract_strided_slice %319 {offsets = [1, 0], sizes = [7, 64], strides = [1, 1]} : vector<9x64xf32> to vector<7x64xf32>
    %322 = vector.extract_strided_slice %319 {offsets = [2, 0], sizes = [7, 64], strides = [1, 1]} : vector<9x64xf32> to vector<7x64xf32>
    %c54_189 = arith.constant 54 : index
    %c0_190 = arith.constant 0 : index
    %323 = vector.load %arg10[%c54_189, %c0_190] : memref<81x64xf32, #tpu.memory_space<vmem>>, vector<9x64xf32>
    %324 = vector.extract_strided_slice %323 {offsets = [0, 0], sizes = [7, 64], strides = [1, 1]} : vector<9x64xf32> to vector<7x64xf32>
    %325 = vector.extract_strided_slice %323 {offsets = [1, 0], sizes = [7, 64], strides = [1, 1]} : vector<9x64xf32> to vector<7x64xf32>
    %326 = vector.extract_strided_slice %323 {offsets = [2, 0], sizes = [7, 64], strides = [1, 1]} : vector<9x64xf32> to vector<7x64xf32>
    %c63_191 = arith.constant 63 : index
    %c0_192 = arith.constant 0 : index
    %327 = vector.load %arg10[%c63_191, %c0_192] : memref<81x64xf32, #tpu.memory_space<vmem>>, vector<9x64xf32>
    %328 = vector.extract_strided_slice %327 {offsets = [0, 0], sizes = [7, 64], strides = [1, 1]} : vector<9x64xf32> to vector<7x64xf32>
    %329 = vector.extract_strided_slice %327 {offsets = [1, 0], sizes = [7, 64], strides = [1, 1]} : vector<9x64xf32> to vector<7x64xf32>
    %330 = vector.extract_strided_slice %327 {offsets = [2, 0], sizes = [7, 64], strides = [1, 1]} : vector<9x64xf32> to vector<7x64xf32>
    %331 = tpu.concatenate %320, %321, %322, %324, %325, %326, %328, %329, %330 in 1 : vector<7x64xf32>, vector<7x64xf32>, vector<7x64xf32>, vector<7x64xf32>, vector<7x64xf32>, vector<7x64xf32>, vector<7x64xf32>, vector<7x64xf32>, vector<7x64xf32> -> vector<7x576xf32>
    %332 = arith.truncf %331 : vector<7x576xf32> to vector<7x576xbf16>
    %c0_193 = arith.constant 0 : index
    %c0_194 = arith.constant 0 : index
    %333 = vector.load %arg6[%c0_193, %c0_194] : memref<576x64xbf16, #tpu.memory_space<vmem>>, vector<576x64xbf16>
    %cst_195 = arith.constant dense<0.000000e+00> : vector<7x64xf32>
    %334 = tpu.matmul %332, %333, %cst_195 {dimension_numbers = #tpu.dot_dimension_numbers<[1], [0], [0], [1], [0, 0, 1, 1], [], []>} : vector<7x576xbf16>, vector<576x64xbf16>, vector<7x64xf32> -> vector<7x64xf32>
    %c0_196 = arith.constant 0 : index
    %c0_197 = arith.constant 0 : index
    %335 = vector.load %arg7[%c0_196, %c0_197] : memref<1x64xf32, #tpu.memory_space<vmem>>, vector<1x64xf32>
    %336 = vector.broadcast %335 : vector<1x64xf32> to vector<7x64xf32>
    %337 = arith.addf %334, %336 : vector<7x64xf32>
    %cst_198 = arith.constant 0.000000e+00 : f32
    %338 = vector.broadcast %cst_198 : f32 to vector<7x64xf32>
    %339 = arith.maximumf %337, %338 : vector<7x64xf32>
    %c0_199 = arith.constant 0 : index
    %c35 = arith.constant 35 : index
    %c0_200 = arith.constant 0 : index
    %340 = vector.load %arg8[%c0_199, %c35, %c0_200] : memref<1x49x64xf32, #tpu.memory_space<vmem>>, vector<1x7x64xf32>
    %341 = vector.shape_cast %340 : vector<1x7x64xf32> to vector<7x64xf32>
    %342 = vector.shape_cast %339 : vector<7x64xf32> to vector<1x7x64xf32>
    tpu.vector_store %arg8[%c0_199, %c35, %c0_200], %342 {strides = array<i32>} : memref<1x49x64xf32, #tpu.memory_space<vmem>>, vector<1x7x64xf32>,
    %c54_201 = arith.constant 54 : index
    %c0_202 = arith.constant 0 : index
    %343 = vector.load %arg10[%c54_201, %c0_202] : memref<81x64xf32, #tpu.memory_space<vmem>>, vector<9x64xf32>
    %344 = vector.extract_strided_slice %343 {offsets = [0, 0], sizes = [7, 64], strides = [1, 1]} : vector<9x64xf32> to vector<7x64xf32>
    %345 = vector.extract_strided_slice %343 {offsets = [1, 0], sizes = [7, 64], strides = [1, 1]} : vector<9x64xf32> to vector<7x64xf32>
    %346 = vector.extract_strided_slice %343 {offsets = [2, 0], sizes = [7, 64], strides = [1, 1]} : vector<9x64xf32> to vector<7x64xf32>
    %c63_203 = arith.constant 63 : index
    %c0_204 = arith.constant 0 : index
    %347 = vector.load %arg10[%c63_203, %c0_204] : memref<81x64xf32, #tpu.memory_space<vmem>>, vector<9x64xf32>
    %348 = vector.extract_strided_slice %347 {offsets = [0, 0], sizes = [7, 64], strides = [1, 1]} : vector<9x64xf32> to vector<7x64xf32>
    %349 = vector.extract_strided_slice %347 {offsets = [1, 0], sizes = [7, 64], strides = [1, 1]} : vector<9x64xf32> to vector<7x64xf32>
    %350 = vector.extract_strided_slice %347 {offsets = [2, 0], sizes = [7, 64], strides = [1, 1]} : vector<9x64xf32> to vector<7x64xf32>
    %c72_205 = arith.constant 72 : index
    %c0_206 = arith.constant 0 : index
    %351 = vector.load %arg10[%c72_205, %c0_206] : memref<81x64xf32, #tpu.memory_space<vmem>>, vector<9x64xf32>
    %352 = vector.extract_strided_slice %351 {offsets = [0, 0], sizes = [7, 64], strides = [1, 1]} : vector<9x64xf32> to vector<7x64xf32>
    %353 = vector.extract_strided_slice %351 {offsets = [1, 0], sizes = [7, 64], strides = [1, 1]} : vector<9x64xf32> to vector<7x64xf32>
    %354 = vector.extract_strided_slice %351 {offsets = [2, 0], sizes = [7, 64], strides = [1, 1]} : vector<9x64xf32> to vector<7x64xf32>
    %355 = tpu.concatenate %344, %345, %346, %348, %349, %350, %352, %353, %354 in 1 : vector<7x64xf32>, vector<7x64xf32>, vector<7x64xf32>, vector<7x64xf32>, vector<7x64xf32>, vector<7x64xf32>, vector<7x64xf32>, vector<7x64xf32>, vector<7x64xf32> -> vector<7x576xf32>
    %356 = arith.truncf %355 : vector<7x576xf32> to vector<7x576xbf16>
    %c0_207 = arith.constant 0 : index
    %c0_208 = arith.constant 0 : index
    %357 = vector.load %arg6[%c0_207, %c0_208] : memref<576x64xbf16, #tpu.memory_space<vmem>>, vector<576x64xbf16>
    %cst_209 = arith.constant dense<0.000000e+00> : vector<7x64xf32>
    %358 = tpu.matmul %356, %357, %cst_209 {dimension_numbers = #tpu.dot_dimension_numbers<[1], [0], [0], [1], [0, 0, 1, 1], [], []>} : vector<7x576xbf16>, vector<576x64xbf16>, vector<7x64xf32> -> vector<7x64xf32>
    %c0_210 = arith.constant 0 : index
    %c0_211 = arith.constant 0 : index
    %359 = vector.load %arg7[%c0_210, %c0_211] : memref<1x64xf32, #tpu.memory_space<vmem>>, vector<1x64xf32>
    %360 = vector.broadcast %359 : vector<1x64xf32> to vector<7x64xf32>
    %361 = arith.addf %358, %360 : vector<7x64xf32>
    %cst_212 = arith.constant 0.000000e+00 : f32
    %362 = vector.broadcast %cst_212 : f32 to vector<7x64xf32>
    %363 = arith.maximumf %361, %362 : vector<7x64xf32>
    %c0_213 = arith.constant 0 : index
    %c42 = arith.constant 42 : index
    %c0_214 = arith.constant 0 : index
    %364 = vector.load %arg8[%c0_213, %c42, %c0_214] : memref<1x49x64xf32, #tpu.memory_space<vmem>>, vector<1x7x64xf32>
    %365 = vector.shape_cast %364 : vector<1x7x64xf32> to vector<7x64xf32>
    %366 = vector.shape_cast %363 : vector<7x64xf32> to vector<1x7x64xf32>
    tpu.vector_store %arg8[%c0_213, %c42, %c0_214], %366 {strides = array<i32>} : memref<1x49x64xf32, #tpu.memory_space<vmem>>, vector<1x7x64xf32>,
    return
  }
  func.func @transform_0(%arg0: i32) -> (i32, i32, i32, i32) {
    %c0_i32 = arith.constant 0 : i32
    %c0_i32_0 = arith.constant 0 : i32
    %c0_i32_1 = arith.constant 0 : i32
    %c0_i32_2 = arith.constant 0 : i32
    return %arg0, %c0_i32, %c0_i32_0, %c0_i32_1 : i32, i32, i32, i32
  }
  func.func @transform_1(%arg0: i32) -> (i32, i32) {
    %c0_i32 = arith.constant 0 : i32
    %c0_i32_0 = arith.constant 0 : i32
    %c0_i32_1 = arith.constant 0 : i32
    return %c0_i32, %c0_i32_0 : i32, i32
  }
  func.func @transform_2(%arg0: i32) -> (i32, i32) {
    %c0_i32 = arith.constant 0 : i32
    %c0_i32_0 = arith.constant 0 : i32
    %c0_i32_1 = arith.constant 0 : i32
    return %c0_i32, %c0_i32_0 : i32, i32
  }
  func.func @transform_3(%arg0: i32) -> (i32, i32) {
    %c0_i32 = arith.constant 0 : i32
    %c0_i32_0 = arith.constant 0 : i32
    %c0_i32_1 = arith.constant 0 : i32
    return %c0_i32, %c0_i32_0 : i32, i32
  }
  func.func @transform_4(%arg0: i32) -> (i32, i32) {
    %c0_i32 = arith.constant 0 : i32
    %c0_i32_0 = arith.constant 0 : i32
    %c0_i32_1 = arith.constant 0 : i32
    return %c0_i32, %c0_i32_0 : i32, i32
  }
  func.func @transform_5(%arg0: i32) -> (i32, i32) {
    %c0_i32 = arith.constant 0 : i32
    %c0_i32_0 = arith.constant 0 : i32
    %c0_i32_1 = arith.constant 0 : i32
    return %c0_i32, %c0_i32_0 : i32, i32
  }
  func.func @transform_6(%arg0: i32) -> (i32, i32) {
    %c0_i32 = arith.constant 0 : i32
    %c0_i32_0 = arith.constant 0 : i32
    %c0_i32_1 = arith.constant 0 : i32
    return %c0_i32, %c0_i32_0 : i32, i32
  }
  func.func @transform_7(%arg0: i32) -> (i32, i32, i32) {
    %c0_i32 = arith.constant 0 : i32
    %c0_i32_0 = arith.constant 0 : i32
    %c0_i32_1 = arith.constant 0 : i32
    return %arg0, %c0_i32, %c0_i32_0 : i32, i32, i32
  }
}

module attributes {stable_mosaic.version = 11 : i64} {
  func.func @_fc_kernel(%arg0: i32, %arg1: memref<8x3136xf32, #tpu.memory_space<vmem>>, %arg2: memref<3136x512xbf16, #tpu.memory_space<vmem>>, %arg3: memref<1x512xf32, #tpu.memory_space<vmem>>, %arg4: memref<512x128xbf16, #tpu.memory_space<vmem>>, %arg5: memref<1x128xf32, #tpu.memory_space<vmem>>, %arg6: memref<8x128xf32, #tpu.memory_space<vmem>>) attributes {dimension_semantics = [#tpu.dimension_semantics<parallel>], iteration_bounds = array<i64: 1>, scalar_prefetch = 0 : i64, scratch_operands = 0 : i64, tpu.core_type = #tpu.core_type<tc>, window_params = [{transform_indices = @transform_0, window_bounds = array<i64: 8, 3136>}, {pipeline_mode = #tpu.pipeline_mode<synchronous>, transform_indices = @transform_1, window_bounds = array<i64: 3136, 512>}, {pipeline_mode = #tpu.pipeline_mode<synchronous>, transform_indices = @transform_2, window_bounds = array<i64: 1, 512>}, {pipeline_mode = #tpu.pipeline_mode<synchronous>, transform_indices = @transform_3, window_bounds = array<i64: 512, 128>}, {pipeline_mode = #tpu.pipeline_mode<synchronous>, transform_indices = @transform_4, window_bounds = array<i64: 1, 128>}, {transform_indices = @transform_5, window_bounds = array<i64: 8, 128>}]} {
    %c0 = arith.constant 0 : index
    %c0_0 = arith.constant 0 : index
    %0 = vector.load %arg1[%c0, %c0_0] : memref<8x3136xf32, #tpu.memory_space<vmem>>, vector<8x3136xf32>
    %1 = arith.truncf %0 : vector<8x3136xf32> to vector<8x3136xbf16>
    %c0_1 = arith.constant 0 : index
    %c0_2 = arith.constant 0 : index
    %2 = vector.load %arg2[%c0_1, %c0_2] : memref<3136x512xbf16, #tpu.memory_space<vmem>>, vector<3136x512xbf16>
    %cst = arith.constant dense<0.000000e+00> : vector<8x512xf32>
    %3 = tpu.matmul %1, %2, %cst {dimension_numbers = #tpu.dot_dimension_numbers<[1], [0], [0], [1], [0, 0, 1, 1], [], []>} : vector<8x3136xbf16>, vector<3136x512xbf16>, vector<8x512xf32> -> vector<8x512xf32>
    %c0_3 = arith.constant 0 : index
    %c0_4 = arith.constant 0 : index
    %4 = vector.load %arg3[%c0_3, %c0_4] : memref<1x512xf32, #tpu.memory_space<vmem>>, vector<1x512xf32>
    %5 = vector.broadcast %4 : vector<1x512xf32> to vector<8x512xf32>
    %6 = arith.addf %3, %5 : vector<8x512xf32>
    %cst_5 = arith.constant 0.000000e+00 : f32
    %7 = vector.broadcast %cst_5 : f32 to vector<8x512xf32>
    %8 = arith.maximumf %6, %7 : vector<8x512xf32>
    %9 = arith.truncf %8 : vector<8x512xf32> to vector<8x512xbf16>
    %c0_6 = arith.constant 0 : index
    %c0_7 = arith.constant 0 : index
    %10 = vector.load %arg4[%c0_6, %c0_7] : memref<512x128xbf16, #tpu.memory_space<vmem>>, vector<512x128xbf16>
    %cst_8 = arith.constant dense<0.000000e+00> : vector<8x128xf32>
    %11 = tpu.matmul %9, %10, %cst_8 {dimension_numbers = #tpu.dot_dimension_numbers<[1], [0], [0], [1], [0, 0, 1, 1], [], []>} : vector<8x512xbf16>, vector<512x128xbf16>, vector<8x128xf32> -> vector<8x128xf32>
    %c0_9 = arith.constant 0 : index
    %c0_10 = arith.constant 0 : index
    %12 = vector.load %arg5[%c0_9, %c0_10] : memref<1x128xf32, #tpu.memory_space<vmem>>, vector<1x128xf32>
    %13 = vector.broadcast %12 : vector<1x128xf32> to vector<8x128xf32>
    %14 = arith.addf %11, %13 : vector<8x128xf32>
    %c0_11 = arith.constant 0 : index
    %c0_12 = arith.constant 0 : index
    %15 = vector.load %arg6[%c0_11, %c0_12] : memref<8x128xf32, #tpu.memory_space<vmem>>, vector<8x128xf32>
    tpu.vector_store %arg6[%c0_11, %c0_12], %14 {strides = array<i32>} : memref<8x128xf32, #tpu.memory_space<vmem>>, vector<8x128xf32>,
    return
  }
  func.func @transform_0(%arg0: i32) -> (i32, i32) {
    %c0_i32 = arith.constant 0 : i32
    %c0_i32_0 = arith.constant 0 : i32
    return %arg0, %c0_i32 : i32, i32
  }
  func.func @transform_1(%arg0: i32) -> (i32, i32) {
    %c0_i32 = arith.constant 0 : i32
    %c0_i32_0 = arith.constant 0 : i32
    %c0_i32_1 = arith.constant 0 : i32
    return %c0_i32, %c0_i32_0 : i32, i32
  }
  func.func @transform_2(%arg0: i32) -> (i32, i32) {
    %c0_i32 = arith.constant 0 : i32
    %c0_i32_0 = arith.constant 0 : i32
    %c0_i32_1 = arith.constant 0 : i32
    return %c0_i32, %c0_i32_0 : i32, i32
  }
  func.func @transform_3(%arg0: i32) -> (i32, i32) {
    %c0_i32 = arith.constant 0 : i32
    %c0_i32_0 = arith.constant 0 : i32
    %c0_i32_1 = arith.constant 0 : i32
    return %c0_i32, %c0_i32_0 : i32, i32
  }
  func.func @transform_4(%arg0: i32) -> (i32, i32) {
    %c0_i32 = arith.constant 0 : i32
    %c0_i32_0 = arith.constant 0 : i32
    %c0_i32_1 = arith.constant 0 : i32
    return %c0_i32, %c0_i32_0 : i32, i32
  }
  func.func @transform_5(%arg0: i32) -> (i32, i32) {
    %c0_i32 = arith.constant 0 : i32
    %c0_i32_0 = arith.constant 0 : i32
    return %arg0, %c0_i32 : i32, i32
  }
}

</mosaic_0001>

<llo_original>
// kernel: cnn_forward.3
$region0: #{cnn_forward.3}
  #allocation0 [shape = 'u32[]', space=smem, size = 0x4, offset = 0x4, fixed_abs, tag = 'smem constant byte address 0x4 - core index']
  #allocation1 [shape = 'u32[72,128]{1,0:T(1,128)}', space=vmem, size = 0x9000, scoped, tag = 'internal scratch']
  %s0 = inlined_call_operand.vmem [shape: f32[8,3136], index: 0, kind: input, shape index: {}]
  %s1 = inlined_call_operand.vmem [shape: bf16[3136,512], index: 1, kind: input, shape index: {}]
  %s2 = inlined_call_operand.vmem [shape: f32[1,512], index: 2, kind: input, shape index: {}]
  %s3 = inlined_call_operand.vmem [shape: bf16[512,128], index: 3, kind: input, shape index: {}]
  %s4 = inlined_call_operand.vmem [shape: f32[1,128], index: 4, kind: input, shape index: {}]
  %s5 = inlined_call_operand.vmem [shape: f32[8,128], index: 5, kind: output, shape index: {}]
  %s6 = sld [smem:[#allocation0]]
  $region30: #{cnn_forward.3} parent=0
    _
  %s8 = ssub.s32 1, %s6
  %s9 = scalar_select 0, %s8, %s6
  // Predicated region
  $region2: #{cnn_forward.3} parent=0 // pred_check
    _
  $region3: #{cnn_forward.3} parent=0 // pred_check_branch
    %11 = sbr.rel (0) target = $region5
  $region4: #{cnn_forward.3} parent=0 // pred_region
    _
  $region5: #{cnn_forward.3} parent=0 // pred_fallthru
    _
  // Predicated region
  $region6: #{cnn_forward.3} parent=0 // pred_check
    _
  $region7: #{cnn_forward.3} parent=0 // pred_check_branch
    %13 = sbr.rel (0) target = $region9
  $region8: #{cnn_forward.3} parent=0 // pred_region
    _
  $region9: #{cnn_forward.3} parent=0 // pred_fallthru
    _
  // Predicated region
  $region10: #{cnn_forward.3} parent=0 // pred_check
    _
  $region11: #{cnn_forward.3} parent=0 // pred_check_branch
    %15 = sbr.rel (0) target = $region13
  $region12: #{cnn_forward.3} parent=0 // pred_region
    _
  $region13: #{cnn_forward.3} parent=0 // pred_fallthru
    _
  // Predicated region
  $region14: #{cnn_forward.3} parent=0 // pred_check
    _
  $region15: #{cnn_forward.3} parent=0 // pred_check_branch
    %17 = sbr.rel (0) target = $region17
  $region16: #{cnn_forward.3} parent=0 // pred_region
    _
  $region17: #{cnn_forward.3} parent=0 // pred_fallthru
    _
  // Predicated region
  $region18: #{cnn_forward.3} parent=0 // pred_check
    _
  $region19: #{cnn_forward.3} parent=0 // pred_check_branch
    %19 = sbr.rel (0) target = $region21
  $region20: #{cnn_forward.3} parent=0 // pred_region
    _
  $region21: #{cnn_forward.3} parent=0 // pred_fallthru
    _
  %v21 = vld [vmem:[%s0] sm:$0xff]
  %v22 = vld [vmem:[%s0 + $0x8] sm:$0xff]
  %v23 = vld [vmem:[%s0 + $0x10] sm:$0xff]
  %v24 = vld [vmem:[%s0 + $0x18] sm:$0xff]
  %v25 = vld [vmem:[%s0 + $0x20] sm:$0xff]
  %v26 = vld [vmem:[%s0 + $0x28] sm:$0xff]
  %v27 = vld [vmem:[%s0 + $0x30] sm:$0xff]
  %v28 = vld [vmem:[%s0 + $0x38] sm:$0xff]
  %v29 = vld [vmem:[%s0 + $0x40] sm:$0xff]
  %v30 = vld [vmem:[%s0 + $0x48] sm:$0xff]
  %v31 = vld [vmem:[%s0 + $0x50] sm:$0xff]
  %v32 = vld [vmem:[%s0 + $0x58] sm:$0xff]
  %v33 = vld [vmem:[%s0 + $0x60] sm:$0xff]
  %v34 = vld [vmem:[%s0 + $0x68] sm:$0xff]
  %v35 = vld [vmem:[%s0 + $0x70] sm:$0xff]
  %v36 = vld [vmem:[%s0 + $0x78] sm:$0xff]
  %v37 = vld [vmem:[%s0 + $0x80] sm:$0xff]
  %v38 = vld [vmem:[%s0 + $0x88] sm:$0xff]
  %v39 = vld [vmem:[%s0 + $0x90] sm:$0xff]
  %v40 = vld [vmem:[%s0 + $0x98] sm:$0xff]
  %v41 = vld [vmem:[%s0 + $0xa0] sm:$0xff]
  %v42 = vld [vmem:[%s0 + $0xa8] sm:$0xff]
  %v43 = vld [vmem:[%s0 + $0xb0] sm:$0xff]
  %v44 = vld [vmem:[%s0 + $0xb8] sm:$0xff]
  %v45 = vld [vmem:[%s0 + $0xc0] sm:$0xff]
  %v46 = vpack.c.bf16 %v21, %v21
  %v47 = vpack.c.bf16 %v22, %v22
  %v48 = vpack.c.bf16 %v23, %v23
  %v49 = vpack.c.bf16 %v24, %v24
  %v50 = vpack.c.bf16 %v25, %v25
  %v51 = vpack.c.bf16 %v26, %v26
  %v52 = vpack.c.bf16 %v27, %v27
  %v53 = vpack.c.bf16 %v28, %v28
  %v54 = vpack.c.bf16 %v29, %v29
  %v55 = vpack.c.bf16 %v30, %v30
  %v56 = vpack.c.bf16 %v31, %v31
  %v57 = vpack.c.bf16 %v32, %v32
  %v58 = vpack.c.bf16 %v33, %v33
  %v59 = vpack.c.bf16 %v34, %v34
  %v60 = vpack.c.bf16 %v35, %v35
  %v61 = vpack.c.bf16 %v36, %v36
  %v62 = vpack.c.bf16 %v37, %v37
  %v63 = vpack.c.bf16 %v38, %v38
  %v64 = vpack.c.bf16 %v39, %v39
  %v65 = vpack.c.bf16 %v40, %v40
  %v66 = vpack.c.bf16 %v41, %v41
  %v67 = vpack.c.bf16 %v42, %v42
  %v68 = vpack.c.bf16 %v43, %v43
  %v69 = vpack.c.bf16 %v44, %v44
  %v70 = vpack.c.bf16 %v45, %v45
  %v71 = vld [vmem:[%s1] sm:$0xff]
  %v72 = vld [vmem:[%s1 + $0x8] sm:$0xff]
  %v73 = vld [vmem:[%s1 + $0x10] sm:$0xff]
  %v74 = vld [vmem:[%s1 + $0x18] sm:$0xff]
  %v75 = vld [vmem:[%s1 + $0x20] sm:$0xff]
  %v76 = vld [vmem:[%s1 + $0x28] sm:$0xff]
  %v77 = vld [vmem:[%s1 + $0x30] sm:$0xff]
  %v78 = vld [vmem:[%s1 + $0x38] sm:$0xff]
  %v79 = vld [vmem:[%s1 + $0x40] sm:$0xff]
  %v80 = vld [vmem:[%s1 + $0x48] sm:$0xff]
  %v81 = vld [vmem:[%s1 + $0x50] sm:$0xff]
  %v82 = vld [vmem:[%s1 + $0x58] sm:$0xff]
  %v83 = vld [vmem:[%s1 + $0x60] sm:$0xff]
  %v84 = vld [vmem:[%s1 + $0x68] sm:$0xff]
  %v85 = vld [vmem:[%s1 + $0x70] sm:$0xff]
  %v86 = vld [vmem:[%s1 + $0x78] sm:$0xff]
  %v87 = vld [vmem:[%s1 + $0x80] sm:$0xff]
  %v88 = vld [vmem:[%s1 + $0x88] sm:$0xff]
  %v89 = vld [vmem:[%s1 + $0x90] sm:$0xff]
  %v90 = vld [vmem:[%s1 + $0x98] sm:$0xff]
  %v91 = vld [vmem:[%s1 + $0xa0] sm:$0xff]
  %v92 = vld [vmem:[%s1 + $0xa8] sm:$0xff]
  %v93 = vld [vmem:[%s1 + $0xb0] sm:$0xff]
  %v94 = vld [vmem:[%s1 + $0xb8] sm:$0xff]
  %v95 = vld [vmem:[%s1 + $0xc0] sm:$0xff]
  %v96 = vld [vmem:[%s1 + $0xc8] sm:$0xff]
  %v97 = vld [vmem:[%s1 + $0xd0] sm:$0xff]
  %v98 = vld [vmem:[%s1 + $0xd8] sm:$0xff]
  %v99 = vld [vmem:[%s1 + $0xe0] sm:$0xff]
  %v100 = vld [vmem:[%s1 + $0xe8] sm:$0xff]
  %v101 = vld [vmem:[%s1 + $0xf0] sm:$0xff]
  %v102 = vld [vmem:[%s1 + $0xf8] sm:$0xff]
  %v103 = vld [vmem:[%s1 + $0x100] sm:$0xff]
  %v104 = vld [vmem:[%s1 + $0x108] sm:$0xff]
  %v105 = vld [vmem:[%s1 + $0x110] sm:$0xff]
  %v106 = vld [vmem:[%s1 + $0x118] sm:$0xff]
  %v107 = vld [vmem:[%s1 + $0x120] sm:$0xff]
  %v108 = vld [vmem:[%s1 + $0x128] sm:$0xff]
  %v109 = vld [vmem:[%s1 + $0x130] sm:$0xff]
  %v110 = vld [vmem:[%s1 + $0x138] sm:$0xff]
  %v111 = vld [vmem:[%s1 + $0x140] sm:$0xff]
  %v112 = vld [vmem:[%s1 + $0x148] sm:$0xff]
  %v113 = vld [vmem:[%s1 + $0x150] sm:$0xff]
  %v114 = vld [vmem:[%s1 + $0x158] sm:$0xff]
  %v115 = vld [vmem:[%s1 + $0x160] sm:$0xff]
  %v116 = vld [vmem:[%s1 + $0x168] sm:$0xff]
  %v117 = vld [vmem:[%s1 + $0x170] sm:$0xff]
  %v118 = vld [vmem:[%s1 + $0x178] sm:$0xff]
  %v119 = vld [vmem:[%s1 + $0x180] sm:$0xff]
  %v120 = vld [vmem:[%s1 + $0x188] sm:$0xff]
  %v121 = vld [vmem:[%s1 + $0x190] sm:$0xff]
  %v122 = vld [vmem:[%s1 + $0x198] sm:$0xff]
  %v123 = vld [vmem:[%s1 + $0x1a0] sm:$0xff]
  %v124 = vld [vmem:[%s1 + $0x1a8] sm:$0xff]
  %v125 = vld [vmem:[%s1 + $0x1b0] sm:$0xff]
  %v126 = vld [vmem:[%s1 + $0x1b8] sm:$0xff]
  %v127 = vld [vmem:[%s1 + $0x1c0] sm:$0xff]
  %v128 = vld [vmem:[%s1 + $0x1c8] sm:$0xff]
  %v129 = vld [vmem:[%s1 + $0x1d0] sm:$0xff]
  %v130 = vld [vmem:[%s1 + $0x1d8] sm:$0xff]
  %v131 = vld [vmem:[%s1 + $0x1e0] sm:$0xff]
  %v132 = vld [vmem:[%s1 + $0x1e8] sm:$0xff]
  %v133 = vld [vmem:[%s1 + $0x1f0] sm:$0xff]
  %v134 = vld [vmem:[%s1 + $0x1f8] sm:$0xff]
  %v135 = vld [vmem:[%s1 + $0x200] sm:$0xff]
  %v136 = vld [vmem:[%s1 + $0x208] sm:$0xff]
  %v137 = vld [vmem:[%s1 + $0x210] sm:$0xff]
  %v138 = vld [vmem:[%s1 + $0x218] sm:$0xff]
  %v139 = vld [vmem:[%s1 + $0x220] sm:$0xff]
  %v140 = vld [vmem:[%s1 + $0x228] sm:$0xff]
  %v141 = vld [vmem:[%s1 + $0x230] sm:$0xff]
  %v142 = vld [vmem:[%s1 + $0x238] sm:$0xff]
  %v143 = vld [vmem:[%s1 + $0x240] sm:$0xff]
  %v144 = vld [vmem:[%s1 + $0x248] sm:$0xff]
  %v145 = vld [vmem:[%s1 + $0x250] sm:$0xff]
  %v146 = vld [vmem:[%s1 + $0x258] sm:$0xff]
  %v147 = vld [vmem:[%s1 + $0x260] sm:$0xff]
  %v148 = vld [vmem:[%s1 + $0x268] sm:$0xff]
  %v149 = vld [vmem:[%s1 + $0x270] sm:$0xff]
  %v150 = vld [vmem:[%s1 + $0x278] sm:$0xff]
  %v151 = vld [vmem:[%s1 + $0x280] sm:$0xff]
  %v152 = vld [vmem:[%s1 + $0x288] sm:$0xff]
  %v153 = vld [vmem:[%s1 + $0x290] sm:$0xff]
  %v154 = vld [vmem:[%s1 + $0x298] sm:$0xff]
  %v155 = vld [vmem:[%s1 + $0x2a0] sm:$0xff]
  %v156 = vld [vmem:[%s1 + $0x2a8] sm:$0xff]
  %v157 = vld [vmem:[%s1 + $0x2b0] sm:$0xff]
  %v158 = vld [vmem:[%s1 + $0x2b8] sm:$0xff]
  %v159 = vld [vmem:[%s1 + $0x2c0] sm:$0xff]
  %v160 = vld [vmem:[%s1 + $0x2c8] sm:$0xff]
  %v161 = vld [vmem:[%s1 + $0x2d0] sm:$0xff]
  %v162 = vld [vmem:[%s1 + $0x2d8] sm:$0xff]
  %v163 = vld [vmem:[%s1 + $0x2e0] sm:$0xff]
  %v164 = vld [vmem:[%s1 + $0x2e8] sm:$0xff]
  %v165 = vld [vmem:[%s1 + $0x2f0] sm:$0xff]
  %v166 = vld [vmem:[%s1 + $0x2f8] sm:$0xff]
  %v167 = vld [vmem:[%s1 + $0x300] sm:$0xff]
  %v168 = vld [vmem:[%s1 + $0x308] sm:$0xff]
  %v169 = vld [vmem:[%s1 + $0x310] sm:$0xff]
  %v170 = vld [vmem:[%s1 + $0x318] sm:$0xff]
  %v171 = vld [vmem:[%s1 + $0x320] sm:$0xff]
  %v172 = vld [vmem:[%s1 + $0x328] sm:$0xff]
  %v173 = vld [vmem:[%s1 + $0x330] sm:$0xff]
  %v174 = vld [vmem:[%s1 + $0x338] sm:$0xff]
  %v175 = vld [vmem:[%s1 + $0x340] sm:$0xff]
  %v176 = vld [vmem:[%s1 + $0x348] sm:$0xff]
  %v177 = vld [vmem:[%s1 + $0x350] sm:$0xff]
  %v178 = vld [vmem:[%s1 + $0x358] sm:$0xff]
  %v179 = vld [vmem:[%s1 + $0x360] sm:$0xff]
  %v180 = vld [vmem:[%s1 + $0x368] sm:$0xff]
  %v181 = vld [vmem:[%s1 + $0x370] sm:$0xff]
  %v182 = vld [vmem:[%s1 + $0x378] sm:$0xff]
  %v183 = vld [vmem:[%s1 + $0x380] sm:$0xff]
  %v184 = vld [vmem:[%s1 + $0x388] sm:$0xff]
  %v185 = vld [vmem:[%s1 + $0x390] sm:$0xff]
  %v186 = vld [vmem:[%s1 + $0x398] sm:$0xff]
  %v187 = vld [vmem:[%s1 + $0x3a0] sm:$0xff]
  %v188 = vld [vmem:[%s1 + $0x3a8] sm:$0xff]
  %v189 = vld [vmem:[%s1 + $0x3b0] sm:$0xff]
  %v190 = vld [vmem:[%s1 + $0x3b8] sm:$0xff]
  %v191 = vld [vmem:[%s1 + $0x3c0] sm:$0xff]
  %v192 = vld [vmem:[%s1 + $0x3c8] sm:$0xff]
  %v193 = vld [vmem:[%s1 + $0x3d0] sm:$0xff]
  %v194 = vld [vmem:[%s1 + $0x3d8] sm:$0xff]
  %v195 = vld [vmem:[%s1 + $0x3e0] sm:$0xff]
  %v196 = vld [vmem:[%s1 + $0x3e8] sm:$0xff]
  %v197 = vld [vmem:[%s1 + $0x3f0] sm:$0xff]
  %v198 = vld [vmem:[%s1 + $0x3f8] sm:$0xff]
  %v199 = vld [vmem:[%s1 + $0x400] sm:$0xff]
  %v200 = vld [vmem:[%s1 + $0x408] sm:$0xff]
  %v201 = vld [vmem:[%s1 + $0x410] sm:$0xff]
  %v202 = vld [vmem:[%s1 + $0x418] sm:$0xff]
  %v203 = vld [vmem:[%s1 + $0x420] sm:$0xff]
  %v204 = vld [vmem:[%s1 + $0x428] sm:$0xff]
  %v205 = vld [vmem:[%s1 + $0x430] sm:$0xff]
  %v206 = vld [vmem:[%s1 + $0x438] sm:$0xff]
  %v207 = vld [vmem:[%s1 + $0x440] sm:$0xff]
  %v208 = vld [vmem:[%s1 + $0x448] sm:$0xff]
  %v209 = vld [vmem:[%s1 + $0x450] sm:$0xff]
  %v210 = vld [vmem:[%s1 + $0x458] sm:$0xff]
  %v211 = vld [vmem:[%s1 + $0x460] sm:$0xff]
  %v212 = vld [vmem:[%s1 + $0x468] sm:$0xff]
  %v213 = vld [vmem:[%s1 + $0x470] sm:$0xff]
  %v214 = vld [vmem:[%s1 + $0x478] sm:$0xff]
  %v215 = vld [vmem:[%s1 + $0x480] sm:$0xff]
  %v216 = vld [vmem:[%s1 + $0x488] sm:$0xff]
  %v217 = vld [vmem:[%s1 + $0x490] sm:$0xff]
  %v218 = vld [vmem:[%s1 + $0x498] sm:$0xff]
  %v219 = vld [vmem:[%s1 + $0x4a0] sm:$0xff]
  %v220 = vld [vmem:[%s1 + $0x4a8] sm:$0xff]
  %v221 = vld [vmem:[%s1 + $0x4b0] sm:$0xff]
  %v222 = vld [vmem:[%s1 + $0x4b8] sm:$0xff]
  %v223 = vld [vmem:[%s1 + $0x4c0] sm:$0xff]
  %v224 = vld [vmem:[%s1 + $0x4c8] sm:$0xff]
  %v225 = vld [vmem:[%s1 + $0x4d0] sm:$0xff]
  %v226 = vld [vmem:[%s1 + $0x4d8] sm:$0xff]
  %v227 = vld [vmem:[%s1 + $0x4e0] sm:$0xff]
  %v228 = vld [vmem:[%s1 + $0x4e8] sm:$0xff]
  %v229 = vld [vmem:[%s1 + $0x4f0] sm:$0xff]
  %v230 = vld [vmem:[%s1 + $0x4f8] sm:$0xff]
  %v231 = vld [vmem:[%s1 + $0x500] sm:$0xff]
  %v232 = vld [vmem:[%s1 + $0x508] sm:$0xff]
  %v233 = vld [vmem:[%s1 + $0x510] sm:$0xff]
  %v234 = vld [vmem:[%s1 + $0x518] sm:$0xff]
  %v235 = vld [vmem:[%s1 + $0x520] sm:$0xff]
  %v236 = vld [vmem:[%s1 + $0x528] sm:$0xff]
  %v237 = vld [vmem:[%s1 + $0x530] sm:$0xff]
  %v238 = vld [vmem:[%s1 + $0x538] sm:$0xff]
  %v239 = vld [vmem:[%s1 + $0x540] sm:$0xff]
  %v240 = vld [vmem:[%s1 + $0x548] sm:$0xff]
  %v241 = vld [vmem:[%s1 + $0x550] sm:$0xff]
  %v242 = vld [vmem:[%s1 + $0x558] sm:$0xff]
  %v243 = vld [vmem:[%s1 + $0x560] sm:$0xff]
  %v244 = vld [vmem:[%s1 + $0x568] sm:$0xff]
  %v245 = vld [vmem:[%s1 + $0x570] sm:$0xff]
  %v246 = vld [vmem:[%s1 + $0x578] sm:$0xff]
  %v247 = vld [vmem:[%s1 + $0x580] sm:$0xff]
  %v248 = vld [vmem:[%s1 + $0x588] sm:$0xff]
  %v249 = vld [vmem:[%s1 + $0x590] sm:$0xff]
  %v250 = vld [vmem:[%s1 + $0x598] sm:$0xff]
  %v251 = vld [vmem:[%s1 + $0x5a0] sm:$0xff]
  %v252 = vld [vmem:[%s1 + $0x5a8] sm:$0xff]
  %v253 = vld [vmem:[%s1 + $0x5b0] sm:$0xff]
  %v254 = vld [vmem:[%s1 + $0x5b8] sm:$0xff]
  %v255 = vld [vmem:[%s1 + $0x5c0] sm:$0xff]
  %v256 = vld [vmem:[%s1 + $0x5c8] sm:$0xff]
  %v257 = vld [vmem:[%s1 + $0x5d0] sm:$0xff]
  %v258 = vld [vmem:[%s1 + $0x5d8] sm:$0xff]
  %v259 = vld [vmem:[%s1 + $0x5e0] sm:$0xff]
  %v260 = vld [vmem:[%s1 + $0x5e8] sm:$0xff]
  %v261 = vld [vmem:[%s1 + $0x5f0] sm:$0xff]
  %v262 = vld [vmem:[%s1 + $0x5f8] sm:$0xff]
  %v263 = vld [vmem:[%s1 + $0x600] sm:$0xff]
  %v264 = vld [vmem:[%s1 + $0x608] sm:$0xff]
  %v265 = vld [vmem:[%s1 + $0x610] sm:$0xff]
  %v266 = vld [vmem:[%s1 + $0x618] sm:$0xff]
  %v267 = vld [vmem:[%s1 + $0x620] sm:$0xff]
  %v268 = vld [vmem:[%s1 + $0x628] sm:$0xff]
  %v269 = vld [vmem:[%s1 + $0x630] sm:$0xff]
  %v270 = vld [vmem:[%s1 + $0x638] sm:$0xff]
  %v271 = vld [vmem:[%s1 + $0x640] sm:$0xff]
  %v272 = vld [vmem:[%s1 + $0x648] sm:$0xff]
  %v273 = vld [vmem:[%s1 + $0x650] sm:$0xff]
  %v274 = vld [vmem:[%s1 + $0x658] sm:$0xff]
  %v275 = vld [vmem:[%s1 + $0x660] sm:$0xff]
  %v276 = vld [vmem:[%s1 + $0x668] sm:$0xff]
  %v277 = vld [vmem:[%s1 + $0x670] sm:$0xff]
  %v278 = vld [vmem:[%s1 + $0x678] sm:$0xff]
  %v279 = vld [vmem:[%s1 + $0x680] sm:$0xff]
  %v280 = vld [vmem:[%s1 + $0x688] sm:$0xff]
  %v281 = vld [vmem:[%s1 + $0x690] sm:$0xff]
  %v282 = vld [vmem:[%s1 + $0x698] sm:$0xff]
  %v283 = vld [vmem:[%s1 + $0x6a0] sm:$0xff]
  %v284 = vld [vmem:[%s1 + $0x6a8] sm:$0xff]
  %v285 = vld [vmem:[%s1 + $0x6b0] sm:$0xff]
  %v286 = vld [vmem:[%s1 + $0x6b8] sm:$0xff]
  %v287 = vld [vmem:[%s1 + $0x6c0] sm:$0xff]
  %v288 = vld [vmem:[%s1 + $0x6c8] sm:$0xff]
  %v289 = vld [vmem:[%s1 + $0x6d0] sm:$0xff]
  %v290 = vld [vmem:[%s1 + $0x6d8] sm:$0xff]
  %v291 = vld [vmem:[%s1 + $0x6e0] sm:$0xff]
  %v292 = vld [vmem:[%s1 + $0x6e8] sm:$0xff]
  %v293 = vld [vmem:[%s1 + $0x6f0] sm:$0xff]
  %v294 = vld [vmem:[%s1 + $0x6f8] sm:$0xff]
  %v295 = vld [vmem:[%s1 + $0x700] sm:$0xff]
  %v296 = vld [vmem:[%s1 + $0x708] sm:$0xff]
  %v297 = vld [vmem:[%s1 + $0x710] sm:$0xff]
  %v298 = vld [vmem:[%s1 + $0x718] sm:$0xff]
  %v299 = vld [vmem:[%s1 + $0x720] sm:$0xff]
  %v300 = vld [vmem:[%s1 + $0x728] sm:$0xff]
  %v301 = vld [vmem:[%s1 + $0x730] sm:$0xff]
  %v302 = vld [vmem:[%s1 + $0x738] sm:$0xff]
  %v303 = vld [vmem:[%s1 + $0x740] sm:$0xff]
  %v304 = vld [vmem:[%s1 + $0x748] sm:$0xff]
  %v305 = vld [vmem:[%s1 + $0x750] sm:$0xff]
  %v306 = vld [vmem:[%s1 + $0x758] sm:$0xff]
  %v307 = vld [vmem:[%s1 + $0x760] sm:$0xff]
  %v308 = vld [vmem:[%s1 + $0x768] sm:$0xff]
  %v309 = vld [vmem:[%s1 + $0x770] sm:$0xff]
  %v310 = vld [vmem:[%s1 + $0x778] sm:$0xff]
  %v311 = vld [vmem:[%s1 + $0x780] sm:$0xff]
  %v312 = vld [vmem:[%s1 + $0x788] sm:$0xff]
  %v313 = vld [vmem:[%s1 + $0x790] sm:$0xff]
  %v314 = vld [vmem:[%s1 + $0x798] sm:$0xff]
  %v315 = vld [vmem:[%s1 + $0x7a0] sm:$0xff]
  %v316 = vld [vmem:[%s1 + $0x7a8] sm:$0xff]
  %v317 = vld [vmem:[%s1 + $0x7b0] sm:$0xff]
  %v318 = vld [vmem:[%s1 + $0x7b8] sm:$0xff]
  %v319 = vld [vmem:[%s1 + $0x7c0] sm:$0xff]
  %v320 = vld [vmem:[%s1 + $0x7c8] sm:$0xff]
  %v321 = vld [vmem:[%s1 + $0x7d0] sm:$0xff]
  %v322 = vld [vmem:[%s1 + $0x7d8] sm:$0xff]
  %v323 = vld [vmem:[%s1 + $0x7e0] sm:$0xff]
  %v324 = vld [vmem:[%s1 + $0x7e8] sm:$0xff]
  %v325 = vld [vmem:[%s1 + $0x7f0] sm:$0xff]
  %v326 = vld [vmem:[%s1 + $0x7f8] sm:$0xff]
  %v327 = vld [vmem:[%s1 + $0x800] sm:$0xff]
  %v328 = vld [vmem:[%s1 + $0x808] sm:$0xff]
  %v329 = vld [vmem:[%s1 + $0x810] sm:$0xff]
  %v330 = vld [vmem:[%s1 + $0x818] sm:$0xff]
  %v331 = vld [vmem:[%s1 + $0x820] sm:$0xff]
  %v332 = vld [vmem:[%s1 + $0x828] sm:$0xff]
  %v333 = vld [vmem:[%s1 + $0x830] sm:$0xff]
  %v334 = vld [vmem:[%s1 + $0x838] sm:$0xff]
  %v335 = vld [vmem:[%s1 + $0x840] sm:$0xff]
  %v336 = vld [vmem:[%s1 + $0x848] sm:$0xff]
  %v337 = vld [vmem:[%s1 + $0x850] sm:$0xff]
  %v338 = vld [vmem:[%s1 + $0x858] sm:$0xff]
  %v339 = vld [vmem:[%s1 + $0x860] sm:$0xff]
  %v340 = vld [vmem:[%s1 + $0x868] sm:$0xff]
  %v341 = vld [vmem:[%s1 + $0x870] sm:$0xff]
  %v342 = vld [vmem:[%s1 + $0x878] sm:$0xff]
  %v343 = vld [vmem:[%s1 + $0x880] sm:$0xff]
  %v344 = vld [vmem:[%s1 + $0x888] sm:$0xff]
  %v345 = vld [vmem:[%s1 + $0x890] sm:$0xff]
  %v346 = vld [vmem:[%s1 + $0x898] sm:$0xff]
  %v347 = vld [vmem:[%s1 + $0x8a0] sm:$0xff]
  %v348 = vld [vmem:[%s1 + $0x8a8] sm:$0xff]
  %v349 = vld [vmem:[%s1 + $0x8b0] sm:$0xff]
  %v350 = vld [vmem:[%s1 + $0x8b8] sm:$0xff]
  %v351 = vld [vmem:[%s1 + $0x8c0] sm:$0xff]
  %v352 = vld [vmem:[%s1 + $0x8c8] sm:$0xff]
  %v353 = vld [vmem:[%s1 + $0x8d0] sm:$0xff]
  %v354 = vld [vmem:[%s1 + $0x8d8] sm:$0xff]
  %v355 = vld [vmem:[%s1 + $0x8e0] sm:$0xff]
  %v356 = vld [vmem:[%s1 + $0x8e8] sm:$0xff]
  %v357 = vld [vmem:[%s1 + $0x8f0] sm:$0xff]
  %v358 = vld [vmem:[%s1 + $0x8f8] sm:$0xff]
  %v359 = vld [vmem:[%s1 + $0x900] sm:$0xff]
  %v360 = vld [vmem:[%s1 + $0x908] sm:$0xff]
  %v361 = vld [vmem:[%s1 + $0x910] sm:$0xff]
  %v362 = vld [vmem:[%s1 + $0x918] sm:$0xff]
  %v363 = vld [vmem:[%s1 + $0x920] sm:$0xff]
  %v364 = vld [vmem:[%s1 + $0x928] sm:$0xff]
  %v365 = vld [vmem:[%s1 + $0x930] sm:$0xff]
  %v366 = vld [vmem:[%s1 + $0x938] sm:$0xff]
  %v367 = vld [vmem:[%s1 + $0x940] sm:$0xff]
  %v368 = vld [vmem:[%s1 + $0x948] sm:$0xff]
  %v369 = vld [vmem:[%s1 + $0x950] sm:$0xff]
  %v370 = vld [vmem:[%s1 + $0x958] sm:$0xff]
  %v371 = vld [vmem:[%s1 + $0x960] sm:$0xff]
  %v372 = vld [vmem:[%s1 + $0x968] sm:$0xff]
  %v373 = vld [vmem:[%s1 + $0x970] sm:$0xff]
  %v374 = vld [vmem:[%s1 + $0x978] sm:$0xff]
  %v375 = vld [vmem:[%s1 + $0x980] sm:$0xff]
  %v376 = vld [vmem:[%s1 + $0x988] sm:$0xff]
  %v377 = vld [vmem:[%s1 + $0x990] sm:$0xff]
  %v378 = vld [vmem:[%s1 + $0x998] sm:$0xff]
  %v379 = vld [vmem:[%s1 + $0x9a0] sm:$0xff]
  %v380 = vld [vmem:[%s1 + $0x9a8] sm:$0xff]
  %v381 = vld [vmem:[%s1 + $0x9b0] sm:$0xff]
  %v382 = vld [vmem:[%s1 + $0x9b8] sm:$0xff]
  %v383 = vld [vmem:[%s1 + $0x9c0] sm:$0xff]
  %v384 = vld [vmem:[%s1 + $0x9c8] sm:$0xff]
  %v385 = vld [vmem:[%s1 + $0x9d0] sm:$0xff]
  %v386 = vld [vmem:[%s1 + $0x9d8] sm:$0xff]
  %v387 = vld [vmem:[%s1 + $0x9e0] sm:$0xff]
  %v388 = vld [vmem:[%s1 + $0x9e8] sm:$0xff]
  %v389 = vld [vmem:[%s1 + $0x9f0] sm:$0xff]
  %v390 = vld [vmem:[%s1 + $0x9f8] sm:$0xff]
  %v391 = vld [vmem:[%s1 + $0xa00] sm:$0xff]
  %v392 = vld [vmem:[%s1 + $0xa08] sm:$0xff]
  %v393 = vld [vmem:[%s1 + $0xa10] sm:$0xff]
  %v394 = vld [vmem:[%s1 + $0xa18] sm:$0xff]
  %v395 = vld [vmem:[%s1 + $0xa20] sm:$0xff]
  %v396 = vld [vmem:[%s1 + $0xa28] sm:$0xff]
  %v397 = vld [vmem:[%s1 + $0xa30] sm:$0xff]
  %v398 = vld [vmem:[%s1 + $0xa38] sm:$0xff]
  %v399 = vld [vmem:[%s1 + $0xa40] sm:$0xff]
  %v400 = vld [vmem:[%s1 + $0xa48] sm:$0xff]
  %v401 = vld [vmem:[%s1 + $0xa50] sm:$0xff]
  %v402 = vld [vmem:[%s1 + $0xa58] sm:$0xff]
  %v403 = vld [vmem:[%s1 + $0xa60] sm:$0xff]
  %v404 = vld [vmem:[%s1 + $0xa68] sm:$0xff]
  %v405 = vld [vmem:[%s1 + $0xa70] sm:$0xff]
  %v406 = vld [vmem:[%s1 + $0xa78] sm:$0xff]
  %v407 = vld [vmem:[%s1 + $0xa80] sm:$0xff]
  %v408 = vld [vmem:[%s1 + $0xa88] sm:$0xff]
  %v409 = vld [vmem:[%s1 + $0xa90] sm:$0xff]
  %v410 = vld [vmem:[%s1 + $0xa98] sm:$0xff]
  %v411 = vld [vmem:[%s1 + $0xaa0] sm:$0xff]
  %v412 = vld [vmem:[%s1 + $0xaa8] sm:$0xff]
  %v413 = vld [vmem:[%s1 + $0xab0] sm:$0xff]
  %v414 = vld [vmem:[%s1 + $0xab8] sm:$0xff]
  %v415 = vld [vmem:[%s1 + $0xac0] sm:$0xff]
  %v416 = vld [vmem:[%s1 + $0xac8] sm:$0xff]
  %v417 = vld [vmem:[%s1 + $0xad0] sm:$0xff]
  %v418 = vld [vmem:[%s1 + $0xad8] sm:$0xff]
  %v419 = vld [vmem:[%s1 + $0xae0] sm:$0xff]
  %v420 = vld [vmem:[%s1 + $0xae8] sm:$0xff]
  %v421 = vld [vmem:[%s1 + $0xaf0] sm:$0xff]
  %v422 = vld [vmem:[%s1 + $0xaf8] sm:$0xff]
  %v423 = vld [vmem:[%s1 + $0xb00] sm:$0xff]
  %v424 = vld [vmem:[%s1 + $0xb08] sm:$0xff]
  %v425 = vld [vmem:[%s1 + $0xb10] sm:$0xff]
  %v426 = vld [vmem:[%s1 + $0xb18] sm:$0xff]
  %v427 = vld [vmem:[%s1 + $0xb20] sm:$0xff]
  %v428 = vld [vmem:[%s1 + $0xb28] sm:$0xff]
  %v429 = vld [vmem:[%s1 + $0xb30] sm:$0xff]
  %v430 = vld [vmem:[%s1 + $0xb38] sm:$0xff]
  %v431 = vld [vmem:[%s1 + $0xb40] sm:$0xff]
  %v432 = vld [vmem:[%s1 + $0xb48] sm:$0xff]
  %v433 = vld [vmem:[%s1 + $0xb50] sm:$0xff]
  %v434 = vld [vmem:[%s1 + $0xb58] sm:$0xff]
  %v435 = vld [vmem:[%s1 + $0xb60] sm:$0xff]
  %v436 = vld [vmem:[%s1 + $0xb68] sm:$0xff]
  %v437 = vld [vmem:[%s1 + $0xb70] sm:$0xff]
  %v438 = vld [vmem:[%s1 + $0xb78] sm:$0xff]
  %v439 = vld [vmem:[%s1 + $0xb80] sm:$0xff]
  %v440 = vld [vmem:[%s1 + $0xb88] sm:$0xff]
  %v441 = vld [vmem:[%s1 + $0xb90] sm:$0xff]
  %v442 = vld [vmem:[%s1 + $0xb98] sm:$0xff]
  %v443 = vld [vmem:[%s1 + $0xba0] sm:$0xff]
  %v444 = vld [vmem:[%s1 + $0xba8] sm:$0xff]
  %v445 = vld [vmem:[%s1 + $0xbb0] sm:$0xff]
  %v446 = vld [vmem:[%s1 + $0xbb8] sm:$0xff]
  %v447 = vld [vmem:[%s1 + $0xbc0] sm:$0xff]
  %v448 = vld [vmem:[%s1 + $0xbc8] sm:$0xff]
  %v449 = vld [vmem:[%s1 + $0xbd0] sm:$0xff]
  %v450 = vld [vmem:[%s1 + $0xbd8] sm:$0xff]
  %v451 = vld [vmem:[%s1 + $0xbe0] sm:$0xff]
  %v452 = vld [vmem:[%s1 + $0xbe8] sm:$0xff]
  %v453 = vld [vmem:[%s1 + $0xbf0] sm:$0xff]
  %v454 = vld [vmem:[%s1 + $0xbf8] sm:$0xff]
  %v455 = vld [vmem:[%s1 + $0xc00] sm:$0xff]
  %v456 = vld [vmem:[%s1 + $0xc08] sm:$0xff]
  %v457 = vld [vmem:[%s1 + $0xc10] sm:$0xff]
  %v458 = vld [vmem:[%s1 + $0xc18] sm:$0xff]
  %v459 = vld [vmem:[%s1 + $0xc20] sm:$0xff]
  %v460 = vld [vmem:[%s1 + $0xc28] sm:$0xff]
  %v461 = vld [vmem:[%s1 + $0xc30] sm:$0xff]
  %v462 = vld [vmem:[%s1 + $0xc38] sm:$0xff]
  %v463 = vld [vmem:[%s1 + $0xc40] sm:$0xff]
  %v464 = vld [vmem:[%s1 + $0xc48] sm:$0xff]
  %v465 = vld [vmem:[%s1 + $0xc50] sm:$0xff]
  %v466 = vld [vmem:[%s1 + $0xc58] sm:$0xff]
  %v467 = vld [vmem:[%s1 + $0xc60] sm:$0xff]
  %v468 = vld [vmem:[%s1 + $0xc68] sm:$0xff]
  %v469 = vld [vmem:[%s1 + $0xc70] sm:$0xff]
  %v470 = vld [vmem:[%s1 + $0xc78] sm:$0xff]
  %v471 = vld [vmem:[%s1 + $0xc80] sm:$0xff]
  %v472 = vld [vmem:[%s1 + $0xc88] sm:$0xff]
  %v473 = vld [vmem:[%s1 + $0xc90] sm:$0xff]
  %v474 = vld [vmem:[%s1 + $0xc98] sm:$0xff]
  %v475 = vld [vmem:[%s1 + $0xca0] sm:$0xff]
  %v476 = vld [vmem:[%s1 + $0xca8] sm:$0xff]
  %v477 = vld [vmem:[%s1 + $0xcb0] sm:$0xff]
  %v478 = vld [vmem:[%s1 + $0xcb8] sm:$0xff]
  %v479 = vld [vmem:[%s1 + $0xcc0] sm:$0xff]
  %v480 = vld [vmem:[%s1 + $0xcc8] sm:$0xff]
  %v481 = vld [vmem:[%s1 + $0xcd0] sm:$0xff]
  %v482 = vld [vmem:[%s1 + $0xcd8] sm:$0xff]
  %v483 = vld [vmem:[%s1 + $0xce0] sm:$0xff]
  %v484 = vld [vmem:[%s1 + $0xce8] sm:$0xff]
  %v485 = vld [vmem:[%s1 + $0xcf0] sm:$0xff]
  %v486 = vld [vmem:[%s1 + $0xcf8] sm:$0xff]
  %v487 = vld [vmem:[%s1 + $0xd00] sm:$0xff]
  %v488 = vld [vmem:[%s1 + $0xd08] sm:$0xff]
  %v489 = vld [vmem:[%s1 + $0xd10] sm:$0xff]
  %v490 = vld [vmem:[%s1 + $0xd18] sm:$0xff]
  %v491 = vld [vmem:[%s1 + $0xd20] sm:$0xff]
  %v492 = vld [vmem:[%s1 + $0xd28] sm:$0xff]
  %v493 = vld [vmem:[%s1 + $0xd30] sm:$0xff]
  %v494 = vld [vmem:[%s1 + $0xd38] sm:$0xff]
  %v495 = vld [vmem:[%s1 + $0xd40] sm:$0xff]
  %v496 = vld [vmem:[%s1 + $0xd48] sm:$0xff]
  %v497 = vld [vmem:[%s1 + $0xd50] sm:$0xff]
  %v498 = vld [vmem:[%s1 + $0xd58] sm:$0xff]
  %v499 = vld [vmem:[%s1 + $0xd60] sm:$0xff]
  %v500 = vld [vmem:[%s1 + $0xd68] sm:$0xff]
  %v501 = vld [vmem:[%s1 + $0xd70] sm:$0xff]
  %v502 = vld [vmem:[%s1 + $0xd78] sm:$0xff]
  %v503 = vld [vmem:[%s1 + $0xd80] sm:$0xff]
  %v504 = vld [vmem:[%s1 + $0xd88] sm:$0xff]
  %v505 = vld [vmem:[%s1 + $0xd90] sm:$0xff]
  %v506 = vld [vmem:[%s1 + $0xd98] sm:$0xff]
  %v507 = vld [vmem:[%s1 + $0xda0] sm:$0xff]
  %v508 = vld [vmem:[%s1 + $0xda8] sm:$0xff]
  %v509 = vld [vmem:[%s1 + $0xdb0] sm:$0xff]
  %v510 = vld [vmem:[%s1 + $0xdb8] sm:$0xff]
  %v511 = vld [vmem:[%s1 + $0xdc0] sm:$0xff]
  %v512 = vld [vmem:[%s1 + $0xdc8] sm:$0xff]
  %v513 = vld [vmem:[%s1 + $0xdd0] sm:$0xff]
  %v514 = vld [vmem:[%s1 + $0xdd8] sm:$0xff]
  %v515 = vld [vmem:[%s1 + $0xde0] sm:$0xff]
  %v516 = vld [vmem:[%s1 + $0xde8] sm:$0xff]
  %v517 = vld [vmem:[%s1 + $0xdf0] sm:$0xff]
  %v518 = vld [vmem:[%s1 + $0xdf8] sm:$0xff]
  %v519 = vld [vmem:[%s1 + $0xe00] sm:$0xff]
  %v520 = vld [vmem:[%s1 + $0xe08] sm:$0xff]
  %v521 = vld [vmem:[%s1 + $0xe10] sm:$0xff]
  %v522 = vld [vmem:[%s1 + $0xe18] sm:$0xff]
  %v523 = vld [vmem:[%s1 + $0xe20] sm:$0xff]
  %v524 = vld [vmem:[%s1 + $0xe28] sm:$0xff]
  %v525 = vld [vmem:[%s1 + $0xe30] sm:$0xff]
  %v526 = vld [vmem:[%s1 + $0xe38] sm:$0xff]
  %v527 = vld [vmem:[%s1 + $0xe40] sm:$0xff]
  %v528 = vld [vmem:[%s1 + $0xe48] sm:$0xff]
  %v529 = vld [vmem:[%s1 + $0xe50] sm:$0xff]
  %v530 = vld [vmem:[%s1 + $0xe58] sm:$0xff]
  %v531 = vld [vmem:[%s1 + $0xe60] sm:$0xff]
  %v532 = vld [vmem:[%s1 + $0xe68] sm:$0xff]
  %v533 = vld [vmem:[%s1 + $0xe70] sm:$0xff]
  %v534 = vld [vmem:[%s1 + $0xe78] sm:$0xff]
  %v535 = vld [vmem:[%s1 + $0xe80] sm:$0xff]
  %v536 = vld [vmem:[%s1 + $0xe88] sm:$0xff]
  %v537 = vld [vmem:[%s1 + $0xe90] sm:$0xff]
  %v538 = vld [vmem:[%s1 + $0xe98] sm:$0xff]
  %v539 = vld [vmem:[%s1 + $0xea0] sm:$0xff]
  %v540 = vld [vmem:[%s1 + $0xea8] sm:$0xff]
  %v541 = vld [vmem:[%s1 + $0xeb0] sm:$0xff]
  %v542 = vld [vmem:[%s1 + $0xeb8] sm:$0xff]
  %v543 = vld [vmem:[%s1 + $0xec0] sm:$0xff]
  %v544 = vld [vmem:[%s1 + $0xec8] sm:$0xff]
  %v545 = vld [vmem:[%s1 + $0xed0] sm:$0xff]
  %v546 = vld [vmem:[%s1 + $0xed8] sm:$0xff]
  %v547 = vld [vmem:[%s1 + $0xee0] sm:$0xff]
  %v548 = vld [vmem:[%s1 + $0xee8] sm:$0xff]
  %v549 = vld [vmem:[%s1 + $0xef0] sm:$0xff]
  %v550 = vld [vmem:[%s1 + $0xef8] sm:$0xff]
  %v551 = vld [vmem:[%s1 + $0xf00] sm:$0xff]
  %v552 = vld [vmem:[%s1 + $0xf08] sm:$0xff]
  %v553 = vld [vmem:[%s1 + $0xf10] sm:$0xff]
  %v554 = vld [vmem:[%s1 + $0xf18] sm:$0xff]
  %v555 = vld [vmem:[%s1 + $0xf20] sm:$0xff]
  %v556 = vld [vmem:[%s1 + $0xf28] sm:$0xff]
  %v557 = vld [vmem:[%s1 + $0xf30] sm:$0xff]
  %v558 = vld [vmem:[%s1 + $0xf38] sm:$0xff]
  %v559 = vld [vmem:[%s1 + $0xf40] sm:$0xff]
  %v560 = vld [vmem:[%s1 + $0xf48] sm:$0xff]
  %v561 = vld [vmem:[%s1 + $0xf50] sm:$0xff]
  %v562 = vld [vmem:[%s1 + $0xf58] sm:$0xff]
  %v563 = vld [vmem:[%s1 + $0xf60] sm:$0xff]
  %v564 = vld [vmem:[%s1 + $0xf68] sm:$0xff]
  %v565 = vld [vmem:[%s1 + $0xf70] sm:$0xff]
  %v566 = vld [vmem:[%s1 + $0xf78] sm:$0xff]
  %v567 = vld [vmem:[%s1 + $0xf80] sm:$0xff]
  %v568 = vld [vmem:[%s1 + $0xf88] sm:$0xff]
  %v569 = vld [vmem:[%s1 + $0xf90] sm:$0xff]
  %v570 = vld [vmem:[%s1 + $0xf98] sm:$0xff]
  %v571 = vld [vmem:[%s1 + $0xfa0] sm:$0xff]
  %v572 = vld [vmem:[%s1 + $0xfa8] sm:$0xff]
  %v573 = vld [vmem:[%s1 + $0xfb0] sm:$0xff]
  %v574 = vld [vmem:[%s1 + $0xfb8] sm:$0xff]
  %v575 = vld [vmem:[%s1 + $0xfc0] sm:$0xff]
  %v576 = vld [vmem:[%s1 + $0xfc8] sm:$0xff]
  %v577 = vld [vmem:[%s1 + $0xfd0] sm:$0xff]
  %v578 = vld [vmem:[%s1 + $0xfd8] sm:$0xff]
  %v579 = vld [vmem:[%s1 + $0xfe0] sm:$0xff]
  %v580 = vld [vmem:[%s1 + $0xfe8] sm:$0xff]
  %v581 = vld [vmem:[%s1 + $0xff0] sm:$0xff]
  %v582 = vld [vmem:[%s1 + $0xff8] sm:$0xff]
  %v583 = vld [vmem:[%s1 + $0x1000] sm:$0xff]
  %v584 = vld [vmem:[%s1 + $0x1008] sm:$0xff]
  %v585 = vld [vmem:[%s1 + $0x1010] sm:$0xff]
  %v586 = vld [vmem:[%s1 + $0x1018] sm:$0xff]
  %v587 = vld [vmem:[%s1 + $0x1020] sm:$0xff]
  %v588 = vld [vmem:[%s1 + $0x1028] sm:$0xff]
  %v589 = vld [vmem:[%s1 + $0x1030] sm:$0xff]
  %v590 = vld [vmem:[%s1 + $0x1038] sm:$0xff]
  %v591 = vld [vmem:[%s1 + $0x1040] sm:$0xff]
  %v592 = vld [vmem:[%s1 + $0x1048] sm:$0xff]
  %v593 = vld [vmem:[%s1 + $0x1050] sm:$0xff]
  %v594 = vld [vmem:[%s1 + $0x1058] sm:$0xff]
  %v595 = vld [vmem:[%s1 + $0x1060] sm:$0xff]
  %v596 = vld [vmem:[%s1 + $0x1068] sm:$0xff]
  %v597 = vld [vmem:[%s1 + $0x1070] sm:$0xff]
  %v598 = vld [vmem:[%s1 + $0x1078] sm:$0xff]
  %v599 = vld [vmem:[%s1 + $0x1080] sm:$0xff]
  %v600 = vld [vmem:[%s1 + $0x1088] sm:$0xff]
  %v601 = vld [vmem:[%s1 + $0x1090] sm:$0xff]
  %v602 = vld [vmem:[%s1 + $0x1098] sm:$0xff]
  %v603 = vld [vmem:[%s1 + $0x10a0] sm:$0xff]
  %v604 = vld [vmem:[%s1 + $0x10a8] sm:$0xff]
  %v605 = vld [vmem:[%s1 + $0x10b0] sm:$0xff]
  %v606 = vld [vmem:[%s1 + $0x10b8] sm:$0xff]
  %v607 = vld [vmem:[%s1 + $0x10c0] sm:$0xff]
  %v608 = vld [vmem:[%s1 + $0x10c8] sm:$0xff]
  %v609 = vld [vmem:[%s1 + $0x10d0] sm:$0xff]
  %v610 = vld [vmem:[%s1 + $0x10d8] sm:$0xff]
  %v611 = vld [vmem:[%s1 + $0x10e0] sm:$0xff]
  %v612 = vld [vmem:[%s1 + $0x10e8] sm:$0xff]
  %v613 = vld [vmem:[%s1 + $0x10f0] sm:$0xff]
  %v614 = vld [vmem:[%s1 + $0x10f8] sm:$0xff]
  %v615 = vld [vmem:[%s1 + $0x1100] sm:$0xff]
  %v616 = vld [vmem:[%s1 + $0x1108] sm:$0xff]
  %v617 = vld [vmem:[%s1 + $0x1110] sm:$0xff]
  %v618 = vld [vmem:[%s1 + $0x1118] sm:$0xff]
  %v619 = vld [vmem:[%s1 + $0x1120] sm:$0xff]
  %v620 = vld [vmem:[%s1 + $0x1128] sm:$0xff]
  %v621 = vld [vmem:[%s1 + $0x1130] sm:$0xff]
  %v622 = vld [vmem:[%s1 + $0x1138] sm:$0xff]
  %v623 = vld [vmem:[%s1 + $0x1140] sm:$0xff]
  %v624 = vld [vmem:[%s1 + $0x1148] sm:$0xff]
  %v625 = vld [vmem:[%s1 + $0x1150] sm:$0xff]
  %v626 = vld [vmem:[%s1 + $0x1158] sm:$0xff]
  %v627 = vld [vmem:[%s1 + $0x1160] sm:$0xff]
  %v628 = vld [vmem:[%s1 + $0x1168] sm:$0xff]
  %v629 = vld [vmem:[%s1 + $0x1170] sm:$0xff]
  %v630 = vld [vmem:[%s1 + $0x1178] sm:$0xff]
  %v631 = vld [vmem:[%s1 + $0x1180] sm:$0xff]
  %v632 = vld [vmem:[%s1 + $0x1188] sm:$0xff]
  %v633 = vld [vmem:[%s1 + $0x1190] sm:$0xff]
  %v634 = vld [vmem:[%s1 + $0x1198] sm:$0xff]
  %v635 = vld [vmem:[%s1 + $0x11a0] sm:$0xff]
  %v636 = vld [vmem:[%s1 + $0x11a8] sm:$0xff]
  %v637 = vld [vmem:[%s1 + $0x11b0] sm:$0xff]
  %v638 = vld [vmem:[%s1 + $0x11b8] sm:$0xff]
  %v639 = vld [vmem:[%s1 + $0x11c0] sm:$0xff]
  %v640 = vld [vmem:[%s1 + $0x11c8] sm:$0xff]
  %v641 = vld [vmem:[%s1 + $0x11d0] sm:$0xff]
  %v642 = vld [vmem:[%s1 + $0x11d8] sm:$0xff]
  %v643 = vld [vmem:[%s1 + $0x11e0] sm:$0xff]
  %v644 = vld [vmem:[%s1 + $0x11e8] sm:$0xff]
  %v645 = vld [vmem:[%s1 + $0x11f0] sm:$0xff]
  %v646 = vld [vmem:[%s1 + $0x11f8] sm:$0xff]
  %v647 = vld [vmem:[%s1 + $0x1200] sm:$0xff]
  %v648 = vld [vmem:[%s1 + $0x1208] sm:$0xff]
  %v649 = vld [vmem:[%s1 + $0x1210] sm:$0xff]
  %v650 = vld [vmem:[%s1 + $0x1218] sm:$0xff]
  %v651 = vld [vmem:[%s1 + $0x1220] sm:$0xff]
  %v652 = vld [vmem:[%s1 + $0x1228] sm:$0xff]
  %v653 = vld [vmem:[%s1 + $0x1230] sm:$0xff]
  %v654 = vld [vmem:[%s1 + $0x1238] sm:$0xff]
  %v655 = vld [vmem:[%s1 + $0x1240] sm:$0xff]
  %v656 = vld [vmem:[%s1 + $0x1248] sm:$0xff]
  %v657 = vld [vmem:[%s1 + $0x1250] sm:$0xff]
  %v658 = vld [vmem:[%s1 + $0x1258] sm:$0xff]
  %v659 = vld [vmem:[%s1 + $0x1260] sm:$0xff]
  %v660 = vld [vmem:[%s1 + $0x1268] sm:$0xff]
  %v661 = vld [vmem:[%s1 + $0x1270] sm:$0xff]
  %v662 = vld [vmem:[%s1 + $0x1278] sm:$0xff]
  %v663 = vld [vmem:[%s1 + $0x1280] sm:$0xff]
  %v664 = vld [vmem:[%s1 + $0x1288] sm:$0xff]
  %v665 = vld [vmem:[%s1 + $0x1290] sm:$0xff]
  %v666 = vld [vmem:[%s1 + $0x1298] sm:$0xff]
  %v667 = vld [vmem:[%s1 + $0x12a0] sm:$0xff]
  %v668 = vld [vmem:[%s1 + $0x12a8] sm:$0xff]
  %v669 = vld [vmem:[%s1 + $0x12b0] sm:$0xff]
  %v670 = vld [vmem:[%s1 + $0x12b8] sm:$0xff]
  %v671 = vld [vmem:[%s1 + $0x12c0] sm:$0xff]
  %v672 = vld [vmem:[%s1 + $0x12c8] sm:$0xff]
  %v673 = vld [vmem:[%s1 + $0x12d0] sm:$0xff]
  %v674 = vld [vmem:[%s1 + $0x12d8] sm:$0xff]
  %v675 = vld [vmem:[%s1 + $0x12e0] sm:$0xff]
  %v676 = vld [vmem:[%s1 + $0x12e8] sm:$0xff]
  %v677 = vld [vmem:[%s1 + $0x12f0] sm:$0xff]
  %v678 = vld [vmem:[%s1 + $0x12f8] sm:$0xff]
  %v679 = vld [vmem:[%s1 + $0x1300] sm:$0xff]
  %v680 = vld [vmem:[%s1 + $0x1308] sm:$0xff]
  %v681 = vld [vmem:[%s1 + $0x1310] sm:$0xff]
  %v682 = vld [vmem:[%s1 + $0x1318] sm:$0xff]
  %v683 = vld [vmem:[%s1 + $0x1320] sm:$0xff]
  %v684 = vld [vmem:[%s1 + $0x1328] sm:$0xff]
  %v685 = vld [vmem:[%s1 + $0x1330] sm:$0xff]
  %v686 = vld [vmem:[%s1 + $0x1338] sm:$0xff]
  %v687 = vld [vmem:[%s1 + $0x1340] sm:$0xff]
  %v688 = vld [vmem:[%s1 + $0x1348] sm:$0xff]
  %v689 = vld [vmem:[%s1 + $0x1350] sm:$0xff]
  %v690 = vld [vmem:[%s1 + $0x1358] sm:$0xff]
  %v691 = vld [vmem:[%s1 + $0x1360] sm:$0xff]
  %v692 = vld [vmem:[%s1 + $0x1368] sm:$0xff]
  %v693 = vld [vmem:[%s1 + $0x1370] sm:$0xff]
  %v694 = vld [vmem:[%s1 + $0x1378] sm:$0xff]
  %v695 = vld [vmem:[%s1 + $0x1380] sm:$0xff]
  %v696 = vld [vmem:[%s1 + $0x1388] sm:$0xff]
  %v697 = vld [vmem:[%s1 + $0x1390] sm:$0xff]
  %v698 = vld [vmem:[%s1 + $0x1398] sm:$0xff]
  %v699 = vld [vmem:[%s1 + $0x13a0] sm:$0xff]
  %v700 = vld [vmem:[%s1 + $0x13a8] sm:$0xff]
  %v701 = vld [vmem:[%s1 + $0x13b0] sm:$0xff]
  %v702 = vld [vmem:[%s1 + $0x13b8] sm:$0xff]
  %v703 = vld [vmem:[%s1 + $0x13c0] sm:$0xff]
  %v704 = vld [vmem:[%s1 + $0x13c8] sm:$0xff]
  %v705 = vld [vmem:[%s1 + $0x13d0] sm:$0xff]
  %v706 = vld [vmem:[%s1 + $0x13d8] sm:$0xff]
  %v707 = vld [vmem:[%s1 + $0x13e0] sm:$0xff]
  %v708 = vld [vmem:[%s1 + $0x13e8] sm:$0xff]
  %v709 = vld [vmem:[%s1 + $0x13f0] sm:$0xff]
  %v710 = vld [vmem:[%s1 + $0x13f8] sm:$0xff]
  %v711 = vld [vmem:[%s1 + $0x1400] sm:$0xff]
  %v712 = vld [vmem:[%s1 + $0x1408] sm:$0xff]
  %v713 = vld [vmem:[%s1 + $0x1410] sm:$0xff]
  %v714 = vld [vmem:[%s1 + $0x1418] sm:$0xff]
  %v715 = vld [vmem:[%s1 + $0x1420] sm:$0xff]
  %v716 = vld [vmem:[%s1 + $0x1428] sm:$0xff]
  %v717 = vld [vmem:[%s1 + $0x1430] sm:$0xff]
  %v718 = vld [vmem:[%s1 + $0x1438] sm:$0xff]
  %v719 = vld [vmem:[%s1 + $0x1440] sm:$0xff]
  %v720 = vld [vmem:[%s1 + $0x1448] sm:$0xff]
  %v721 = vld [vmem:[%s1 + $0x1450] sm:$0xff]
  %v722 = vld [vmem:[%s1 + $0x1458] sm:$0xff]
  %v723 = vld [vmem:[%s1 + $0x1460] sm:$0xff]
  %v724 = vld [vmem:[%s1 + $0x1468] sm:$0xff]
  %v725 = vld [vmem:[%s1 + $0x1470] sm:$0xff]
  %v726 = vld [vmem:[%s1 + $0x1478] sm:$0xff]
  %v727 = vld [vmem:[%s1 + $0x1480] sm:$0xff]
  %v728 = vld [vmem:[%s1 + $0x1488] sm:$0xff]
  %v729 = vld [vmem:[%s1 + $0x1490] sm:$0xff]
  %v730 = vld [vmem:[%s1 + $0x1498] sm:$0xff]
  %v731 = vld [vmem:[%s1 + $0x14a0] sm:$0xff]
  %v732 = vld [vmem:[%s1 + $0x14a8] sm:$0xff]
  %v733 = vld [vmem:[%s1 + $0x14b0] sm:$0xff]
  %v734 = vld [vmem:[%s1 + $0x14b8] sm:$0xff]
  %v735 = vld [vmem:[%s1 + $0x14c0] sm:$0xff]
  %v736 = vld [vmem:[%s1 + $0x14c8] sm:$0xff]
  %v737 = vld [vmem:[%s1 + $0x14d0] sm:$0xff]
  %v738 = vld [vmem:[%s1 + $0x14d8] sm:$0xff]
  %v739 = vld [vmem:[%s1 + $0x14e0] sm:$0xff]
  %v740 = vld [vmem:[%s1 + $0x14e8] sm:$0xff]
  %v741 = vld [vmem:[%s1 + $0x14f0] sm:$0xff]
  %v742 = vld [vmem:[%s1 + $0x14f8] sm:$0xff]
  %v743 = vld [vmem:[%s1 + $0x1500] sm:$0xff]
  %v744 = vld [vmem:[%s1 + $0x1508] sm:$0xff]
  %v745 = vld [vmem:[%s1 + $0x1510] sm:$0xff]
  %v746 = vld [vmem:[%s1 + $0x1518] sm:$0xff]
  %v747 = vld [vmem:[%s1 + $0x1520] sm:$0xff]
  %v748 = vld [vmem:[%s1 + $0x1528] sm:$0xff]
  %v749 = vld [vmem:[%s1 + $0x1530] sm:$0xff]
  %v750 = vld [vmem:[%s1 + $0x1538] sm:$0xff]
  %v751 = vld [vmem:[%s1 + $0x1540] sm:$0xff]
  %v752 = vld [vmem:[%s1 + $0x1548] sm:$0xff]
  %v753 = vld [vmem:[%s1 + $0x1550] sm:$0xff]
  %v754 = vld [vmem:[%s1 + $0x1558] sm:$0xff]
  %v755 = vld [vmem:[%s1 + $0x1560] sm:$0xff]
  %v756 = vld [vmem:[%s1 + $0x1568] sm:$0xff]
  %v757 = vld [vmem:[%s1 + $0x1570] sm:$0xff]
  %v758 = vld [vmem:[%s1 + $0x1578] sm:$0xff]
  %v759 = vld [vmem:[%s1 + $0x1580] sm:$0xff]
  %v760 = vld [vmem:[%s1 + $0x1588] sm:$0xff]
  %v761 = vld [vmem:[%s1 + $0x1590] sm:$0xff]
  %v762 = vld [vmem:[%s1 + $0x1598] sm:$0xff]
  %v763 = vld [vmem:[%s1 + $0x15a0] sm:$0xff]
  %v764 = vld [vmem:[%s1 + $0x15a8] sm:$0xff]
  %v765 = vld [vmem:[%s1 + $0x15b0] sm:$0xff]
  %v766 = vld [vmem:[%s1 + $0x15b8] sm:$0xff]
  %v767 = vld [vmem:[%s1 + $0x15c0] sm:$0xff]
  %v768 = vld [vmem:[%s1 + $0x15c8] sm:$0xff]
  %v769 = vld [vmem:[%s1 + $0x15d0] sm:$0xff]
  %v770 = vld [vmem:[%s1 + $0x15d8] sm:$0xff]
  %v771 = vld [vmem:[%s1 + $0x15e0] sm:$0xff]
  %v772 = vld [vmem:[%s1 + $0x15e8] sm:$0xff]
  %v773 = vld [vmem:[%s1 + $0x15f0] sm:$0xff]
  %v774 = vld [vmem:[%s1 + $0x15f8] sm:$0xff]
  %v775 = vld [vmem:[%s1 + $0x1600] sm:$0xff]
  %v776 = vld [vmem:[%s1 + $0x1608] sm:$0xff]
  %v777 = vld [vmem:[%s1 + $0x1610] sm:$0xff]
  %v778 = vld [vmem:[%s1 + $0x1618] sm:$0xff]
  %v779 = vld [vmem:[%s1 + $0x1620] sm:$0xff]
  %v780 = vld [vmem:[%s1 + $0x1628] sm:$0xff]
  %v781 = vld [vmem:[%s1 + $0x1630] sm:$0xff]
  %v782 = vld [vmem:[%s1 + $0x1638] sm:$0xff]
  %v783 = vld [vmem:[%s1 + $0x1640] sm:$0xff]
  %v784 = vld [vmem:[%s1 + $0x1648] sm:$0xff]
  %v785 = vld [vmem:[%s1 + $0x1650] sm:$0xff]
  %v786 = vld [vmem:[%s1 + $0x1658] sm:$0xff]
  %v787 = vld [vmem:[%s1 + $0x1660] sm:$0xff]
  %v788 = vld [vmem:[%s1 + $0x1668] sm:$0xff]
  %v789 = vld [vmem:[%s1 + $0x1670] sm:$0xff]
  %v790 = vld [vmem:[%s1 + $0x1678] sm:$0xff]
  %v791 = vld [vmem:[%s1 + $0x1680] sm:$0xff]
  %v792 = vld [vmem:[%s1 + $0x1688] sm:$0xff]
  %v793 = vld [vmem:[%s1 + $0x1690] sm:$0xff]
  %v794 = vld [vmem:[%s1 + $0x1698] sm:$0xff]
  %v795 = vld [vmem:[%s1 + $0x16a0] sm:$0xff]
  %v796 = vld [vmem:[%s1 + $0x16a8] sm:$0xff]
  %v797 = vld [vmem:[%s1 + $0x16b0] sm:$0xff]
  %v798 = vld [vmem:[%s1 + $0x16b8] sm:$0xff]
  %v799 = vld [vmem:[%s1 + $0x16c0] sm:$0xff]
  %v800 = vld [vmem:[%s1 + $0x16c8] sm:$0xff]
  %v801 = vld [vmem:[%s1 + $0x16d0] sm:$0xff]
  %v802 = vld [vmem:[%s1 + $0x16d8] sm:$0xff]
  %v803 = vld [vmem:[%s1 + $0x16e0] sm:$0xff]
  %v804 = vld [vmem:[%s1 + $0x16e8] sm:$0xff]
  %v805 = vld [vmem:[%s1 + $0x16f0] sm:$0xff]
  %v806 = vld [vmem:[%s1 + $0x16f8] sm:$0xff]
  %v807 = vld [vmem:[%s1 + $0x1700] sm:$0xff]
  %v808 = vld [vmem:[%s1 + $0x1708] sm:$0xff]
  %v809 = vld [vmem:[%s1 + $0x1710] sm:$0xff]
  %v810 = vld [vmem:[%s1 + $0x1718] sm:$0xff]
  %v811 = vld [vmem:[%s1 + $0x1720] sm:$0xff]
  %v812 = vld [vmem:[%s1 + $0x1728] sm:$0xff]
  %v813 = vld [vmem:[%s1 + $0x1730] sm:$0xff]
  %v814 = vld [vmem:[%s1 + $0x1738] sm:$0xff]
  %v815 = vld [vmem:[%s1 + $0x1740] sm:$0xff]
  %v816 = vld [vmem:[%s1 + $0x1748] sm:$0xff]
  %v817 = vld [vmem:[%s1 + $0x1750] sm:$0xff]
  %v818 = vld [vmem:[%s1 + $0x1758] sm:$0xff]
  %v819 = vld [vmem:[%s1 + $0x1760] sm:$0xff]
  %v820 = vld [vmem:[%s1 + $0x1768] sm:$0xff]
  %v821 = vld [vmem:[%s1 + $0x1770] sm:$0xff]
  %v822 = vld [vmem:[%s1 + $0x1778] sm:$0xff]
  %v823 = vld [vmem:[%s1 + $0x1780] sm:$0xff]
  %v824 = vld [vmem:[%s1 + $0x1788] sm:$0xff]
  %v825 = vld [vmem:[%s1 + $0x1790] sm:$0xff]
  %v826 = vld [vmem:[%s1 + $0x1798] sm:$0xff]
  %v827 = vld [vmem:[%s1 + $0x17a0] sm:$0xff]
  %v828 = vld [vmem:[%s1 + $0x17a8] sm:$0xff]
  %v829 = vld [vmem:[%s1 + $0x17b0] sm:$0xff]
  %v830 = vld [vmem:[%s1 + $0x17b8] sm:$0xff]
  %v831 = vld [vmem:[%s1 + $0x17c0] sm:$0xff]
  %v832 = vld [vmem:[%s1 + $0x17c8] sm:$0xff]
  %v833 = vld [vmem:[%s1 + $0x17d0] sm:$0xff]
  %v834 = vld [vmem:[%s1 + $0x17d8] sm:$0xff]
  %v835 = vld [vmem:[%s1 + $0x17e0] sm:$0xff]
  %v836 = vld [vmem:[%s1 + $0x17e8] sm:$0xff]
  %v837 = vld [vmem:[%s1 + $0x17f0] sm:$0xff]
  %v838 = vld [vmem:[%s1 + $0x17f8] sm:$0xff]
  %v839 = vld [vmem:[%s1 + $0x1800] sm:$0xff]
  %v840 = vld [vmem:[%s1 + $0x1808] sm:$0xff]
  %v841 = vld [vmem:[%s1 + $0x1810] sm:$0xff]
  %v842 = vld [vmem:[%s1 + $0x1818] sm:$0xff]
  %v843 = vld [vmem:[%s1 + $0x1820] sm:$0xff]
  %v844 = vld [vmem:[%s1 + $0x1828] sm:$0xff]
  %v845 = vld [vmem:[%s1 + $0x1830] sm:$0xff]
  %v846 = vld [vmem:[%s1 + $0x1838] sm:$0xff]
  %v847 = vld [vmem:[%s1 + $0x1840] sm:$0xff]
  %v848 = vld [vmem:[%s1 + $0x1848] sm:$0xff]
  %v849 = vld [vmem:[%s1 + $0x1850] sm:$0xff]
  %v850 = vld [vmem:[%s1 + $0x1858] sm:$0xff]
  %v851 = vld [vmem:[%s1 + $0x1860] sm:$0xff]
  %v852 = vld [vmem:[%s1 + $0x1868] sm:$0xff]
  %v853 = vld [vmem:[%s1 + $0x1870] sm:$0xff]
  %v854 = vld [vmem:[%s1 + $0x1878] sm:$0xff]
  %v855 = vld [vmem:[%s2] sm:$0xf]
  %v857 = vperm.slane %v855, 0
  %v858 = vperm.slane %v855, 1
  %v859 = vperm.slane %v855, 2
  %v860 = vperm.slane %v855, 3
  %v1649 = vunpack.c.l.b16 %v71
  %v1650 = vunpack.c.h.b16 %v71
  %v1651 = vunpack.c.l.b16 %v72
  %v1652 = vunpack.c.h.b16 %v72
  %v1653 = vunpack.c.l.b16 %v73
  %v1654 = vunpack.c.h.b16 %v73
  %v1655 = vunpack.c.l.b16 %v74
  %v1656 = vunpack.c.h.b16 %v74
  %v1657 = vunpack.c.l.b16 %v75
  %v1658 = vunpack.c.h.b16 %v75
  %v1659 = vunpack.c.l.b16 %v76
  %v1660 = vunpack.c.h.b16 %v76
  %v1661 = vunpack.c.l.b16 %v77
  %v1662 = vunpack.c.h.b16 %v77
  %v1663 = vunpack.c.l.b16 %v78
  %v1664 = vunpack.c.h.b16 %v78
  %v1665 = vunpack.c.l.b16 %v79
  %v1666 = vunpack.c.h.b16 %v79
  %v1667 = vunpack.c.l.b16 %v80
  %v1668 = vunpack.c.h.b16 %v80
  %v1669 = vunpack.c.l.b16 %v81
  %v1670 = vunpack.c.h.b16 %v81
  %v1671 = vunpack.c.l.b16 %v82
  %v1672 = vunpack.c.h.b16 %v82
  %v1673 = vunpack.c.l.b16 %v83
  %v1674 = vunpack.c.h.b16 %v83
  %v1675 = vunpack.c.l.b16 %v84
  %v1676 = vunpack.c.h.b16 %v84
  %v1677 = vunpack.c.l.b16 %v85
  %v1678 = vunpack.c.h.b16 %v85
  %v1679 = vunpack.c.l.b16 %v86
  %v1680 = vunpack.c.h.b16 %v86
  %v1681 = vunpack.c.l.b16 %v87
  %v1682 = vunpack.c.h.b16 %v87
  %v1683 = vunpack.c.l.b16 %v88
  %v1684 = vunpack.c.h.b16 %v88
  %v1685 = vunpack.c.l.b16 %v89
  %v1686 = vunpack.c.h.b16 %v89
  %v1687 = vunpack.c.l.b16 %v90
  %v1688 = vunpack.c.h.b16 %v90
  %v1689 = vunpack.c.l.b16 %v91
  %v1690 = vunpack.c.h.b16 %v91
  %v1691 = vunpack.c.l.b16 %v92
  %v1692 = vunpack.c.h.b16 %v92
  %v1693 = vunpack.c.l.b16 %v93
  %v1694 = vunpack.c.h.b16 %v93
  %v1695 = vunpack.c.l.b16 %v94
  %v1696 = vunpack.c.h.b16 %v94
  %v1697 = vunpack.c.l.b16 %v95
  %v1698 = vunpack.c.h.b16 %v95
  %v1699 = vunpack.c.l.b16 %v96
  %v1700 = vunpack.c.h.b16 %v96
  %v1701 = vunpack.c.l.b16 %v97
  %v1702 = vunpack.c.h.b16 %v97
  %v1703 = vunpack.c.l.b16 %v98
  %v1704 = vunpack.c.h.b16 %v98
  %v1705 = vunpack.c.l.b16 %v99
  %v1706 = vunpack.c.h.b16 %v99
  %v1707 = vunpack.c.l.b16 %v100
  %v1708 = vunpack.c.h.b16 %v100
  %v1709 = vunpack.c.l.b16 %v101
  %v1710 = vunpack.c.h.b16 %v101
  %v1711 = vunpack.c.l.b16 %v102
  %v1712 = vunpack.c.h.b16 %v102
  %v1713 = vunpack.c.l.b16 %v103
  %v1714 = vunpack.c.h.b16 %v103
  %v1715 = vunpack.c.l.b16 %v104
  %v1716 = vunpack.c.h.b16 %v104
  %v1717 = vunpack.c.l.b16 %v105
  %v1718 = vunpack.c.h.b16 %v105
  %v1719 = vunpack.c.l.b16 %v106
  %v1720 = vunpack.c.h.b16 %v106
  %v1721 = vunpack.c.l.b16 %v107
  %v1722 = vunpack.c.h.b16 %v107
  %v1723 = vunpack.c.l.b16 %v108
  %v1724 = vunpack.c.h.b16 %v108
  %v1725 = vunpack.c.l.b16 %v109
  %v1726 = vunpack.c.h.b16 %v109
  %v1727 = vunpack.c.l.b16 %v110
  %v1728 = vunpack.c.h.b16 %v110
  %v1729 = vunpack.c.l.b16 %v111
  %v1730 = vunpack.c.h.b16 %v111
  %v1731 = vunpack.c.l.b16 %v112
  %v1732 = vunpack.c.h.b16 %v112
  %v1733 = vunpack.c.l.b16 %v113
  %v1734 = vunpack.c.h.b16 %v113
  %v1735 = vunpack.c.l.b16 %v114
  %v1736 = vunpack.c.h.b16 %v114
  %v1737 = vunpack.c.l.b16 %v115
  %v1738 = vunpack.c.h.b16 %v115
  %v1739 = vunpack.c.l.b16 %v116
  %v1740 = vunpack.c.h.b16 %v116
  %v1741 = vunpack.c.l.b16 %v117
  %v1742 = vunpack.c.h.b16 %v117
  %v1743 = vunpack.c.l.b16 %v118
  %v1744 = vunpack.c.h.b16 %v118
  %v1745 = vunpack.c.l.b16 %v119
  %v1746 = vunpack.c.h.b16 %v119
  %v1747 = vunpack.c.l.b16 %v120
  %v1748 = vunpack.c.h.b16 %v120
  %v1749 = vunpack.c.l.b16 %v121
  %v1750 = vunpack.c.h.b16 %v121
  %v1751 = vunpack.c.l.b16 %v122
  %v1752 = vunpack.c.h.b16 %v122
  %v1753 = vunpack.c.l.b16 %v123
  %v1754 = vunpack.c.h.b16 %v123
  %v1755 = vunpack.c.l.b16 %v124
  %v1756 = vunpack.c.h.b16 %v124
  %v1757 = vunpack.c.l.b16 %v125
  %v1758 = vunpack.c.h.b16 %v125
  %v1759 = vunpack.c.l.b16 %v126
  %v1760 = vunpack.c.h.b16 %v126
  %v1761 = vunpack.c.l.b16 %v127
  %v1762 = vunpack.c.h.b16 %v127
  %v1763 = vunpack.c.l.b16 %v128
  %v1764 = vunpack.c.h.b16 %v128
  %v1765 = vunpack.c.l.b16 %v129
  %v1766 = vunpack.c.h.b16 %v129
  %v1767 = vunpack.c.l.b16 %v130
  %v1768 = vunpack.c.h.b16 %v130
  %v1769 = vunpack.c.l.b16 %v131
  %v1770 = vunpack.c.h.b16 %v131
  %v1771 = vunpack.c.l.b16 %v132
  %v1772 = vunpack.c.h.b16 %v132
  %v1773 = vunpack.c.l.b16 %v133
  %v1774 = vunpack.c.h.b16 %v133
  %v1775 = vunpack.c.l.b16 %v134
  %v1776 = vunpack.c.h.b16 %v134
  %v1777 = vunpack.c.l.b16 %v135
  %v1778 = vunpack.c.h.b16 %v135
  %v1779 = vunpack.c.l.b16 %v136
  %v1780 = vunpack.c.h.b16 %v136
  %v1781 = vunpack.c.l.b16 %v137
  %v1782 = vunpack.c.h.b16 %v137
  %v1783 = vunpack.c.l.b16 %v138
  %v1784 = vunpack.c.h.b16 %v138
  %v1785 = vunpack.c.l.b16 %v139
  %v1786 = vunpack.c.h.b16 %v139
  %v1787 = vunpack.c.l.b16 %v140
  %v1788 = vunpack.c.h.b16 %v140
  %v1789 = vunpack.c.l.b16 %v141
  %v1790 = vunpack.c.h.b16 %v141
  %v1791 = vunpack.c.l.b16 %v142
  %v1792 = vunpack.c.h.b16 %v142
  %v1793 = vunpack.c.l.b16 %v143
  %v1794 = vunpack.c.h.b16 %v143
  %v1795 = vunpack.c.l.b16 %v144
  %v1796 = vunpack.c.h.b16 %v144
  %v1797 = vunpack.c.l.b16 %v145
  %v1798 = vunpack.c.h.b16 %v145
  %v1799 = vunpack.c.l.b16 %v146
  %v1800 = vunpack.c.h.b16 %v146
  %v1801 = vunpack.c.l.b16 %v147
  %v1802 = vunpack.c.h.b16 %v147
  %v1803 = vunpack.c.l.b16 %v148
  %v1804 = vunpack.c.h.b16 %v148
  %v1805 = vunpack.c.l.b16 %v149
  %v1806 = vunpack.c.h.b16 %v149
  %v1807 = vunpack.c.l.b16 %v150
  %v1808 = vunpack.c.h.b16 %v150
  %v1809 = vunpack.c.l.b16 %v151
  %v1810 = vunpack.c.h.b16 %v151
  %v1811 = vunpack.c.l.b16 %v152
  %v1812 = vunpack.c.h.b16 %v152
  %v1813 = vunpack.c.l.b16 %v153
  %v1814 = vunpack.c.h.b16 %v153
  %v1815 = vunpack.c.l.b16 %v154
  %v1816 = vunpack.c.h.b16 %v154
  %v1817 = vunpack.c.l.b16 %v155
  %v1818 = vunpack.c.h.b16 %v155
  %v1819 = vunpack.c.l.b16 %v156
  %v1820 = vunpack.c.h.b16 %v156
  %v1821 = vunpack.c.l.b16 %v157
  %v1822 = vunpack.c.h.b16 %v157
  %v1823 = vunpack.c.l.b16 %v158
  %v1824 = vunpack.c.h.b16 %v158
  %v1825 = vunpack.c.l.b16 %v159
  %v1826 = vunpack.c.h.b16 %v159
  %v1827 = vunpack.c.l.b16 %v160
  %v1828 = vunpack.c.h.b16 %v160
  %v1829 = vunpack.c.l.b16 %v161
  %v1830 = vunpack.c.h.b16 %v161
  %v1831 = vunpack.c.l.b16 %v162
  %v1832 = vunpack.c.h.b16 %v162
  %v1833 = vunpack.c.l.b16 %v163
  %v1834 = vunpack.c.h.b16 %v163
  %v1835 = vunpack.c.l.b16 %v164
  %v1836 = vunpack.c.h.b16 %v164
  %v1837 = vunpack.c.l.b16 %v165
  %v1838 = vunpack.c.h.b16 %v165
  %v1839 = vunpack.c.l.b16 %v166
  %v1840 = vunpack.c.h.b16 %v166
  %v1841 = vunpack.c.l.b16 %v167
  %v1842 = vunpack.c.h.b16 %v167
  %v1843 = vunpack.c.l.b16 %v168
  %v1844 = vunpack.c.h.b16 %v168
  %v1845 = vunpack.c.l.b16 %v169
  %v1846 = vunpack.c.h.b16 %v169
  %v1847 = vunpack.c.l.b16 %v170
  %v1848 = vunpack.c.h.b16 %v170
  %v1849 = vunpack.c.l.b16 %v171
  %v1850 = vunpack.c.h.b16 %v171
  %v1851 = vunpack.c.l.b16 %v172
  %v1852 = vunpack.c.h.b16 %v172
  %v1853 = vunpack.c.l.b16 %v173
  %v1854 = vunpack.c.h.b16 %v173
  %v1855 = vunpack.c.l.b16 %v174
  %v1856 = vunpack.c.h.b16 %v174
  %v1857 = vunpack.c.l.b16 %v175
  %v1858 = vunpack.c.h.b16 %v175
  %v1859 = vunpack.c.l.b16 %v176
  %v1860 = vunpack.c.h.b16 %v176
  %v1861 = vunpack.c.l.b16 %v177
  %v1862 = vunpack.c.h.b16 %v177
  %v1863 = vunpack.c.l.b16 %v178
  %v1864 = vunpack.c.h.b16 %v178
  %v1865 = vunpack.c.l.b16 %v179
  %v1866 = vunpack.c.h.b16 %v179
  %v1867 = vunpack.c.l.b16 %v180
  %v1868 = vunpack.c.h.b16 %v180
  %v1869 = vunpack.c.l.b16 %v181
  %v1870 = vunpack.c.h.b16 %v181
  %v1871 = vunpack.c.l.b16 %v182
  %v1872 = vunpack.c.h.b16 %v182
  %v1873 = vunpack.c.l.b16 %v183
  %v1874 = vunpack.c.h.b16 %v183
  %v1875 = vunpack.c.l.b16 %v184
  %v1876 = vunpack.c.h.b16 %v184
  %v1877 = vunpack.c.l.b16 %v185
  %v1878 = vunpack.c.h.b16 %v185
  %v1879 = vunpack.c.l.b16 %v186
  %v1880 = vunpack.c.h.b16 %v186
  %v1881 = vunpack.c.l.b16 %v187
  %v1882 = vunpack.c.h.b16 %v187
  %v1883 = vunpack.c.l.b16 %v188
  %v1884 = vunpack.c.h.b16 %v188
  %v1885 = vunpack.c.l.b16 %v189
  %v1886 = vunpack.c.h.b16 %v189
  %v1887 = vunpack.c.l.b16 %v190
  %v1888 = vunpack.c.h.b16 %v190
  %v1889 = vunpack.c.l.b16 %v191
  %v1890 = vunpack.c.h.b16 %v191
  %v1891 = vunpack.c.l.b16 %v192
  %v1892 = vunpack.c.h.b16 %v192
  %v1893 = vunpack.c.l.b16 %v193
  %v1894 = vunpack.c.h.b16 %v193
  %v1895 = vunpack.c.l.b16 %v194
  %v1896 = vunpack.c.h.b16 %v194
  %v1897 = vunpack.c.l.b16 %v195
  %v1898 = vunpack.c.h.b16 %v195
  %v1899 = vunpack.c.l.b16 %v196
  %v1900 = vunpack.c.h.b16 %v196
  %v1901 = vunpack.c.l.b16 %v197
  %v1902 = vunpack.c.h.b16 %v197
  %v1903 = vunpack.c.l.b16 %v198
  %v1904 = vunpack.c.h.b16 %v198
  %v1905 = vunpack.c.l.b16 %v199
  %v1906 = vunpack.c.h.b16 %v199
  %v1907 = vunpack.c.l.b16 %v200
  %v1908 = vunpack.c.h.b16 %v200
  %v1909 = vunpack.c.l.b16 %v201
  %v1910 = vunpack.c.h.b16 %v201
  %v1911 = vunpack.c.l.b16 %v202
  %v1912 = vunpack.c.h.b16 %v202
  %v1913 = vunpack.c.l.b16 %v203
  %v1914 = vunpack.c.h.b16 %v203
  %v1915 = vunpack.c.l.b16 %v204
  %v1916 = vunpack.c.h.b16 %v204
  %v1917 = vunpack.c.l.b16 %v205
  %v1918 = vunpack.c.h.b16 %v205
  %v1919 = vunpack.c.l.b16 %v206
  %v1920 = vunpack.c.h.b16 %v206
  %v1921 = vunpack.c.l.b16 %v207
  %v1922 = vunpack.c.h.b16 %v207
  %v1923 = vunpack.c.l.b16 %v208
  %v1924 = vunpack.c.h.b16 %v208
  %v1925 = vunpack.c.l.b16 %v209
  %v1926 = vunpack.c.h.b16 %v209
  %v1927 = vunpack.c.l.b16 %v210
  %v1928 = vunpack.c.h.b16 %v210
  %v1929 = vunpack.c.l.b16 %v211
  %v1930 = vunpack.c.h.b16 %v211
  %v1931 = vunpack.c.l.b16 %v212
  %v1932 = vunpack.c.h.b16 %v212
  %v1933 = vunpack.c.l.b16 %v213
  %v1934 = vunpack.c.h.b16 %v213
  %v1935 = vunpack.c.l.b16 %v214
  %v1936 = vunpack.c.h.b16 %v214
  %v1937 = vunpack.c.l.b16 %v215
  %v1938 = vunpack.c.h.b16 %v215
  %v1939 = vunpack.c.l.b16 %v216
  %v1940 = vunpack.c.h.b16 %v216
  %v1941 = vunpack.c.l.b16 %v217
  %v1942 = vunpack.c.h.b16 %v217
  %v1943 = vunpack.c.l.b16 %v218
  %v1944 = vunpack.c.h.b16 %v218
  %v1945 = vunpack.c.l.b16 %v219
  %v1946 = vunpack.c.h.b16 %v219
  %v1947 = vunpack.c.l.b16 %v220
  %v1948 = vunpack.c.h.b16 %v220
  %v1949 = vunpack.c.l.b16 %v221
  %v1950 = vunpack.c.h.b16 %v221
  %v1951 = vunpack.c.l.b16 %v222
  %v1952 = vunpack.c.h.b16 %v222
  %v1953 = vunpack.c.l.b16 %v223
  %v1954 = vunpack.c.h.b16 %v223
  %v1955 = vunpack.c.l.b16 %v224
  %v1956 = vunpack.c.h.b16 %v224
  %v1957 = vunpack.c.l.b16 %v225
  %v1958 = vunpack.c.h.b16 %v225
  %v1959 = vunpack.c.l.b16 %v226
  %v1960 = vunpack.c.h.b16 %v226
  %v1961 = vunpack.c.l.b16 %v227
  %v1962 = vunpack.c.h.b16 %v227
  %v1963 = vunpack.c.l.b16 %v228
  %v1964 = vunpack.c.h.b16 %v228
  %v1965 = vunpack.c.l.b16 %v229
  %v1966 = vunpack.c.h.b16 %v229
  %v1967 = vunpack.c.l.b16 %v230
  %v1968 = vunpack.c.h.b16 %v230
  %v1969 = vunpack.c.l.b16 %v231
  %v1970 = vunpack.c.h.b16 %v231
  %v1971 = vunpack.c.l.b16 %v232
  %v1972 = vunpack.c.h.b16 %v232
  %v1973 = vunpack.c.l.b16 %v233
  %v1974 = vunpack.c.h.b16 %v233
  %v1975 = vunpack.c.l.b16 %v234
  %v1976 = vunpack.c.h.b16 %v234
  %v1977 = vunpack.c.l.b16 %v235
  %v1978 = vunpack.c.h.b16 %v235
  %v1979 = vunpack.c.l.b16 %v236
  %v1980 = vunpack.c.h.b16 %v236
  %v1981 = vunpack.c.l.b16 %v237
  %v1982 = vunpack.c.h.b16 %v237
  %v1983 = vunpack.c.l.b16 %v238
  %v1984 = vunpack.c.h.b16 %v238
  %v1985 = vunpack.c.l.b16 %v239
  %v1986 = vunpack.c.h.b16 %v239
  %v1987 = vunpack.c.l.b16 %v240
  %v1988 = vunpack.c.h.b16 %v240
  %v1989 = vunpack.c.l.b16 %v241
  %v1990 = vunpack.c.h.b16 %v241
  %v1991 = vunpack.c.l.b16 %v242
  %v1992 = vunpack.c.h.b16 %v242
  %v1993 = vunpack.c.l.b16 %v243
  %v1994 = vunpack.c.h.b16 %v243
  %v1995 = vunpack.c.l.b16 %v244
  %v1996 = vunpack.c.h.b16 %v244
  %v1997 = vunpack.c.l.b16 %v245
  %v1998 = vunpack.c.h.b16 %v245
  %v1999 = vunpack.c.l.b16 %v246
  %v2000 = vunpack.c.h.b16 %v246
  %v2001 = vunpack.c.l.b16 %v247
  %v2002 = vunpack.c.h.b16 %v247
  %v2003 = vunpack.c.l.b16 %v248
  %v2004 = vunpack.c.h.b16 %v248
  %v2005 = vunpack.c.l.b16 %v249
  %v2006 = vunpack.c.h.b16 %v249
  %v2007 = vunpack.c.l.b16 %v250
  %v2008 = vunpack.c.h.b16 %v250
  %v2009 = vunpack.c.l.b16 %v251
  %v2010 = vunpack.c.h.b16 %v251
  %v2011 = vunpack.c.l.b16 %v252
  %v2012 = vunpack.c.h.b16 %v252
  %v2013 = vunpack.c.l.b16 %v253
  %v2014 = vunpack.c.h.b16 %v253
  %v2015 = vunpack.c.l.b16 %v254
  %v2016 = vunpack.c.h.b16 %v254
  %v2017 = vunpack.c.l.b16 %v255
  %v2018 = vunpack.c.h.b16 %v255
  %v2019 = vunpack.c.l.b16 %v256
  %v2020 = vunpack.c.h.b16 %v256
  %v2021 = vunpack.c.l.b16 %v257
  %v2022 = vunpack.c.h.b16 %v257
  %v2023 = vunpack.c.l.b16 %v258
  %v2024 = vunpack.c.h.b16 %v258
  %v2025 = vunpack.c.l.b16 %v259
  %v2026 = vunpack.c.h.b16 %v259
  %v2027 = vunpack.c.l.b16 %v260
  %v2028 = vunpack.c.h.b16 %v260
  %v2029 = vunpack.c.l.b16 %v261
  %v2030 = vunpack.c.h.b16 %v261
  %v2031 = vunpack.c.l.b16 %v262
  %v2032 = vunpack.c.h.b16 %v262
  %v2033 = vunpack.c.l.b16 %v263
  %v2034 = vunpack.c.h.b16 %v263
  %v2035 = vunpack.c.l.b16 %v264
  %v2036 = vunpack.c.h.b16 %v264
  %v2037 = vunpack.c.l.b16 %v265
  %v2038 = vunpack.c.h.b16 %v265
  %v2039 = vunpack.c.l.b16 %v266
  %v2040 = vunpack.c.h.b16 %v266
  %v2041 = vunpack.c.l.b16 %v267
  %v2042 = vunpack.c.h.b16 %v267
  %v2043 = vunpack.c.l.b16 %v268
  %v2044 = vunpack.c.h.b16 %v268
  %v2045 = vunpack.c.l.b16 %v269
  %v2046 = vunpack.c.h.b16 %v269
  %v2047 = vunpack.c.l.b16 %v270
  %v2048 = vunpack.c.h.b16 %v270
  %v2049 = vunpack.c.l.b16 %v271
  %v2050 = vunpack.c.h.b16 %v271
  %v2051 = vunpack.c.l.b16 %v272
  %v2052 = vunpack.c.h.b16 %v272
  %v2053 = vunpack.c.l.b16 %v273
  %v2054 = vunpack.c.h.b16 %v273
  %v2055 = vunpack.c.l.b16 %v274
  %v2056 = vunpack.c.h.b16 %v274
  %v2057 = vunpack.c.l.b16 %v275
  %v2058 = vunpack.c.h.b16 %v275
  %v2059 = vunpack.c.l.b16 %v276
  %v2060 = vunpack.c.h.b16 %v276
  %v2061 = vunpack.c.l.b16 %v277
  %v2062 = vunpack.c.h.b16 %v277
  %v2063 = vunpack.c.l.b16 %v278
  %v2064 = vunpack.c.h.b16 %v278
  %v2065 = vunpack.c.l.b16 %v279
  %v2066 = vunpack.c.h.b16 %v279
  %v2067 = vunpack.c.l.b16 %v280
  %v2068 = vunpack.c.h.b16 %v280
  %v2069 = vunpack.c.l.b16 %v281
  %v2070 = vunpack.c.h.b16 %v281
  %v2071 = vunpack.c.l.b16 %v282
  %v2072 = vunpack.c.h.b16 %v282
  %v2073 = vunpack.c.l.b16 %v283
  %v2074 = vunpack.c.h.b16 %v283
  %v2075 = vunpack.c.l.b16 %v284
  %v2076 = vunpack.c.h.b16 %v284
  %v2077 = vunpack.c.l.b16 %v285
  %v2078 = vunpack.c.h.b16 %v285
  %v2079 = vunpack.c.l.b16 %v286
  %v2080 = vunpack.c.h.b16 %v286
  %v2081 = vunpack.c.l.b16 %v287
  %v2082 = vunpack.c.h.b16 %v287
  %v2083 = vunpack.c.l.b16 %v288
  %v2084 = vunpack.c.h.b16 %v288
  %v2085 = vunpack.c.l.b16 %v289
  %v2086 = vunpack.c.h.b16 %v289
  %v2087 = vunpack.c.l.b16 %v290
  %v2088 = vunpack.c.h.b16 %v290
  %v2089 = vunpack.c.l.b16 %v291
  %v2090 = vunpack.c.h.b16 %v291
  %v2091 = vunpack.c.l.b16 %v292
  %v2092 = vunpack.c.h.b16 %v292
  %v2093 = vunpack.c.l.b16 %v293
  %v2094 = vunpack.c.h.b16 %v293
  %v2095 = vunpack.c.l.b16 %v294
  %v2096 = vunpack.c.h.b16 %v294
  %v2097 = vunpack.c.l.b16 %v295
  %v2098 = vunpack.c.h.b16 %v295
  %v2099 = vunpack.c.l.b16 %v296
  %v2100 = vunpack.c.h.b16 %v296
  %v2101 = vunpack.c.l.b16 %v297
  %v2102 = vunpack.c.h.b16 %v297
  %v2103 = vunpack.c.l.b16 %v298
  %v2104 = vunpack.c.h.b16 %v298
  %v2105 = vunpack.c.l.b16 %v299
  %v2106 = vunpack.c.h.b16 %v299
  %v2107 = vunpack.c.l.b16 %v300
  %v2108 = vunpack.c.h.b16 %v300
  %v2109 = vunpack.c.l.b16 %v301
  %v2110 = vunpack.c.h.b16 %v301
  %v2111 = vunpack.c.l.b16 %v302
  %v2112 = vunpack.c.h.b16 %v302
  %v2113 = vunpack.c.l.b16 %v303
  %v2114 = vunpack.c.h.b16 %v303
  %v2115 = vunpack.c.l.b16 %v304
  %v2116 = vunpack.c.h.b16 %v304
  %v2117 = vunpack.c.l.b16 %v305
  %v2118 = vunpack.c.h.b16 %v305
  %v2119 = vunpack.c.l.b16 %v306
  %v2120 = vunpack.c.h.b16 %v306
  %v2121 = vunpack.c.l.b16 %v307
  %v2122 = vunpack.c.h.b16 %v307
  %v2123 = vunpack.c.l.b16 %v308
  %v2124 = vunpack.c.h.b16 %v308
  %v2125 = vunpack.c.l.b16 %v309
  %v2126 = vunpack.c.h.b16 %v309
  %v2127 = vunpack.c.l.b16 %v310
  %v2128 = vunpack.c.h.b16 %v310
  %v2129 = vunpack.c.l.b16 %v311
  %v2130 = vunpack.c.h.b16 %v311
  %v2131 = vunpack.c.l.b16 %v312
  %v2132 = vunpack.c.h.b16 %v312
  %v2133 = vunpack.c.l.b16 %v313
  %v2134 = vunpack.c.h.b16 %v313
  %v2135 = vunpack.c.l.b16 %v314
  %v2136 = vunpack.c.h.b16 %v314
  %v2137 = vunpack.c.l.b16 %v315
  %v2138 = vunpack.c.h.b16 %v315
  %v2139 = vunpack.c.l.b16 %v316
  %v2140 = vunpack.c.h.b16 %v316
  %v2141 = vunpack.c.l.b16 %v317
  %v2142 = vunpack.c.h.b16 %v317
  %v2143 = vunpack.c.l.b16 %v318
  %v2144 = vunpack.c.h.b16 %v318
  %v2145 = vunpack.c.l.b16 %v319
  %v2146 = vunpack.c.h.b16 %v319
  %v2147 = vunpack.c.l.b16 %v320
  %v2148 = vunpack.c.h.b16 %v320
  %v2149 = vunpack.c.l.b16 %v321
  %v2150 = vunpack.c.h.b16 %v321
  %v2151 = vunpack.c.l.b16 %v322
  %v2152 = vunpack.c.h.b16 %v322
  %v2153 = vunpack.c.l.b16 %v323
  %v2154 = vunpack.c.h.b16 %v323
  %v2155 = vunpack.c.l.b16 %v324
  %v2156 = vunpack.c.h.b16 %v324
  %v2157 = vunpack.c.l.b16 %v325
  %v2158 = vunpack.c.h.b16 %v325
  %v2159 = vunpack.c.l.b16 %v326
  %v2160 = vunpack.c.h.b16 %v326
  %v2161 = vunpack.c.l.b16 %v327
  %v2162 = vunpack.c.h.b16 %v327
  %v2163 = vunpack.c.l.b16 %v328
  %v2164 = vunpack.c.h.b16 %v328
  %v2165 = vunpack.c.l.b16 %v329
  %v2166 = vunpack.c.h.b16 %v329
  %v2167 = vunpack.c.l.b16 %v330
  %v2168 = vunpack.c.h.b16 %v330
  %v2169 = vunpack.c.l.b16 %v331
  %v2170 = vunpack.c.h.b16 %v331
  %v2171 = vunpack.c.l.b16 %v332
  %v2172 = vunpack.c.h.b16 %v332
  %v2173 = vunpack.c.l.b16 %v333
  %v2174 = vunpack.c.h.b16 %v333
  %v2175 = vunpack.c.l.b16 %v334
  %v2176 = vunpack.c.h.b16 %v334
  %v2177 = vunpack.c.l.b16 %v335
  %v2178 = vunpack.c.h.b16 %v335
  %v2179 = vunpack.c.l.b16 %v336
  %v2180 = vunpack.c.h.b16 %v336
  %v2181 = vunpack.c.l.b16 %v337
  %v2182 = vunpack.c.h.b16 %v337
  %v2183 = vunpack.c.l.b16 %v338
  %v2184 = vunpack.c.h.b16 %v338
  %v2185 = vunpack.c.l.b16 %v339
  %v2186 = vunpack.c.h.b16 %v339
  %v2187 = vunpack.c.l.b16 %v340
  %v2188 = vunpack.c.h.b16 %v340
  %v2189 = vunpack.c.l.b16 %v341
  %v2190 = vunpack.c.h.b16 %v341
  %v2191 = vunpack.c.l.b16 %v342
  %v2192 = vunpack.c.h.b16 %v342
  %v2193 = vunpack.c.l.b16 %v343
  %v2194 = vunpack.c.h.b16 %v343
  %v2195 = vunpack.c.l.b16 %v344
  %v2196 = vunpack.c.h.b16 %v344
  %v2197 = vunpack.c.l.b16 %v345
  %v2198 = vunpack.c.h.b16 %v345
  %v2199 = vunpack.c.l.b16 %v346
  %v2200 = vunpack.c.h.b16 %v346
  %v2201 = vunpack.c.l.b16 %v347
  %v2202 = vunpack.c.h.b16 %v347
  %v2203 = vunpack.c.l.b16 %v348
  %v2204 = vunpack.c.h.b16 %v348
  %v2205 = vunpack.c.l.b16 %v349
  %v2206 = vunpack.c.h.b16 %v349
  %v2207 = vunpack.c.l.b16 %v350
  %v2208 = vunpack.c.h.b16 %v350
  %v2209 = vunpack.c.l.b16 %v351
  %v2210 = vunpack.c.h.b16 %v351
  %v2211 = vunpack.c.l.b16 %v352
  %v2212 = vunpack.c.h.b16 %v352
  %v2213 = vunpack.c.l.b16 %v353
  %v2214 = vunpack.c.h.b16 %v353
  %v2215 = vunpack.c.l.b16 %v354
  %v2216 = vunpack.c.h.b16 %v354
  %v2217 = vunpack.c.l.b16 %v355
  %v2218 = vunpack.c.h.b16 %v355
  %v2219 = vunpack.c.l.b16 %v356
  %v2220 = vunpack.c.h.b16 %v356
  %v2221 = vunpack.c.l.b16 %v357
  %v2222 = vunpack.c.h.b16 %v357
  %v2223 = vunpack.c.l.b16 %v358
  %v2224 = vunpack.c.h.b16 %v358
  %v2225 = vunpack.c.l.b16 %v359
  %v2226 = vunpack.c.h.b16 %v359
  %v2227 = vunpack.c.l.b16 %v360
  %v2228 = vunpack.c.h.b16 %v360
  %v2229 = vunpack.c.l.b16 %v361
  %v2230 = vunpack.c.h.b16 %v361
  %v2231 = vunpack.c.l.b16 %v362
  %v2232 = vunpack.c.h.b16 %v362
  %v2233 = vunpack.c.l.b16 %v363
  %v2234 = vunpack.c.h.b16 %v363
  %v2235 = vunpack.c.l.b16 %v364
  %v2236 = vunpack.c.h.b16 %v364
  %v2237 = vunpack.c.l.b16 %v365
  %v2238 = vunpack.c.h.b16 %v365
  %v2239 = vunpack.c.l.b16 %v366
  %v2240 = vunpack.c.h.b16 %v366
  %v2241 = vunpack.c.l.b16 %v367
  %v2242 = vunpack.c.h.b16 %v367
  %v2243 = vunpack.c.l.b16 %v368
  %v2244 = vunpack.c.h.b16 %v368
  %v2245 = vunpack.c.l.b16 %v369
  %v2246 = vunpack.c.h.b16 %v369
  %v2247 = vunpack.c.l.b16 %v370
  %v2248 = vunpack.c.h.b16 %v370
  %v2249 = vunpack.c.l.b16 %v371
  %v2250 = vunpack.c.h.b16 %v371
  %v2251 = vunpack.c.l.b16 %v372
  %v2252 = vunpack.c.h.b16 %v372
  %v2253 = vunpack.c.l.b16 %v373
  %v2254 = vunpack.c.h.b16 %v373
  %v2255 = vunpack.c.l.b16 %v374
  %v2256 = vunpack.c.h.b16 %v374
  %v2257 = vunpack.c.l.b16 %v375
  %v2258 = vunpack.c.h.b16 %v375
  %v2259 = vunpack.c.l.b16 %v376
  %v2260 = vunpack.c.h.b16 %v376
  %v2261 = vunpack.c.l.b16 %v377
  %v2262 = vunpack.c.h.b16 %v377
  %v2263 = vunpack.c.l.b16 %v378
  %v2264 = vunpack.c.h.b16 %v378
  %v2265 = vunpack.c.l.b16 %v379
  %v2266 = vunpack.c.h.b16 %v379
  %v2267 = vunpack.c.l.b16 %v380
  %v2268 = vunpack.c.h.b16 %v380
  %v2269 = vunpack.c.l.b16 %v381
  %v2270 = vunpack.c.h.b16 %v381
  %v2271 = vunpack.c.l.b16 %v382
  %v2272 = vunpack.c.h.b16 %v382
  %v2273 = vunpack.c.l.b16 %v383
  %v2274 = vunpack.c.h.b16 %v383
  %v2275 = vunpack.c.l.b16 %v384
  %v2276 = vunpack.c.h.b16 %v384
  %v2277 = vunpack.c.l.b16 %v385
  %v2278 = vunpack.c.h.b16 %v385
  %v2279 = vunpack.c.l.b16 %v386
  %v2280 = vunpack.c.h.b16 %v386
  %v2281 = vunpack.c.l.b16 %v387
  %v2282 = vunpack.c.h.b16 %v387
  %v2283 = vunpack.c.l.b16 %v388
  %v2284 = vunpack.c.h.b16 %v388
  %v2285 = vunpack.c.l.b16 %v389
  %v2286 = vunpack.c.h.b16 %v389
  %v2287 = vunpack.c.l.b16 %v390
  %v2288 = vunpack.c.h.b16 %v390
  %v2289 = vunpack.c.l.b16 %v391
  %v2290 = vunpack.c.h.b16 %v391
  %v2291 = vunpack.c.l.b16 %v392
  %v2292 = vunpack.c.h.b16 %v392
  %v2293 = vunpack.c.l.b16 %v393
  %v2294 = vunpack.c.h.b16 %v393
  %v2295 = vunpack.c.l.b16 %v394
  %v2296 = vunpack.c.h.b16 %v394
  %v2297 = vunpack.c.l.b16 %v395
  %v2298 = vunpack.c.h.b16 %v395
  %v2299 = vunpack.c.l.b16 %v396
  %v2300 = vunpack.c.h.b16 %v396
  %v2301 = vunpack.c.l.b16 %v397
  %v2302 = vunpack.c.h.b16 %v397
  %v2303 = vunpack.c.l.b16 %v398
  %v2304 = vunpack.c.h.b16 %v398
  %v2305 = vunpack.c.l.b16 %v399
  %v2306 = vunpack.c.h.b16 %v399
  %v2307 = vunpack.c.l.b16 %v400
  %v2308 = vunpack.c.h.b16 %v400
  %v2309 = vunpack.c.l.b16 %v401
  %v2310 = vunpack.c.h.b16 %v401
  %v2311 = vunpack.c.l.b16 %v402
  %v2312 = vunpack.c.h.b16 %v402
  %v2313 = vunpack.c.l.b16 %v403
  %v2314 = vunpack.c.h.b16 %v403
  %v2315 = vunpack.c.l.b16 %v404
  %v2316 = vunpack.c.h.b16 %v404
  %v2317 = vunpack.c.l.b16 %v405
  %v2318 = vunpack.c.h.b16 %v405
  %v2319 = vunpack.c.l.b16 %v406
  %v2320 = vunpack.c.h.b16 %v406
  %v2321 = vunpack.c.l.b16 %v407
  %v2322 = vunpack.c.h.b16 %v407
  %v2323 = vunpack.c.l.b16 %v408
  %v2324 = vunpack.c.h.b16 %v408
  %v2325 = vunpack.c.l.b16 %v409
  %v2326 = vunpack.c.h.b16 %v409
  %v2327 = vunpack.c.l.b16 %v410
  %v2328 = vunpack.c.h.b16 %v410
  %v2329 = vunpack.c.l.b16 %v411
  %v2330 = vunpack.c.h.b16 %v411
  %v2331 = vunpack.c.l.b16 %v412
  %v2332 = vunpack.c.h.b16 %v412
  %v2333 = vunpack.c.l.b16 %v413
  %v2334 = vunpack.c.h.b16 %v413
  %v2335 = vunpack.c.l.b16 %v414
  %v2336 = vunpack.c.h.b16 %v414
  %v2337 = vunpack.c.l.b16 %v415
  %v2338 = vunpack.c.h.b16 %v415
  %v2339 = vunpack.c.l.b16 %v416
  %v2340 = vunpack.c.h.b16 %v416
  %v2341 = vunpack.c.l.b16 %v417
  %v2342 = vunpack.c.h.b16 %v417
  %v2343 = vunpack.c.l.b16 %v418
  %v2344 = vunpack.c.h.b16 %v418
  %v2345 = vunpack.c.l.b16 %v419
  %v2346 = vunpack.c.h.b16 %v419
  %v2347 = vunpack.c.l.b16 %v420
  %v2348 = vunpack.c.h.b16 %v420
  %v2349 = vunpack.c.l.b16 %v421
  %v2350 = vunpack.c.h.b16 %v421
  %v2351 = vunpack.c.l.b16 %v422
  %v2352 = vunpack.c.h.b16 %v422
  %v2353 = vunpack.c.l.b16 %v423
  %v2354 = vunpack.c.h.b16 %v423
  %v2355 = vunpack.c.l.b16 %v424
  %v2356 = vunpack.c.h.b16 %v424
  %v2357 = vunpack.c.l.b16 %v425
  %v2358 = vunpack.c.h.b16 %v425
  %v2359 = vunpack.c.l.b16 %v426
  %v2360 = vunpack.c.h.b16 %v426
  %v2361 = vunpack.c.l.b16 %v427
  %v2362 = vunpack.c.h.b16 %v427
  %v2363 = vunpack.c.l.b16 %v428
  %v2364 = vunpack.c.h.b16 %v428
  %v2365 = vunpack.c.l.b16 %v429
  %v2366 = vunpack.c.h.b16 %v429
  %v2367 = vunpack.c.l.b16 %v430
  %v2368 = vunpack.c.h.b16 %v430
  %v2369 = vunpack.c.l.b16 %v431
  %v2370 = vunpack.c.h.b16 %v431
  %v2371 = vunpack.c.l.b16 %v432
  %v2372 = vunpack.c.h.b16 %v432
  %v2373 = vunpack.c.l.b16 %v433
  %v2374 = vunpack.c.h.b16 %v433
  %v2375 = vunpack.c.l.b16 %v434
  %v2376 = vunpack.c.h.b16 %v434
  %v2377 = vunpack.c.l.b16 %v435
  %v2378 = vunpack.c.h.b16 %v435
  %v2379 = vunpack.c.l.b16 %v436
  %v2380 = vunpack.c.h.b16 %v436
  %v2381 = vunpack.c.l.b16 %v437
  %v2382 = vunpack.c.h.b16 %v437
  %v2383 = vunpack.c.l.b16 %v438
  %v2384 = vunpack.c.h.b16 %v438
  %v2385 = vunpack.c.l.b16 %v439
  %v2386 = vunpack.c.h.b16 %v439
  %v2387 = vunpack.c.l.b16 %v440
  %v2388 = vunpack.c.h.b16 %v440
  %v2389 = vunpack.c.l.b16 %v441
  %v2390 = vunpack.c.h.b16 %v441
  %v2391 = vunpack.c.l.b16 %v442
  %v2392 = vunpack.c.h.b16 %v442
  %v2393 = vunpack.c.l.b16 %v443
  %v2394 = vunpack.c.h.b16 %v443
  %v2395 = vunpack.c.l.b16 %v444
  %v2396 = vunpack.c.h.b16 %v444
  %v2397 = vunpack.c.l.b16 %v445
  %v2398 = vunpack.c.h.b16 %v445
  %v2399 = vunpack.c.l.b16 %v446
  %v2400 = vunpack.c.h.b16 %v446
  %v2401 = vunpack.c.l.b16 %v447
  %v2402 = vunpack.c.h.b16 %v447
  %v2403 = vunpack.c.l.b16 %v448
  %v2404 = vunpack.c.h.b16 %v448
  %v2405 = vunpack.c.l.b16 %v449
  %v2406 = vunpack.c.h.b16 %v449
  %v2407 = vunpack.c.l.b16 %v450
  %v2408 = vunpack.c.h.b16 %v450
  %v2409 = vunpack.c.l.b16 %v451
  %v2410 = vunpack.c.h.b16 %v451
  %v2411 = vunpack.c.l.b16 %v452
  %v2412 = vunpack.c.h.b16 %v452
  %v2413 = vunpack.c.l.b16 %v453
  %v2414 = vunpack.c.h.b16 %v453
  %v2415 = vunpack.c.l.b16 %v454
  %v2416 = vunpack.c.h.b16 %v454
  %v2417 = vunpack.c.l.b16 %v455
  %v2418 = vunpack.c.h.b16 %v455
  %v2419 = vunpack.c.l.b16 %v456
  %v2420 = vunpack.c.h.b16 %v456
  %v2421 = vunpack.c.l.b16 %v457
  %v2422 = vunpack.c.h.b16 %v457
  %v2423 = vunpack.c.l.b16 %v458
  %v2424 = vunpack.c.h.b16 %v458
  %v2425 = vunpack.c.l.b16 %v459
  %v2426 = vunpack.c.h.b16 %v459
  %v2427 = vunpack.c.l.b16 %v460
  %v2428 = vunpack.c.h.b16 %v460
  %v2429 = vunpack.c.l.b16 %v461
  %v2430 = vunpack.c.h.b16 %v461
  %v2431 = vunpack.c.l.b16 %v462
  %v2432 = vunpack.c.h.b16 %v462
  %v2433 = vunpack.c.l.b16 %v463
  %v2434 = vunpack.c.h.b16 %v463
  %v2435 = vunpack.c.l.b16 %v464
  %v2436 = vunpack.c.h.b16 %v464
  %v2437 = vunpack.c.l.b16 %v465
  %v2438 = vunpack.c.h.b16 %v465
  %v2439 = vunpack.c.l.b16 %v466
  %v2440 = vunpack.c.h.b16 %v466
  %v2441 = vunpack.c.l.b16 %v467
  %v2442 = vunpack.c.h.b16 %v467
  %v2443 = vunpack.c.l.b16 %v468
  %v2444 = vunpack.c.h.b16 %v468
  %v2445 = vunpack.c.l.b16 %v469
  %v2446 = vunpack.c.h.b16 %v469
  %v2447 = vunpack.c.l.b16 %v470
  %v2448 = vunpack.c.h.b16 %v470
  %v2449 = vunpack.c.l.b16 %v471
  %v2450 = vunpack.c.h.b16 %v471
  %v2451 = vunpack.c.l.b16 %v472
  %v2452 = vunpack.c.h.b16 %v472
  %v2453 = vunpack.c.l.b16 %v473
  %v2454 = vunpack.c.h.b16 %v473
  %v2455 = vunpack.c.l.b16 %v474
  %v2456 = vunpack.c.h.b16 %v474
  %v2457 = vunpack.c.l.b16 %v475
  %v2458 = vunpack.c.h.b16 %v475
  %v2459 = vunpack.c.l.b16 %v476
  %v2460 = vunpack.c.h.b16 %v476
  %v2461 = vunpack.c.l.b16 %v477
  %v2462 = vunpack.c.h.b16 %v477
  %v2463 = vunpack.c.l.b16 %v478
  %v2464 = vunpack.c.h.b16 %v478
  %v2465 = vunpack.c.l.b16 %v479
  %v2466 = vunpack.c.h.b16 %v479
  %v2467 = vunpack.c.l.b16 %v480
  %v2468 = vunpack.c.h.b16 %v480
  %v2469 = vunpack.c.l.b16 %v481
  %v2470 = vunpack.c.h.b16 %v481
  %v2471 = vunpack.c.l.b16 %v482
  %v2472 = vunpack.c.h.b16 %v482
  %v2473 = vunpack.c.l.b16 %v483
  %v2474 = vunpack.c.h.b16 %v483
  %v2475 = vunpack.c.l.b16 %v484
  %v2476 = vunpack.c.h.b16 %v484
  %v2477 = vunpack.c.l.b16 %v485
  %v2478 = vunpack.c.h.b16 %v485
  %v2479 = vunpack.c.l.b16 %v486
  %v2480 = vunpack.c.h.b16 %v486
  %v2481 = vunpack.c.l.b16 %v487
  %v2482 = vunpack.c.h.b16 %v487
  %v2483 = vunpack.c.l.b16 %v488
  %v2484 = vunpack.c.h.b16 %v488
  %v2485 = vunpack.c.l.b16 %v489
  %v2486 = vunpack.c.h.b16 %v489
  %v2487 = vunpack.c.l.b16 %v490
  %v2488 = vunpack.c.h.b16 %v490
  %v2489 = vunpack.c.l.b16 %v491
  %v2490 = vunpack.c.h.b16 %v491
  %v2491 = vunpack.c.l.b16 %v492
  %v2492 = vunpack.c.h.b16 %v492
  %v2493 = vunpack.c.l.b16 %v493
  %v2494 = vunpack.c.h.b16 %v493
  %v2495 = vunpack.c.l.b16 %v494
  %v2496 = vunpack.c.h.b16 %v494
  %v2497 = vunpack.c.l.b16 %v495
  %v2498 = vunpack.c.h.b16 %v495
  %v2499 = vunpack.c.l.b16 %v496
  %v2500 = vunpack.c.h.b16 %v496
  %v2501 = vunpack.c.l.b16 %v497
  %v2502 = vunpack.c.h.b16 %v497
  %v2503 = vunpack.c.l.b16 %v498
  %v2504 = vunpack.c.h.b16 %v498
  %v2505 = vunpack.c.l.b16 %v499
  %v2506 = vunpack.c.h.b16 %v499
  %v2507 = vunpack.c.l.b16 %v500
  %v2508 = vunpack.c.h.b16 %v500
  %v2509 = vunpack.c.l.b16 %v501
  %v2510 = vunpack.c.h.b16 %v501
  %v2511 = vunpack.c.l.b16 %v502
  %v2512 = vunpack.c.h.b16 %v502
  %v2513 = vunpack.c.l.b16 %v503
  %v2514 = vunpack.c.h.b16 %v503
  %v2515 = vunpack.c.l.b16 %v504
  %v2516 = vunpack.c.h.b16 %v504
  %v2517 = vunpack.c.l.b16 %v505
  %v2518 = vunpack.c.h.b16 %v505
  %v2519 = vunpack.c.l.b16 %v506
  %v2520 = vunpack.c.h.b16 %v506
  %v2521 = vunpack.c.l.b16 %v507
  %v2522 = vunpack.c.h.b16 %v507
  %v2523 = vunpack.c.l.b16 %v508
  %v2524 = vunpack.c.h.b16 %v508
  %v2525 = vunpack.c.l.b16 %v509
  %v2526 = vunpack.c.h.b16 %v509
  %v2527 = vunpack.c.l.b16 %v510
  %v2528 = vunpack.c.h.b16 %v510
  %v2529 = vunpack.c.l.b16 %v511
  %v2530 = vunpack.c.h.b16 %v511
  %v2531 = vunpack.c.l.b16 %v512
  %v2532 = vunpack.c.h.b16 %v512
  %v2533 = vunpack.c.l.b16 %v513
  %v2534 = vunpack.c.h.b16 %v513
  %v2535 = vunpack.c.l.b16 %v514
  %v2536 = vunpack.c.h.b16 %v514
  %v2537 = vunpack.c.l.b16 %v515
  %v2538 = vunpack.c.h.b16 %v515
  %v2539 = vunpack.c.l.b16 %v516
  %v2540 = vunpack.c.h.b16 %v516
  %v2541 = vunpack.c.l.b16 %v517
  %v2542 = vunpack.c.h.b16 %v517
  %v2543 = vunpack.c.l.b16 %v518
  %v2544 = vunpack.c.h.b16 %v518
  %v2545 = vunpack.c.l.b16 %v519
  %v2546 = vunpack.c.h.b16 %v519
  %v2547 = vunpack.c.l.b16 %v520
  %v2548 = vunpack.c.h.b16 %v520
  %v2549 = vunpack.c.l.b16 %v521
  %v2550 = vunpack.c.h.b16 %v521
  %v2551 = vunpack.c.l.b16 %v522
  %v2552 = vunpack.c.h.b16 %v522
  %v2553 = vunpack.c.l.b16 %v523
  %v2554 = vunpack.c.h.b16 %v523
  %v2555 = vunpack.c.l.b16 %v524
  %v2556 = vunpack.c.h.b16 %v524
  %v2557 = vunpack.c.l.b16 %v525
  %v2558 = vunpack.c.h.b16 %v525
  %v2559 = vunpack.c.l.b16 %v526
  %v2560 = vunpack.c.h.b16 %v526
  %v2561 = vunpack.c.l.b16 %v527
  %v2562 = vunpack.c.h.b16 %v527
  %v2563 = vunpack.c.l.b16 %v528
  %v2564 = vunpack.c.h.b16 %v528
  %v2565 = vunpack.c.l.b16 %v529
  %v2566 = vunpack.c.h.b16 %v529
  %v2567 = vunpack.c.l.b16 %v530
  %v2568 = vunpack.c.h.b16 %v530
  %v2569 = vunpack.c.l.b16 %v531
  %v2570 = vunpack.c.h.b16 %v531
  %v2571 = vunpack.c.l.b16 %v532
  %v2572 = vunpack.c.h.b16 %v532
  %v2573 = vunpack.c.l.b16 %v533
  %v2574 = vunpack.c.h.b16 %v533
  %v2575 = vunpack.c.l.b16 %v534
  %v2576 = vunpack.c.h.b16 %v534
  %v2577 = vunpack.c.l.b16 %v535
  %v2578 = vunpack.c.h.b16 %v535
  %v2579 = vunpack.c.l.b16 %v536
  %v2580 = vunpack.c.h.b16 %v536
  %v2581 = vunpack.c.l.b16 %v537
  %v2582 = vunpack.c.h.b16 %v537
  %v2583 = vunpack.c.l.b16 %v538
  %v2584 = vunpack.c.h.b16 %v538
  %v2585 = vunpack.c.l.b16 %v539
  %v2586 = vunpack.c.h.b16 %v539
  %v2587 = vunpack.c.l.b16 %v540
  %v2588 = vunpack.c.h.b16 %v540
  %v2589 = vunpack.c.l.b16 %v541
  %v2590 = vunpack.c.h.b16 %v541
  %v2591 = vunpack.c.l.b16 %v542
  %v2592 = vunpack.c.h.b16 %v542
  %v2593 = vunpack.c.l.b16 %v543
  %v2594 = vunpack.c.h.b16 %v543
  %v2595 = vunpack.c.l.b16 %v544
  %v2596 = vunpack.c.h.b16 %v544
  %v2597 = vunpack.c.l.b16 %v545
  %v2598 = vunpack.c.h.b16 %v545
  %v2599 = vunpack.c.l.b16 %v546
  %v2600 = vunpack.c.h.b16 %v546
  %v2601 = vunpack.c.l.b16 %v547
  %v2602 = vunpack.c.h.b16 %v547
  %v2603 = vunpack.c.l.b16 %v548
  %v2604 = vunpack.c.h.b16 %v548
  %v2605 = vunpack.c.l.b16 %v549
  %v2606 = vunpack.c.h.b16 %v549
  %v2607 = vunpack.c.l.b16 %v550
  %v2608 = vunpack.c.h.b16 %v550
  %v2609 = vunpack.c.l.b16 %v551
  %v2610 = vunpack.c.h.b16 %v551
  %v2611 = vunpack.c.l.b16 %v552
  %v2612 = vunpack.c.h.b16 %v552
  %v2613 = vunpack.c.l.b16 %v553
  %v2614 = vunpack.c.h.b16 %v553
  %v2615 = vunpack.c.l.b16 %v554
  %v2616 = vunpack.c.h.b16 %v554
  %v2617 = vunpack.c.l.b16 %v555
  %v2618 = vunpack.c.h.b16 %v555
  %v2619 = vunpack.c.l.b16 %v556
  %v2620 = vunpack.c.h.b16 %v556
  %v2621 = vunpack.c.l.b16 %v557
  %v2622 = vunpack.c.h.b16 %v557
  %v2623 = vunpack.c.l.b16 %v558
  %v2624 = vunpack.c.h.b16 %v558
  %v2625 = vunpack.c.l.b16 %v559
  %v2626 = vunpack.c.h.b16 %v559
  %v2627 = vunpack.c.l.b16 %v560
  %v2628 = vunpack.c.h.b16 %v560
  %v2629 = vunpack.c.l.b16 %v561
  %v2630 = vunpack.c.h.b16 %v561
  %v2631 = vunpack.c.l.b16 %v562
  %v2632 = vunpack.c.h.b16 %v562
  %v2633 = vunpack.c.l.b16 %v563
  %v2634 = vunpack.c.h.b16 %v563
  %v2635 = vunpack.c.l.b16 %v564
  %v2636 = vunpack.c.h.b16 %v564
  %v2637 = vunpack.c.l.b16 %v565
  %v2638 = vunpack.c.h.b16 %v565
  %v2639 = vunpack.c.l.b16 %v566
  %v2640 = vunpack.c.h.b16 %v566
  %v2641 = vunpack.c.l.b16 %v567
  %v2642 = vunpack.c.h.b16 %v567
  %v2643 = vunpack.c.l.b16 %v568
  %v2644 = vunpack.c.h.b16 %v568
  %v2645 = vunpack.c.l.b16 %v569
  %v2646 = vunpack.c.h.b16 %v569
  %v2647 = vunpack.c.l.b16 %v570
  %v2648 = vunpack.c.h.b16 %v570
  %v2649 = vunpack.c.l.b16 %v571
  %v2650 = vunpack.c.h.b16 %v571
  %v2651 = vunpack.c.l.b16 %v572
  %v2652 = vunpack.c.h.b16 %v572
  %v2653 = vunpack.c.l.b16 %v573
  %v2654 = vunpack.c.h.b16 %v573
  %v2655 = vunpack.c.l.b16 %v574
  %v2656 = vunpack.c.h.b16 %v574
  %v2657 = vunpack.c.l.b16 %v575
  %v2658 = vunpack.c.h.b16 %v575
  %v2659 = vunpack.c.l.b16 %v576
  %v2660 = vunpack.c.h.b16 %v576
  %v2661 = vunpack.c.l.b16 %v577
  %v2662 = vunpack.c.h.b16 %v577
  %v2663 = vunpack.c.l.b16 %v578
  %v2664 = vunpack.c.h.b16 %v578
  %v2665 = vunpack.c.l.b16 %v579
  %v2666 = vunpack.c.h.b16 %v579
  %v2667 = vunpack.c.l.b16 %v580
  %v2668 = vunpack.c.h.b16 %v580
  %v2669 = vunpack.c.l.b16 %v581
  %v2670 = vunpack.c.h.b16 %v581
  %v2671 = vunpack.c.l.b16 %v582
  %v2672 = vunpack.c.h.b16 %v582
  %v2673 = vunpack.c.l.b16 %v583
  %v2674 = vunpack.c.h.b16 %v583
  %v2675 = vunpack.c.l.b16 %v584
  %v2676 = vunpack.c.h.b16 %v584
  %v2677 = vunpack.c.l.b16 %v585
  %v2678 = vunpack.c.h.b16 %v585
  %v2679 = vunpack.c.l.b16 %v586
  %v2680 = vunpack.c.h.b16 %v586
  %v2681 = vunpack.c.l.b16 %v587
  %v2682 = vunpack.c.h.b16 %v587
  %v2683 = vunpack.c.l.b16 %v588
  %v2684 = vunpack.c.h.b16 %v588
  %v2685 = vunpack.c.l.b16 %v589
  %v2686 = vunpack.c.h.b16 %v589
  %v2687 = vunpack.c.l.b16 %v590
  %v2688 = vunpack.c.h.b16 %v590
  %v2689 = vunpack.c.l.b16 %v591
  %v2690 = vunpack.c.h.b16 %v591
  %v2691 = vunpack.c.l.b16 %v592
  %v2692 = vunpack.c.h.b16 %v592
  %v2693 = vunpack.c.l.b16 %v593
  %v2694 = vunpack.c.h.b16 %v593
  %v2695 = vunpack.c.l.b16 %v594
  %v2696 = vunpack.c.h.b16 %v594
  %v2697 = vunpack.c.l.b16 %v595
  %v2698 = vunpack.c.h.b16 %v595
  %v2699 = vunpack.c.l.b16 %v596
  %v2700 = vunpack.c.h.b16 %v596
  %v2701 = vunpack.c.l.b16 %v597
  %v2702 = vunpack.c.h.b16 %v597
  %v2703 = vunpack.c.l.b16 %v598
  %v2704 = vunpack.c.h.b16 %v598
  %v2705 = vunpack.c.l.b16 %v599
  %v2706 = vunpack.c.h.b16 %v599
  %v2707 = vunpack.c.l.b16 %v600
  %v2708 = vunpack.c.h.b16 %v600
  %v2709 = vunpack.c.l.b16 %v601
  %v2710 = vunpack.c.h.b16 %v601
  %v2711 = vunpack.c.l.b16 %v602
  %v2712 = vunpack.c.h.b16 %v602
  %v2713 = vunpack.c.l.b16 %v603
  %v2714 = vunpack.c.h.b16 %v603
  %v2715 = vunpack.c.l.b16 %v604
  %v2716 = vunpack.c.h.b16 %v604
  %v2717 = vunpack.c.l.b16 %v605
  %v2718 = vunpack.c.h.b16 %v605
  %v2719 = vunpack.c.l.b16 %v606
  %v2720 = vunpack.c.h.b16 %v606
  %v2721 = vunpack.c.l.b16 %v607
  %v2722 = vunpack.c.h.b16 %v607
  %v2723 = vunpack.c.l.b16 %v608
  %v2724 = vunpack.c.h.b16 %v608
  %v2725 = vunpack.c.l.b16 %v609
  %v2726 = vunpack.c.h.b16 %v609
  %v2727 = vunpack.c.l.b16 %v610
  %v2728 = vunpack.c.h.b16 %v610
  %v2729 = vunpack.c.l.b16 %v611
  %v2730 = vunpack.c.h.b16 %v611
  %v2731 = vunpack.c.l.b16 %v612
  %v2732 = vunpack.c.h.b16 %v612
  %v2733 = vunpack.c.l.b16 %v613
  %v2734 = vunpack.c.h.b16 %v613
  %v2735 = vunpack.c.l.b16 %v614
  %v2736 = vunpack.c.h.b16 %v614
  %v2737 = vunpack.c.l.b16 %v615
  %v2738 = vunpack.c.h.b16 %v615
  %v2739 = vunpack.c.l.b16 %v616
  %v2740 = vunpack.c.h.b16 %v616
  %v2741 = vunpack.c.l.b16 %v617
  %v2742 = vunpack.c.h.b16 %v617
  %v2743 = vunpack.c.l.b16 %v618
  %v2744 = vunpack.c.h.b16 %v618
  %v2745 = vunpack.c.l.b16 %v619
  %v2746 = vunpack.c.h.b16 %v619
  %v2747 = vunpack.c.l.b16 %v620
  %v2748 = vunpack.c.h.b16 %v620
  %v2749 = vunpack.c.l.b16 %v621
  %v2750 = vunpack.c.h.b16 %v621
  %v2751 = vunpack.c.l.b16 %v622
  %v2752 = vunpack.c.h.b16 %v622
  %v2753 = vunpack.c.l.b16 %v623
  %v2754 = vunpack.c.h.b16 %v623
  %v2755 = vunpack.c.l.b16 %v624
  %v2756 = vunpack.c.h.b16 %v624
  %v2757 = vunpack.c.l.b16 %v625
  %v2758 = vunpack.c.h.b16 %v625
  %v2759 = vunpack.c.l.b16 %v626
  %v2760 = vunpack.c.h.b16 %v626
  %v2761 = vunpack.c.l.b16 %v627
  %v2762 = vunpack.c.h.b16 %v627
  %v2763 = vunpack.c.l.b16 %v628
  %v2764 = vunpack.c.h.b16 %v628
  %v2765 = vunpack.c.l.b16 %v629
  %v2766 = vunpack.c.h.b16 %v629
  %v2767 = vunpack.c.l.b16 %v630
  %v2768 = vunpack.c.h.b16 %v630
  %v2769 = vunpack.c.l.b16 %v631
  %v2770 = vunpack.c.h.b16 %v631
  %v2771 = vunpack.c.l.b16 %v632
  %v2772 = vunpack.c.h.b16 %v632
  %v2773 = vunpack.c.l.b16 %v633
  %v2774 = vunpack.c.h.b16 %v633
  %v2775 = vunpack.c.l.b16 %v634
  %v2776 = vunpack.c.h.b16 %v634
  %v2777 = vunpack.c.l.b16 %v635
  %v2778 = vunpack.c.h.b16 %v635
  %v2779 = vunpack.c.l.b16 %v636
  %v2780 = vunpack.c.h.b16 %v636
  %v2781 = vunpack.c.l.b16 %v637
  %v2782 = vunpack.c.h.b16 %v637
  %v2783 = vunpack.c.l.b16 %v638
  %v2784 = vunpack.c.h.b16 %v638
  %v2785 = vunpack.c.l.b16 %v639
  %v2786 = vunpack.c.h.b16 %v639
  %v2787 = vunpack.c.l.b16 %v640
  %v2788 = vunpack.c.h.b16 %v640
  %v2789 = vunpack.c.l.b16 %v641
  %v2790 = vunpack.c.h.b16 %v641
  %v2791 = vunpack.c.l.b16 %v642
  %v2792 = vunpack.c.h.b16 %v642
  %v2793 = vunpack.c.l.b16 %v643
  %v2794 = vunpack.c.h.b16 %v643
  %v2795 = vunpack.c.l.b16 %v644
  %v2796 = vunpack.c.h.b16 %v644
  %v2797 = vunpack.c.l.b16 %v645
  %v2798 = vunpack.c.h.b16 %v645
  %v2799 = vunpack.c.l.b16 %v646
  %v2800 = vunpack.c.h.b16 %v646
  %v2801 = vunpack.c.l.b16 %v647
  %v2802 = vunpack.c.h.b16 %v647
  %v2803 = vunpack.c.l.b16 %v648
  %v2804 = vunpack.c.h.b16 %v648
  %v2805 = vunpack.c.l.b16 %v649
  %v2806 = vunpack.c.h.b16 %v649
  %v2807 = vunpack.c.l.b16 %v650
  %v2808 = vunpack.c.h.b16 %v650
  %v2809 = vunpack.c.l.b16 %v651
  %v2810 = vunpack.c.h.b16 %v651
  %v2811 = vunpack.c.l.b16 %v652
  %v2812 = vunpack.c.h.b16 %v652
  %v2813 = vunpack.c.l.b16 %v653
  %v2814 = vunpack.c.h.b16 %v653
  %v2815 = vunpack.c.l.b16 %v654
  %v2816 = vunpack.c.h.b16 %v654
  %v2817 = vunpack.c.l.b16 %v655
  %v2818 = vunpack.c.h.b16 %v655
  %v2819 = vunpack.c.l.b16 %v656
  %v2820 = vunpack.c.h.b16 %v656
  %v2821 = vunpack.c.l.b16 %v657
  %v2822 = vunpack.c.h.b16 %v657
  %v2823 = vunpack.c.l.b16 %v658
  %v2824 = vunpack.c.h.b16 %v658
  %v2825 = vunpack.c.l.b16 %v659
  %v2826 = vunpack.c.h.b16 %v659
  %v2827 = vunpack.c.l.b16 %v660
  %v2828 = vunpack.c.h.b16 %v660
  %v2829 = vunpack.c.l.b16 %v661
  %v2830 = vunpack.c.h.b16 %v661
  %v2831 = vunpack.c.l.b16 %v662
  %v2832 = vunpack.c.h.b16 %v662
  %v2833 = vunpack.c.l.b16 %v663
  %v2834 = vunpack.c.h.b16 %v663
  %v2835 = vunpack.c.l.b16 %v664
  %v2836 = vunpack.c.h.b16 %v664
  %v2837 = vunpack.c.l.b16 %v665
  %v2838 = vunpack.c.h.b16 %v665
  %v2839 = vunpack.c.l.b16 %v666
  %v2840 = vunpack.c.h.b16 %v666
  %v2841 = vunpack.c.l.b16 %v667
  %v2842 = vunpack.c.h.b16 %v667
  %v2843 = vunpack.c.l.b16 %v668
  %v2844 = vunpack.c.h.b16 %v668
  %v2845 = vunpack.c.l.b16 %v669
  %v2846 = vunpack.c.h.b16 %v669
  %v2847 = vunpack.c.l.b16 %v670
  %v2848 = vunpack.c.h.b16 %v670
  %v2849 = vunpack.c.l.b16 %v671
  %v2850 = vunpack.c.h.b16 %v671
  %v2851 = vunpack.c.l.b16 %v672
  %v2852 = vunpack.c.h.b16 %v672
  %v2853 = vunpack.c.l.b16 %v673
  %v2854 = vunpack.c.h.b16 %v673
  %v2855 = vunpack.c.l.b16 %v674
  %v2856 = vunpack.c.h.b16 %v674
  %v2857 = vunpack.c.l.b16 %v675
  %v2858 = vunpack.c.h.b16 %v675
  %v2859 = vunpack.c.l.b16 %v676
  %v2860 = vunpack.c.h.b16 %v676
  %v2861 = vunpack.c.l.b16 %v677
  %v2862 = vunpack.c.h.b16 %v677
  %v2863 = vunpack.c.l.b16 %v678
  %v2864 = vunpack.c.h.b16 %v678
  %v2865 = vunpack.c.l.b16 %v679
  %v2866 = vunpack.c.h.b16 %v679
  %v2867 = vunpack.c.l.b16 %v680
  %v2868 = vunpack.c.h.b16 %v680
  %v2869 = vunpack.c.l.b16 %v681
  %v2870 = vunpack.c.h.b16 %v681
  %v2871 = vunpack.c.l.b16 %v682
  %v2872 = vunpack.c.h.b16 %v682
  %v2873 = vunpack.c.l.b16 %v683
  %v2874 = vunpack.c.h.b16 %v683
  %v2875 = vunpack.c.l.b16 %v684
  %v2876 = vunpack.c.h.b16 %v684
  %v2877 = vunpack.c.l.b16 %v685
  %v2878 = vunpack.c.h.b16 %v685
  %v2879 = vunpack.c.l.b16 %v686
  %v2880 = vunpack.c.h.b16 %v686
  %v2881 = vunpack.c.l.b16 %v687
  %v2882 = vunpack.c.h.b16 %v687
  %v2883 = vunpack.c.l.b16 %v688
  %v2884 = vunpack.c.h.b16 %v688
  %v2885 = vunpack.c.l.b16 %v689
  %v2886 = vunpack.c.h.b16 %v689
  %v2887 = vunpack.c.l.b16 %v690
  %v2888 = vunpack.c.h.b16 %v690
  %v2889 = vunpack.c.l.b16 %v691
  %v2890 = vunpack.c.h.b16 %v691
  %v2891 = vunpack.c.l.b16 %v692
  %v2892 = vunpack.c.h.b16 %v692
  %v2893 = vunpack.c.l.b16 %v693
  %v2894 = vunpack.c.h.b16 %v693
  %v2895 = vunpack.c.l.b16 %v694
  %v2896 = vunpack.c.h.b16 %v694
  %v2897 = vunpack.c.l.b16 %v695
  %v2898 = vunpack.c.h.b16 %v695
  %v2899 = vunpack.c.l.b16 %v696
  %v2900 = vunpack.c.h.b16 %v696
  %v2901 = vunpack.c.l.b16 %v697
  %v2902 = vunpack.c.h.b16 %v697
  %v2903 = vunpack.c.l.b16 %v698
  %v2904 = vunpack.c.h.b16 %v698
  %v2905 = vunpack.c.l.b16 %v699
  %v2906 = vunpack.c.h.b16 %v699
  %v2907 = vunpack.c.l.b16 %v700
  %v2908 = vunpack.c.h.b16 %v700
  %v2909 = vunpack.c.l.b16 %v701
  %v2910 = vunpack.c.h.b16 %v701
  %v2911 = vunpack.c.l.b16 %v702
  %v2912 = vunpack.c.h.b16 %v702
  %v2913 = vunpack.c.l.b16 %v703
  %v2914 = vunpack.c.h.b16 %v703
  %v2915 = vunpack.c.l.b16 %v704
  %v2916 = vunpack.c.h.b16 %v704
  %v2917 = vunpack.c.l.b16 %v705
  %v2918 = vunpack.c.h.b16 %v705
  %v2919 = vunpack.c.l.b16 %v706
  %v2920 = vunpack.c.h.b16 %v706
  %v2921 = vunpack.c.l.b16 %v707
  %v2922 = vunpack.c.h.b16 %v707
  %v2923 = vunpack.c.l.b16 %v708
  %v2924 = vunpack.c.h.b16 %v708
  %v2925 = vunpack.c.l.b16 %v709
  %v2926 = vunpack.c.h.b16 %v709
  %v2927 = vunpack.c.l.b16 %v710
  %v2928 = vunpack.c.h.b16 %v710
  %v2929 = vunpack.c.l.b16 %v711
  %v2930 = vunpack.c.h.b16 %v711
  %v2931 = vunpack.c.l.b16 %v712
  %v2932 = vunpack.c.h.b16 %v712
  %v2933 = vunpack.c.l.b16 %v713
  %v2934 = vunpack.c.h.b16 %v713
  %v2935 = vunpack.c.l.b16 %v714
  %v2936 = vunpack.c.h.b16 %v714
  %v2937 = vunpack.c.l.b16 %v715
  %v2938 = vunpack.c.h.b16 %v715
  %v2939 = vunpack.c.l.b16 %v716
  %v2940 = vunpack.c.h.b16 %v716
  %v2941 = vunpack.c.l.b16 %v717
  %v2942 = vunpack.c.h.b16 %v717
  %v2943 = vunpack.c.l.b16 %v718
  %v2944 = vunpack.c.h.b16 %v718
  %v2945 = vunpack.c.l.b16 %v719
  %v2946 = vunpack.c.h.b16 %v719
  %v2947 = vunpack.c.l.b16 %v720
  %v2948 = vunpack.c.h.b16 %v720
  %v2949 = vunpack.c.l.b16 %v721
  %v2950 = vunpack.c.h.b16 %v721
  %v2951 = vunpack.c.l.b16 %v722
  %v2952 = vunpack.c.h.b16 %v722
  %v2953 = vunpack.c.l.b16 %v723
  %v2954 = vunpack.c.h.b16 %v723
  %v2955 = vunpack.c.l.b16 %v724
  %v2956 = vunpack.c.h.b16 %v724
  %v2957 = vunpack.c.l.b16 %v725
  %v2958 = vunpack.c.h.b16 %v725
  %v2959 = vunpack.c.l.b16 %v726
  %v2960 = vunpack.c.h.b16 %v726
  %v2961 = vunpack.c.l.b16 %v727
  %v2962 = vunpack.c.h.b16 %v727
  %v2963 = vunpack.c.l.b16 %v728
  %v2964 = vunpack.c.h.b16 %v728
  %v2965 = vunpack.c.l.b16 %v729
  %v2966 = vunpack.c.h.b16 %v729
  %v2967 = vunpack.c.l.b16 %v730
  %v2968 = vunpack.c.h.b16 %v730
  %v2969 = vunpack.c.l.b16 %v731
  %v2970 = vunpack.c.h.b16 %v731
  %v2971 = vunpack.c.l.b16 %v732
  %v2972 = vunpack.c.h.b16 %v732
  %v2973 = vunpack.c.l.b16 %v733
  %v2974 = vunpack.c.h.b16 %v733
  %v2975 = vunpack.c.l.b16 %v734
  %v2976 = vunpack.c.h.b16 %v734
  %v2977 = vunpack.c.l.b16 %v735
  %v2978 = vunpack.c.h.b16 %v735
  %v2979 = vunpack.c.l.b16 %v736
  %v2980 = vunpack.c.h.b16 %v736
  %v2981 = vunpack.c.l.b16 %v737
  %v2982 = vunpack.c.h.b16 %v737
  %v2983 = vunpack.c.l.b16 %v738
  %v2984 = vunpack.c.h.b16 %v738
  %v2985 = vunpack.c.l.b16 %v739
  %v2986 = vunpack.c.h.b16 %v739
  %v2987 = vunpack.c.l.b16 %v740
  %v2988 = vunpack.c.h.b16 %v740
  %v2989 = vunpack.c.l.b16 %v741
  %v2990 = vunpack.c.h.b16 %v741
  %v2991 = vunpack.c.l.b16 %v742
  %v2992 = vunpack.c.h.b16 %v742
  %v2993 = vunpack.c.l.b16 %v743
  %v2994 = vunpack.c.h.b16 %v743
  %v2995 = vunpack.c.l.b16 %v744
  %v2996 = vunpack.c.h.b16 %v744
  %v2997 = vunpack.c.l.b16 %v745
  %v2998 = vunpack.c.h.b16 %v745
  %v2999 = vunpack.c.l.b16 %v746
  %v3000 = vunpack.c.h.b16 %v746
  %v3001 = vunpack.c.l.b16 %v747
  %v3002 = vunpack.c.h.b16 %v747
  %v3003 = vunpack.c.l.b16 %v748
  %v3004 = vunpack.c.h.b16 %v748
  %v3005 = vunpack.c.l.b16 %v749
  %v3006 = vunpack.c.h.b16 %v749
  %v3007 = vunpack.c.l.b16 %v750
  %v3008 = vunpack.c.h.b16 %v750
  %v3009 = vunpack.c.l.b16 %v751
  %v3010 = vunpack.c.h.b16 %v751
  %v3011 = vunpack.c.l.b16 %v752
  %v3012 = vunpack.c.h.b16 %v752
  %v3013 = vunpack.c.l.b16 %v753
  %v3014 = vunpack.c.h.b16 %v753
  %v3015 = vunpack.c.l.b16 %v754
  %v3016 = vunpack.c.h.b16 %v754
  %v3017 = vunpack.c.l.b16 %v755
  %v3018 = vunpack.c.h.b16 %v755
  %v3019 = vunpack.c.l.b16 %v756
  %v3020 = vunpack.c.h.b16 %v756
  %v3021 = vunpack.c.l.b16 %v757
  %v3022 = vunpack.c.h.b16 %v757
  %v3023 = vunpack.c.l.b16 %v758
  %v3024 = vunpack.c.h.b16 %v758
  %v3025 = vunpack.c.l.b16 %v759
  %v3026 = vunpack.c.h.b16 %v759
  %v3027 = vunpack.c.l.b16 %v760
  %v3028 = vunpack.c.h.b16 %v760
  %v3029 = vunpack.c.l.b16 %v761
  %v3030 = vunpack.c.h.b16 %v761
  %v3031 = vunpack.c.l.b16 %v762
  %v3032 = vunpack.c.h.b16 %v762
  %v3033 = vunpack.c.l.b16 %v763
  %v3034 = vunpack.c.h.b16 %v763
  %v3035 = vunpack.c.l.b16 %v764
  %v3036 = vunpack.c.h.b16 %v764
  %v3037 = vunpack.c.l.b16 %v765
  %v3038 = vunpack.c.h.b16 %v765
  %v3039 = vunpack.c.l.b16 %v766
  %v3040 = vunpack.c.h.b16 %v766
  %v3041 = vunpack.c.l.b16 %v767
  %v3042 = vunpack.c.h.b16 %v767
  %v3043 = vunpack.c.l.b16 %v768
  %v3044 = vunpack.c.h.b16 %v768
  %v3045 = vunpack.c.l.b16 %v769
  %v3046 = vunpack.c.h.b16 %v769
  %v3047 = vunpack.c.l.b16 %v770
  %v3048 = vunpack.c.h.b16 %v770
  %v3049 = vunpack.c.l.b16 %v771
  %v3050 = vunpack.c.h.b16 %v771
  %v3051 = vunpack.c.l.b16 %v772
  %v3052 = vunpack.c.h.b16 %v772
  %v3053 = vunpack.c.l.b16 %v773
  %v3054 = vunpack.c.h.b16 %v773
  %v3055 = vunpack.c.l.b16 %v774
  %v3056 = vunpack.c.h.b16 %v774
  %v3057 = vunpack.c.l.b16 %v775
  %v3058 = vunpack.c.h.b16 %v775
  %v3059 = vunpack.c.l.b16 %v776
  %v3060 = vunpack.c.h.b16 %v776
  %v3061 = vunpack.c.l.b16 %v777
  %v3062 = vunpack.c.h.b16 %v777
  %v3063 = vunpack.c.l.b16 %v778
  %v3064 = vunpack.c.h.b16 %v778
  %v3065 = vunpack.c.l.b16 %v779
  %v3066 = vunpack.c.h.b16 %v779
  %v3067 = vunpack.c.l.b16 %v780
  %v3068 = vunpack.c.h.b16 %v780
  %v3069 = vunpack.c.l.b16 %v781
  %v3070 = vunpack.c.h.b16 %v781
  %v3071 = vunpack.c.l.b16 %v782
  %v3072 = vunpack.c.h.b16 %v782
  %v3073 = vunpack.c.l.b16 %v783
  %v3074 = vunpack.c.h.b16 %v783
  %v3075 = vunpack.c.l.b16 %v784
  %v3076 = vunpack.c.h.b16 %v784
  %v3077 = vunpack.c.l.b16 %v785
  %v3078 = vunpack.c.h.b16 %v785
  %v3079 = vunpack.c.l.b16 %v786
  %v3080 = vunpack.c.h.b16 %v786
  %v3081 = vunpack.c.l.b16 %v787
  %v3082 = vunpack.c.h.b16 %v787
  %v3083 = vunpack.c.l.b16 %v788
  %v3084 = vunpack.c.h.b16 %v788
  %v3085 = vunpack.c.l.b16 %v789
  %v3086 = vunpack.c.h.b16 %v789
  %v3087 = vunpack.c.l.b16 %v790
  %v3088 = vunpack.c.h.b16 %v790
  %v3089 = vunpack.c.l.b16 %v791
  %v3090 = vunpack.c.h.b16 %v791
  %v3091 = vunpack.c.l.b16 %v792
  %v3092 = vunpack.c.h.b16 %v792
  %v3093 = vunpack.c.l.b16 %v793
  %v3094 = vunpack.c.h.b16 %v793
  %v3095 = vunpack.c.l.b16 %v794
  %v3096 = vunpack.c.h.b16 %v794
  %v3097 = vunpack.c.l.b16 %v795
  %v3098 = vunpack.c.h.b16 %v795
  %v3099 = vunpack.c.l.b16 %v796
  %v3100 = vunpack.c.h.b16 %v796
  %v3101 = vunpack.c.l.b16 %v797
  %v3102 = vunpack.c.h.b16 %v797
  %v3103 = vunpack.c.l.b16 %v798
  %v3104 = vunpack.c.h.b16 %v798
  %v3105 = vunpack.c.l.b16 %v799
  %v3106 = vunpack.c.h.b16 %v799
  %v3107 = vunpack.c.l.b16 %v800
  %v3108 = vunpack.c.h.b16 %v800
  %v3109 = vunpack.c.l.b16 %v801
  %v3110 = vunpack.c.h.b16 %v801
  %v3111 = vunpack.c.l.b16 %v802
  %v3112 = vunpack.c.h.b16 %v802
  %v3113 = vunpack.c.l.b16 %v803
  %v3114 = vunpack.c.h.b16 %v803
  %v3115 = vunpack.c.l.b16 %v804
  %v3116 = vunpack.c.h.b16 %v804
  %v3117 = vunpack.c.l.b16 %v805
  %v3118 = vunpack.c.h.b16 %v805
  %v3119 = vunpack.c.l.b16 %v806
  %v3120 = vunpack.c.h.b16 %v806
  %v3121 = vunpack.c.l.b16 %v807
  %v3122 = vunpack.c.h.b16 %v807
  %v3123 = vunpack.c.l.b16 %v808
  %v3124 = vunpack.c.h.b16 %v808
  %v3125 = vunpack.c.l.b16 %v809
  %v3126 = vunpack.c.h.b16 %v809
  %v3127 = vunpack.c.l.b16 %v810
  %v3128 = vunpack.c.h.b16 %v810
  %v3129 = vunpack.c.l.b16 %v811
  %v3130 = vunpack.c.h.b16 %v811
  %v3131 = vunpack.c.l.b16 %v812
  %v3132 = vunpack.c.h.b16 %v812
  %v3133 = vunpack.c.l.b16 %v813
  %v3134 = vunpack.c.h.b16 %v813
  %v3135 = vunpack.c.l.b16 %v814
  %v3136 = vunpack.c.h.b16 %v814
  %v3137 = vunpack.c.l.b16 %v815
  %v3138 = vunpack.c.h.b16 %v815
  %v3139 = vunpack.c.l.b16 %v816
  %v3140 = vunpack.c.h.b16 %v816
  %v3141 = vunpack.c.l.b16 %v817
  %v3142 = vunpack.c.h.b16 %v817
  %v3143 = vunpack.c.l.b16 %v818
  %v3144 = vunpack.c.h.b16 %v818
  %v3145 = vunpack.c.l.b16 %v819
  %v3146 = vunpack.c.h.b16 %v819
  %v3147 = vunpack.c.l.b16 %v820
  %v3148 = vunpack.c.h.b16 %v820
  %v3149 = vunpack.c.l.b16 %v821
  %v3150 = vunpack.c.h.b16 %v821
  %v3151 = vunpack.c.l.b16 %v822
  %v3152 = vunpack.c.h.b16 %v822
  %v3153 = vunpack.c.l.b16 %v823
  %v3154 = vunpack.c.h.b16 %v823
  %v3155 = vunpack.c.l.b16 %v824
  %v3156 = vunpack.c.h.b16 %v824
  %v3157 = vunpack.c.l.b16 %v825
  %v3158 = vunpack.c.h.b16 %v825
  %v3159 = vunpack.c.l.b16 %v826
  %v3160 = vunpack.c.h.b16 %v826
  %v3161 = vunpack.c.l.b16 %v827
  %v3162 = vunpack.c.h.b16 %v827
  %v3163 = vunpack.c.l.b16 %v828
  %v3164 = vunpack.c.h.b16 %v828
  %v3165 = vunpack.c.l.b16 %v829
  %v3166 = vunpack.c.h.b16 %v829
  %v3167 = vunpack.c.l.b16 %v830
  %v3168 = vunpack.c.h.b16 %v830
  %v3169 = vunpack.c.l.b16 %v831
  %v3170 = vunpack.c.h.b16 %v831
  %v3171 = vunpack.c.l.b16 %v832
  %v3172 = vunpack.c.h.b16 %v832
  %v3173 = vunpack.c.l.b16 %v833
  %v3174 = vunpack.c.h.b16 %v833
  %v3175 = vunpack.c.l.b16 %v834
  %v3176 = vunpack.c.h.b16 %v834
  %v3177 = vunpack.c.l.b16 %v835
  %v3178 = vunpack.c.h.b16 %v835
  %v3179 = vunpack.c.l.b16 %v836
  %v3180 = vunpack.c.h.b16 %v836
  %v3181 = vunpack.c.l.b16 %v837
  %v3182 = vunpack.c.h.b16 %v837
  %v3183 = vunpack.c.l.b16 %v838
  %v3184 = vunpack.c.h.b16 %v838
  %v3185 = vunpack.c.l.b16 %v839
  %v3186 = vunpack.c.h.b16 %v839
  %v3187 = vunpack.c.l.b16 %v840
  %v3188 = vunpack.c.h.b16 %v840
  %v3189 = vunpack.c.l.b16 %v841
  %v3190 = vunpack.c.h.b16 %v841
  %v3191 = vunpack.c.l.b16 %v842
  %v3192 = vunpack.c.h.b16 %v842
  %v3193 = vunpack.c.l.b16 %v843
  %v3194 = vunpack.c.h.b16 %v843
  %v3195 = vunpack.c.l.b16 %v844
  %v3196 = vunpack.c.h.b16 %v844
  %v3197 = vunpack.c.l.b16 %v845
  %v3198 = vunpack.c.h.b16 %v845
  %v3199 = vunpack.c.l.b16 %v846
  %v3200 = vunpack.c.h.b16 %v846
  %v3201 = vunpack.c.l.b16 %v847
  %v3202 = vunpack.c.h.b16 %v847
  %v3203 = vunpack.c.l.b16 %v848
  %v3204 = vunpack.c.h.b16 %v848
  %v3205 = vunpack.c.l.b16 %v849
  %v3206 = vunpack.c.h.b16 %v849
  %v3207 = vunpack.c.l.b16 %v850
  %v3208 = vunpack.c.h.b16 %v850
  %v3209 = vunpack.c.l.b16 %v851
  %v3210 = vunpack.c.h.b16 %v851
  %v3211 = vunpack.c.l.b16 %v852
  %v3212 = vunpack.c.h.b16 %v852
  %v3213 = vunpack.c.l.b16 %v853
  %v3214 = vunpack.c.h.b16 %v853
  %v3215 = vunpack.c.l.b16 %v854
  %v3216 = vunpack.c.h.b16 %v854
  %v3217 = vpack.c.b16 %v1653, %v1649
  %v3218 = vpack.c.b16 %v1654, %v1650
  %v3219 = vpack.c.b16 %v1655, %v1651
  %v3220 = vpack.c.b16 %v1656, %v1652
  %v3221 = vpack.c.b16 %v1661, %v1657
  %v3222 = vpack.c.b16 %v1662, %v1658
  %v3223 = vpack.c.b16 %v1663, %v1659
  %v3224 = vpack.c.b16 %v1664, %v1660
  %v3225 = vpack.c.b16 %v1669, %v1665
  %v3226 = vpack.c.b16 %v1670, %v1666
  %v3227 = vpack.c.b16 %v1671, %v1667
  %v3228 = vpack.c.b16 %v1672, %v1668
  %v3229 = vpack.c.b16 %v1677, %v1673
  %v3230 = vpack.c.b16 %v1678, %v1674
  %v3231 = vpack.c.b16 %v1679, %v1675
  %v3232 = vpack.c.b16 %v1680, %v1676
  %v3233 = vpack.c.b16 %v1685, %v1681
  %v3234 = vpack.c.b16 %v1686, %v1682
  %v3235 = vpack.c.b16 %v1687, %v1683
  %v3236 = vpack.c.b16 %v1688, %v1684
  %v3237 = vpack.c.b16 %v1693, %v1689
  %v3238 = vpack.c.b16 %v1694, %v1690
  %v3239 = vpack.c.b16 %v1695, %v1691
  %v3240 = vpack.c.b16 %v1696, %v1692
  %v3241 = vpack.c.b16 %v1701, %v1697
  %v3242 = vpack.c.b16 %v1702, %v1698
  %v3243 = vpack.c.b16 %v1703, %v1699
  %v3244 = vpack.c.b16 %v1704, %v1700
  %v3245 = vpack.c.b16 %v1709, %v1705
  %v3246 = vpack.c.b16 %v1710, %v1706
  %v3247 = vpack.c.b16 %v1711, %v1707
  %v3248 = vpack.c.b16 %v1712, %v1708
  %v3249 = vpack.c.b16 %v1717, %v1713
  %v3250 = vpack.c.b16 %v1718, %v1714
  %v3251 = vpack.c.b16 %v1719, %v1715
  %v3252 = vpack.c.b16 %v1720, %v1716
  %v3253 = vpack.c.b16 %v1725, %v1721
  %v3254 = vpack.c.b16 %v1726, %v1722
  %v3255 = vpack.c.b16 %v1727, %v1723
  %v3256 = vpack.c.b16 %v1728, %v1724
  %v3257 = vpack.c.b16 %v1733, %v1729
  %v3258 = vpack.c.b16 %v1734, %v1730
  %v3259 = vpack.c.b16 %v1735, %v1731
  %v3260 = vpack.c.b16 %v1736, %v1732
  %v3261 = vpack.c.b16 %v1741, %v1737
  %v3262 = vpack.c.b16 %v1742, %v1738
  %v3263 = vpack.c.b16 %v1743, %v1739
  %v3264 = vpack.c.b16 %v1744, %v1740
  %v3265 = vpack.c.b16 %v1749, %v1745
  %v3266 = vpack.c.b16 %v1750, %v1746
  %v3267 = vpack.c.b16 %v1751, %v1747
  %v3268 = vpack.c.b16 %v1752, %v1748
  %v3269 = vpack.c.b16 %v1757, %v1753
  %v3270 = vpack.c.b16 %v1758, %v1754
  %v3271 = vpack.c.b16 %v1759, %v1755
  %v3272 = vpack.c.b16 %v1760, %v1756
  %v3273 = vpack.c.b16 %v1765, %v1761
  %v3274 = vpack.c.b16 %v1766, %v1762
  %v3275 = vpack.c.b16 %v1767, %v1763
  %v3276 = vpack.c.b16 %v1768, %v1764
  %v3277 = vpack.c.b16 %v1773, %v1769
  %v3278 = vpack.c.b16 %v1774, %v1770
  %v3279 = vpack.c.b16 %v1775, %v1771
  %v3280 = vpack.c.b16 %v1776, %v1772
  %v3281 = vpack.c.b16 %v1781, %v1777
  %v3282 = vpack.c.b16 %v1782, %v1778
  %v3283 = vpack.c.b16 %v1783, %v1779
  %v3284 = vpack.c.b16 %v1784, %v1780
  %v3285 = vpack.c.b16 %v1789, %v1785
  %v3286 = vpack.c.b16 %v1790, %v1786
  %v3287 = vpack.c.b16 %v1791, %v1787
  %v3288 = vpack.c.b16 %v1792, %v1788
  %v3289 = vpack.c.b16 %v1797, %v1793
  %v3290 = vpack.c.b16 %v1798, %v1794
  %v3291 = vpack.c.b16 %v1799, %v1795
  %v3292 = vpack.c.b16 %v1800, %v1796
  %v3293 = vpack.c.b16 %v1805, %v1801
  %v3294 = vpack.c.b16 %v1806, %v1802
  %v3295 = vpack.c.b16 %v1807, %v1803
  %v3296 = vpack.c.b16 %v1808, %v1804
  %v3297 = vpack.c.b16 %v1813, %v1809
  %v3298 = vpack.c.b16 %v1814, %v1810
  %v3299 = vpack.c.b16 %v1815, %v1811
  %v3300 = vpack.c.b16 %v1816, %v1812
  %v3301 = vpack.c.b16 %v1821, %v1817
  %v3302 = vpack.c.b16 %v1822, %v1818
  %v3303 = vpack.c.b16 %v1823, %v1819
  %v3304 = vpack.c.b16 %v1824, %v1820
  %v3305 = vpack.c.b16 %v1829, %v1825
  %v3306 = vpack.c.b16 %v1830, %v1826
  %v3307 = vpack.c.b16 %v1831, %v1827
  %v3308 = vpack.c.b16 %v1832, %v1828
  %v3309 = vpack.c.b16 %v1837, %v1833
  %v3310 = vpack.c.b16 %v1838, %v1834
  %v3311 = vpack.c.b16 %v1839, %v1835
  %v3312 = vpack.c.b16 %v1840, %v1836
  %v3313 = vpack.c.b16 %v1845, %v1841
  %v3314 = vpack.c.b16 %v1846, %v1842
  %v3315 = vpack.c.b16 %v1847, %v1843
  %v3316 = vpack.c.b16 %v1848, %v1844
  %v3317 = vpack.c.b16 %v1853, %v1849
  %v3318 = vpack.c.b16 %v1854, %v1850
  %v3319 = vpack.c.b16 %v1855, %v1851
  %v3320 = vpack.c.b16 %v1856, %v1852
  %v3321 = vpack.c.b16 %v1861, %v1857
  %v3322 = vpack.c.b16 %v1862, %v1858
  %v3323 = vpack.c.b16 %v1863, %v1859
  %v3324 = vpack.c.b16 %v1864, %v1860
  %v3325 = vpack.c.b16 %v1869, %v1865
  %v3326 = vpack.c.b16 %v1870, %v1866
  %v3327 = vpack.c.b16 %v1871, %v1867
  %v3328 = vpack.c.b16 %v1872, %v1868
  %v3329 = vpack.c.b16 %v1877, %v1873
  %v3330 = vpack.c.b16 %v1878, %v1874
  %v3331 = vpack.c.b16 %v1879, %v1875
  %v3332 = vpack.c.b16 %v1880, %v1876
  %v3333 = vpack.c.b16 %v1885, %v1881
  %v3334 = vpack.c.b16 %v1886, %v1882
  %v3335 = vpack.c.b16 %v1887, %v1883
  %v3336 = vpack.c.b16 %v1888, %v1884
  %v3337 = vpack.c.b16 %v1893, %v1889
  %v3338 = vpack.c.b16 %v1894, %v1890
  %v3339 = vpack.c.b16 %v1895, %v1891
  %v3340 = vpack.c.b16 %v1896, %v1892
  %v3341 = vpack.c.b16 %v1901, %v1897
  %v3342 = vpack.c.b16 %v1902, %v1898
  %v3343 = vpack.c.b16 %v1903, %v1899
  %v3344 = vpack.c.b16 %v1904, %v1900
  %v3345 = vpack.c.b16 %v1909, %v1905
  %v3346 = vpack.c.b16 %v1910, %v1906
  %v3347 = vpack.c.b16 %v1911, %v1907
  %v3348 = vpack.c.b16 %v1912, %v1908
  %v3349 = vpack.c.b16 %v1917, %v1913
  %v3350 = vpack.c.b16 %v1918, %v1914
  %v3351 = vpack.c.b16 %v1919, %v1915
  %v3352 = vpack.c.b16 %v1920, %v1916
  %v3353 = vpack.c.b16 %v1925, %v1921
  %v3354 = vpack.c.b16 %v1926, %v1922
  %v3355 = vpack.c.b16 %v1927, %v1923
  %v3356 = vpack.c.b16 %v1928, %v1924
  %v3357 = vpack.c.b16 %v1933, %v1929
  %v3358 = vpack.c.b16 %v1934, %v1930
  %v3359 = vpack.c.b16 %v1935, %v1931
  %v3360 = vpack.c.b16 %v1936, %v1932
  %v3361 = vpack.c.b16 %v1941, %v1937
  %v3362 = vpack.c.b16 %v1942, %v1938
  %v3363 = vpack.c.b16 %v1943, %v1939
  %v3364 = vpack.c.b16 %v1944, %v1940
  %v3365 = vpack.c.b16 %v1949, %v1945
  %v3366 = vpack.c.b16 %v1950, %v1946
  %v3367 = vpack.c.b16 %v1951, %v1947
  %v3368 = vpack.c.b16 %v1952, %v1948
  %v3369 = vpack.c.b16 %v1957, %v1953
  %v3370 = vpack.c.b16 %v1958, %v1954
  %v3371 = vpack.c.b16 %v1959, %v1955
  %v3372 = vpack.c.b16 %v1960, %v1956
  %v3373 = vpack.c.b16 %v1965, %v1961
  %v3374 = vpack.c.b16 %v1966, %v1962
  %v3375 = vpack.c.b16 %v1967, %v1963
  %v3376 = vpack.c.b16 %v1968, %v1964
  %v3377 = vpack.c.b16 %v1973, %v1969
  %v3378 = vpack.c.b16 %v1974, %v1970
  %v3379 = vpack.c.b16 %v1975, %v1971
  %v3380 = vpack.c.b16 %v1976, %v1972
  %v3381 = vpack.c.b16 %v1981, %v1977
  %v3382 = vpack.c.b16 %v1982, %v1978
  %v3383 = vpack.c.b16 %v1983, %v1979
  %v3384 = vpack.c.b16 %v1984, %v1980
  %v3385 = vpack.c.b16 %v1989, %v1985
  %v3386 = vpack.c.b16 %v1990, %v1986
  %v3387 = vpack.c.b16 %v1991, %v1987
  %v3388 = vpack.c.b16 %v1992, %v1988
  %v3389 = vpack.c.b16 %v1997, %v1993
  %v3390 = vpack.c.b16 %v1998, %v1994
  %v3391 = vpack.c.b16 %v1999, %v1995
  %v3392 = vpack.c.b16 %v2000, %v1996
  %v3393 = vpack.c.b16 %v2005, %v2001
  %v3394 = vpack.c.b16 %v2006, %v2002
  %v3395 = vpack.c.b16 %v2007, %v2003
  %v3396 = vpack.c.b16 %v2008, %v2004
  %v3397 = vpack.c.b16 %v2013, %v2009
  %v3398 = vpack.c.b16 %v2014, %v2010
  %v3399 = vpack.c.b16 %v2015, %v2011
  %v3400 = vpack.c.b16 %v2016, %v2012
  %v3401 = vpack.c.b16 %v2021, %v2017
  %v3402 = vpack.c.b16 %v2022, %v2018
  %v3403 = vpack.c.b16 %v2023, %v2019
  %v3404 = vpack.c.b16 %v2024, %v2020
  %v3405 = vpack.c.b16 %v2029, %v2025
  %v3406 = vpack.c.b16 %v2030, %v2026
  %v3407 = vpack.c.b16 %v2031, %v2027
  %v3408 = vpack.c.b16 %v2032, %v2028
  %v3409 = vpack.c.b16 %v2037, %v2033
  %v3410 = vpack.c.b16 %v2038, %v2034
  %v3411 = vpack.c.b16 %v2039, %v2035
  %v3412 = vpack.c.b16 %v2040, %v2036
  %v3413 = vpack.c.b16 %v2045, %v2041
  %v3414 = vpack.c.b16 %v2046, %v2042
  %v3415 = vpack.c.b16 %v2047, %v2043
  %v3416 = vpack.c.b16 %v2048, %v2044
  %v3417 = vpack.c.b16 %v2053, %v2049
  %v3418 = vpack.c.b16 %v2054, %v2050
  %v3419 = vpack.c.b16 %v2055, %v2051
  %v3420 = vpack.c.b16 %v2056, %v2052
  %v3421 = vpack.c.b16 %v2061, %v2057
  %v3422 = vpack.c.b16 %v2062, %v2058
  %v3423 = vpack.c.b16 %v2063, %v2059
  %v3424 = vpack.c.b16 %v2064, %v2060
  %v3425 = vpack.c.b16 %v2069, %v2065
  %v3426 = vpack.c.b16 %v2070, %v2066
  %v3427 = vpack.c.b16 %v2071, %v2067
  %v3428 = vpack.c.b16 %v2072, %v2068
  %v3429 = vpack.c.b16 %v2077, %v2073
  %v3430 = vpack.c.b16 %v2078, %v2074
  %v3431 = vpack.c.b16 %v2079, %v2075
  %v3432 = vpack.c.b16 %v2080, %v2076
  %v3433 = vpack.c.b16 %v2085, %v2081
  %v3434 = vpack.c.b16 %v2086, %v2082
  %v3435 = vpack.c.b16 %v2087, %v2083
  %v3436 = vpack.c.b16 %v2088, %v2084
  %v3437 = vpack.c.b16 %v2093, %v2089
  %v3438 = vpack.c.b16 %v2094, %v2090
  %v3439 = vpack.c.b16 %v2095, %v2091
  %v3440 = vpack.c.b16 %v2096, %v2092
  %v3441 = vpack.c.b16 %v2101, %v2097
  %v3442 = vpack.c.b16 %v2102, %v2098
  %v3443 = vpack.c.b16 %v2103, %v2099
  %v3444 = vpack.c.b16 %v2104, %v2100
  %v3445 = vpack.c.b16 %v2109, %v2105
  %v3446 = vpack.c.b16 %v2110, %v2106
  %v3447 = vpack.c.b16 %v2111, %v2107
  %v3448 = vpack.c.b16 %v2112, %v2108
  %v3449 = vpack.c.b16 %v2117, %v2113
  %v3450 = vpack.c.b16 %v2118, %v2114
  %v3451 = vpack.c.b16 %v2119, %v2115
  %v3452 = vpack.c.b16 %v2120, %v2116
  %v3453 = vpack.c.b16 %v2125, %v2121
  %v3454 = vpack.c.b16 %v2126, %v2122
  %v3455 = vpack.c.b16 %v2127, %v2123
  %v3456 = vpack.c.b16 %v2128, %v2124
  %v3457 = vpack.c.b16 %v2133, %v2129
  %v3458 = vpack.c.b16 %v2134, %v2130
  %v3459 = vpack.c.b16 %v2135, %v2131
  %v3460 = vpack.c.b16 %v2136, %v2132
  %v3461 = vpack.c.b16 %v2141, %v2137
  %v3462 = vpack.c.b16 %v2142, %v2138
  %v3463 = vpack.c.b16 %v2143, %v2139
  %v3464 = vpack.c.b16 %v2144, %v2140
  %v3465 = vpack.c.b16 %v2149, %v2145
  %v3466 = vpack.c.b16 %v2150, %v2146
  %v3467 = vpack.c.b16 %v2151, %v2147
  %v3468 = vpack.c.b16 %v2152, %v2148
  %v3469 = vpack.c.b16 %v2157, %v2153
  %v3470 = vpack.c.b16 %v2158, %v2154
  %v3471 = vpack.c.b16 %v2159, %v2155
  %v3472 = vpack.c.b16 %v2160, %v2156
  %v3473 = vpack.c.b16 %v2165, %v2161
  %v3474 = vpack.c.b16 %v2166, %v2162
  %v3475 = vpack.c.b16 %v2167, %v2163
  %v3476 = vpack.c.b16 %v2168, %v2164
  %v3477 = vpack.c.b16 %v2173, %v2169
  %v3478 = vpack.c.b16 %v2174, %v2170
  %v3479 = vpack.c.b16 %v2175, %v2171
  %v3480 = vpack.c.b16 %v2176, %v2172
  %v3481 = vpack.c.b16 %v2181, %v2177
  %v3482 = vpack.c.b16 %v2182, %v2178
  %v3483 = vpack.c.b16 %v2183, %v2179
  %v3484 = vpack.c.b16 %v2184, %v2180
  %v3485 = vpack.c.b16 %v2189, %v2185
  %v3486 = vpack.c.b16 %v2190, %v2186
  %v3487 = vpack.c.b16 %v2191, %v2187
  %v3488 = vpack.c.b16 %v2192, %v2188
  %v3489 = vpack.c.b16 %v2197, %v2193
  %v3490 = vpack.c.b16 %v2198, %v2194
  %v3491 = vpack.c.b16 %v2199, %v2195
  %v3492 = vpack.c.b16 %v2200, %v2196
  %v3493 = vpack.c.b16 %v2205, %v2201
  %v3494 = vpack.c.b16 %v2206, %v2202
  %v3495 = vpack.c.b16 %v2207, %v2203
  %v3496 = vpack.c.b16 %v2208, %v2204
  %v3497 = vpack.c.b16 %v2213, %v2209
  %v3498 = vpack.c.b16 %v2214, %v2210
  %v3499 = vpack.c.b16 %v2215, %v2211
  %v3500 = vpack.c.b16 %v2216, %v2212
  %v3501 = vpack.c.b16 %v2221, %v2217
  %v3502 = vpack.c.b16 %v2222, %v2218
  %v3503 = vpack.c.b16 %v2223, %v2219
  %v3504 = vpack.c.b16 %v2224, %v2220
  %v3505 = vpack.c.b16 %v2229, %v2225
  %v3506 = vpack.c.b16 %v2230, %v2226
  %v3507 = vpack.c.b16 %v2231, %v2227
  %v3508 = vpack.c.b16 %v2232, %v2228
  %v3509 = vpack.c.b16 %v2237, %v2233
  %v3510 = vpack.c.b16 %v2238, %v2234
  %v3511 = vpack.c.b16 %v2239, %v2235
  %v3512 = vpack.c.b16 %v2240, %v2236
  %v3513 = vpack.c.b16 %v2245, %v2241
  %v3514 = vpack.c.b16 %v2246, %v2242
  %v3515 = vpack.c.b16 %v2247, %v2243
  %v3516 = vpack.c.b16 %v2248, %v2244
  %v3517 = vpack.c.b16 %v2253, %v2249
  %v3518 = vpack.c.b16 %v2254, %v2250
  %v3519 = vpack.c.b16 %v2255, %v2251
  %v3520 = vpack.c.b16 %v2256, %v2252
  %v3521 = vpack.c.b16 %v2261, %v2257
  %v3522 = vpack.c.b16 %v2262, %v2258
  %v3523 = vpack.c.b16 %v2263, %v2259
  %v3524 = vpack.c.b16 %v2264, %v2260
  %v3525 = vpack.c.b16 %v2269, %v2265
  %v3526 = vpack.c.b16 %v2270, %v2266
  %v3527 = vpack.c.b16 %v2271, %v2267
  %v3528 = vpack.c.b16 %v2272, %v2268
  %v3529 = vpack.c.b16 %v2277, %v2273
  %v3530 = vpack.c.b16 %v2278, %v2274
  %v3531 = vpack.c.b16 %v2279, %v2275
  %v3532 = vpack.c.b16 %v2280, %v2276
  %v3533 = vpack.c.b16 %v2285, %v2281
  %v3534 = vpack.c.b16 %v2286, %v2282
  %v3535 = vpack.c.b16 %v2287, %v2283
  %v3536 = vpack.c.b16 %v2288, %v2284
  %v3537 = vpack.c.b16 %v2293, %v2289
  %v3538 = vpack.c.b16 %v2294, %v2290
  %v3539 = vpack.c.b16 %v2295, %v2291
  %v3540 = vpack.c.b16 %v2296, %v2292
  %v3541 = vpack.c.b16 %v2301, %v2297
  %v3542 = vpack.c.b16 %v2302, %v2298
  %v3543 = vpack.c.b16 %v2303, %v2299
  %v3544 = vpack.c.b16 %v2304, %v2300
  %v3545 = vpack.c.b16 %v2309, %v2305
  %v3546 = vpack.c.b16 %v2310, %v2306
  %v3547 = vpack.c.b16 %v2311, %v2307
  %v3548 = vpack.c.b16 %v2312, %v2308
  %v3549 = vpack.c.b16 %v2317, %v2313
  %v3550 = vpack.c.b16 %v2318, %v2314
  %v3551 = vpack.c.b16 %v2319, %v2315
  %v3552 = vpack.c.b16 %v2320, %v2316
  %v3553 = vpack.c.b16 %v2325, %v2321
  %v3554 = vpack.c.b16 %v2326, %v2322
  %v3555 = vpack.c.b16 %v2327, %v2323
  %v3556 = vpack.c.b16 %v2328, %v2324
  %v3557 = vpack.c.b16 %v2333, %v2329
  %v3558 = vpack.c.b16 %v2334, %v2330
  %v3559 = vpack.c.b16 %v2335, %v2331
  %v3560 = vpack.c.b16 %v2336, %v2332
  %v3561 = vpack.c.b16 %v2341, %v2337
  %v3562 = vpack.c.b16 %v2342, %v2338
  %v3563 = vpack.c.b16 %v2343, %v2339
  %v3564 = vpack.c.b16 %v2344, %v2340
  %v3565 = vpack.c.b16 %v2349, %v2345
  %v3566 = vpack.c.b16 %v2350, %v2346
  %v3567 = vpack.c.b16 %v2351, %v2347
  %v3568 = vpack.c.b16 %v2352, %v2348
  %v3569 = vpack.c.b16 %v2357, %v2353
  %v3570 = vpack.c.b16 %v2358, %v2354
  %v3571 = vpack.c.b16 %v2359, %v2355
  %v3572 = vpack.c.b16 %v2360, %v2356
  %v3573 = vpack.c.b16 %v2365, %v2361
  %v3574 = vpack.c.b16 %v2366, %v2362
  %v3575 = vpack.c.b16 %v2367, %v2363
  %v3576 = vpack.c.b16 %v2368, %v2364
  %v3577 = vpack.c.b16 %v2373, %v2369
  %v3578 = vpack.c.b16 %v2374, %v2370
  %v3579 = vpack.c.b16 %v2375, %v2371
  %v3580 = vpack.c.b16 %v2376, %v2372
  %v3581 = vpack.c.b16 %v2381, %v2377
  %v3582 = vpack.c.b16 %v2382, %v2378
  %v3583 = vpack.c.b16 %v2383, %v2379
  %v3584 = vpack.c.b16 %v2384, %v2380
  %v3585 = vpack.c.b16 %v2389, %v2385
  %v3586 = vpack.c.b16 %v2390, %v2386
  %v3587 = vpack.c.b16 %v2391, %v2387
  %v3588 = vpack.c.b16 %v2392, %v2388
  %v3589 = vpack.c.b16 %v2397, %v2393
  %v3590 = vpack.c.b16 %v2398, %v2394
  %v3591 = vpack.c.b16 %v2399, %v2395
  %v3592 = vpack.c.b16 %v2400, %v2396
  %v3593 = vpack.c.b16 %v2405, %v2401
  %v3594 = vpack.c.b16 %v2406, %v2402
  %v3595 = vpack.c.b16 %v2407, %v2403
  %v3596 = vpack.c.b16 %v2408, %v2404
  %v3597 = vpack.c.b16 %v2413, %v2409
  %v3598 = vpack.c.b16 %v2414, %v2410
  %v3599 = vpack.c.b16 %v2415, %v2411
  %v3600 = vpack.c.b16 %v2416, %v2412
  %v3601 = vpack.c.b16 %v2421, %v2417
  %v3602 = vpack.c.b16 %v2422, %v2418
  %v3603 = vpack.c.b16 %v2423, %v2419
  %v3604 = vpack.c.b16 %v2424, %v2420
  %v3605 = vpack.c.b16 %v2429, %v2425
  %v3606 = vpack.c.b16 %v2430, %v2426
  %v3607 = vpack.c.b16 %v2431, %v2427
  %v3608 = vpack.c.b16 %v2432, %v2428
  %v3609 = vpack.c.b16 %v2437, %v2433
  %v3610 = vpack.c.b16 %v2438, %v2434
  %v3611 = vpack.c.b16 %v2439, %v2435
  %v3612 = vpack.c.b16 %v2440, %v2436
  %v3613 = vpack.c.b16 %v2445, %v2441
  %v3614 = vpack.c.b16 %v2446, %v2442
  %v3615 = vpack.c.b16 %v2447, %v2443
  %v3616 = vpack.c.b16 %v2448, %v2444
  %v3617 = vpack.c.b16 %v2453, %v2449
  %v3618 = vpack.c.b16 %v2454, %v2450
  %v3619 = vpack.c.b16 %v2455, %v2451
  %v3620 = vpack.c.b16 %v2456, %v2452
  %v3621 = vpack.c.b16 %v2461, %v2457
  %v3622 = vpack.c.b16 %v2462, %v2458
  %v3623 = vpack.c.b16 %v2463, %v2459
  %v3624 = vpack.c.b16 %v2464, %v2460
  %v3625 = vpack.c.b16 %v2469, %v2465
  %v3626 = vpack.c.b16 %v2470, %v2466
  %v3627 = vpack.c.b16 %v2471, %v2467
  %v3628 = vpack.c.b16 %v2472, %v2468
  %v3629 = vpack.c.b16 %v2477, %v2473
  %v3630 = vpack.c.b16 %v2478, %v2474
  %v3631 = vpack.c.b16 %v2479, %v2475
  %v3632 = vpack.c.b16 %v2480, %v2476
  %v3633 = vpack.c.b16 %v2485, %v2481
  %v3634 = vpack.c.b16 %v2486, %v2482
  %v3635 = vpack.c.b16 %v2487, %v2483
  %v3636 = vpack.c.b16 %v2488, %v2484
  %v3637 = vpack.c.b16 %v2493, %v2489
  %v3638 = vpack.c.b16 %v2494, %v2490
  %v3639 = vpack.c.b16 %v2495, %v2491
  %v3640 = vpack.c.b16 %v2496, %v2492
  %v3641 = vpack.c.b16 %v2501, %v2497
  %v3642 = vpack.c.b16 %v2502, %v2498
  %v3643 = vpack.c.b16 %v2503, %v2499
  %v3644 = vpack.c.b16 %v2504, %v2500
  %v3645 = vpack.c.b16 %v2509, %v2505
  %v3646 = vpack.c.b16 %v2510, %v2506
  %v3647 = vpack.c.b16 %v2511, %v2507
  %v3648 = vpack.c.b16 %v2512, %v2508
  %v3649 = vpack.c.b16 %v2517, %v2513
  %v3650 = vpack.c.b16 %v2518, %v2514
  %v3651 = vpack.c.b16 %v2519, %v2515
  %v3652 = vpack.c.b16 %v2520, %v2516
  %v3653 = vpack.c.b16 %v2525, %v2521
  %v3654 = vpack.c.b16 %v2526, %v2522
  %v3655 = vpack.c.b16 %v2527, %v2523
  %v3656 = vpack.c.b16 %v2528, %v2524
  %v3657 = vpack.c.b16 %v2533, %v2529
  %v3658 = vpack.c.b16 %v2534, %v2530
  %v3659 = vpack.c.b16 %v2535, %v2531
  %v3660 = vpack.c.b16 %v2536, %v2532
  %v3661 = vpack.c.b16 %v2541, %v2537
  %v3662 = vpack.c.b16 %v2542, %v2538
  %v3663 = vpack.c.b16 %v2543, %v2539
  %v3664 = vpack.c.b16 %v2544, %v2540
  %v3665 = vpack.c.b16 %v2549, %v2545
  %v3666 = vpack.c.b16 %v2550, %v2546
  %v3667 = vpack.c.b16 %v2551, %v2547
  %v3668 = vpack.c.b16 %v2552, %v2548
  %v3669 = vpack.c.b16 %v2557, %v2553
  %v3670 = vpack.c.b16 %v2558, %v2554
  %v3671 = vpack.c.b16 %v2559, %v2555
  %v3672 = vpack.c.b16 %v2560, %v2556
  %v3673 = vpack.c.b16 %v2565, %v2561
  %v3674 = vpack.c.b16 %v2566, %v2562
  %v3675 = vpack.c.b16 %v2567, %v2563
  %v3676 = vpack.c.b16 %v2568, %v2564
  %v3677 = vpack.c.b16 %v2573, %v2569
  %v3678 = vpack.c.b16 %v2574, %v2570
  %v3679 = vpack.c.b16 %v2575, %v2571
  %v3680 = vpack.c.b16 %v2576, %v2572
  %v3681 = vpack.c.b16 %v2581, %v2577
  %v3682 = vpack.c.b16 %v2582, %v2578
  %v3683 = vpack.c.b16 %v2583, %v2579
  %v3684 = vpack.c.b16 %v2584, %v2580
  %v3685 = vpack.c.b16 %v2589, %v2585
  %v3686 = vpack.c.b16 %v2590, %v2586
  %v3687 = vpack.c.b16 %v2591, %v2587
  %v3688 = vpack.c.b16 %v2592, %v2588
  %v3689 = vpack.c.b16 %v2597, %v2593
  %v3690 = vpack.c.b16 %v2598, %v2594
  %v3691 = vpack.c.b16 %v2599, %v2595
  %v3692 = vpack.c.b16 %v2600, %v2596
  %v3693 = vpack.c.b16 %v2605, %v2601
  %v3694 = vpack.c.b16 %v2606, %v2602
  %v3695 = vpack.c.b16 %v2607, %v2603
  %v3696 = vpack.c.b16 %v2608, %v2604
  %v3697 = vpack.c.b16 %v2613, %v2609
  %v3698 = vpack.c.b16 %v2614, %v2610
  %v3699 = vpack.c.b16 %v2615, %v2611
  %v3700 = vpack.c.b16 %v2616, %v2612
  %v3701 = vpack.c.b16 %v2621, %v2617
  %v3702 = vpack.c.b16 %v2622, %v2618
  %v3703 = vpack.c.b16 %v2623, %v2619
  %v3704 = vpack.c.b16 %v2624, %v2620
  %v3705 = vpack.c.b16 %v2629, %v2625
  %v3706 = vpack.c.b16 %v2630, %v2626
  %v3707 = vpack.c.b16 %v2631, %v2627
  %v3708 = vpack.c.b16 %v2632, %v2628
  %v3709 = vpack.c.b16 %v2637, %v2633
  %v3710 = vpack.c.b16 %v2638, %v2634
  %v3711 = vpack.c.b16 %v2639, %v2635
  %v3712 = vpack.c.b16 %v2640, %v2636
  %v3713 = vpack.c.b16 %v2645, %v2641
  %v3714 = vpack.c.b16 %v2646, %v2642
  %v3715 = vpack.c.b16 %v2647, %v2643
  %v3716 = vpack.c.b16 %v2648, %v2644
  %v3717 = vpack.c.b16 %v2653, %v2649
  %v3718 = vpack.c.b16 %v2654, %v2650
  %v3719 = vpack.c.b16 %v2655, %v2651
  %v3720 = vpack.c.b16 %v2656, %v2652
  %v3721 = vpack.c.b16 %v2661, %v2657
  %v3722 = vpack.c.b16 %v2662, %v2658
  %v3723 = vpack.c.b16 %v2663, %v2659
  %v3724 = vpack.c.b16 %v2664, %v2660
  %v3725 = vpack.c.b16 %v2669, %v2665
  %v3726 = vpack.c.b16 %v2670, %v2666
  %v3727 = vpack.c.b16 %v2671, %v2667
  %v3728 = vpack.c.b16 %v2672, %v2668
  %v3729 = vpack.c.b16 %v2677, %v2673
  %v3730 = vpack.c.b16 %v2678, %v2674
  %v3731 = vpack.c.b16 %v2679, %v2675
  %v3732 = vpack.c.b16 %v2680, %v2676
  %v3733 = vpack.c.b16 %v2685, %v2681
  %v3734 = vpack.c.b16 %v2686, %v2682
  %v3735 = vpack.c.b16 %v2687, %v2683
  %v3736 = vpack.c.b16 %v2688, %v2684
  %v3737 = vpack.c.b16 %v2693, %v2689
  %v3738 = vpack.c.b16 %v2694, %v2690
  %v3739 = vpack.c.b16 %v2695, %v2691
  %v3740 = vpack.c.b16 %v2696, %v2692
  %v3741 = vpack.c.b16 %v2701, %v2697
  %v3742 = vpack.c.b16 %v2702, %v2698
  %v3743 = vpack.c.b16 %v2703, %v2699
  %v3744 = vpack.c.b16 %v2704, %v2700
  %v3745 = vpack.c.b16 %v2709, %v2705
  %v3746 = vpack.c.b16 %v2710, %v2706
  %v3747 = vpack.c.b16 %v2711, %v2707
  %v3748 = vpack.c.b16 %v2712, %v2708
  %v3749 = vpack.c.b16 %v2717, %v2713
  %v3750 = vpack.c.b16 %v2718, %v2714
  %v3751 = vpack.c.b16 %v2719, %v2715
  %v3752 = vpack.c.b16 %v2720, %v2716
  %v3753 = vpack.c.b16 %v2725, %v2721
  %v3754 = vpack.c.b16 %v2726, %v2722
  %v3755 = vpack.c.b16 %v2727, %v2723
  %v3756 = vpack.c.b16 %v2728, %v2724
  %v3757 = vpack.c.b16 %v2733, %v2729
  %v3758 = vpack.c.b16 %v2734, %v2730
  %v3759 = vpack.c.b16 %v2735, %v2731
  %v3760 = vpack.c.b16 %v2736, %v2732
  %v3761 = vpack.c.b16 %v2741, %v2737
  %v3762 = vpack.c.b16 %v2742, %v2738
  %v3763 = vpack.c.b16 %v2743, %v2739
  %v3764 = vpack.c.b16 %v2744, %v2740
  %v3765 = vpack.c.b16 %v2749, %v2745
  %v3766 = vpack.c.b16 %v2750, %v2746
  %v3767 = vpack.c.b16 %v2751, %v2747
  %v3768 = vpack.c.b16 %v2752, %v2748
  %v3769 = vpack.c.b16 %v2757, %v2753
  %v3770 = vpack.c.b16 %v2758, %v2754
  %v3771 = vpack.c.b16 %v2759, %v2755
  %v3772 = vpack.c.b16 %v2760, %v2756
  %v3773 = vpack.c.b16 %v2765, %v2761
  %v3774 = vpack.c.b16 %v2766, %v2762
  %v3775 = vpack.c.b16 %v2767, %v2763
  %v3776 = vpack.c.b16 %v2768, %v2764
  %v3777 = vpack.c.b16 %v2773, %v2769
  %v3778 = vpack.c.b16 %v2774, %v2770
  %v3779 = vpack.c.b16 %v2775, %v2771
  %v3780 = vpack.c.b16 %v2776, %v2772
  %v3781 = vpack.c.b16 %v2781, %v2777
  %v3782 = vpack.c.b16 %v2782, %v2778
  %v3783 = vpack.c.b16 %v2783, %v2779
  %v3784 = vpack.c.b16 %v2784, %v2780
  %v3785 = vpack.c.b16 %v2789, %v2785
  %v3786 = vpack.c.b16 %v2790, %v2786
  %v3787 = vpack.c.b16 %v2791, %v2787
  %v3788 = vpack.c.b16 %v2792, %v2788
  %v3789 = vpack.c.b16 %v2797, %v2793
  %v3790 = vpack.c.b16 %v2798, %v2794
  %v3791 = vpack.c.b16 %v2799, %v2795
  %v3792 = vpack.c.b16 %v2800, %v2796
  %v3793 = vpack.c.b16 %v2805, %v2801
  %v3794 = vpack.c.b16 %v2806, %v2802
  %v3795 = vpack.c.b16 %v2807, %v2803
  %v3796 = vpack.c.b16 %v2808, %v2804
  %v3797 = vpack.c.b16 %v2813, %v2809
  %v3798 = vpack.c.b16 %v2814, %v2810
  %v3799 = vpack.c.b16 %v2815, %v2811
  %v3800 = vpack.c.b16 %v2816, %v2812
  %v3801 = vpack.c.b16 %v2821, %v2817
  %v3802 = vpack.c.b16 %v2822, %v2818
  %v3803 = vpack.c.b16 %v2823, %v2819
  %v3804 = vpack.c.b16 %v2824, %v2820
  %v3805 = vpack.c.b16 %v2829, %v2825
  %v3806 = vpack.c.b16 %v2830, %v2826
  %v3807 = vpack.c.b16 %v2831, %v2827
  %v3808 = vpack.c.b16 %v2832, %v2828
  %v3809 = vpack.c.b16 %v2837, %v2833
  %v3810 = vpack.c.b16 %v2838, %v2834
  %v3811 = vpack.c.b16 %v2839, %v2835
  %v3812 = vpack.c.b16 %v2840, %v2836
  %v3813 = vpack.c.b16 %v2845, %v2841
  %v3814 = vpack.c.b16 %v2846, %v2842
  %v3815 = vpack.c.b16 %v2847, %v2843
  %v3816 = vpack.c.b16 %v2848, %v2844
  %v3817 = vpack.c.b16 %v2853, %v2849
  %v3818 = vpack.c.b16 %v2854, %v2850
  %v3819 = vpack.c.b16 %v2855, %v2851
  %v3820 = vpack.c.b16 %v2856, %v2852
  %v3821 = vpack.c.b16 %v2861, %v2857
  %v3822 = vpack.c.b16 %v2862, %v2858
  %v3823 = vpack.c.b16 %v2863, %v2859
  %v3824 = vpack.c.b16 %v2864, %v2860
  %v3825 = vpack.c.b16 %v2869, %v2865
  %v3826 = vpack.c.b16 %v2870, %v2866
  %v3827 = vpack.c.b16 %v2871, %v2867
  %v3828 = vpack.c.b16 %v2872, %v2868
  %v3829 = vpack.c.b16 %v2877, %v2873
  %v3830 = vpack.c.b16 %v2878, %v2874
  %v3831 = vpack.c.b16 %v2879, %v2875
  %v3832 = vpack.c.b16 %v2880, %v2876
  %v3833 = vpack.c.b16 %v2885, %v2881
  %v3834 = vpack.c.b16 %v2886, %v2882
  %v3835 = vpack.c.b16 %v2887, %v2883
  %v3836 = vpack.c.b16 %v2888, %v2884
  %v3837 = vpack.c.b16 %v2893, %v2889
  %v3838 = vpack.c.b16 %v2894, %v2890
  %v3839 = vpack.c.b16 %v2895, %v2891
  %v3840 = vpack.c.b16 %v2896, %v2892
  %v3841 = vpack.c.b16 %v2901, %v2897
  %v3842 = vpack.c.b16 %v2902, %v2898
  %v3843 = vpack.c.b16 %v2903, %v2899
  %v3844 = vpack.c.b16 %v2904, %v2900
  %v3845 = vpack.c.b16 %v2909, %v2905
  %v3846 = vpack.c.b16 %v2910, %v2906
  %v3847 = vpack.c.b16 %v2911, %v2907
  %v3848 = vpack.c.b16 %v2912, %v2908
  %v3849 = vpack.c.b16 %v2917, %v2913
  %v3850 = vpack.c.b16 %v2918, %v2914
  %v3851 = vpack.c.b16 %v2919, %v2915
  %v3852 = vpack.c.b16 %v2920, %v2916
  %v3853 = vpack.c.b16 %v2925, %v2921
  %v3854 = vpack.c.b16 %v2926, %v2922
  %v3855 = vpack.c.b16 %v2927, %v2923
  %v3856 = vpack.c.b16 %v2928, %v2924
  %v3857 = vpack.c.b16 %v2933, %v2929
  %v3858 = vpack.c.b16 %v2934, %v2930
  %v3859 = vpack.c.b16 %v2935, %v2931
  %v3860 = vpack.c.b16 %v2936, %v2932
  %v3861 = vpack.c.b16 %v2941, %v2937
  %v3862 = vpack.c.b16 %v2942, %v2938
  %v3863 = vpack.c.b16 %v2943, %v2939
  %v3864 = vpack.c.b16 %v2944, %v2940
  %v3865 = vpack.c.b16 %v2949, %v2945
  %v3866 = vpack.c.b16 %v2950, %v2946
  %v3867 = vpack.c.b16 %v2951, %v2947
  %v3868 = vpack.c.b16 %v2952, %v2948
  %v3869 = vpack.c.b16 %v2957, %v2953
  %v3870 = vpack.c.b16 %v2958, %v2954
  %v3871 = vpack.c.b16 %v2959, %v2955
  %v3872 = vpack.c.b16 %v2960, %v2956
  %v3873 = vpack.c.b16 %v2965, %v2961
  %v3874 = vpack.c.b16 %v2966, %v2962
  %v3875 = vpack.c.b16 %v2967, %v2963
  %v3876 = vpack.c.b16 %v2968, %v2964
  %v3877 = vpack.c.b16 %v2973, %v2969
  %v3878 = vpack.c.b16 %v2974, %v2970
  %v3879 = vpack.c.b16 %v2975, %v2971
  %v3880 = vpack.c.b16 %v2976, %v2972
  %v3881 = vpack.c.b16 %v2981, %v2977
  %v3882 = vpack.c.b16 %v2982, %v2978
  %v3883 = vpack.c.b16 %v2983, %v2979
  %v3884 = vpack.c.b16 %v2984, %v2980
  %v3885 = vpack.c.b16 %v2989, %v2985
  %v3886 = vpack.c.b16 %v2990, %v2986
  %v3887 = vpack.c.b16 %v2991, %v2987
  %v3888 = vpack.c.b16 %v2992, %v2988
  %v3889 = vpack.c.b16 %v2997, %v2993
  %v3890 = vpack.c.b16 %v2998, %v2994
  %v3891 = vpack.c.b16 %v2999, %v2995
  %v3892 = vpack.c.b16 %v3000, %v2996
  %v3893 = vpack.c.b16 %v3005, %v3001
  %v3894 = vpack.c.b16 %v3006, %v3002
  %v3895 = vpack.c.b16 %v3007, %v3003
  %v3896 = vpack.c.b16 %v3008, %v3004
  %v3897 = vpack.c.b16 %v3013, %v3009
  %v3898 = vpack.c.b16 %v3014, %v3010
  %v3899 = vpack.c.b16 %v3015, %v3011
  %v3900 = vpack.c.b16 %v3016, %v3012
  %v3901 = vpack.c.b16 %v3021, %v3017
  %v3902 = vpack.c.b16 %v3022, %v3018
  %v3903 = vpack.c.b16 %v3023, %v3019
  %v3904 = vpack.c.b16 %v3024, %v3020
  %v3905 = vpack.c.b16 %v3029, %v3025
  %v3906 = vpack.c.b16 %v3030, %v3026
  %v3907 = vpack.c.b16 %v3031, %v3027
  %v3908 = vpack.c.b16 %v3032, %v3028
  %v3909 = vpack.c.b16 %v3037, %v3033
  %v3910 = vpack.c.b16 %v3038, %v3034
  %v3911 = vpack.c.b16 %v3039, %v3035
  %v3912 = vpack.c.b16 %v3040, %v3036
  %v3913 = vpack.c.b16 %v3045, %v3041
  %v3914 = vpack.c.b16 %v3046, %v3042
  %v3915 = vpack.c.b16 %v3047, %v3043
  %v3916 = vpack.c.b16 %v3048, %v3044
  %v3917 = vpack.c.b16 %v3053, %v3049
  %v3918 = vpack.c.b16 %v3054, %v3050
  %v3919 = vpack.c.b16 %v3055, %v3051
  %v3920 = vpack.c.b16 %v3056, %v3052
  %v3921 = vpack.c.b16 %v3061, %v3057
  %v3922 = vpack.c.b16 %v3062, %v3058
  %v3923 = vpack.c.b16 %v3063, %v3059
  %v3924 = vpack.c.b16 %v3064, %v3060
  %v3925 = vpack.c.b16 %v3069, %v3065
  %v3926 = vpack.c.b16 %v3070, %v3066
  %v3927 = vpack.c.b16 %v3071, %v3067
  %v3928 = vpack.c.b16 %v3072, %v3068
  %v3929 = vpack.c.b16 %v3077, %v3073
  %v3930 = vpack.c.b16 %v3078, %v3074
  %v3931 = vpack.c.b16 %v3079, %v3075
  %v3932 = vpack.c.b16 %v3080, %v3076
  %v3933 = vpack.c.b16 %v3085, %v3081
  %v3934 = vpack.c.b16 %v3086, %v3082
  %v3935 = vpack.c.b16 %v3087, %v3083
  %v3936 = vpack.c.b16 %v3088, %v3084
  %v3937 = vpack.c.b16 %v3093, %v3089
  %v3938 = vpack.c.b16 %v3094, %v3090
  %v3939 = vpack.c.b16 %v3095, %v3091
  %v3940 = vpack.c.b16 %v3096, %v3092
  %v3941 = vpack.c.b16 %v3101, %v3097
  %v3942 = vpack.c.b16 %v3102, %v3098
  %v3943 = vpack.c.b16 %v3103, %v3099
  %v3944 = vpack.c.b16 %v3104, %v3100
  %v3945 = vpack.c.b16 %v3109, %v3105
  %v3946 = vpack.c.b16 %v3110, %v3106
  %v3947 = vpack.c.b16 %v3111, %v3107
  %v3948 = vpack.c.b16 %v3112, %v3108
  %v3949 = vpack.c.b16 %v3117, %v3113
  %v3950 = vpack.c.b16 %v3118, %v3114
  %v3951 = vpack.c.b16 %v3119, %v3115
  %v3952 = vpack.c.b16 %v3120, %v3116
  %v3953 = vpack.c.b16 %v3125, %v3121
  %v3954 = vpack.c.b16 %v3126, %v3122
  %v3955 = vpack.c.b16 %v3127, %v3123
  %v3956 = vpack.c.b16 %v3128, %v3124
  %v3957 = vpack.c.b16 %v3133, %v3129
  %v3958 = vpack.c.b16 %v3134, %v3130
  %v3959 = vpack.c.b16 %v3135, %v3131
  %v3960 = vpack.c.b16 %v3136, %v3132
  %v3961 = vpack.c.b16 %v3141, %v3137
  %v3962 = vpack.c.b16 %v3142, %v3138
  %v3963 = vpack.c.b16 %v3143, %v3139
  %v3964 = vpack.c.b16 %v3144, %v3140
  %v3965 = vpack.c.b16 %v3149, %v3145
  %v3966 = vpack.c.b16 %v3150, %v3146
  %v3967 = vpack.c.b16 %v3151, %v3147
  %v3968 = vpack.c.b16 %v3152, %v3148
  %v3969 = vpack.c.b16 %v3157, %v3153
  %v3970 = vpack.c.b16 %v3158, %v3154
  %v3971 = vpack.c.b16 %v3159, %v3155
  %v3972 = vpack.c.b16 %v3160, %v3156
  %v3973 = vpack.c.b16 %v3165, %v3161
  %v3974 = vpack.c.b16 %v3166, %v3162
  %v3975 = vpack.c.b16 %v3167, %v3163
  %v3976 = vpack.c.b16 %v3168, %v3164
  %v3977 = vpack.c.b16 %v3173, %v3169
  %v3978 = vpack.c.b16 %v3174, %v3170
  %v3979 = vpack.c.b16 %v3175, %v3171
  %v3980 = vpack.c.b16 %v3176, %v3172
  %v3981 = vpack.c.b16 %v3181, %v3177
  %v3982 = vpack.c.b16 %v3182, %v3178
  %v3983 = vpack.c.b16 %v3183, %v3179
  %v3984 = vpack.c.b16 %v3184, %v3180
  %v3985 = vpack.c.b16 %v3189, %v3185
  %v3986 = vpack.c.b16 %v3190, %v3186
  %v3987 = vpack.c.b16 %v3191, %v3187
  %v3988 = vpack.c.b16 %v3192, %v3188
  %v3989 = vpack.c.b16 %v3197, %v3193
  %v3990 = vpack.c.b16 %v3198, %v3194
  %v3991 = vpack.c.b16 %v3199, %v3195
  %v3992 = vpack.c.b16 %v3200, %v3196
  %v3993 = vpack.c.b16 %v3205, %v3201
  %v3994 = vpack.c.b16 %v3206, %v3202
  %v3995 = vpack.c.b16 %v3207, %v3203
  %v3996 = vpack.c.b16 %v3208, %v3204
  %v3997 = vpack.c.b16 %v3213, %v3209
  %v3998 = vpack.c.b16 %v3214, %v3210
  %v3999 = vpack.c.b16 %v3215, %v3211
  %v4000 = vpack.c.b16 %v3216, %v3212
  %vm4785 = vcmask 523264
  %v4787 = vsel %vm4785, %v70, 0
  %4789 = vmatpush.bf16.msra.mxu0 %v3245
  %4790 = vmatpush.bf16.msra.mxu0 %v3241
  %4791 = vmatpush.bf16.msra.mxu0 %v3237
  %4792 = vmatpush.bf16.msra.mxu0 %v3233
  %4793 = vmatpush.bf16.msra.mxu0 %v3229
  %4794 = vmatpush.bf16.msra.mxu0 %v3225
  %4795 = vmatpush.bf16.msra.mxu0 %v3221
  %4796 = vmatpush.bf16.msra.mxu0 %v3217
  %4797 = vmatmul.bf16.gmra.mxu0 %v46
  %v4798 = vpop.f32.mrf.mxu0
  %v4799 = vadd.f32 %v857, %v4798
  %v4800 = vpop.f32.mrf.mxu0
  %4801 = vdwg.mxu0
  %4802 = vmatpush.bf16.msra.mxu0 %v3277
  %4803 = vmatpush.bf16.msra.mxu0 %v3273
  %4804 = vmatpush.bf16.msra.mxu0 %v3269
  %4805 = vmatpush.bf16.msra.mxu0 %v3265
  %4806 = vmatpush.bf16.msra.mxu0 %v3261
  %4807 = vmatpush.bf16.msra.mxu0 %v3257
  %4808 = vmatpush.bf16.msra.mxu0 %v3253
  %4809 = vmatpush.bf16.msra.mxu0 %v3249
  %4810 = vmatmul.bf16.gmra.mxu0 %v47
  %v4811 = vpop.f32.mrf.mxu0
  %v4812 = vadd.f32 %v4799, %v4811
  %v4813 = vpop.f32.mrf.mxu0
  %4814 = vdwg.mxu0
  %4815 = vmatpush.bf16.msra.mxu0 %v3309
  %4816 = vmatpush.bf16.msra.mxu0 %v3305
  %4817 = vmatpush.bf16.msra.mxu0 %v3301
  %4818 = vmatpush.bf16.msra.mxu0 %v3297
  %4819 = vmatpush.bf16.msra.mxu0 %v3293
  %4820 = vmatpush.bf16.msra.mxu0 %v3289
  %4821 = vmatpush.bf16.msra.mxu0 %v3285
  %4822 = vmatpush.bf16.msra.mxu0 %v3281
  %4823 = vmatmul.bf16.gmra.mxu0 %v48
  %v4824 = vpop.f32.mrf.mxu0
  %v4825 = vadd.f32 %v4812, %v4824
  %v4826 = vpop.f32.mrf.mxu0
  %4827 = vdwg.mxu0
  %4828 = vmatpush.bf16.msra.mxu0 %v3341
  %4829 = vmatpush.bf16.msra.mxu0 %v3337
  %4830 = vmatpush.bf16.msra.mxu0 %v3333
  %4831 = vmatpush.bf16.msra.mxu0 %v3329
  %4832 = vmatpush.bf16.msra.mxu0 %v3325
  %4833 = vmatpush.bf16.msra.mxu0 %v3321
  %4834 = vmatpush.bf16.msra.mxu0 %v3317
  %4835 = vmatpush.bf16.msra.mxu0 %v3313
  %4836 = vmatmul.bf16.gmra.mxu0 %v49
  %v4837 = vpop.f32.mrf.mxu0
  %v4838 = vadd.f32 %v4825, %v4837
  %v4839 = vpop.f32.mrf.mxu0
  %4840 = vdwg.mxu0
  %4841 = vmatpush.bf16.msra.mxu0 %v3373
  %4842 = vmatpush.bf16.msra.mxu0 %v3369
  %4843 = vmatpush.bf16.msra.mxu0 %v3365
  %4844 = vmatpush.bf16.msra.mxu0 %v3361
  %4845 = vmatpush.bf16.msra.mxu0 %v3357
  %4846 = vmatpush.bf16.msra.mxu0 %v3353
  %4847 = vmatpush.bf16.msra.mxu0 %v3349
  %4848 = vmatpush.bf16.msra.mxu0 %v3345
  %4849 = vmatmul.bf16.gmra.mxu0 %v50
  %v4850 = vpop.f32.mrf.mxu0
  %v4851 = vadd.f32 %v4838, %v4850
  %v4852 = vpop.f32.mrf.mxu0
  %4853 = vdwg.mxu0
  %4854 = vmatpush.bf16.msra.mxu0 %v3405
  %4855 = vmatpush.bf16.msra.mxu0 %v3401
  %4856 = vmatpush.bf16.msra.mxu0 %v3397
  %4857 = vmatpush.bf16.msra.mxu0 %v3393
  %4858 = vmatpush.bf16.msra.mxu0 %v3389
  %4859 = vmatpush.bf16.msra.mxu0 %v3385
  %4860 = vmatpush.bf16.msra.mxu0 %v3381
  %4861 = vmatpush.bf16.msra.mxu0 %v3377
  %4862 = vmatmul.bf16.gmra.mxu0 %v51
  %v4863 = vpop.f32.mrf.mxu0
  %v4864 = vadd.f32 %v4851, %v4863
  %v4865 = vpop.f32.mrf.mxu0
  %4866 = vdwg.mxu0
  %4867 = vmatpush.bf16.msra.mxu0 %v3437
  %4868 = vmatpush.bf16.msra.mxu0 %v3433
  %4869 = vmatpush.bf16.msra.mxu0 %v3429
  %4870 = vmatpush.bf16.msra.mxu0 %v3425
  %4871 = vmatpush.bf16.msra.mxu0 %v3421
  %4872 = vmatpush.bf16.msra.mxu0 %v3417
  %4873 = vmatpush.bf16.msra.mxu0 %v3413
  %4874 = vmatpush.bf16.msra.mxu0 %v3409
  %4875 = vmatmul.bf16.gmra.mxu0 %v52
  %v4876 = vpop.f32.mrf.mxu0
  %v4877 = vadd.f32 %v4864, %v4876
  %v4878 = vpop.f32.mrf.mxu0
  %4879 = vdwg.mxu0
  %4880 = vmatpush.bf16.msra.mxu0 %v3469
  %4881 = vmatpush.bf16.msra.mxu0 %v3465
  %4882 = vmatpush.bf16.msra.mxu0 %v3461
  %4883 = vmatpush.bf16.msra.mxu0 %v3457
  %4884 = vmatpush.bf16.msra.mxu0 %v3453
  %4885 = vmatpush.bf16.msra.mxu0 %v3449
  %4886 = vmatpush.bf16.msra.mxu0 %v3445
  %4887 = vmatpush.bf16.msra.mxu0 %v3441
  %4888 = vmatmul.bf16.gmra.mxu0 %v53
  %v4889 = vpop.f32.mrf.mxu0
  %v4890 = vadd.f32 %v4877, %v4889
  %v4891 = vpop.f32.mrf.mxu0
  %4892 = vdwg.mxu0
  %4893 = vmatpush.bf16.msra.mxu0 %v3501
  %4894 = vmatpush.bf16.msra.mxu0 %v3497
  %4895 = vmatpush.bf16.msra.mxu0 %v3493
  %4896 = vmatpush.bf16.msra.mxu0 %v3489
  %4897 = vmatpush.bf16.msra.mxu0 %v3485
  %4898 = vmatpush.bf16.msra.mxu0 %v3481
  %4899 = vmatpush.bf16.msra.mxu0 %v3477
  %4900 = vmatpush.bf16.msra.mxu0 %v3473
  %4901 = vmatmul.bf16.gmra.mxu0 %v54
  %v4902 = vpop.f32.mrf.mxu0
  %v4903 = vadd.f32 %v4890, %v4902
  %v4904 = vpop.f32.mrf.mxu0
  %4905 = vdwg.mxu0
  %4906 = vmatpush.bf16.msra.mxu0 %v3533
  %4907 = vmatpush.bf16.msra.mxu0 %v3529
  %4908 = vmatpush.bf16.msra.mxu0 %v3525
  %4909 = vmatpush.bf16.msra.mxu0 %v3521
  %4910 = vmatpush.bf16.msra.mxu0 %v3517
  %4911 = vmatpush.bf16.msra.mxu0 %v3513
  %4912 = vmatpush.bf16.msra.mxu0 %v3509
  %4913 = vmatpush.bf16.msra.mxu0 %v3505
  %4914 = vmatmul.bf16.gmra.mxu0 %v55
  %v4915 = vpop.f32.mrf.mxu0
  %v4916 = vadd.f32 %v4903, %v4915
  %v4917 = vpop.f32.mrf.mxu0
  %4918 = vdwg.mxu0
  %4919 = vmatpush.bf16.msra.mxu0 %v3565
  %4920 = vmatpush.bf16.msra.mxu0 %v3561
  %4921 = vmatpush.bf16.msra.mxu0 %v3557
  %4922 = vmatpush.bf16.msra.mxu0 %v3553
  %4923 = vmatpush.bf16.msra.mxu0 %v3549
  %4924 = vmatpush.bf16.msra.mxu0 %v3545
  %4925 = vmatpush.bf16.msra.mxu0 %v3541
  %4926 = vmatpush.bf16.msra.mxu0 %v3537
  %4927 = vmatmul.bf16.gmra.mxu0 %v56
  %v4928 = vpop.f32.mrf.mxu0
  %v4929 = vadd.f32 %v4916, %v4928
  %v4930 = vpop.f32.mrf.mxu0
  %4931 = vdwg.mxu0
  %4932 = vmatpush.bf16.msra.mxu0 %v3597
  %4933 = vmatpush.bf16.msra.mxu0 %v3593
  %4934 = vmatpush.bf16.msra.mxu0 %v3589
  %4935 = vmatpush.bf16.msra.mxu0 %v3585
  %4936 = vmatpush.bf16.msra.mxu0 %v3581
  %4937 = vmatpush.bf16.msra.mxu0 %v3577
  %4938 = vmatpush.bf16.msra.mxu0 %v3573
  %4939 = vmatpush.bf16.msra.mxu0 %v3569
  %4940 = vmatmul.bf16.gmra.mxu0 %v57
  %v4941 = vpop.f32.mrf.mxu0
  %v4942 = vadd.f32 %v4929, %v4941
  %v4943 = vpop.f32.mrf.mxu0
  %4944 = vdwg.mxu0
  %4945 = vmatpush.bf16.msra.mxu0 %v3629
  %4946 = vmatpush.bf16.msra.mxu0 %v3625
  %4947 = vmatpush.bf16.msra.mxu0 %v3621
  %4948 = vmatpush.bf16.msra.mxu0 %v3617
  %4949 = vmatpush.bf16.msra.mxu0 %v3613
  %4950 = vmatpush.bf16.msra.mxu0 %v3609
  %4951 = vmatpush.bf16.msra.mxu0 %v3605
  %4952 = vmatpush.bf16.msra.mxu0 %v3601
  %4953 = vmatmul.bf16.gmra.mxu0 %v58
  %v4954 = vpop.f32.mrf.mxu0
  %v4955 = vadd.f32 %v4942, %v4954
  %v4956 = vpop.f32.mrf.mxu0
  %4957 = vdwg.mxu0
  %4958 = vmatpush.bf16.msra.mxu0 %v3661
  %4959 = vmatpush.bf16.msra.mxu0 %v3657
  %4960 = vmatpush.bf16.msra.mxu0 %v3653
  %4961 = vmatpush.bf16.msra.mxu0 %v3649
  %4962 = vmatpush.bf16.msra.mxu0 %v3645
  %4963 = vmatpush.bf16.msra.mxu0 %v3641
  %4964 = vmatpush.bf16.msra.mxu0 %v3637
  %4965 = vmatpush.bf16.msra.mxu0 %v3633
  %4966 = vmatmul.bf16.gmra.mxu0 %v59
  %v4967 = vpop.f32.mrf.mxu0
  %v4968 = vadd.f32 %v4955, %v4967
  %v4969 = vpop.f32.mrf.mxu0
  %4970 = vdwg.mxu0
  %4971 = vmatpush.bf16.msra.mxu0 %v3693
  %4972 = vmatpush.bf16.msra.mxu0 %v3689
  %4973 = vmatpush.bf16.msra.mxu0 %v3685
  %4974 = vmatpush.bf16.msra.mxu0 %v3681
  %4975 = vmatpush.bf16.msra.mxu0 %v3677
  %4976 = vmatpush.bf16.msra.mxu0 %v3673
  %4977 = vmatpush.bf16.msra.mxu0 %v3669
  %4978 = vmatpush.bf16.msra.mxu0 %v3665
  %4979 = vmatmul.bf16.gmra.mxu0 %v60
  %v4980 = vpop.f32.mrf.mxu0
  %v4981 = vadd.f32 %v4968, %v4980
  %v4982 = vpop.f32.mrf.mxu0
  %4983 = vdwg.mxu0
  %4984 = vmatpush.bf16.msra.mxu0 %v3725
  %4985 = vmatpush.bf16.msra.mxu0 %v3721
  %4986 = vmatpush.bf16.msra.mxu0 %v3717
  %4987 = vmatpush.bf16.msra.mxu0 %v3713
  %4988 = vmatpush.bf16.msra.mxu0 %v3709
  %4989 = vmatpush.bf16.msra.mxu0 %v3705
  %4990 = vmatpush.bf16.msra.mxu0 %v3701
  %4991 = vmatpush.bf16.msra.mxu0 %v3697
  %4992 = vmatmul.bf16.gmra.mxu0 %v61
  %v4993 = vpop.f32.mrf.mxu0
  %v4994 = vadd.f32 %v4981, %v4993
  %v4995 = vpop.f32.mrf.mxu0
  %4996 = vdwg.mxu0
  %4997 = vmatpush.bf16.msra.mxu0 %v3757
  %4998 = vmatpush.bf16.msra.mxu0 %v3753
  %4999 = vmatpush.bf16.msra.mxu0 %v3749
  %5000 = vmatpush.bf16.msra.mxu0 %v3745
  %5001 = vmatpush.bf16.msra.mxu0 %v3741
  %5002 = vmatpush.bf16.msra.mxu0 %v3737
  %5003 = vmatpush.bf16.msra.mxu0 %v3733
  %5004 = vmatpush.bf16.msra.mxu0 %v3729
  %5005 = vmatmul.bf16.gmra.mxu0 %v62
  %v5006 = vpop.f32.mrf.mxu0
  %v5007 = vadd.f32 %v4994, %v5006
  %v5008 = vpop.f32.mrf.mxu0
  %5009 = vdwg.mxu0
  %5010 = vmatpush.bf16.msra.mxu0 %v3789
  %5011 = vmatpush.bf16.msra.mxu0 %v3785
  %5012 = vmatpush.bf16.msra.mxu0 %v3781
  %5013 = vmatpush.bf16.msra.mxu0 %v3777
  %5014 = vmatpush.bf16.msra.mxu0 %v3773
  %5015 = vmatpush.bf16.msra.mxu0 %v3769
  %5016 = vmatpush.bf16.msra.mxu0 %v3765
  %5017 = vmatpush.bf16.msra.mxu0 %v3761
  %5018 = vmatmul.bf16.gmra.mxu0 %v63
  %v5019 = vpop.f32.mrf.mxu0
  %v5020 = vadd.f32 %v5007, %v5019
  %v5021 = vpop.f32.mrf.mxu0
  %5022 = vdwg.mxu0
  %5023 = vmatpush.bf16.msra.mxu0 %v3821
  %5024 = vmatpush.bf16.msra.mxu0 %v3817
  %5025 = vmatpush.bf16.msra.mxu0 %v3813
  %5026 = vmatpush.bf16.msra.mxu0 %v3809
  %5027 = vmatpush.bf16.msra.mxu0 %v3805
  %5028 = vmatpush.bf16.msra.mxu0 %v3801
  %5029 = vmatpush.bf16.msra.mxu0 %v3797
  %5030 = vmatpush.bf16.msra.mxu0 %v3793
  %5031 = vmatmul.bf16.gmra.mxu0 %v64
  %v5032 = vpop.f32.mrf.mxu0
  %v5033 = vadd.f32 %v5020, %v5032
  %v5034 = vpop.f32.mrf.mxu0
  %5035 = vdwg.mxu0
  %5036 = vmatpush.bf16.msra.mxu0 %v3853
  %5037 = vmatpush.bf16.msra.mxu0 %v3849
  %5038 = vmatpush.bf16.msra.mxu0 %v3845
  %5039 = vmatpush.bf16.msra.mxu0 %v3841
  %5040 = vmatpush.bf16.msra.mxu0 %v3837
  %5041 = vmatpush.bf16.msra.mxu0 %v3833
  %5042 = vmatpush.bf16.msra.mxu0 %v3829
  %5043 = vmatpush.bf16.msra.mxu0 %v3825
  %5044 = vmatmul.bf16.gmra.mxu0 %v65
  %v5045 = vpop.f32.mrf.mxu0
  %v5046 = vadd.f32 %v5033, %v5045
  %v5047 = vpop.f32.mrf.mxu0
  %5048 = vdwg.mxu0
  %5049 = vmatpush.bf16.msra.mxu0 %v3885
  %5050 = vmatpush.bf16.msra.mxu0 %v3881
  %5051 = vmatpush.bf16.msra.mxu0 %v3877
  %5052 = vmatpush.bf16.msra.mxu0 %v3873
  %5053 = vmatpush.bf16.msra.mxu0 %v3869
  %5054 = vmatpush.bf16.msra.mxu0 %v3865
  %5055 = vmatpush.bf16.msra.mxu0 %v3861
  %5056 = vmatpush.bf16.msra.mxu0 %v3857
  %5057 = vmatmul.bf16.gmra.mxu0 %v66
  %v5058 = vpop.f32.mrf.mxu0
  %v5059 = vadd.f32 %v5046, %v5058
  %v5060 = vpop.f32.mrf.mxu0
  %5061 = vdwg.mxu0
  %5062 = vmatpush.bf16.msra.mxu0 %v3917
  %5063 = vmatpush.bf16.msra.mxu0 %v3913
  %5064 = vmatpush.bf16.msra.mxu0 %v3909
  %5065 = vmatpush.bf16.msra.mxu0 %v3905
  %5066 = vmatpush.bf16.msra.mxu0 %v3901
  %5067 = vmatpush.bf16.msra.mxu0 %v3897
  %5068 = vmatpush.bf16.msra.mxu0 %v3893
  %5069 = vmatpush.bf16.msra.mxu0 %v3889
  %5070 = vmatmul.bf16.gmra.mxu0 %v67
  %v5071 = vpop.f32.mrf.mxu0
  %v5072 = vadd.f32 %v5059, %v5071
  %v5073 = vpop.f32.mrf.mxu0
  %5074 = vdwg.mxu0
  %5075 = vmatpush.bf16.msra.mxu0 %v3949
  %5076 = vmatpush.bf16.msra.mxu0 %v3945
  %5077 = vmatpush.bf16.msra.mxu0 %v3941
  %5078 = vmatpush.bf16.msra.mxu0 %v3937
  %5079 = vmatpush.bf16.msra.mxu0 %v3933
  %5080 = vmatpush.bf16.msra.mxu0 %v3929
  %5081 = vmatpush.bf16.msra.mxu0 %v3925
  %5082 = vmatpush.bf16.msra.mxu0 %v3921
  %5083 = vmatmul.bf16.gmra.mxu0 %v68
  %v5084 = vpop.f32.mrf.mxu0
  %v5085 = vadd.f32 %v5072, %v5084
  %v5086 = vpop.f32.mrf.mxu0
  %5087 = vdwg.mxu0
  %5088 = vmatpush.bf16.msra.mxu0 %v3981
  %5089 = vmatpush.bf16.msra.mxu0 %v3977
  %5090 = vmatpush.bf16.msra.mxu0 %v3973
  %5091 = vmatpush.bf16.msra.mxu0 %v3969
  %5092 = vmatpush.bf16.msra.mxu0 %v3965
  %5093 = vmatpush.bf16.msra.mxu0 %v3961
  %5094 = vmatpush.bf16.msra.mxu0 %v3957
  %5095 = vmatpush.bf16.msra.mxu0 %v3953
  %5096 = vmatmul.bf16.gmra.mxu0 %v69
  %v5097 = vpop.f32.mrf.mxu0
  %v5098 = vadd.f32 %v5085, %v5097
  %v5099 = vpop.f32.mrf.mxu0
  %5100 = vdwg.mxu0
  %5101 = vmatpush.bf16.msra.mxu0 0
  %5102 = vmatpush.bf16.msra.mxu0 0
  %5103 = vmatpush.bf16.msra.mxu0 0
  %5104 = vmatpush.bf16.msra.mxu0 0
  %5105 = vmatpush.bf16.msra.mxu0 %v3997
  %5106 = vmatpush.bf16.msra.mxu0 %v3993
  %5107 = vmatpush.bf16.msra.mxu0 %v3989
  %5108 = vmatpush.bf16.msra.mxu0 %v3985
  %5109 = vmatmul.bf16.gmra.mxu0 %v4787
  %v5110 = vpop.f32.mrf.mxu0
  %v5111 = vadd.f32 %v5098, %v5110
  %v5112 = vpop.f32.mrf.mxu0
  %5113 = vdwg.mxu0
  %5114 = vmatpush.bf16.msra.mxu0 %v3246
  %5115 = vmatpush.bf16.msra.mxu0 %v3242
  %5116 = vmatpush.bf16.msra.mxu0 %v3238
  %5117 = vmatpush.bf16.msra.mxu0 %v3234
  %5118 = vmatpush.bf16.msra.mxu0 %v3230
  %5119 = vmatpush.bf16.msra.mxu0 %v3226
  %5120 = vmatpush.bf16.msra.mxu0 %v3222
  %5121 = vmatpush.bf16.msra.mxu0 %v3218
  %5122 = vmatmul.bf16.gmra.mxu0 %v46
  %v5123 = vpop.f32.mrf.mxu0
  %v5124 = vadd.f32 %v858, %v5123
  %v5125 = vpop.f32.mrf.mxu0
  %5126 = vdwg.mxu0
  %5127 = vmatpush.bf16.msra.mxu0 %v3278
  %5128 = vmatpush.bf16.msra.mxu0 %v3274
  %5129 = vmatpush.bf16.msra.mxu0 %v3270
  %5130 = vmatpush.bf16.msra.mxu0 %v3266
  %5131 = vmatpush.bf16.msra.mxu0 %v3262
  %5132 = vmatpush.bf16.msra.mxu0 %v3258
  %5133 = vmatpush.bf16.msra.mxu0 %v3254
  %5134 = vmatpush.bf16.msra.mxu0 %v3250
  %5135 = vmatmul.bf16.gmra.mxu0 %v47
  %v5136 = vpop.f32.mrf.mxu0
  %v5137 = vadd.f32 %v5124, %v5136
  %v5138 = vpop.f32.mrf.mxu0
  %5139 = vdwg.mxu0
  %5140 = vmatpush.bf16.msra.mxu0 %v3310
  %5141 = vmatpush.bf16.msra.mxu0 %v3306
  %5142 = vmatpush.bf16.msra.mxu0 %v3302
  %5143 = vmatpush.bf16.msra.mxu0 %v3298
  %5144 = vmatpush.bf16.msra.mxu0 %v3294
  %5145 = vmatpush.bf16.msra.mxu0 %v3290
  %5146 = vmatpush.bf16.msra.mxu0 %v3286
  %5147 = vmatpush.bf16.msra.mxu0 %v3282
  %5148 = vmatmul.bf16.gmra.mxu0 %v48
  %v5149 = vpop.f32.mrf.mxu0
  %v5150 = vadd.f32 %v5137, %v5149
  %v5151 = vpop.f32.mrf.mxu0
  %5152 = vdwg.mxu0
  %5153 = vmatpush.bf16.msra.mxu0 %v3342
  %5154 = vmatpush.bf16.msra.mxu0 %v3338
  %5155 = vmatpush.bf16.msra.mxu0 %v3334
  %5156 = vmatpush.bf16.msra.mxu0 %v3330
  %5157 = vmatpush.bf16.msra.mxu0 %v3326
  %5158 = vmatpush.bf16.msra.mxu0 %v3322
  %5159 = vmatpush.bf16.msra.mxu0 %v3318
  %5160 = vmatpush.bf16.msra.mxu0 %v3314
  %5161 = vmatmul.bf16.gmra.mxu0 %v49
  %v5162 = vpop.f32.mrf.mxu0
  %v5163 = vadd.f32 %v5150, %v5162
  %v5164 = vpop.f32.mrf.mxu0
  %5165 = vdwg.mxu0
  %5166 = vmatpush.bf16.msra.mxu0 %v3374
  %5167 = vmatpush.bf16.msra.mxu0 %v3370
  %5168 = vmatpush.bf16.msra.mxu0 %v3366
  %5169 = vmatpush.bf16.msra.mxu0 %v3362
  %5170 = vmatpush.bf16.msra.mxu0 %v3358
  %5171 = vmatpush.bf16.msra.mxu0 %v3354
  %5172 = vmatpush.bf16.msra.mxu0 %v3350
  %5173 = vmatpush.bf16.msra.mxu0 %v3346
  %5174 = vmatmul.bf16.gmra.mxu0 %v50
  %v5175 = vpop.f32.mrf.mxu0
  %v5176 = vadd.f32 %v5163, %v5175
  %v5177 = vpop.f32.mrf.mxu0
  %5178 = vdwg.mxu0
  %5179 = vmatpush.bf16.msra.mxu0 %v3406
  %5180 = vmatpush.bf16.msra.mxu0 %v3402
  %5181 = vmatpush.bf16.msra.mxu0 %v3398
  %5182 = vmatpush.bf16.msra.mxu0 %v3394
  %5183 = vmatpush.bf16.msra.mxu0 %v3390
  %5184 = vmatpush.bf16.msra.mxu0 %v3386
  %5185 = vmatpush.bf16.msra.mxu0 %v3382
  %5186 = vmatpush.bf16.msra.mxu0 %v3378
  %5187 = vmatmul.bf16.gmra.mxu0 %v51
  %v5188 = vpop.f32.mrf.mxu0
  %v5189 = vadd.f32 %v5176, %v5188
  %v5190 = vpop.f32.mrf.mxu0
  %5191 = vdwg.mxu0
  %5192 = vmatpush.bf16.msra.mxu0 %v3438
  %5193 = vmatpush.bf16.msra.mxu0 %v3434
  %5194 = vmatpush.bf16.msra.mxu0 %v3430
  %5195 = vmatpush.bf16.msra.mxu0 %v3426
  %5196 = vmatpush.bf16.msra.mxu0 %v3422
  %5197 = vmatpush.bf16.msra.mxu0 %v3418
  %5198 = vmatpush.bf16.msra.mxu0 %v3414
  %5199 = vmatpush.bf16.msra.mxu0 %v3410
  %5200 = vmatmul.bf16.gmra.mxu0 %v52
  %v5201 = vpop.f32.mrf.mxu0
  %v5202 = vadd.f32 %v5189, %v5201
  %v5203 = vpop.f32.mrf.mxu0
  %5204 = vdwg.mxu0
  %5205 = vmatpush.bf16.msra.mxu0 %v3470
  %5206 = vmatpush.bf16.msra.mxu0 %v3466
  %5207 = vmatpush.bf16.msra.mxu0 %v3462
  %5208 = vmatpush.bf16.msra.mxu0 %v3458
  %5209 = vmatpush.bf16.msra.mxu0 %v3454
  %5210 = vmatpush.bf16.msra.mxu0 %v3450
  %5211 = vmatpush.bf16.msra.mxu0 %v3446
  %5212 = vmatpush.bf16.msra.mxu0 %v3442
  %5213 = vmatmul.bf16.gmra.mxu0 %v53
  %v5214 = vpop.f32.mrf.mxu0
  %v5215 = vadd.f32 %v5202, %v5214
  %v5216 = vpop.f32.mrf.mxu0
  %5217 = vdwg.mxu0
  %5218 = vmatpush.bf16.msra.mxu0 %v3502
  %5219 = vmatpush.bf16.msra.mxu0 %v3498
  %5220 = vmatpush.bf16.msra.mxu0 %v3494
  %5221 = vmatpush.bf16.msra.mxu0 %v3490
  %5222 = vmatpush.bf16.msra.mxu0 %v3486
  %5223 = vmatpush.bf16.msra.mxu0 %v3482
  %5224 = vmatpush.bf16.msra.mxu0 %v3478
  %5225 = vmatpush.bf16.msra.mxu0 %v3474
  %5226 = vmatmul.bf16.gmra.mxu0 %v54
  %v5227 = vpop.f32.mrf.mxu0
  %v5228 = vadd.f32 %v5215, %v5227
  %v5229 = vpop.f32.mrf.mxu0
  %5230 = vdwg.mxu0
  %5231 = vmatpush.bf16.msra.mxu0 %v3534
  %5232 = vmatpush.bf16.msra.mxu0 %v3530
  %5233 = vmatpush.bf16.msra.mxu0 %v3526
  %5234 = vmatpush.bf16.msra.mxu0 %v3522
  %5235 = vmatpush.bf16.msra.mxu0 %v3518
  %5236 = vmatpush.bf16.msra.mxu0 %v3514
  %5237 = vmatpush.bf16.msra.mxu0 %v3510
  %5238 = vmatpush.bf16.msra.mxu0 %v3506
  %5239 = vmatmul.bf16.gmra.mxu0 %v55
  %v5240 = vpop.f32.mrf.mxu0
  %v5241 = vadd.f32 %v5228, %v5240
  %v5242 = vpop.f32.mrf.mxu0
  %5243 = vdwg.mxu0
  %5244 = vmatpush.bf16.msra.mxu0 %v3566
  %5245 = vmatpush.bf16.msra.mxu0 %v3562
  %5246 = vmatpush.bf16.msra.mxu0 %v3558
  %5247 = vmatpush.bf16.msra.mxu0 %v3554
  %5248 = vmatpush.bf16.msra.mxu0 %v3550
  %5249 = vmatpush.bf16.msra.mxu0 %v3546
  %5250 = vmatpush.bf16.msra.mxu0 %v3542
  %5251 = vmatpush.bf16.msra.mxu0 %v3538
  %5252 = vmatmul.bf16.gmra.mxu0 %v56
  %v5253 = vpop.f32.mrf.mxu0
  %v5254 = vadd.f32 %v5241, %v5253
  %v5255 = vpop.f32.mrf.mxu0
  %5256 = vdwg.mxu0
  %5257 = vmatpush.bf16.msra.mxu0 %v3598
  %5258 = vmatpush.bf16.msra.mxu0 %v3594
  %5259 = vmatpush.bf16.msra.mxu0 %v3590
  %5260 = vmatpush.bf16.msra.mxu0 %v3586
  %5261 = vmatpush.bf16.msra.mxu0 %v3582
  %5262 = vmatpush.bf16.msra.mxu0 %v3578
  %5263 = vmatpush.bf16.msra.mxu0 %v3574
  %5264 = vmatpush.bf16.msra.mxu0 %v3570
  %5265 = vmatmul.bf16.gmra.mxu0 %v57
  %v5266 = vpop.f32.mrf.mxu0
  %v5267 = vadd.f32 %v5254, %v5266
  %v5268 = vpop.f32.mrf.mxu0
  %5269 = vdwg.mxu0
  %5270 = vmatpush.bf16.msra.mxu0 %v3630
  %5271 = vmatpush.bf16.msra.mxu0 %v3626
  %5272 = vmatpush.bf16.msra.mxu0 %v3622
  %5273 = vmatpush.bf16.msra.mxu0 %v3618
  %5274 = vmatpush.bf16.msra.mxu0 %v3614
  %5275 = vmatpush.bf16.msra.mxu0 %v3610
  %5276 = vmatpush.bf16.msra.mxu0 %v3606
  %5277 = vmatpush.bf16.msra.mxu0 %v3602
  %5278 = vmatmul.bf16.gmra.mxu0 %v58
  %v5279 = vpop.f32.mrf.mxu0
  %v5280 = vadd.f32 %v5267, %v5279
  %v5281 = vpop.f32.mrf.mxu0
  %5282 = vdwg.mxu0
  %5283 = vmatpush.bf16.msra.mxu0 %v3662
  %5284 = vmatpush.bf16.msra.mxu0 %v3658
  %5285 = vmatpush.bf16.msra.mxu0 %v3654
  %5286 = vmatpush.bf16.msra.mxu0 %v3650
  %5287 = vmatpush.bf16.msra.mxu0 %v3646
  %5288 = vmatpush.bf16.msra.mxu0 %v3642
  %5289 = vmatpush.bf16.msra.mxu0 %v3638
  %5290 = vmatpush.bf16.msra.mxu0 %v3634
  %5291 = vmatmul.bf16.gmra.mxu0 %v59
  %v5292 = vpop.f32.mrf.mxu0
  %v5293 = vadd.f32 %v5280, %v5292
  %v5294 = vpop.f32.mrf.mxu0
  %5295 = vdwg.mxu0
  %5296 = vmatpush.bf16.msra.mxu0 %v3694
  %5297 = vmatpush.bf16.msra.mxu0 %v3690
  %5298 = vmatpush.bf16.msra.mxu0 %v3686
  %5299 = vmatpush.bf16.msra.mxu0 %v3682
  %5300 = vmatpush.bf16.msra.mxu0 %v3678
  %5301 = vmatpush.bf16.msra.mxu0 %v3674
  %5302 = vmatpush.bf16.msra.mxu0 %v3670
  %5303 = vmatpush.bf16.msra.mxu0 %v3666
  %5304 = vmatmul.bf16.gmra.mxu0 %v60
  %v5305 = vpop.f32.mrf.mxu0
  %v5306 = vadd.f32 %v5293, %v5305
  %v5307 = vpop.f32.mrf.mxu0
  %5308 = vdwg.mxu0
  %5309 = vmatpush.bf16.msra.mxu0 %v3726
  %5310 = vmatpush.bf16.msra.mxu0 %v3722
  %5311 = vmatpush.bf16.msra.mxu0 %v3718
  %5312 = vmatpush.bf16.msra.mxu0 %v3714
  %5313 = vmatpush.bf16.msra.mxu0 %v3710
  %5314 = vmatpush.bf16.msra.mxu0 %v3706
  %5315 = vmatpush.bf16.msra.mxu0 %v3702
  %5316 = vmatpush.bf16.msra.mxu0 %v3698
  %5317 = vmatmul.bf16.gmra.mxu0 %v61
  %v5318 = vpop.f32.mrf.mxu0
  %v5319 = vadd.f32 %v5306, %v5318
  %v5320 = vpop.f32.mrf.mxu0
  %5321 = vdwg.mxu0
  %5322 = vmatpush.bf16.msra.mxu0 %v3758
  %5323 = vmatpush.bf16.msra.mxu0 %v3754
  %5324 = vmatpush.bf16.msra.mxu0 %v3750
  %5325 = vmatpush.bf16.msra.mxu0 %v3746
  %5326 = vmatpush.bf16.msra.mxu0 %v3742
  %5327 = vmatpush.bf16.msra.mxu0 %v3738
  %5328 = vmatpush.bf16.msra.mxu0 %v3734
  %5329 = vmatpush.bf16.msra.mxu0 %v3730
  %5330 = vmatmul.bf16.gmra.mxu0 %v62
  %v5331 = vpop.f32.mrf.mxu0
  %v5332 = vadd.f32 %v5319, %v5331
  %v5333 = vpop.f32.mrf.mxu0
  %5334 = vdwg.mxu0
  %5335 = vmatpush.bf16.msra.mxu0 %v3790
  %5336 = vmatpush.bf16.msra.mxu0 %v3786
  %5337 = vmatpush.bf16.msra.mxu0 %v3782
  %5338 = vmatpush.bf16.msra.mxu0 %v3778
  %5339 = vmatpush.bf16.msra.mxu0 %v3774
  %5340 = vmatpush.bf16.msra.mxu0 %v3770
  %5341 = vmatpush.bf16.msra.mxu0 %v3766
  %5342 = vmatpush.bf16.msra.mxu0 %v3762
  %5343 = vmatmul.bf16.gmra.mxu0 %v63
  %v5344 = vpop.f32.mrf.mxu0
  %v5345 = vadd.f32 %v5332, %v5344
  %v5346 = vpop.f32.mrf.mxu0
  %5347 = vdwg.mxu0
  %5348 = vmatpush.bf16.msra.mxu0 %v3822
  %5349 = vmatpush.bf16.msra.mxu0 %v3818
  %5350 = vmatpush.bf16.msra.mxu0 %v3814
  %5351 = vmatpush.bf16.msra.mxu0 %v3810
  %5352 = vmatpush.bf16.msra.mxu0 %v3806
  %5353 = vmatpush.bf16.msra.mxu0 %v3802
  %5354 = vmatpush.bf16.msra.mxu0 %v3798
  %5355 = vmatpush.bf16.msra.mxu0 %v3794
  %5356 = vmatmul.bf16.gmra.mxu0 %v64
  %v5357 = vpop.f32.mrf.mxu0
  %v5358 = vadd.f32 %v5345, %v5357
  %v5359 = vpop.f32.mrf.mxu0
  %5360 = vdwg.mxu0
  %5361 = vmatpush.bf16.msra.mxu0 %v3854
  %5362 = vmatpush.bf16.msra.mxu0 %v3850
  %5363 = vmatpush.bf16.msra.mxu0 %v3846
  %5364 = vmatpush.bf16.msra.mxu0 %v3842
  %5365 = vmatpush.bf16.msra.mxu0 %v3838
  %5366 = vmatpush.bf16.msra.mxu0 %v3834
  %5367 = vmatpush.bf16.msra.mxu0 %v3830
  %5368 = vmatpush.bf16.msra.mxu0 %v3826
  %5369 = vmatmul.bf16.gmra.mxu0 %v65
  %v5370 = vpop.f32.mrf.mxu0
  %v5371 = vadd.f32 %v5358, %v5370
  %v5372 = vpop.f32.mrf.mxu0
  %5373 = vdwg.mxu0
  %5374 = vmatpush.bf16.msra.mxu0 %v3886
  %5375 = vmatpush.bf16.msra.mxu0 %v3882
  %5376 = vmatpush.bf16.msra.mxu0 %v3878
  %5377 = vmatpush.bf16.msra.mxu0 %v3874
  %5378 = vmatpush.bf16.msra.mxu0 %v3870
  %5379 = vmatpush.bf16.msra.mxu0 %v3866
  %5380 = vmatpush.bf16.msra.mxu0 %v3862
  %5381 = vmatpush.bf16.msra.mxu0 %v3858
  %5382 = vmatmul.bf16.gmra.mxu0 %v66
  %v5383 = vpop.f32.mrf.mxu0
  %v5384 = vadd.f32 %v5371, %v5383
  %v5385 = vpop.f32.mrf.mxu0
  %5386 = vdwg.mxu0
  %5387 = vmatpush.bf16.msra.mxu0 %v3918
  %5388 = vmatpush.bf16.msra.mxu0 %v3914
  %5389 = vmatpush.bf16.msra.mxu0 %v3910
  %5390 = vmatpush.bf16.msra.mxu0 %v3906
  %5391 = vmatpush.bf16.msra.mxu0 %v3902
  %5392 = vmatpush.bf16.msra.mxu0 %v3898
  %5393 = vmatpush.bf16.msra.mxu0 %v3894
  %5394 = vmatpush.bf16.msra.mxu0 %v3890
  %5395 = vmatmul.bf16.gmra.mxu0 %v67
  %v5396 = vpop.f32.mrf.mxu0
  %v5397 = vadd.f32 %v5384, %v5396
  %v5398 = vpop.f32.mrf.mxu0
  %5399 = vdwg.mxu0
  %5400 = vmatpush.bf16.msra.mxu0 %v3950
  %5401 = vmatpush.bf16.msra.mxu0 %v3946
  %5402 = vmatpush.bf16.msra.mxu0 %v3942
  %5403 = vmatpush.bf16.msra.mxu0 %v3938
  %5404 = vmatpush.bf16.msra.mxu0 %v3934
  %5405 = vmatpush.bf16.msra.mxu0 %v3930
  %5406 = vmatpush.bf16.msra.mxu0 %v3926
  %5407 = vmatpush.bf16.msra.mxu0 %v3922
  %5408 = vmatmul.bf16.gmra.mxu0 %v68
  %v5409 = vpop.f32.mrf.mxu0
  %v5410 = vadd.f32 %v5397, %v5409
  %v5411 = vpop.f32.mrf.mxu0
  %5412 = vdwg.mxu0
  %5413 = vmatpush.bf16.msra.mxu0 %v3982
  %5414 = vmatpush.bf16.msra.mxu0 %v3978
  %5415 = vmatpush.bf16.msra.mxu0 %v3974
  %5416 = vmatpush.bf16.msra.mxu0 %v3970
  %5417 = vmatpush.bf16.msra.mxu0 %v3966
  %5418 = vmatpush.bf16.msra.mxu0 %v3962
  %5419 = vmatpush.bf16.msra.mxu0 %v3958
  %5420 = vmatpush.bf16.msra.mxu0 %v3954
  %5421 = vmatmul.bf16.gmra.mxu0 %v69
  %v5422 = vpop.f32.mrf.mxu0
  %v5423 = vadd.f32 %v5410, %v5422
  %v5424 = vpop.f32.mrf.mxu0
  %5425 = vdwg.mxu0
  %5426 = vmatpush.bf16.msra.mxu0 0
  %5427 = vmatpush.bf16.msra.mxu0 0
  %5428 = vmatpush.bf16.msra.mxu0 0
  %5429 = vmatpush.bf16.msra.mxu0 0
  %5430 = vmatpush.bf16.msra.mxu0 %v3998
  %5431 = vmatpush.bf16.msra.mxu0 %v3994
  %5432 = vmatpush.bf16.msra.mxu0 %v3990
  %5433 = vmatpush.bf16.msra.mxu0 %v3986
  %5434 = vmatmul.bf16.gmra.mxu0 %v4787
  %v5435 = vpop.f32.mrf.mxu0
  %v5436 = vadd.f32 %v5423, %v5435
  %v5437 = vpop.f32.mrf.mxu0
  %5438 = vdwg.mxu0
  %5439 = vmatpush.bf16.msra.mxu0 %v3247
  %5440 = vmatpush.bf16.msra.mxu0 %v3243
  %5441 = vmatpush.bf16.msra.mxu0 %v3239
  %5442 = vmatpush.bf16.msra.mxu0 %v3235
  %5443 = vmatpush.bf16.msra.mxu0 %v3231
  %5444 = vmatpush.bf16.msra.mxu0 %v3227
  %5445 = vmatpush.bf16.msra.mxu0 %v3223
  %5446 = vmatpush.bf16.msra.mxu0 %v3219
  %5447 = vmatmul.bf16.gmra.mxu0 %v46
  %v5448 = vpop.f32.mrf.mxu0
  %v5449 = vadd.f32 %v859, %v5448
  %v5450 = vpop.f32.mrf.mxu0
  %5451 = vdwg.mxu0
  %5452 = vmatpush.bf16.msra.mxu0 %v3279
  %5453 = vmatpush.bf16.msra.mxu0 %v3275
  %5454 = vmatpush.bf16.msra.mxu0 %v3271
  %5455 = vmatpush.bf16.msra.mxu0 %v3267
  %5456 = vmatpush.bf16.msra.mxu0 %v3263
  %5457 = vmatpush.bf16.msra.mxu0 %v3259
  %5458 = vmatpush.bf16.msra.mxu0 %v3255
  %5459 = vmatpush.bf16.msra.mxu0 %v3251
  %5460 = vmatmul.bf16.gmra.mxu0 %v47
  %v5461 = vpop.f32.mrf.mxu0
  %v5462 = vadd.f32 %v5449, %v5461
  %v5463 = vpop.f32.mrf.mxu0
  %5464 = vdwg.mxu0
  %5465 = vmatpush.bf16.msra.mxu0 %v3311
  %5466 = vmatpush.bf16.msra.mxu0 %v3307
  %5467 = vmatpush.bf16.msra.mxu0 %v3303
  %5468 = vmatpush.bf16.msra.mxu0 %v3299
  %5469 = vmatpush.bf16.msra.mxu0 %v3295
  %5470 = vmatpush.bf16.msra.mxu0 %v3291
  %5471 = vmatpush.bf16.msra.mxu0 %v3287
  %5472 = vmatpush.bf16.msra.mxu0 %v3283
  %5473 = vmatmul.bf16.gmra.mxu0 %v48
  %v5474 = vpop.f32.mrf.mxu0
  %v5475 = vadd.f32 %v5462, %v5474
  %v5476 = vpop.f32.mrf.mxu0
  %5477 = vdwg.mxu0
  %5478 = vmatpush.bf16.msra.mxu0 %v3343
  %5479 = vmatpush.bf16.msra.mxu0 %v3339
  %5480 = vmatpush.bf16.msra.mxu0 %v3335
  %5481 = vmatpush.bf16.msra.mxu0 %v3331
  %5482 = vmatpush.bf16.msra.mxu0 %v3327
  %5483 = vmatpush.bf16.msra.mxu0 %v3323
  %5484 = vmatpush.bf16.msra.mxu0 %v3319
  %5485 = vmatpush.bf16.msra.mxu0 %v3315
  %5486 = vmatmul.bf16.gmra.mxu0 %v49
  %v5487 = vpop.f32.mrf.mxu0
  %v5488 = vadd.f32 %v5475, %v5487
  %v5489 = vpop.f32.mrf.mxu0
  %5490 = vdwg.mxu0
  %5491 = vmatpush.bf16.msra.mxu0 %v3375
  %5492 = vmatpush.bf16.msra.mxu0 %v3371
  %5493 = vmatpush.bf16.msra.mxu0 %v3367
  %5494 = vmatpush.bf16.msra.mxu0 %v3363
  %5495 = vmatpush.bf16.msra.mxu0 %v3359
  %5496 = vmatpush.bf16.msra.mxu0 %v3355
  %5497 = vmatpush.bf16.msra.mxu0 %v3351
  %5498 = vmatpush.bf16.msra.mxu0 %v3347
  %5499 = vmatmul.bf16.gmra.mxu0 %v50
  %v5500 = vpop.f32.mrf.mxu0
  %v5501 = vadd.f32 %v5488, %v5500
  %v5502 = vpop.f32.mrf.mxu0
  %5503 = vdwg.mxu0
  %5504 = vmatpush.bf16.msra.mxu0 %v3407
  %5505 = vmatpush.bf16.msra.mxu0 %v3403
  %5506 = vmatpush.bf16.msra.mxu0 %v3399
  %5507 = vmatpush.bf16.msra.mxu0 %v3395
  %5508 = vmatpush.bf16.msra.mxu0 %v3391
  %5509 = vmatpush.bf16.msra.mxu0 %v3387
  %5510 = vmatpush.bf16.msra.mxu0 %v3383
  %5511 = vmatpush.bf16.msra.mxu0 %v3379
  %5512 = vmatmul.bf16.gmra.mxu0 %v51
  %v5513 = vpop.f32.mrf.mxu0
  %v5514 = vadd.f32 %v5501, %v5513
  %v5515 = vpop.f32.mrf.mxu0
  %5516 = vdwg.mxu0
  %5517 = vmatpush.bf16.msra.mxu0 %v3439
  %5518 = vmatpush.bf16.msra.mxu0 %v3435
  %5519 = vmatpush.bf16.msra.mxu0 %v3431
  %5520 = vmatpush.bf16.msra.mxu0 %v3427
  %5521 = vmatpush.bf16.msra.mxu0 %v3423
  %5522 = vmatpush.bf16.msra.mxu0 %v3419
  %5523 = vmatpush.bf16.msra.mxu0 %v3415
  %5524 = vmatpush.bf16.msra.mxu0 %v3411
  %5525 = vmatmul.bf16.gmra.mxu0 %v52
  %v5526 = vpop.f32.mrf.mxu0
  %v5527 = vadd.f32 %v5514, %v5526
  %v5528 = vpop.f32.mrf.mxu0
  %5529 = vdwg.mxu0
  %5530 = vmatpush.bf16.msra.mxu0 %v3471
  %5531 = vmatpush.bf16.msra.mxu0 %v3467
  %5532 = vmatpush.bf16.msra.mxu0 %v3463
  %5533 = vmatpush.bf16.msra.mxu0 %v3459
  %5534 = vmatpush.bf16.msra.mxu0 %v3455
  %5535 = vmatpush.bf16.msra.mxu0 %v3451
  %5536 = vmatpush.bf16.msra.mxu0 %v3447
  %5537 = vmatpush.bf16.msra.mxu0 %v3443
  %5538 = vmatmul.bf16.gmra.mxu0 %v53
  %v5539 = vpop.f32.mrf.mxu0
  %v5540 = vadd.f32 %v5527, %v5539
  %v5541 = vpop.f32.mrf.mxu0
  %5542 = vdwg.mxu0
  %5543 = vmatpush.bf16.msra.mxu0 %v3503
  %5544 = vmatpush.bf16.msra.mxu0 %v3499
  %5545 = vmatpush.bf16.msra.mxu0 %v3495
  %5546 = vmatpush.bf16.msra.mxu0 %v3491
  %5547 = vmatpush.bf16.msra.mxu0 %v3487
  %5548 = vmatpush.bf16.msra.mxu0 %v3483
  %5549 = vmatpush.bf16.msra.mxu0 %v3479
  %5550 = vmatpush.bf16.msra.mxu0 %v3475
  %5551 = vmatmul.bf16.gmra.mxu0 %v54
  %v5552 = vpop.f32.mrf.mxu0
  %v5553 = vadd.f32 %v5540, %v5552
  %v5554 = vpop.f32.mrf.mxu0
  %5555 = vdwg.mxu0
  %5556 = vmatpush.bf16.msra.mxu0 %v3535
  %5557 = vmatpush.bf16.msra.mxu0 %v3531
  %5558 = vmatpush.bf16.msra.mxu0 %v3527
  %5559 = vmatpush.bf16.msra.mxu0 %v3523
  %5560 = vmatpush.bf16.msra.mxu0 %v3519
  %5561 = vmatpush.bf16.msra.mxu0 %v3515
  %5562 = vmatpush.bf16.msra.mxu0 %v3511
  %5563 = vmatpush.bf16.msra.mxu0 %v3507
  %5564 = vmatmul.bf16.gmra.mxu0 %v55
  %v5565 = vpop.f32.mrf.mxu0
  %v5566 = vadd.f32 %v5553, %v5565
  %v5567 = vpop.f32.mrf.mxu0
  %5568 = vdwg.mxu0
  %5569 = vmatpush.bf16.msra.mxu0 %v3567
  %5570 = vmatpush.bf16.msra.mxu0 %v3563
  %5571 = vmatpush.bf16.msra.mxu0 %v3559
  %5572 = vmatpush.bf16.msra.mxu0 %v3555
  %5573 = vmatpush.bf16.msra.mxu0 %v3551
  %5574 = vmatpush.bf16.msra.mxu0 %v3547
  %5575 = vmatpush.bf16.msra.mxu0 %v3543
  %5576 = vmatpush.bf16.msra.mxu0 %v3539
  %5577 = vmatmul.bf16.gmra.mxu0 %v56
  %v5578 = vpop.f32.mrf.mxu0
  %v5579 = vadd.f32 %v5566, %v5578
  %v5580 = vpop.f32.mrf.mxu0
  %5581 = vdwg.mxu0
  %5582 = vmatpush.bf16.msra.mxu0 %v3599
  %5583 = vmatpush.bf16.msra.mxu0 %v3595
  %5584 = vmatpush.bf16.msra.mxu0 %v3591
  %5585 = vmatpush.bf16.msra.mxu0 %v3587
  %5586 = vmatpush.bf16.msra.mxu0 %v3583
  %5587 = vmatpush.bf16.msra.mxu0 %v3579
  %5588 = vmatpush.bf16.msra.mxu0 %v3575
  %5589 = vmatpush.bf16.msra.mxu0 %v3571
  %5590 = vmatmul.bf16.gmra.mxu0 %v57
  %v5591 = vpop.f32.mrf.mxu0
  %v5592 = vadd.f32 %v5579, %v5591
  %v5593 = vpop.f32.mrf.mxu0
  %5594 = vdwg.mxu0
  %5595 = vmatpush.bf16.msra.mxu0 %v3631
  %5596 = vmatpush.bf16.msra.mxu0 %v3627
  %5597 = vmatpush.bf16.msra.mxu0 %v3623
  %5598 = vmatpush.bf16.msra.mxu0 %v3619
  %5599 = vmatpush.bf16.msra.mxu0 %v3615
  %5600 = vmatpush.bf16.msra.mxu0 %v3611
  %5601 = vmatpush.bf16.msra.mxu0 %v3607
  %5602 = vmatpush.bf16.msra.mxu0 %v3603
  %5603 = vmatmul.bf16.gmra.mxu0 %v58
  %v5604 = vpop.f32.mrf.mxu0
  %v5605 = vadd.f32 %v5592, %v5604
  %v5606 = vpop.f32.mrf.mxu0
  %5607 = vdwg.mxu0
  %5608 = vmatpush.bf16.msra.mxu0 %v3663
  %5609 = vmatpush.bf16.msra.mxu0 %v3659
  %5610 = vmatpush.bf16.msra.mxu0 %v3655
  %5611 = vmatpush.bf16.msra.mxu0 %v3651
  %5612 = vmatpush.bf16.msra.mxu0 %v3647
  %5613 = vmatpush.bf16.msra.mxu0 %v3643
  %5614 = vmatpush.bf16.msra.mxu0 %v3639
  %5615 = vmatpush.bf16.msra.mxu0 %v3635
  %5616 = vmatmul.bf16.gmra.mxu0 %v59
  %v5617 = vpop.f32.mrf.mxu0
  %v5618 = vadd.f32 %v5605, %v5617
  %v5619 = vpop.f32.mrf.mxu0
  %5620 = vdwg.mxu0
  %5621 = vmatpush.bf16.msra.mxu0 %v3695
  %5622 = vmatpush.bf16.msra.mxu0 %v3691
  %5623 = vmatpush.bf16.msra.mxu0 %v3687
  %5624 = vmatpush.bf16.msra.mxu0 %v3683
  %5625 = vmatpush.bf16.msra.mxu0 %v3679
  %5626 = vmatpush.bf16.msra.mxu0 %v3675
  %5627 = vmatpush.bf16.msra.mxu0 %v3671
  %5628 = vmatpush.bf16.msra.mxu0 %v3667
  %5629 = vmatmul.bf16.gmra.mxu0 %v60
  %v5630 = vpop.f32.mrf.mxu0
  %v5631 = vadd.f32 %v5618, %v5630
  %v5632 = vpop.f32.mrf.mxu0
  %5633 = vdwg.mxu0
  %5634 = vmatpush.bf16.msra.mxu0 %v3727
  %5635 = vmatpush.bf16.msra.mxu0 %v3723
  %5636 = vmatpush.bf16.msra.mxu0 %v3719
  %5637 = vmatpush.bf16.msra.mxu0 %v3715
  %5638 = vmatpush.bf16.msra.mxu0 %v3711
  %5639 = vmatpush.bf16.msra.mxu0 %v3707
  %5640 = vmatpush.bf16.msra.mxu0 %v3703
  %5641 = vmatpush.bf16.msra.mxu0 %v3699
  %5642 = vmatmul.bf16.gmra.mxu0 %v61
  %v5643 = vpop.f32.mrf.mxu0
  %v5644 = vadd.f32 %v5631, %v5643
  %v5645 = vpop.f32.mrf.mxu0
  %5646 = vdwg.mxu0
  %5647 = vmatpush.bf16.msra.mxu0 %v3759
  %5648 = vmatpush.bf16.msra.mxu0 %v3755
  %5649 = vmatpush.bf16.msra.mxu0 %v3751
  %5650 = vmatpush.bf16.msra.mxu0 %v3747
  %5651 = vmatpush.bf16.msra.mxu0 %v3743
  %5652 = vmatpush.bf16.msra.mxu0 %v3739
  %5653 = vmatpush.bf16.msra.mxu0 %v3735
  %5654 = vmatpush.bf16.msra.mxu0 %v3731
  %5655 = vmatmul.bf16.gmra.mxu0 %v62
  %v5656 = vpop.f32.mrf.mxu0
  %v5657 = vadd.f32 %v5644, %v5656
  %v5658 = vpop.f32.mrf.mxu0
  %5659 = vdwg.mxu0
  %5660 = vmatpush.bf16.msra.mxu0 %v3791
  %5661 = vmatpush.bf16.msra.mxu0 %v3787
  %5662 = vmatpush.bf16.msra.mxu0 %v3783
  %5663 = vmatpush.bf16.msra.mxu0 %v3779
  %5664 = vmatpush.bf16.msra.mxu0 %v3775
  %5665 = vmatpush.bf16.msra.mxu0 %v3771
  %5666 = vmatpush.bf16.msra.mxu0 %v3767
  %5667 = vmatpush.bf16.msra.mxu0 %v3763
  %5668 = vmatmul.bf16.gmra.mxu0 %v63
  %v5669 = vpop.f32.mrf.mxu0
  %v5670 = vadd.f32 %v5657, %v5669
  %v5671 = vpop.f32.mrf.mxu0
  %5672 = vdwg.mxu0
  %5673 = vmatpush.bf16.msra.mxu0 %v3823
  %5674 = vmatpush.bf16.msra.mxu0 %v3819
  %5675 = vmatpush.bf16.msra.mxu0 %v3815
  %5676 = vmatpush.bf16.msra.mxu0 %v3811
  %5677 = vmatpush.bf16.msra.mxu0 %v3807
  %5678 = vmatpush.bf16.msra.mxu0 %v3803
  %5679 = vmatpush.bf16.msra.mxu0 %v3799
  %5680 = vmatpush.bf16.msra.mxu0 %v3795
  %5681 = vmatmul.bf16.gmra.mxu0 %v64
  %v5682 = vpop.f32.mrf.mxu0
  %v5683 = vadd.f32 %v5670, %v5682
  %v5684 = vpop.f32.mrf.mxu0
  %5685 = vdwg.mxu0
  %5686 = vmatpush.bf16.msra.mxu0 %v3855
  %5687 = vmatpush.bf16.msra.mxu0 %v3851
  %5688 = vmatpush.bf16.msra.mxu0 %v3847
  %5689 = vmatpush.bf16.msra.mxu0 %v3843
  %5690 = vmatpush.bf16.msra.mxu0 %v3839
  %5691 = vmatpush.bf16.msra.mxu0 %v3835
  %5692 = vmatpush.bf16.msra.mxu0 %v3831
  %5693 = vmatpush.bf16.msra.mxu0 %v3827
  %5694 = vmatmul.bf16.gmra.mxu0 %v65
  %v5695 = vpop.f32.mrf.mxu0
  %v5696 = vadd.f32 %v5683, %v5695
  %v5697 = vpop.f32.mrf.mxu0
  %5698 = vdwg.mxu0
  %5699 = vmatpush.bf16.msra.mxu0 %v3887
  %5700 = vmatpush.bf16.msra.mxu0 %v3883
  %5701 = vmatpush.bf16.msra.mxu0 %v3879
  %5702 = vmatpush.bf16.msra.mxu0 %v3875
  %5703 = vmatpush.bf16.msra.mxu0 %v3871
  %5704 = vmatpush.bf16.msra.mxu0 %v3867
  %5705 = vmatpush.bf16.msra.mxu0 %v3863
  %5706 = vmatpush.bf16.msra.mxu0 %v3859
  %5707 = vmatmul.bf16.gmra.mxu0 %v66
  %v5708 = vpop.f32.mrf.mxu0
  %v5709 = vadd.f32 %v5696, %v5708
  %v5710 = vpop.f32.mrf.mxu0
  %5711 = vdwg.mxu0
  %5712 = vmatpush.bf16.msra.mxu0 %v3919
  %5713 = vmatpush.bf16.msra.mxu0 %v3915
  %5714 = vmatpush.bf16.msra.mxu0 %v3911
  %5715 = vmatpush.bf16.msra.mxu0 %v3907
  %5716 = vmatpush.bf16.msra.mxu0 %v3903
  %5717 = vmatpush.bf16.msra.mxu0 %v3899
  %5718 = vmatpush.bf16.msra.mxu0 %v3895
  %5719 = vmatpush.bf16.msra.mxu0 %v3891
  %5720 = vmatmul.bf16.gmra.mxu0 %v67
  %v5721 = vpop.f32.mrf.mxu0
  %v5722 = vadd.f32 %v5709, %v5721
  %v5723 = vpop.f32.mrf.mxu0
  %5724 = vdwg.mxu0
  %5725 = vmatpush.bf16.msra.mxu0 %v3951
  %5726 = vmatpush.bf16.msra.mxu0 %v3947
  %5727 = vmatpush.bf16.msra.mxu0 %v3943
  %5728 = vmatpush.bf16.msra.mxu0 %v3939
  %5729 = vmatpush.bf16.msra.mxu0 %v3935
  %5730 = vmatpush.bf16.msra.mxu0 %v3931
  %5731 = vmatpush.bf16.msra.mxu0 %v3927
  %5732 = vmatpush.bf16.msra.mxu0 %v3923
  %5733 = vmatmul.bf16.gmra.mxu0 %v68
  %v5734 = vpop.f32.mrf.mxu0
  %v5735 = vadd.f32 %v5722, %v5734
  %v5736 = vpop.f32.mrf.mxu0
  %5737 = vdwg.mxu0
  %5738 = vmatpush.bf16.msra.mxu0 %v3983
  %5739 = vmatpush.bf16.msra.mxu0 %v3979
  %5740 = vmatpush.bf16.msra.mxu0 %v3975
  %5741 = vmatpush.bf16.msra.mxu0 %v3971
  %5742 = vmatpush.bf16.msra.mxu0 %v3967
  %5743 = vmatpush.bf16.msra.mxu0 %v3963
  %5744 = vmatpush.bf16.msra.mxu0 %v3959
  %5745 = vmatpush.bf16.msra.mxu0 %v3955
  %5746 = vmatmul.bf16.gmra.mxu0 %v69
  %v5747 = vpop.f32.mrf.mxu0
  %v5748 = vadd.f32 %v5735, %v5747
  %v5749 = vpop.f32.mrf.mxu0
  %5750 = vdwg.mxu0
  %5751 = vmatpush.bf16.msra.mxu0 0
  %5752 = vmatpush.bf16.msra.mxu0 0
  %5753 = vmatpush.bf16.msra.mxu0 0
  %5754 = vmatpush.bf16.msra.mxu0 0
  %5755 = vmatpush.bf16.msra.mxu0 %v3999
  %5756 = vmatpush.bf16.msra.mxu0 %v3995
  %5757 = vmatpush.bf16.msra.mxu0 %v3991
  %5758 = vmatpush.bf16.msra.mxu0 %v3987
  %5759 = vmatmul.bf16.gmra.mxu0 %v4787
  %v5760 = vpop.f32.mrf.mxu0
  %v5761 = vadd.f32 %v5748, %v5760
  %v5762 = vpop.f32.mrf.mxu0
  %5763 = vdwg.mxu0
  %5764 = vmatpush.bf16.msra.mxu0 %v3248
  %5765 = vmatpush.bf16.msra.mxu0 %v3244
  %5766 = vmatpush.bf16.msra.mxu0 %v3240
  %5767 = vmatpush.bf16.msra.mxu0 %v3236
  %5768 = vmatpush.bf16.msra.mxu0 %v3232
  %5769 = vmatpush.bf16.msra.mxu0 %v3228
  %5770 = vmatpush.bf16.msra.mxu0 %v3224
  %5771 = vmatpush.bf16.msra.mxu0 %v3220
  %5772 = vmatmul.bf16.gmra.mxu0 %v46
  %v5773 = vpop.f32.mrf.mxu0
  %v5774 = vadd.f32 %v860, %v5773
  %v5775 = vpop.f32.mrf.mxu0
  %5776 = vdwg.mxu0
  %5777 = vmatpush.bf16.msra.mxu0 %v3280
  %5778 = vmatpush.bf16.msra.mxu0 %v3276
  %5779 = vmatpush.bf16.msra.mxu0 %v3272
  %5780 = vmatpush.bf16.msra.mxu0 %v3268
  %5781 = vmatpush.bf16.msra.mxu0 %v3264
  %5782 = vmatpush.bf16.msra.mxu0 %v3260
  %5783 = vmatpush.bf16.msra.mxu0 %v3256
  %5784 = vmatpush.bf16.msra.mxu0 %v3252
  %5785 = vmatmul.bf16.gmra.mxu0 %v47
  %v5786 = vpop.f32.mrf.mxu0
  %v5787 = vadd.f32 %v5774, %v5786
  %v5788 = vpop.f32.mrf.mxu0
  %5789 = vdwg.mxu0
  %5790 = vmatpush.bf16.msra.mxu0 %v3312
  %5791 = vmatpush.bf16.msra.mxu0 %v3308
  %5792 = vmatpush.bf16.msra.mxu0 %v3304
  %5793 = vmatpush.bf16.msra.mxu0 %v3300
  %5794 = vmatpush.bf16.msra.mxu0 %v3296
  %5795 = vmatpush.bf16.msra.mxu0 %v3292
  %5796 = vmatpush.bf16.msra.mxu0 %v3288
  %5797 = vmatpush.bf16.msra.mxu0 %v3284
  %5798 = vmatmul.bf16.gmra.mxu0 %v48
  %v5799 = vpop.f32.mrf.mxu0
  %v5800 = vadd.f32 %v5787, %v5799
  %v5801 = vpop.f32.mrf.mxu0
  %5802 = vdwg.mxu0
  %5803 = vmatpush.bf16.msra.mxu0 %v3344
  %5804 = vmatpush.bf16.msra.mxu0 %v3340
  %5805 = vmatpush.bf16.msra.mxu0 %v3336
  %5806 = vmatpush.bf16.msra.mxu0 %v3332
  %5807 = vmatpush.bf16.msra.mxu0 %v3328
  %5808 = vmatpush.bf16.msra.mxu0 %v3324
  %5809 = vmatpush.bf16.msra.mxu0 %v3320
  %5810 = vmatpush.bf16.msra.mxu0 %v3316
  %5811 = vmatmul.bf16.gmra.mxu0 %v49
  %v5812 = vpop.f32.mrf.mxu0
  %v5813 = vadd.f32 %v5800, %v5812
  %v5814 = vpop.f32.mrf.mxu0
  %5815 = vdwg.mxu0
  %5816 = vmatpush.bf16.msra.mxu0 %v3376
  %5817 = vmatpush.bf16.msra.mxu0 %v3372
  %5818 = vmatpush.bf16.msra.mxu0 %v3368
  %5819 = vmatpush.bf16.msra.mxu0 %v3364
  %5820 = vmatpush.bf16.msra.mxu0 %v3360
  %5821 = vmatpush.bf16.msra.mxu0 %v3356
  %5822 = vmatpush.bf16.msra.mxu0 %v3352
  %5823 = vmatpush.bf16.msra.mxu0 %v3348
  %5824 = vmatmul.bf16.gmra.mxu0 %v50
  %v5825 = vpop.f32.mrf.mxu0
  %v5826 = vadd.f32 %v5813, %v5825
  %v5827 = vpop.f32.mrf.mxu0
  %5828 = vdwg.mxu0
  %5829 = vmatpush.bf16.msra.mxu0 %v3408
  %5830 = vmatpush.bf16.msra.mxu0 %v3404
  %5831 = vmatpush.bf16.msra.mxu0 %v3400
  %5832 = vmatpush.bf16.msra.mxu0 %v3396
  %5833 = vmatpush.bf16.msra.mxu0 %v3392
  %5834 = vmatpush.bf16.msra.mxu0 %v3388
  %5835 = vmatpush.bf16.msra.mxu0 %v3384
  %5836 = vmatpush.bf16.msra.mxu0 %v3380
  %5837 = vmatmul.bf16.gmra.mxu0 %v51
  %v5838 = vpop.f32.mrf.mxu0
  %v5839 = vadd.f32 %v5826, %v5838
  %v5840 = vpop.f32.mrf.mxu0
  %5841 = vdwg.mxu0
  %5842 = vmatpush.bf16.msra.mxu0 %v3440
  %5843 = vmatpush.bf16.msra.mxu0 %v3436
  %5844 = vmatpush.bf16.msra.mxu0 %v3432
  %5845 = vmatpush.bf16.msra.mxu0 %v3428
  %5846 = vmatpush.bf16.msra.mxu0 %v3424
  %5847 = vmatpush.bf16.msra.mxu0 %v3420
  %5848 = vmatpush.bf16.msra.mxu0 %v3416
  %5849 = vmatpush.bf16.msra.mxu0 %v3412
  %5850 = vmatmul.bf16.gmra.mxu0 %v52
  %v5851 = vpop.f32.mrf.mxu0
  %v5852 = vadd.f32 %v5839, %v5851
  %v5853 = vpop.f32.mrf.mxu0
  %5854 = vdwg.mxu0
  %5855 = vmatpush.bf16.msra.mxu0 %v3472
  %5856 = vmatpush.bf16.msra.mxu0 %v3468
  %5857 = vmatpush.bf16.msra.mxu0 %v3464
  %5858 = vmatpush.bf16.msra.mxu0 %v3460
  %5859 = vmatpush.bf16.msra.mxu0 %v3456
  %5860 = vmatpush.bf16.msra.mxu0 %v3452
  %5861 = vmatpush.bf16.msra.mxu0 %v3448
  %5862 = vmatpush.bf16.msra.mxu0 %v3444
  %5863 = vmatmul.bf16.gmra.mxu0 %v53
  %v5864 = vpop.f32.mrf.mxu0
  %v5865 = vadd.f32 %v5852, %v5864
  %v5866 = vpop.f32.mrf.mxu0
  %5867 = vdwg.mxu0
  %5868 = vmatpush.bf16.msra.mxu0 %v3504
  %5869 = vmatpush.bf16.msra.mxu0 %v3500
  %5870 = vmatpush.bf16.msra.mxu0 %v3496
  %5871 = vmatpush.bf16.msra.mxu0 %v3492
  %5872 = vmatpush.bf16.msra.mxu0 %v3488
  %5873 = vmatpush.bf16.msra.mxu0 %v3484
  %5874 = vmatpush.bf16.msra.mxu0 %v3480
  %5875 = vmatpush.bf16.msra.mxu0 %v3476
  %5876 = vmatmul.bf16.gmra.mxu0 %v54
  %v5877 = vpop.f32.mrf.mxu0
  %v5878 = vadd.f32 %v5865, %v5877
  %v5879 = vpop.f32.mrf.mxu0
  %5880 = vdwg.mxu0
  %5881 = vmatpush.bf16.msra.mxu0 %v3536
  %5882 = vmatpush.bf16.msra.mxu0 %v3532
  %5883 = vmatpush.bf16.msra.mxu0 %v3528
  %5884 = vmatpush.bf16.msra.mxu0 %v3524
  %5885 = vmatpush.bf16.msra.mxu0 %v3520
  %5886 = vmatpush.bf16.msra.mxu0 %v3516
  %5887 = vmatpush.bf16.msra.mxu0 %v3512
  %5888 = vmatpush.bf16.msra.mxu0 %v3508
  %5889 = vmatmul.bf16.gmra.mxu0 %v55
  %v5890 = vpop.f32.mrf.mxu0
  %v5891 = vadd.f32 %v5878, %v5890
  %v5892 = vpop.f32.mrf.mxu0
  %5893 = vdwg.mxu0
  %5894 = vmatpush.bf16.msra.mxu0 %v3568
  %5895 = vmatpush.bf16.msra.mxu0 %v3564
  %5896 = vmatpush.bf16.msra.mxu0 %v3560
  %5897 = vmatpush.bf16.msra.mxu0 %v3556
  %5898 = vmatpush.bf16.msra.mxu0 %v3552
  %5899 = vmatpush.bf16.msra.mxu0 %v3548
  %5900 = vmatpush.bf16.msra.mxu0 %v3544
  %5901 = vmatpush.bf16.msra.mxu0 %v3540
  %5902 = vmatmul.bf16.gmra.mxu0 %v56
  %v5903 = vpop.f32.mrf.mxu0
  %v5904 = vadd.f32 %v5891, %v5903
  %v5905 = vpop.f32.mrf.mxu0
  %5906 = vdwg.mxu0
  %5907 = vmatpush.bf16.msra.mxu0 %v3600
  %5908 = vmatpush.bf16.msra.mxu0 %v3596
  %5909 = vmatpush.bf16.msra.mxu0 %v3592
  %5910 = vmatpush.bf16.msra.mxu0 %v3588
  %5911 = vmatpush.bf16.msra.mxu0 %v3584
  %5912 = vmatpush.bf16.msra.mxu0 %v3580
  %5913 = vmatpush.bf16.msra.mxu0 %v3576
  %5914 = vmatpush.bf16.msra.mxu0 %v3572
  %5915 = vmatmul.bf16.gmra.mxu0 %v57
  %v5916 = vpop.f32.mrf.mxu0
  %v5917 = vadd.f32 %v5904, %v5916
  %v5918 = vpop.f32.mrf.mxu0
  %5919 = vdwg.mxu0
  %5920 = vmatpush.bf16.msra.mxu0 %v3632
  %5921 = vmatpush.bf16.msra.mxu0 %v3628
  %5922 = vmatpush.bf16.msra.mxu0 %v3624
  %5923 = vmatpush.bf16.msra.mxu0 %v3620
  %5924 = vmatpush.bf16.msra.mxu0 %v3616
  %5925 = vmatpush.bf16.msra.mxu0 %v3612
  %5926 = vmatpush.bf16.msra.mxu0 %v3608
  %5927 = vmatpush.bf16.msra.mxu0 %v3604
  %5928 = vmatmul.bf16.gmra.mxu0 %v58
  %v5929 = vpop.f32.mrf.mxu0
  %v5930 = vadd.f32 %v5917, %v5929
  %v5931 = vpop.f32.mrf.mxu0
  %5932 = vdwg.mxu0
  %5933 = vmatpush.bf16.msra.mxu0 %v3664
  %5934 = vmatpush.bf16.msra.mxu0 %v3660
  %5935 = vmatpush.bf16.msra.mxu0 %v3656
  %5936 = vmatpush.bf16.msra.mxu0 %v3652
  %5937 = vmatpush.bf16.msra.mxu0 %v3648
  %5938 = vmatpush.bf16.msra.mxu0 %v3644
  %5939 = vmatpush.bf16.msra.mxu0 %v3640
  %5940 = vmatpush.bf16.msra.mxu0 %v3636
  %5941 = vmatmul.bf16.gmra.mxu0 %v59
  %v5942 = vpop.f32.mrf.mxu0
  %v5943 = vadd.f32 %v5930, %v5942
  %v5944 = vpop.f32.mrf.mxu0
  %5945 = vdwg.mxu0
  %5946 = vmatpush.bf16.msra.mxu0 %v3696
  %5947 = vmatpush.bf16.msra.mxu0 %v3692
  %5948 = vmatpush.bf16.msra.mxu0 %v3688
  %5949 = vmatpush.bf16.msra.mxu0 %v3684
  %5950 = vmatpush.bf16.msra.mxu0 %v3680
  %5951 = vmatpush.bf16.msra.mxu0 %v3676
  %5952 = vmatpush.bf16.msra.mxu0 %v3672
  %5953 = vmatpush.bf16.msra.mxu0 %v3668
  %5954 = vmatmul.bf16.gmra.mxu0 %v60
  %v5955 = vpop.f32.mrf.mxu0
  %v5956 = vadd.f32 %v5943, %v5955
  %v5957 = vpop.f32.mrf.mxu0
  %5958 = vdwg.mxu0
  %5959 = vmatpush.bf16.msra.mxu0 %v3728
  %5960 = vmatpush.bf16.msra.mxu0 %v3724
  %5961 = vmatpush.bf16.msra.mxu0 %v3720
  %5962 = vmatpush.bf16.msra.mxu0 %v3716
  %5963 = vmatpush.bf16.msra.mxu0 %v3712
  %5964 = vmatpush.bf16.msra.mxu0 %v3708
  %5965 = vmatpush.bf16.msra.mxu0 %v3704
  %5966 = vmatpush.bf16.msra.mxu0 %v3700
  %5967 = vmatmul.bf16.gmra.mxu0 %v61
  %v5968 = vpop.f32.mrf.mxu0
  %v5969 = vadd.f32 %v5956, %v5968
  %v5970 = vpop.f32.mrf.mxu0
  %5971 = vdwg.mxu0
  %5972 = vmatpush.bf16.msra.mxu0 %v3760
  %5973 = vmatpush.bf16.msra.mxu0 %v3756
  %5974 = vmatpush.bf16.msra.mxu0 %v3752
  %5975 = vmatpush.bf16.msra.mxu0 %v3748
  %5976 = vmatpush.bf16.msra.mxu0 %v3744
  %5977 = vmatpush.bf16.msra.mxu0 %v3740
  %5978 = vmatpush.bf16.msra.mxu0 %v3736
  %5979 = vmatpush.bf16.msra.mxu0 %v3732
  %5980 = vmatmul.bf16.gmra.mxu0 %v62
  %v5981 = vpop.f32.mrf.mxu0
  %v5982 = vadd.f32 %v5969, %v5981
  %v5983 = vpop.f32.mrf.mxu0
  %5984 = vdwg.mxu0
  %5985 = vmatpush.bf16.msra.mxu0 %v3792
  %5986 = vmatpush.bf16.msra.mxu0 %v3788
  %5987 = vmatpush.bf16.msra.mxu0 %v3784
  %5988 = vmatpush.bf16.msra.mxu0 %v3780
  %5989 = vmatpush.bf16.msra.mxu0 %v3776
  %5990 = vmatpush.bf16.msra.mxu0 %v3772
  %5991 = vmatpush.bf16.msra.mxu0 %v3768
  %5992 = vmatpush.bf16.msra.mxu0 %v3764
  %5993 = vmatmul.bf16.gmra.mxu0 %v63
  %v5994 = vpop.f32.mrf.mxu0
  %v5995 = vadd.f32 %v5982, %v5994
  %v5996 = vpop.f32.mrf.mxu0
  %5997 = vdwg.mxu0
  %5998 = vmatpush.bf16.msra.mxu0 %v3824
  %5999 = vmatpush.bf16.msra.mxu0 %v3820
  %6000 = vmatpush.bf16.msra.mxu0 %v3816
  %6001 = vmatpush.bf16.msra.mxu0 %v3812
  %6002 = vmatpush.bf16.msra.mxu0 %v3808
  %6003 = vmatpush.bf16.msra.mxu0 %v3804
  %6004 = vmatpush.bf16.msra.mxu0 %v3800
  %6005 = vmatpush.bf16.msra.mxu0 %v3796
  %6006 = vmatmul.bf16.gmra.mxu0 %v64
  %v6007 = vpop.f32.mrf.mxu0
  %v6008 = vadd.f32 %v5995, %v6007
  %v6009 = vpop.f32.mrf.mxu0
  %6010 = vdwg.mxu0
  %6011 = vmatpush.bf16.msra.mxu0 %v3856
  %6012 = vmatpush.bf16.msra.mxu0 %v3852
  %6013 = vmatpush.bf16.msra.mxu0 %v3848
  %6014 = vmatpush.bf16.msra.mxu0 %v3844
  %6015 = vmatpush.bf16.msra.mxu0 %v3840
  %6016 = vmatpush.bf16.msra.mxu0 %v3836
  %6017 = vmatpush.bf16.msra.mxu0 %v3832
  %6018 = vmatpush.bf16.msra.mxu0 %v3828
  %6019 = vmatmul.bf16.gmra.mxu0 %v65
  %v6020 = vpop.f32.mrf.mxu0
  %v6021 = vadd.f32 %v6008, %v6020
  %v6022 = vpop.f32.mrf.mxu0
  %6023 = vdwg.mxu0
  %6024 = vmatpush.bf16.msra.mxu0 %v3888
  %6025 = vmatpush.bf16.msra.mxu0 %v3884
  %6026 = vmatpush.bf16.msra.mxu0 %v3880
  %6027 = vmatpush.bf16.msra.mxu0 %v3876
  %6028 = vmatpush.bf16.msra.mxu0 %v3872
  %6029 = vmatpush.bf16.msra.mxu0 %v3868
  %6030 = vmatpush.bf16.msra.mxu0 %v3864
  %6031 = vmatpush.bf16.msra.mxu0 %v3860
  %6032 = vmatmul.bf16.gmra.mxu0 %v66
  %v6033 = vpop.f32.mrf.mxu0
  %v6034 = vadd.f32 %v6021, %v6033
  %v6035 = vpop.f32.mrf.mxu0
  %6036 = vdwg.mxu0
  %6037 = vmatpush.bf16.msra.mxu0 %v3920
  %6038 = vmatpush.bf16.msra.mxu0 %v3916
  %6039 = vmatpush.bf16.msra.mxu0 %v3912
  %6040 = vmatpush.bf16.msra.mxu0 %v3908
  %6041 = vmatpush.bf16.msra.mxu0 %v3904
  %6042 = vmatpush.bf16.msra.mxu0 %v3900
  %6043 = vmatpush.bf16.msra.mxu0 %v3896
  %6044 = vmatpush.bf16.msra.mxu0 %v3892
  %6045 = vmatmul.bf16.gmra.mxu0 %v67
  %v6046 = vpop.f32.mrf.mxu0
  %v6047 = vadd.f32 %v6034, %v6046
  %v6048 = vpop.f32.mrf.mxu0
  %6049 = vdwg.mxu0
  %6050 = vmatpush.bf16.msra.mxu0 %v3952
  %6051 = vmatpush.bf16.msra.mxu0 %v3948
  %6052 = vmatpush.bf16.msra.mxu0 %v3944
  %6053 = vmatpush.bf16.msra.mxu0 %v3940
  %6054 = vmatpush.bf16.msra.mxu0 %v3936
  %6055 = vmatpush.bf16.msra.mxu0 %v3932
  %6056 = vmatpush.bf16.msra.mxu0 %v3928
  %6057 = vmatpush.bf16.msra.mxu0 %v3924
  %6058 = vmatmul.bf16.gmra.mxu0 %v68
  %v6059 = vpop.f32.mrf.mxu0
  %v6060 = vadd.f32 %v6047, %v6059
  %v6061 = vpop.f32.mrf.mxu0
  %6062 = vdwg.mxu0
  %6063 = vmatpush.bf16.msra.mxu0 %v3984
  %6064 = vmatpush.bf16.msra.mxu0 %v3980
  %6065 = vmatpush.bf16.msra.mxu0 %v3976
  %6066 = vmatpush.bf16.msra.mxu0 %v3972
  %6067 = vmatpush.bf16.msra.mxu0 %v3968
  %6068 = vmatpush.bf16.msra.mxu0 %v3964
  %6069 = vmatpush.bf16.msra.mxu0 %v3960
  %6070 = vmatpush.bf16.msra.mxu0 %v3956
  %6071 = vmatmul.bf16.gmra.mxu0 %v69
  %v6072 = vpop.f32.mrf.mxu0
  %v6073 = vadd.f32 %v6060, %v6072
  %v6074 = vpop.f32.mrf.mxu0
  %6075 = vdwg.mxu0
  %6076 = vmatpush.bf16.msra.mxu0 0
  %6077 = vmatpush.bf16.msra.mxu0 0
  %6078 = vmatpush.bf16.msra.mxu0 0
  %6079 = vmatpush.bf16.msra.mxu0 0
  %6080 = vmatpush.bf16.msra.mxu0 %v4000
  %6081 = vmatpush.bf16.msra.mxu0 %v3996
  %6082 = vmatpush.bf16.msra.mxu0 %v3992
  %6083 = vmatpush.bf16.msra.mxu0 %v3988
  %6084 = vmatmul.bf16.gmra.mxu0 %v4787
  %v6085 = vpop.f32.mrf.mxu0
  %v6086 = vadd.f32 %v6073, %v6085
  %v6087 = vpop.f32.mrf.mxu0
  %6088 = vdwg.mxu0
  %v6089 = vmax.f32 %v5111, 0.0
  %v6090 = vmax.f32 %v5436, 0.0
  %v6091 = vmax.f32 %v5761, 0.0
  %v6092 = vmax.f32 %v6086, 0.0
  %v6093 = vpack.c.bf16 %v6089, %v6089
  %v6094 = vpack.c.bf16 %v6090, %v6090
  %v6095 = vpack.c.bf16 %v6091, %v6091
  %v6096 = vpack.c.bf16 %v6092, %v6092
  %v6097 = vld [vmem:[%s3] sm:$0xf]
  %v6098 = vld [vmem:[%s3 + $0x4] sm:$0xf]
  %v6099 = vld [vmem:[%s3 + $0x8] sm:$0xf]
  %v6100 = vld [vmem:[%s3 + $0xc] sm:$0xf]
  %v6101 = vld [vmem:[%s3 + $0x10] sm:$0xf]
  %v6102 = vld [vmem:[%s3 + $0x14] sm:$0xf]
  %v6103 = vld [vmem:[%s3 + $0x18] sm:$0xf]
  %v6104 = vld [vmem:[%s3 + $0x1c] sm:$0xf]
  %v6105 = vld [vmem:[%s3 + $0x20] sm:$0xf]
  %v6106 = vld [vmem:[%s3 + $0x24] sm:$0xf]
  %v6107 = vld [vmem:[%s3 + $0x28] sm:$0xf]
  %v6108 = vld [vmem:[%s3 + $0x2c] sm:$0xf]
  %v6109 = vld [vmem:[%s3 + $0x30] sm:$0xf]
  %v6110 = vld [vmem:[%s3 + $0x34] sm:$0xf]
  %v6111 = vld [vmem:[%s3 + $0x38] sm:$0xf]
  %v6112 = vld [vmem:[%s3 + $0x3c] sm:$0xf]
  %v6113 = vld [vmem:[%s3 + $0x40] sm:$0xf]
  %v6114 = vld [vmem:[%s3 + $0x44] sm:$0xf]
  %v6115 = vld [vmem:[%s3 + $0x48] sm:$0xf]
  %v6116 = vld [vmem:[%s3 + $0x4c] sm:$0xf]
  %v6117 = vld [vmem:[%s3 + $0x50] sm:$0xf]
  %v6118 = vld [vmem:[%s3 + $0x54] sm:$0xf]
  %v6119 = vld [vmem:[%s3 + $0x58] sm:$0xf]
  %v6120 = vld [vmem:[%s3 + $0x5c] sm:$0xf]
  %v6121 = vld [vmem:[%s3 + $0x60] sm:$0xf]
  %v6122 = vld [vmem:[%s3 + $0x64] sm:$0xf]
  %v6123 = vld [vmem:[%s3 + $0x68] sm:$0xf]
  %v6124 = vld [vmem:[%s3 + $0x6c] sm:$0xf]
  %v6125 = vld [vmem:[%s3 + $0x70] sm:$0xf]
  %v6126 = vld [vmem:[%s3 + $0x74] sm:$0xf]
  %v6127 = vld [vmem:[%s3 + $0x78] sm:$0xf]
  %v6128 = vld [vmem:[%s3 + $0x7c] sm:$0xf]
  %v6129 = vld [vmem:[%s3 + $0x80] sm:$0xf]
  %v6130 = vld [vmem:[%s3 + $0x84] sm:$0xf]
  %v6131 = vld [vmem:[%s3 + $0x88] sm:$0xf]
  %v6132 = vld [vmem:[%s3 + $0x8c] sm:$0xf]
  %v6133 = vld [vmem:[%s3 + $0x90] sm:$0xf]
  %v6134 = vld [vmem:[%s3 + $0x94] sm:$0xf]
  %v6135 = vld [vmem:[%s3 + $0x98] sm:$0xf]
  %v6136 = vld [vmem:[%s3 + $0x9c] sm:$0xf]
  %v6137 = vld [vmem:[%s3 + $0xa0] sm:$0xf]
  %v6138 = vld [vmem:[%s3 + $0xa4] sm:$0xf]
  %v6139 = vld [vmem:[%s3 + $0xa8] sm:$0xf]
  %v6140 = vld [vmem:[%s3 + $0xac] sm:$0xf]
  %v6141 = vld [vmem:[%s3 + $0xb0] sm:$0xf]
  %v6142 = vld [vmem:[%s3 + $0xb4] sm:$0xf]
  %v6143 = vld [vmem:[%s3 + $0xb8] sm:$0xf]
  %v6144 = vld [vmem:[%s3 + $0xbc] sm:$0xf]
  %v6145 = vld [vmem:[%s3 + $0xc0] sm:$0xf]
  %v6146 = vld [vmem:[%s3 + $0xc4] sm:$0xf]
  %v6147 = vld [vmem:[%s3 + $0xc8] sm:$0xf]
  %v6148 = vld [vmem:[%s3 + $0xcc] sm:$0xf]
  %v6149 = vld [vmem:[%s3 + $0xd0] sm:$0xf]
  %v6150 = vld [vmem:[%s3 + $0xd4] sm:$0xf]
  %v6151 = vld [vmem:[%s3 + $0xd8] sm:$0xf]
  %v6152 = vld [vmem:[%s3 + $0xdc] sm:$0xf]
  %v6153 = vld [vmem:[%s3 + $0xe0] sm:$0xf]
  %v6154 = vld [vmem:[%s3 + $0xe4] sm:$0xf]
  %v6155 = vld [vmem:[%s3 + $0xe8] sm:$0xf]
  %v6156 = vld [vmem:[%s3 + $0xec] sm:$0xf]
  %v6157 = vld [vmem:[%s3 + $0xf0] sm:$0xf]
  %v6158 = vld [vmem:[%s3 + $0xf4] sm:$0xf]
  %v6159 = vld [vmem:[%s3 + $0xf8] sm:$0xf]
  %v6160 = vld [vmem:[%s3 + $0xfc] sm:$0xf]
  %v6161 = vld [vmem:[%s4] sm:$0x1]
  %v6163 = vperm.slane %v6161, 0
  %v6229 = vunpack.c.l.b16 %v6097
  %v6230 = vunpack.c.l.b16 %v6098
  %v6231 = vunpack.c.l.b16 %v6099
  %v6232 = vunpack.c.l.b16 %v6100
  %v6233 = vunpack.c.l.b16 %v6101
  %v6234 = vunpack.c.l.b16 %v6102
  %v6235 = vunpack.c.l.b16 %v6103
  %v6236 = vunpack.c.l.b16 %v6104
  %v6237 = vunpack.c.l.b16 %v6105
  %v6238 = vunpack.c.l.b16 %v6106
  %v6239 = vunpack.c.l.b16 %v6107
  %v6240 = vunpack.c.l.b16 %v6108
  %v6241 = vunpack.c.l.b16 %v6109
  %v6242 = vunpack.c.l.b16 %v6110
  %v6243 = vunpack.c.l.b16 %v6111
  %v6244 = vunpack.c.l.b16 %v6112
  %v6245 = vunpack.c.l.b16 %v6113
  %v6246 = vunpack.c.l.b16 %v6114
  %v6247 = vunpack.c.l.b16 %v6115
  %v6248 = vunpack.c.l.b16 %v6116
  %v6249 = vunpack.c.l.b16 %v6117
  %v6250 = vunpack.c.l.b16 %v6118
  %v6251 = vunpack.c.l.b16 %v6119
  %v6252 = vunpack.c.l.b16 %v6120
  %v6253 = vunpack.c.l.b16 %v6121
  %v6254 = vunpack.c.l.b16 %v6122
  %v6255 = vunpack.c.l.b16 %v6123
  %v6256 = vunpack.c.l.b16 %v6124
  %v6257 = vunpack.c.l.b16 %v6125
  %v6258 = vunpack.c.l.b16 %v6126
  %v6259 = vunpack.c.l.b16 %v6127
  %v6260 = vunpack.c.l.b16 %v6128
  %v6261 = vunpack.c.l.b16 %v6129
  %v6262 = vunpack.c.l.b16 %v6130
  %v6263 = vunpack.c.l.b16 %v6131
  %v6264 = vunpack.c.l.b16 %v6132
  %v6265 = vunpack.c.l.b16 %v6133
  %v6266 = vunpack.c.l.b16 %v6134
  %v6267 = vunpack.c.l.b16 %v6135
  %v6268 = vunpack.c.l.b16 %v6136
  %v6269 = vunpack.c.l.b16 %v6137
  %v6270 = vunpack.c.l.b16 %v6138
  %v6271 = vunpack.c.l.b16 %v6139
  %v6272 = vunpack.c.l.b16 %v6140
  %v6273 = vunpack.c.l.b16 %v6141
  %v6274 = vunpack.c.l.b16 %v6142
  %v6275 = vunpack.c.l.b16 %v6143
  %v6276 = vunpack.c.l.b16 %v6144
  %v6277 = vunpack.c.l.b16 %v6145
  %v6278 = vunpack.c.l.b16 %v6146
  %v6279 = vunpack.c.l.b16 %v6147
  %v6280 = vunpack.c.l.b16 %v6148
  %v6281 = vunpack.c.l.b16 %v6149
  %v6282 = vunpack.c.l.b16 %v6150
  %v6283 = vunpack.c.l.b16 %v6151
  %v6284 = vunpack.c.l.b16 %v6152
  %v6285 = vunpack.c.l.b16 %v6153
  %v6286 = vunpack.c.l.b16 %v6154
  %v6287 = vunpack.c.l.b16 %v6155
  %v6288 = vunpack.c.l.b16 %v6156
  %v6289 = vunpack.c.l.b16 %v6157
  %v6290 = vunpack.c.l.b16 %v6158
  %v6291 = vunpack.c.l.b16 %v6159
  %v6292 = vunpack.c.l.b16 %v6160
  %v6293 = vpack.c.b16 %v6230, %v6229
  %v6294 = vpack.c.b16 %v6232, %v6231
  %v6295 = vpack.c.b16 %v6234, %v6233
  %v6296 = vpack.c.b16 %v6236, %v6235
  %v6297 = vpack.c.b16 %v6238, %v6237
  %v6298 = vpack.c.b16 %v6240, %v6239
  %v6299 = vpack.c.b16 %v6242, %v6241
  %v6300 = vpack.c.b16 %v6244, %v6243
  %v6301 = vpack.c.b16 %v6246, %v6245
  %v6302 = vpack.c.b16 %v6248, %v6247
  %v6303 = vpack.c.b16 %v6250, %v6249
  %v6304 = vpack.c.b16 %v6252, %v6251
  %v6305 = vpack.c.b16 %v6254, %v6253
  %v6306 = vpack.c.b16 %v6256, %v6255
  %v6307 = vpack.c.b16 %v6258, %v6257
  %v6308 = vpack.c.b16 %v6260, %v6259
  %v6309 = vpack.c.b16 %v6262, %v6261
  %v6310 = vpack.c.b16 %v6264, %v6263
  %v6311 = vpack.c.b16 %v6266, %v6265
  %v6312 = vpack.c.b16 %v6268, %v6267
  %v6313 = vpack.c.b16 %v6270, %v6269
  %v6314 = vpack.c.b16 %v6272, %v6271
  %v6315 = vpack.c.b16 %v6274, %v6273
  %v6316 = vpack.c.b16 %v6276, %v6275
  %v6317 = vpack.c.b16 %v6278, %v6277
  %v6318 = vpack.c.b16 %v6280, %v6279
  %v6319 = vpack.c.b16 %v6282, %v6281
  %v6320 = vpack.c.b16 %v6284, %v6283
  %v6321 = vpack.c.b16 %v6286, %v6285
  %v6322 = vpack.c.b16 %v6288, %v6287
  %v6323 = vpack.c.b16 %v6290, %v6289
  %v6324 = vpack.c.b16 %v6292, %v6291
  %6357 = vmatpush.bf16.msra.mxu0 %v6300
  %6358 = vmatpush.bf16.msra.mxu0 %v6299
  %6359 = vmatpush.bf16.msra.mxu0 %v6298
  %6360 = vmatpush.bf16.msra.mxu0 %v6297
  %6361 = vmatpush.bf16.msra.mxu0 %v6296
  %6362 = vmatpush.bf16.msra.mxu0 %v6295
  %6363 = vmatpush.bf16.msra.mxu0 %v6294
  %6364 = vmatpush.bf16.msra.mxu0 %v6293
  %6365 = vmatmul.bf16.gmra.mxu0 %v6093
  %v6366 = vpop.f32.mrf.mxu0
  %v6367 = vadd.f32 %v6163, %v6366
  %v6368 = vpop.f32.mrf.mxu0
  %6369 = vdwg.mxu0
  %6370 = vmatpush.bf16.msra.mxu0 %v6308
  %6371 = vmatpush.bf16.msra.mxu0 %v6307
  %6372 = vmatpush.bf16.msra.mxu0 %v6306
  %6373 = vmatpush.bf16.msra.mxu0 %v6305
  %6374 = vmatpush.bf16.msra.mxu0 %v6304
  %6375 = vmatpush.bf16.msra.mxu0 %v6303
  %6376 = vmatpush.bf16.msra.mxu0 %v6302
  %6377 = vmatpush.bf16.msra.mxu0 %v6301
  %6378 = vmatmul.bf16.gmra.mxu0 %v6094
  %v6379 = vpop.f32.mrf.mxu0
  %v6380 = vadd.f32 %v6367, %v6379
  %v6381 = vpop.f32.mrf.mxu0
  %6382 = vdwg.mxu0
  %6383 = vmatpush.bf16.msra.mxu0 %v6316
  %6384 = vmatpush.bf16.msra.mxu0 %v6315
  %6385 = vmatpush.bf16.msra.mxu0 %v6314
  %6386 = vmatpush.bf16.msra.mxu0 %v6313
  %6387 = vmatpush.bf16.msra.mxu0 %v6312
  %6388 = vmatpush.bf16.msra.mxu0 %v6311
  %6389 = vmatpush.bf16.msra.mxu0 %v6310
  %6390 = vmatpush.bf16.msra.mxu0 %v6309
  %6391 = vmatmul.bf16.gmra.mxu0 %v6095
  %v6392 = vpop.f32.mrf.mxu0
  %v6393 = vadd.f32 %v6380, %v6392
  %v6394 = vpop.f32.mrf.mxu0
  %6395 = vdwg.mxu0
  %6396 = vmatpush.bf16.msra.mxu0 %v6324
  %6397 = vmatpush.bf16.msra.mxu0 %v6323
  %6398 = vmatpush.bf16.msra.mxu0 %v6322
  %6399 = vmatpush.bf16.msra.mxu0 %v6321
  %6400 = vmatpush.bf16.msra.mxu0 %v6320
  %6401 = vmatpush.bf16.msra.mxu0 %v6319
  %6402 = vmatpush.bf16.msra.mxu0 %v6318
  %6403 = vmatpush.bf16.msra.mxu0 %v6317
  %6404 = vmatmul.bf16.gmra.mxu0 %v6096
  %v6405 = vpop.f32.mrf.mxu0
  %v6406 = vadd.f32 %v6393, %v6405
  %v6407 = vpop.f32.mrf.mxu0
  %6408 = vdwg.mxu0
  %6409 = vst [vmem:[%s5] sm:$0xff] %v6406
  // Predicated region
  $region22: #{cnn_forward.3} parent=0 // pred_check
    _
  $region23: #{cnn_forward.3} parent=0 // pred_check_branch
    %6411 = sbr.rel (0) target = $region25
  $region24: #{cnn_forward.3} parent=0 // pred_region
    _
  $region25: #{cnn_forward.3} parent=0 // pred_fallthru
    _
  // Predicated region
  $region26: #{cnn_forward.3} parent=0 // pred_check
    _
  $region27: #{cnn_forward.3} parent=0 // pred_check_branch
    %6413 = sbr.rel (0) target = $region29
  $region28: #{cnn_forward.3} parent=0 // pred_region
    _
  $region29: #{cnn_forward.3} parent=0 // pred_fallthru
    _

// kernel: cnn_forward.2
$region0: #{cnn_forward.2}
  #allocation0 [shape = 'u32[]', space=smem, size = 0x4, offset = 0x4, fixed_abs, tag = 'smem constant byte address 0x4 - core index']
  #allocation1 [shape = 'u32[72,128]{1,0:T(1,128)}', space=vmem, size = 0x9000, scoped, tag = 'internal scratch']
  #allocation2 [shape = 'f32[200,64]{1,0:T(8,128)}', space=vmem, size = 0x19000, scoped, tag = 'scratch operand']
  #allocation3 [shape = 'f32[81,64]{1,0:T(8,128)}', space=vmem, size = 0xb000, scoped, tag = 'scratch operand']
  %s0 = inlined_call_operand.vmem [shape: f32[2,84,11,32], index: 0, kind: input, shape index: {}]
  %s1 = inlined_call_operand.vmem [shape: bf16[256,32], index: 1, kind: input, shape index: {}]
  %s2 = inlined_call_operand.vmem [shape: f32[1,32], index: 2, kind: input, shape index: {}]
  %s3 = inlined_call_operand.vmem [shape: bf16[512,64], index: 3, kind: input, shape index: {}]
  %s4 = inlined_call_operand.vmem [shape: f32[1,64], index: 4, kind: input, shape index: {}]
  %s5 = inlined_call_operand.vmem [shape: bf16[576,64], index: 5, kind: input, shape index: {}]
  %s6 = inlined_call_operand.vmem [shape: f32[1,64], index: 6, kind: input, shape index: {}]
  %s7 = inlined_call_operand.vmem [shape: f32[2,49,64], index: 7, kind: output, shape index: {}]
  %s8 = sld [smem:[#allocation0]]
  $region68: #{cnn_forward.2} parent=0
    _
  %s10 = ssub.s32 1, %s8
  %s11 = scalar_select 0, %s10, %s8
  loop: start=0, step=1, limit=4
  $region2: #{cnn_forward.2} parent=0 // loop_pre_header
    _
  $region3: #{cnn_forward.2} parent=0 // loop_header
    %s13 = sphi 0, %s17
    %p14 = scmp.ge.s32.totalorder %s13, 4
    %s23 = sphi 0, %s25
    %s26 = sphi 0, %s23
    %s27 = sphi 0, %s26
    %s43 = sphi 0, %s27
    %s47 = sphi 0, %s47
    %s49 = sphi 0, %s47
    %s50 = sphi 0, %s49
    %s64 = sphi 0, %s50
    %s68 = sphi 0, %s68
    %s70 = sphi 0, %s68
    %s71 = sphi 0, %s70
    %s85 = sphi 0, %s71
    %s89 = sphi 0, %s89
    %s91 = sphi 0, %s89
    %s92 = sphi 0, %s91
    %s106 = sphi 0, %s92
    %s110 = sphi 0, %s110
    %s112 = sphi 0, %s110
    %s113 = sphi 0, %s112
    %s127 = sphi 0, %s113
    %s131 = sphi 0, %s131
    %s133 = sphi 0, %s131
    %s134 = sphi 0, %s133
    %s148 = sphi 0, %s134
    %s152 = sphi 0, %s152
    %s154 = sphi 0, %s152
    %s155 = sphi 0, %s154
    %s169 = sphi 0, %s155
    %s175 = sphi 0, %s177
    %s178 = sphi 0, %s175
    %s179 = sphi 0, %s178
    %s195 = sphi 0, %s179
  $region4: #{cnn_forward.2} parent=0 // loop_header_branch
    %16 = sbr.rel (%p14) target = $region8
  $region5: #{cnn_forward.2} parent=0 // loop_body
    %s18 = ssub.s32 %s13, 1
    %s19 = ssub.s32 %s13, 2
    %s20 = sadd.s32 %s13, 1
    %s21 = ssub.s32 %s13, %s20
    %p22 = scmp.eq.s32.totalorder %s21, 0
    %s24 = sadd.s32 %s23, 1
    %s25 = scalar_select %p22, %s23, %s24
    %p28 = pneg %p22
    %p29 = scmp.eq.s32.totalorder %s13, 1
    %p30 = por %p28, %p29
    %p31 = scmp.ne.s32.totalorder %s23, %s26
    %p32 = scmp.eq.s32.totalorder %s13, 0
    %p33 = por %p31, %p32
    %p34 = scmp.ne.s32.totalorder %s23, %s26
    %p35 = scmp.eq.s32.totalorder %s18, 1
    %p36 = por %p34, %p35
    %p37 = scmp.ne.s32.totalorder %s26, %s27
    %p38 = scmp.eq.s32.totalorder %s18, 0
    %p39 = por %p37, %p38
    %p40 = scmp.ne.s32.totalorder %s26, %s27
    %p41 = scmp.eq.s32.totalorder %s19, 1
    %p42 = por %p40, %p41
    %p44 = scmp.ne.s32.totalorder %s27, %s43
    %p45 = scmp.eq.s32.totalorder %s19, 0
    %p46 = por %p44, %p45
    %s48 = sadd.s32 %s47, 1
    %p51 = scmp.eq.s32.totalorder %s13, 1
    %p52 = scmp.ne.s32.totalorder %s47, %s49
    %p53 = scmp.eq.s32.totalorder %s13, 0
    %p54 = por %p52, %p53
    %p55 = scmp.ne.s32.totalorder %s47, %s49
    %p56 = scmp.eq.s32.totalorder %s18, 1
    %p57 = por %p55, %p56
    %p58 = scmp.ne.s32.totalorder %s49, %s50
    %p59 = scmp.eq.s32.totalorder %s18, 0
    %p60 = por %p58, %p59
    %p61 = scmp.ne.s32.totalorder %s49, %s50
    %p62 = scmp.eq.s32.totalorder %s19, 1
    %p63 = por %p61, %p62
    %p65 = scmp.ne.s32.totalorder %s50, %s64
    %p66 = scmp.eq.s32.totalorder %s19, 0
    %p67 = por %p65, %p66
    %s69 = sadd.s32 %s68, 1
    %p72 = scmp.eq.s32.totalorder %s13, 1
    %p73 = scmp.ne.s32.totalorder %s68, %s70
    %p74 = scmp.eq.s32.totalorder %s13, 0
    %p75 = por %p73, %p74
    %p76 = scmp.ne.s32.totalorder %s68, %s70
    %p77 = scmp.eq.s32.totalorder %s18, 1
    %p78 = por %p76, %p77
    %p79 = scmp.ne.s32.totalorder %s70, %s71
    %p80 = scmp.eq.s32.totalorder %s18, 0
    %p81 = por %p79, %p80
    %p82 = scmp.ne.s32.totalorder %s70, %s71
    %p83 = scmp.eq.s32.totalorder %s19, 1
    %p84 = por %p82, %p83
    %p86 = scmp.ne.s32.totalorder %s71, %s85
    %p87 = scmp.eq.s32.totalorder %s19, 0
    %p88 = por %p86, %p87
    %s90 = sadd.s32 %s89, 1
    %p93 = scmp.eq.s32.totalorder %s13, 1
    %p94 = scmp.ne.s32.totalorder %s89, %s91
    %p95 = scmp.eq.s32.totalorder %s13, 0
    %p96 = por %p94, %p95
    %p97 = scmp.ne.s32.totalorder %s89, %s91
    %p98 = scmp.eq.s32.totalorder %s18, 1
    %p99 = por %p97, %p98
    %p100 = scmp.ne.s32.totalorder %s91, %s92
    %p101 = scmp.eq.s32.totalorder %s18, 0
    %p102 = por %p100, %p101
    %p103 = scmp.ne.s32.totalorder %s91, %s92
    %p104 = scmp.eq.s32.totalorder %s19, 1
    %p105 = por %p103, %p104
    %p107 = scmp.ne.s32.totalorder %s92, %s106
    %p108 = scmp.eq.s32.totalorder %s19, 0
    %p109 = por %p107, %p108
    %s111 = sadd.s32 %s110, 1
    %p114 = scmp.eq.s32.totalorder %s13, 1
    %p115 = scmp.ne.s32.totalorder %s110, %s112
    %p116 = scmp.eq.s32.totalorder %s13, 0
    %p117 = por %p115, %p116
    %p118 = scmp.ne.s32.totalorder %s110, %s112
    %p119 = scmp.eq.s32.totalorder %s18, 1
    %p120 = por %p118, %p119
    %p121 = scmp.ne.s32.totalorder %s112, %s113
    %p122 = scmp.eq.s32.totalorder %s18, 0
    %p123 = por %p121, %p122
    %p124 = scmp.ne.s32.totalorder %s112, %s113
    %p125 = scmp.eq.s32.totalorder %s19, 1
    %p126 = por %p124, %p125
    %p128 = scmp.ne.s32.totalorder %s113, %s127
    %p129 = scmp.eq.s32.totalorder %s19, 0
    %p130 = por %p128, %p129
    %s132 = sadd.s32 %s131, 1
    %p135 = scmp.eq.s32.totalorder %s13, 1
    %p136 = scmp.ne.s32.totalorder %s131, %s133
    %p137 = scmp.eq.s32.totalorder %s13, 0
    %p138 = por %p136, %p137
    %p139 = scmp.ne.s32.totalorder %s131, %s133
    %p140 = scmp.eq.s32.totalorder %s18, 1
    %p141 = por %p139, %p140
    %p142 = scmp.ne.s32.totalorder %s133, %s134
    %p143 = scmp.eq.s32.totalorder %s18, 0
    %p144 = por %p142, %p143
    %p145 = scmp.ne.s32.totalorder %s133, %s134
    %p146 = scmp.eq.s32.totalorder %s19, 1
    %p147 = por %p145, %p146
    %p149 = scmp.ne.s32.totalorder %s134, %s148
    %p150 = scmp.eq.s32.totalorder %s19, 0
    %p151 = por %p149, %p150
    %s153 = sadd.s32 %s152, 1
    %p156 = scmp.eq.s32.totalorder %s13, 1
    %p157 = scmp.ne.s32.totalorder %s152, %s154
    %p158 = scmp.eq.s32.totalorder %s13, 0
    %p159 = por %p157, %p158
    %p160 = scmp.ne.s32.totalorder %s152, %s154
    %p161 = scmp.eq.s32.totalorder %s18, 1
    %p162 = por %p160, %p161
    %p163 = scmp.ne.s32.totalorder %s154, %s155
    %p164 = scmp.eq.s32.totalorder %s18, 0
    %p165 = por %p163, %p164
    %p166 = scmp.ne.s32.totalorder %s154, %s155
    %p167 = scmp.eq.s32.totalorder %s19, 1
    %p168 = por %p166, %p167
    %p170 = scmp.ne.s32.totalorder %s155, %s169
    %p171 = scmp.eq.s32.totalorder %s19, 0
    %p172 = por %p170, %p171
    %s173 = ssub.s32 %s13, %s20
    %p174 = scmp.eq.s32.totalorder %s173, 0
    %s176 = sadd.s32 %s175, 1
    %s177 = scalar_select %p174, %s175, %s176
    %p180 = pneg %p174
    %p181 = scmp.eq.s32.totalorder %s13, 1
    %p182 = por %p180, %p181
    %p183 = scmp.ne.s32.totalorder %s175, %s178
    %p184 = scmp.eq.s32.totalorder %s13, 0
    %p185 = por %p183, %p184
    %p186 = scmp.ne.s32.totalorder %s175, %s178
    %p187 = scmp.eq.s32.totalorder %s18, 1
    %p188 = por %p186, %p187
    %p189 = scmp.ne.s32.totalorder %s178, %s179
    %p190 = scmp.eq.s32.totalorder %s18, 0
    %p191 = por %p189, %p190
    %p192 = scmp.ne.s32.totalorder %s178, %s179
    %p193 = scmp.eq.s32.totalorder %s19, 1
    %p194 = por %p192, %p193
    %p196 = scmp.ne.s32.totalorder %s179, %s195
    %p197 = scmp.eq.s32.totalorder %s19, 0
    %p198 = por %p196, %p197
    %p199 = scmp.le.s32.totalorder 1, %s13
    %p200 = scmp.lt.s32.totalorder %s13, 3
    %p201 = pnand %p199, %p200
    %p202 = pneg %p201
    // Predicated region
    $region9: #{cnn_forward.2} parent=5 // pred_check
      _
    $region10: #{cnn_forward.2} parent=5 // pred_check_branch
      %204 = sbr.rel (%p201) target = $region12
    $region11: #{cnn_forward.2} parent=5 // pred_region
      %s205 = ssub.s32 %s13, 1
      // Predicated region
      $region13: #{cnn_forward.2} parent=11 // pred_check
        %p206 = pneg %p60
      $region14: #{cnn_forward.2} parent=11 // pred_check_branch
        %208 = sbr.rel (%p206) target = $region16
      $region15: #{cnn_forward.2} parent=11 // pred_region
        _
      $region16: #{cnn_forward.2} parent=11 // pred_fallthru
        _
      // Predicated region
      $region17: #{cnn_forward.2} parent=11 // pred_check
        %p209 = pneg %p81
      $region18: #{cnn_forward.2} parent=11 // pred_check_branch
        %211 = sbr.rel (%p209) target = $region20
      $region19: #{cnn_forward.2} parent=11 // pred_region
        _
      $region20: #{cnn_forward.2} parent=11 // pred_fallthru
        _
      // Predicated region
      $region21: #{cnn_forward.2} parent=11 // pred_check
        %p212 = pneg %p102
      $region22: #{cnn_forward.2} parent=11 // pred_check_branch
        %214 = sbr.rel (%p212) target = $region24
      $region23: #{cnn_forward.2} parent=11 // pred_region
        _
      $region24: #{cnn_forward.2} parent=11 // pred_fallthru
        _
      // Predicated region
      $region25: #{cnn_forward.2} parent=11 // pred_check
        %p215 = pneg %p123
      $region26: #{cnn_forward.2} parent=11 // pred_check_branch
        %217 = sbr.rel (%p215) target = $region28
      $region27: #{cnn_forward.2} parent=11 // pred_region
        _
      $region28: #{cnn_forward.2} parent=11 // pred_fallthru
        _
      // Predicated region
      $region29: #{cnn_forward.2} parent=11 // pred_check
        %p218 = pneg %p144
      $region30: #{cnn_forward.2} parent=11 // pred_check_branch
        %220 = sbr.rel (%p218) target = $region32
      $region31: #{cnn_forward.2} parent=11 // pred_region
        _
      $region32: #{cnn_forward.2} parent=11 // pred_fallthru
        _
      // Predicated region
      $region33: #{cnn_forward.2} parent=11 // pred_check
        %p221 = pneg %p165
      $region34: #{cnn_forward.2} parent=11 // pred_check_branch
        %223 = sbr.rel (%p221) target = $region36
      $region35: #{cnn_forward.2} parent=11 // pred_region
        _
      $region36: #{cnn_forward.2} parent=11 // pred_fallthru
        _
    $region12: #{cnn_forward.2} parent=5 // pred_fallthru
      _
    %p224 = scmp.lt.s32.totalorder %s13, 2
    // Predicated region
    $region37: #{cnn_forward.2} parent=5 // pred_check
      %p225 = pneg %p224
    $region38: #{cnn_forward.2} parent=5 // pred_check_branch
      %227 = sbr.rel (%p225) target = $region40
    $region39: #{cnn_forward.2} parent=5 // pred_region
      // Predicated region
      $region41: #{cnn_forward.2} parent=39 // pred_check
        %p228 = pneg %p33
      $region42: #{cnn_forward.2} parent=39 // pred_check_branch
        %230 = sbr.rel (%p228) target = $region44
      $region43: #{cnn_forward.2} parent=39 // pred_region
        %p231 = scmp.lt.s32.totalorder %s13, 1
        %s232 = scalar_select %p231, %s13, 1
        %s233 = smul.addr %s232, 168
        %s234 = smul.addr %s233, 8
        %s235 = scalar_lea.vmem %s0, %s234
      $region44: #{cnn_forward.2} parent=39 // pred_fallthru
        _
    $region40: #{cnn_forward.2} parent=5 // pred_fallthru
      _
    %p236 = scmp.le.s32.totalorder 1, %s13
    %p237 = scmp.lt.s32.totalorder %s13, 3
    %p238 = pnand %p236, %p237
    %p239 = pneg %p238
    // Predicated region
    $region45: #{cnn_forward.2} parent=5 // pred_check
      _
    $region46: #{cnn_forward.2} parent=5 // pred_check_branch
      %241 = sbr.rel (%p238) target = $region48
    $region47: #{cnn_forward.2} parent=5 // pred_region
      %s242 = ssub.s32 %s13, 1
      %p243 = scmp.lt.s32.totalorder %s18, 1
      %s244 = scalar_select %p243, %s18, 1
      %s245 = smul.addr %s244, 168
      %s246 = smul.addr %s245, 8
      %s247 = scalar_lea.vmem %s0, %s246
      %p248 = pneg %p39
      %p249 = pneg %p36
      %p250 = pneg %p60
      %p251 = pneg %p57
      %p252 = pneg %p81
      %p253 = pneg %p78
      %p254 = pneg %p102
      %p255 = pneg %p99
      %p256 = pneg %p123
      %p257 = pneg %p120
      %p258 = pneg %p144
      %p259 = pneg %p141
      %p260 = pneg %p165
      %p261 = pneg %p162
      %p262 = pneg %p191
      %p263 = pneg %p188
      %p264 = scmp.lt.s32.totalorder %s18, 1
      %s265 = scalar_select %p264, %s18, 1
      %s266 = smul.addr %s265, 7
      %s267 = smul.addr %s266, 8
      %s268 = scalar_lea.vmem %s7, %s267
      %p269 = scmp.lt.s32.totalorder %s18, 1
      %s270 = scalar_select %p269, %s18, 1
      %s271 = smul.addr %s270, 168
      %s272 = smul.addr %s271, 8
      %s273 = scalar_lea.vmem %s0, %s272
      %p274 = scmp.lt.s32.totalorder %s18, 1
      %s275 = scalar_select %p274, %s18, 1
      %s276 = smul.addr %s275, 7
      %s277 = smul.addr %s276, 8
      %s278 = scalar_lea.vmem %s7, %s277
      loop: start=0, step=1, limit=20
      $region49: #{cnn_forward.2} parent=47 // loop_pre_header
        _
      $region50: #{cnn_forward.2} parent=47 // loop_header
        %s281 = sphi 0, %s285
        %p282 = scmp.ge.s32.totalorder %s281, 20
      $region51: #{cnn_forward.2} parent=47 // loop_header_branch
        %284 = sbr.rel (%p282) target = $region55
      $region52: #{cnn_forward.2} parent=47 // loop_body
        %s286 = smul.u32 %s281, 4
        %s287 = smul.u32 %s286, 16
        %s288 = scalar_lea.vmem %s273, %s287
        %v289 = vld [vmem:[%s288] sm:$0xff]
        %v290 = vld [vmem:[%s288 + $0x8] sm:$0x7]
        %s291 = sadd.s32 %s286, 1
        %s292 = smul.u32 %s291, 16
        %s293 = scalar_lea.vmem %s273, %s292
        %v294 = vld [vmem:[%s293] sm:$0xff]
        %v295 = vld [vmem:[%s293 + $0x8] sm:$0x7]
        %s296 = sadd.s32 %s286, 2
        %s297 = smul.u32 %s296, 16
        %s298 = scalar_lea.vmem %s273, %s297
        %v299 = vld [vmem:[%s298] sm:$0xff]
        %v300 = vld [vmem:[%s298 + $0x8] sm:$0x7]
        %s301 = sadd.s32 %s286, 3
        %s302 = smul.u32 %s301, 16
        %s303 = scalar_lea.vmem %s273, %s302
        %v304 = vld [vmem:[%s303] sm:$0xff]
        %v305 = vld [vmem:[%s303 + $0x8] sm:$0x7]
        %s306 = sadd.s32 %s286, 4
        %s307 = smul.u32 %s306, 16
        %s308 = scalar_lea.vmem %s273, %s307
        %v309 = vld [vmem:[%s308] sm:$0xff]
        %v310 = vld [vmem:[%s308 + $0x8] sm:$0x7]
        %s311 = sadd.s32 %s286, 5
        %s312 = smul.u32 %s311, 16
        %s313 = scalar_lea.vmem %s273, %s312
        %v314 = vld [vmem:[%s313] sm:$0xff]
        %v315 = vld [vmem:[%s313 + $0x8] sm:$0x7]
        %s316 = sadd.s32 %s286, 6
        %s317 = smul.u32 %s316, 16
        %s318 = scalar_lea.vmem %s273, %s317
        %v319 = vld [vmem:[%s318] sm:$0xff]
        %v320 = vld [vmem:[%s318 + $0x8] sm:$0x7]
        %s321 = sadd.s32 %s286, 7
        %s322 = smul.u32 %s321, 16
        %s323 = scalar_lea.vmem %s273, %s322
        %v324 = vld [vmem:[%s323] sm:$0xff]
        %v325 = vld [vmem:[%s323 + $0x8] sm:$0x7]
        %328 = vrot.lane.b32.xlu0 %v294, 32
        %v329 = vpop.permute.xlu0 %328
        %330 = vrot.lane.b32.xlu0 %v295, 32
        %v331 = vpop.permute.xlu0 %330
        %336 = vrot.lane.b32.xlu0 %v299, 64
        %v337 = vpop.permute.xlu0 %336
        %338 = vrot.lane.b32.xlu0 %v300, 64
        %v339 = vpop.permute.xlu0 %338
        %344 = vrot.lane.b32.xlu0 %v304, 96
        %v345 = vpop.permute.xlu0 %344
        %346 = vrot.lane.b32.xlu0 %v305, 96
        %v347 = vpop.permute.xlu0 %346
        %352 = vrot.lane.b32.xlu0 %v314, 32
        %v353 = vpop.permute.xlu0 %352
        %354 = vrot.lane.b32.xlu0 %v315, 32
        %v355 = vpop.permute.xlu0 %354
        %360 = vrot.lane.b32.xlu0 %v319, 64
        %v361 = vpop.permute.xlu0 %360
        %362 = vrot.lane.b32.xlu0 %v320, 64
        %v363 = vpop.permute.xlu0 %362
        %368 = vrot.lane.b32.xlu0 %v324, 96
        %v369 = vpop.permute.xlu0 %368
        %370 = vrot.lane.b32.xlu0 %v325, 96
        %v371 = vpop.permute.xlu0 %370
        %vm374 = vcmask 261120
        %v375 = vsel %vm374, %v289, %v329
        %v376 = vsel %vm374, %v290, %v331
        %vm377 = vcmask 523264
        %v378 = vsel %vm377, %v375, %v337
        %v379 = vsel %vm377, %v376, %v339
        %vm380 = vcmask 785408
        %v381 = vsel %vm380, %v378, %v345
        %v382 = vsel %vm380, %v379, %v347
        %v383 = vsel %vm374, %v309, %v353
        %v384 = vsel %vm374, %v310, %v355
        %v385 = vsel %vm377, %v383, %v361
        %v386 = vsel %vm377, %v384, %v363
        %v387 = vsel %vm380, %v385, %v369
        %v388 = vsel %vm380, %v386, %v371
        %391 = vrot.lane.b32.xlu0 %v289, 112
        %v392 = vpop.permute.xlu0 %391
        %393 = vrot.lane.b32.xlu0 %v290, 112
        %v394 = vpop.permute.xlu0 %393
        %vm397 = vcmask 1046528
        %v398 = vrot.slane %v289, 1
        %v399 = vrot.slane %v290, 1
        %v400 = vsel %vm397, %v398, %v399
        %401 = vrot.lane.b32.xlu0 %v400, 16
        %v402 = vpop.permute.xlu0 %401
        %403 = vrot.lane.b32.xlu0 %v399, 16
        %v404 = vpop.permute.xlu0 %403
        %407 = vrot.lane.b32.xlu0 %v294, 16
        %v408 = vpop.permute.xlu0 %407
        %409 = vrot.lane.b32.xlu0 %v295, 16
        %v410 = vpop.permute.xlu0 %409
        %v413 = vrot.slane %v294, 1
        %v414 = vrot.slane %v295, 1
        %v415 = vsel %vm397, %v413, %v414
        %416 = vrot.lane.b32.xlu0 %v415, 48
        %v417 = vpop.permute.xlu0 %416
        %418 = vrot.lane.b32.xlu0 %v414, 48
        %v419 = vpop.permute.xlu0 %418
        %422 = vrot.lane.b32.xlu0 %v299, 48
        %v423 = vpop.permute.xlu0 %422
        %424 = vrot.lane.b32.xlu0 %v300, 48
        %v425 = vpop.permute.xlu0 %424
        %v428 = vrot.slane %v299, 1
        %v429 = vrot.slane %v300, 1
        %v430 = vsel %vm397, %v428, %v429
        %431 = vrot.lane.b32.xlu0 %v430, 80
        %v432 = vpop.permute.xlu0 %431
        %433 = vrot.lane.b32.xlu0 %v429, 80
        %v434 = vpop.permute.xlu0 %433
        %437 = vrot.lane.b32.xlu0 %v304, 80
        %v438 = vpop.permute.xlu0 %437
        %439 = vrot.lane.b32.xlu0 %v305, 80
        %v440 = vpop.permute.xlu0 %439
        %v443 = vrot.slane %v304, 1
        %v444 = vrot.slane %v305, 1
        %v445 = vsel %vm397, %v443, %v444
        %446 = vrot.lane.b32.xlu0 %v445, 112
        %v447 = vpop.permute.xlu0 %446
        %448 = vrot.lane.b32.xlu0 %v444, 112
        %v449 = vpop.permute.xlu0 %448
        %454 = vrot.lane.b32.xlu0 %v309, 112
        %v455 = vpop.permute.xlu0 %454
        %456 = vrot.lane.b32.xlu0 %v310, 112
        %v457 = vpop.permute.xlu0 %456
        %v460 = vrot.slane %v309, 1
        %v461 = vrot.slane %v310, 1
        %v462 = vsel %vm397, %v460, %v461
        %463 = vrot.lane.b32.xlu0 %v462, 16
        %v464 = vpop.permute.xlu0 %463
        %465 = vrot.lane.b32.xlu0 %v461, 16
        %v466 = vpop.permute.xlu0 %465
        %469 = vrot.lane.b32.xlu0 %v314, 16
        %v470 = vpop.permute.xlu0 %469
        %471 = vrot.lane.b32.xlu0 %v315, 16
        %v472 = vpop.permute.xlu0 %471
        %v475 = vrot.slane %v314, 1
        %v476 = vrot.slane %v315, 1
        %v477 = vsel %vm397, %v475, %v476
        %478 = vrot.lane.b32.xlu0 %v477, 48
        %v479 = vpop.permute.xlu0 %478
        %480 = vrot.lane.b32.xlu0 %v476, 48
        %v481 = vpop.permute.xlu0 %480
        %484 = vrot.lane.b32.xlu0 %v319, 48
        %v485 = vpop.permute.xlu0 %484
        %486 = vrot.lane.b32.xlu0 %v320, 48
        %v487 = vpop.permute.xlu0 %486
        %v490 = vrot.slane %v319, 1
        %v491 = vrot.slane %v320, 1
        %v492 = vsel %vm397, %v490, %v491
        %493 = vrot.lane.b32.xlu0 %v492, 80
        %v494 = vpop.permute.xlu0 %493
        %495 = vrot.lane.b32.xlu0 %v491, 80
        %v496 = vpop.permute.xlu0 %495
        %499 = vrot.lane.b32.xlu0 %v324, 80
        %v500 = vpop.permute.xlu0 %499
        %501 = vrot.lane.b32.xlu0 %v325, 80
        %v502 = vpop.permute.xlu0 %501
        %v505 = vrot.slane %v324, 1
        %v506 = vrot.slane %v325, 1
        %v507 = vsel %vm397, %v505, %v506
        %508 = vrot.lane.b32.xlu0 %v507, 112
        %v509 = vpop.permute.xlu0 %508
        %510 = vrot.lane.b32.xlu0 %v506, 112
        %v511 = vpop.permute.xlu0 %510
        %vm514 = vcmask 130048
        %v515 = vsel %vm514, %v392, %v402
        %v516 = vsel %vm514, %v394, %v404
        %v517 = vsel %vm374, %v515, %v408
        %v518 = vsel %vm374, %v516, %v410
        %vm519 = vcmask 392192
        %v520 = vsel %vm519, %v517, %v417
        %v521 = vsel %vm519, %v518, %v419
        %v522 = vsel %vm377, %v520, %v423
        %v523 = vsel %vm377, %v521, %v425
        %vm524 = vcmask 654336
        %v525 = vsel %vm524, %v522, %v432
        %v526 = vsel %vm524, %v523, %v434
        %v527 = vsel %vm380, %v525, %v438
        %v528 = vsel %vm380, %v526, %v440
        %vm529 = vcmask 916480
        %v530 = vsel %vm529, %v527, %v447
        %v531 = vsel %vm529, %v528, %v449
        %v532 = vsel %vm514, %v455, %v464
        %v533 = vsel %vm514, %v457, %v466
        %v534 = vsel %vm374, %v532, %v470
        %v535 = vsel %vm374, %v533, %v472
        %v536 = vsel %vm519, %v534, %v479
        %v537 = vsel %vm519, %v535, %v481
        %v538 = vsel %vm377, %v536, %v485
        %v539 = vsel %vm377, %v537, %v487
        %v540 = vsel %vm524, %v538, %v494
        %v541 = vsel %vm524, %v539, %v496
        %v542 = vsel %vm380, %v540, %v500
        %v543 = vsel %vm380, %v541, %v502
        %v544 = vsel %vm529, %v542, %v509
        %v545 = vsel %vm529, %v543, %v511
        %vm550 = vcmask 1041408
        %v551 = vrot.slane %v530, 6
        %v552 = vrot.slane %v544, 6
        %v553 = vrot.slane %v531, 6
        %v554 = vsel %vm550, %v551, %v553
        %v555 = vrot.slane %v545, 6
        %v556 = vsel %vm550, %v552, %v555
        %v561 = vsel %vm550, %v382, %v551
        %v562 = vsel %vm550, %v388, %v552
        %v563 = vpack.c.bf16 %v561, %v381
        %v564 = vpack.c.bf16 %v562, %v387
        %v565 = vpack.c.bf16 %v554, %v554
        %v566 = vpack.c.bf16 %v556, %v556
        %v567 = vld [vmem:[%s1] sm:$0xf]
        %v568 = vld [vmem:[%s1 + $0x4] sm:$0xf]
        %v569 = vld [vmem:[%s1 + $0x8] sm:$0xf]
        %v570 = vld [vmem:[%s1 + $0xc] sm:$0xf]
        %v571 = vld [vmem:[%s1 + $0x10] sm:$0xf]
        %v572 = vld [vmem:[%s1 + $0x14] sm:$0xf]
        %v573 = vld [vmem:[%s1 + $0x18] sm:$0xf]
        %v574 = vld [vmem:[%s1 + $0x1c] sm:$0xf]
        %v575 = vld [vmem:[%s1 + $0x20] sm:$0xf]
        %v576 = vld [vmem:[%s1 + $0x24] sm:$0xf]
        %v577 = vld [vmem:[%s1 + $0x28] sm:$0xf]
        %v578 = vld [vmem:[%s1 + $0x2c] sm:$0xf]
        %v579 = vld [vmem:[%s1 + $0x30] sm:$0xf]
        %v580 = vld [vmem:[%s1 + $0x34] sm:$0xf]
        %v581 = vld [vmem:[%s1 + $0x38] sm:$0xf]
        %v582 = vld [vmem:[%s1 + $0x3c] sm:$0xf]
        %v583 = vld [vmem:[%s1 + $0x40] sm:$0xf]
        %v584 = vld [vmem:[%s1 + $0x44] sm:$0xf]
        %v585 = vld [vmem:[%s1 + $0x48] sm:$0xf]
        %v586 = vld [vmem:[%s1 + $0x4c] sm:$0xf]
        %v587 = vld [vmem:[%s1 + $0x50] sm:$0xf]
        %v588 = vld [vmem:[%s1 + $0x54] sm:$0xf]
        %v589 = vld [vmem:[%s1 + $0x58] sm:$0xf]
        %v590 = vld [vmem:[%s1 + $0x5c] sm:$0xf]
        %v591 = vld [vmem:[%s1 + $0x60] sm:$0xf]
        %v592 = vld [vmem:[%s1 + $0x64] sm:$0xf]
        %v593 = vld [vmem:[%s1 + $0x68] sm:$0xf]
        %v594 = vld [vmem:[%s1 + $0x6c] sm:$0xf]
        %v595 = vld [vmem:[%s1 + $0x70] sm:$0xf]
        %v596 = vld [vmem:[%s1 + $0x74] sm:$0xf]
        %v597 = vld [vmem:[%s1 + $0x78] sm:$0xf]
        %v598 = vld [vmem:[%s1 + $0x7c] sm:$0xf]
        %v599 = vld [vmem:[%s2] sm:$0x1]
        %v601 = vperm.slane %v599, 0
        %v635 = vunpack.c.l.b16 %v567
        %v636 = vunpack.c.l.b16 %v568
        %v637 = vunpack.c.l.b16 %v569
        %v638 = vunpack.c.l.b16 %v570
        %v639 = vunpack.c.l.b16 %v571
        %v640 = vunpack.c.l.b16 %v572
        %v641 = vunpack.c.l.b16 %v573
        %v642 = vunpack.c.l.b16 %v574
        %v643 = vunpack.c.l.b16 %v575
        %v644 = vunpack.c.l.b16 %v576
        %v645 = vunpack.c.l.b16 %v577
        %v646 = vunpack.c.l.b16 %v578
        %v647 = vunpack.c.l.b16 %v579
        %v648 = vunpack.c.l.b16 %v580
        %v649 = vunpack.c.l.b16 %v581
        %v650 = vunpack.c.l.b16 %v582
        %v651 = vunpack.c.l.b16 %v583
        %v652 = vunpack.c.l.b16 %v584
        %v653 = vunpack.c.l.b16 %v585
        %v654 = vunpack.c.l.b16 %v586
        %v655 = vunpack.c.l.b16 %v587
        %v656 = vunpack.c.l.b16 %v588
        %v657 = vunpack.c.l.b16 %v589
        %v658 = vunpack.c.l.b16 %v590
        %v659 = vunpack.c.l.b16 %v591
        %v660 = vunpack.c.l.b16 %v592
        %v661 = vunpack.c.l.b16 %v593
        %v662 = vunpack.c.l.b16 %v594
        %v663 = vunpack.c.l.b16 %v595
        %v664 = vunpack.c.l.b16 %v596
        %v665 = vunpack.c.l.b16 %v597
        %v666 = vunpack.c.l.b16 %v598
        %v667 = vpack.c.b16 %v636, %v635
        %v668 = vpack.c.b16 %v638, %v637
        %v669 = vpack.c.b16 %v640, %v639
        %v670 = vpack.c.b16 %v642, %v641
        %v671 = vpack.c.b16 %v644, %v643
        %v672 = vpack.c.b16 %v646, %v645
        %v673 = vpack.c.b16 %v648, %v647
        %v674 = vpack.c.b16 %v650, %v649
        %v675 = vpack.c.b16 %v652, %v651
        %v676 = vpack.c.b16 %v654, %v653
        %v677 = vpack.c.b16 %v656, %v655
        %v678 = vpack.c.b16 %v658, %v657
        %v679 = vpack.c.b16 %v660, %v659
        %v680 = vpack.c.b16 %v662, %v661
        %v681 = vpack.c.b16 %v664, %v663
        %v682 = vpack.c.b16 %v666, %v665
        %699 = vmatpush.bf16.msra.mxu0 %v674
        %700 = vmatpush.bf16.msra.mxu0 %v673
        %701 = vmatpush.bf16.msra.mxu0 %v672
        %702 = vmatpush.bf16.msra.mxu0 %v671
        %703 = vmatpush.bf16.msra.mxu0 %v670
        %704 = vmatpush.bf16.msra.mxu0 %v669
        %705 = vmatpush.bf16.msra.mxu0 %v668
        %706 = vmatpush.bf16.msra.mxu0 %v667
        %707 = vmatmul.bf16.gmra.mxu0 %v563
        %v708 = vpop.f32.mrf.mxu0
        %v709 = vadd.f32 %v601, %v708
        %v710 = vpop.f32.mrf.mxu0
        %v711 = vadd.f32 %v601, %v710
        %712 = vmatmul.bf16.gmra.mxu0 %v565
        %v713 = vpop.f32.mrf.mxu0
        %v714 = vadd.f32 %v601, %v713
        %v715 = vpop.f32.mrf.mxu0
        %716 = vdwg.mxu0
        %717 = vmatpush.bf16.msra.mxu0 %v682
        %718 = vmatpush.bf16.msra.mxu0 %v681
        %719 = vmatpush.bf16.msra.mxu0 %v680
        %720 = vmatpush.bf16.msra.mxu0 %v679
        %721 = vmatpush.bf16.msra.mxu0 %v678
        %722 = vmatpush.bf16.msra.mxu0 %v677
        %723 = vmatpush.bf16.msra.mxu0 %v676
        %724 = vmatpush.bf16.msra.mxu0 %v675
        %725 = vmatmul.bf16.gmra.mxu0 %v564
        %v726 = vpop.f32.mrf.mxu0
        %v727 = vadd.f32 %v709, %v726
        %v728 = vpop.f32.mrf.mxu0
        %v729 = vadd.f32 %v711, %v728
        %730 = vmatmul.bf16.gmra.mxu0 %v566
        %v731 = vpop.f32.mrf.mxu0
        %v732 = vadd.f32 %v714, %v731
        %v733 = vpop.f32.mrf.mxu0
        %734 = vdwg.mxu0
        %v735 = vmax.f32 %v727, 0.0
        %v736 = vmax.f32 %v729, 0.0
        %v737 = vmax.f32 %v732, 0.0
        %vm740 = vcmask 1045504
        %v741 = vrot.slane %v736, 2
        %v742 = vrot.slane %v737, 2
        %v743 = vsel %vm740, %v741, %v742
        %744 = vrot.lane.b32.xlu0 %v743, 32
        %v745 = vpop.permute.xlu0 %744
        %746 = vrot.lane.b32.xlu0 %v742, 32
        %v747 = vpop.permute.xlu0 %746
        %v750 = vsel %vm374, %v735, %v745
        %v751 = vsel %vm374, %v736, %v747
        %s752 = smul.u32 %s281, 10
        %s753 = scalar_lea.vmem [#allocation2], %s752
        %754 = vst.msk [vmem:[%s753] sm:$0xff] %vm377, %v750
        %vm755 = vcmask 517120
        %756 = vst.msk [vmem:[%s753 + $0x8] sm:$0x3] %vm755, %v751
      $region53: #{cnn_forward.2} parent=47 // loop_footer
        %s285 = sadd.s32 1, %s281
      $region54: #{cnn_forward.2} parent=47 // loop_footer_branch
        %280 = sbr.rel target = $region50
      $region55: #{cnn_forward.2} parent=47 // loop_exit
        _
      %v757 = vld [vmem:[#allocation2] sm:$0xff]
      %v758 = vld [vmem:[#allocation2 + $0x8] sm:$0x3]
      %v759 = vld [vmem:[#allocation2 + $0xa] sm:$0xff]
      %v760 = vld [vmem:[#allocation2 + $0x12] sm:$0x3]
      %v761 = vld [vmem:[#allocation2 + $0x14] sm:$0xff]
      %v762 = vld [vmem:[#allocation2 + $0x1c] sm:$0x3]
      %v763 = vld [vmem:[#allocation2 + $0x1e] sm:$0xff]
      %v764 = vld [vmem:[#allocation2 + $0x26] sm:$0x3]
      %vm767 = vcmask 1046528
      %v768 = vrot.slane %v757, 1
      %v769 = vrot.slane %v758, 1
      %v770 = vsel %vm767, %v768, %v769
      %771 = vrot.lane.b32.xlu0 %v770, 64
      %v772 = vpop.permute.xlu0 %771
      %773 = vrot.lane.b32.xlu0 %v769, 64
      %v774 = vpop.permute.xlu0 %773
      %v779 = vrot.slane %v759, 1
      %v780 = vrot.slane %v760, 1
      %v781 = vsel %vm767, %v779, %v780
      %782 = vrot.lane.b32.xlu0 %v781, 64
      %v783 = vpop.permute.xlu0 %782
      %784 = vrot.lane.b32.xlu0 %v780, 64
      %v785 = vpop.permute.xlu0 %784
      %v790 = vrot.slane %v761, 1
      %v791 = vrot.slane %v762, 1
      %v792 = vsel %vm767, %v790, %v791
      %793 = vrot.lane.b32.xlu0 %v792, 64
      %v794 = vpop.permute.xlu0 %793
      %795 = vrot.lane.b32.xlu0 %v791, 64
      %v796 = vpop.permute.xlu0 %795
      %v801 = vrot.slane %v763, 1
      %v802 = vrot.slane %v764, 1
      %v803 = vsel %vm767, %v801, %v802
      %804 = vrot.lane.b32.xlu0 %v803, 64
      %v805 = vpop.permute.xlu0 %804
      %806 = vrot.lane.b32.xlu0 %v802, 64
      %v807 = vpop.permute.xlu0 %806
      %vm810 = vcmask 523264
      %v811 = vsel %vm810, %v757, %v772
      %v812 = vsel %vm810, %v758, %v774
      %v813 = vsel %vm810, %v759, %v783
      %v814 = vsel %vm810, %v760, %v785
      %v815 = vsel %vm810, %v761, %v794
      %v816 = vsel %vm810, %v762, %v796
      %v817 = vsel %vm810, %v763, %v805
      %v818 = vsel %vm810, %v764, %v807
      %v819 = vpack.c.bf16 %v812, %v811
      %v820 = vpack.c.bf16 %v814, %v813
      %v821 = vpack.c.bf16 %v816, %v815
      %v822 = vpack.c.bf16 %v818, %v817
      %v823 = vld [vmem:[%s3] sm:$0xf]
      %v824 = vld [vmem:[%s3 + $0x4] sm:$0xf]
      %v825 = vld [vmem:[%s3 + $0x8] sm:$0xf]
      %v826 = vld [vmem:[%s3 + $0xc] sm:$0xf]
      %v827 = vld [vmem:[%s3 + $0x10] sm:$0xf]
      %v828 = vld [vmem:[%s3 + $0x14] sm:$0xf]
      %v829 = vld [vmem:[%s3 + $0x18] sm:$0xf]
      %v830 = vld [vmem:[%s3 + $0x1c] sm:$0xf]
      %v831 = vld [vmem:[%s3 + $0x20] sm:$0xf]
      %v832 = vld [vmem:[%s3 + $0x24] sm:$0xf]
      %v833 = vld [vmem:[%s3 + $0x28] sm:$0xf]
      %v834 = vld [vmem:[%s3 + $0x2c] sm:$0xf]
      %v835 = vld [vmem:[%s3 + $0x30] sm:$0xf]
      %v836 = vld [vmem:[%s3 + $0x34] sm:$0xf]
      %v837 = vld [vmem:[%s3 + $0x38] sm:$0xf]
      %v838 = vld [vmem:[%s3 + $0x3c] sm:$0xf]
      %v839 = vld [vmem:[%s3 + $0x40] sm:$0xf]
      %v840 = vld [vmem:[%s3 + $0x44] sm:$0xf]
      %v841 = vld [vmem:[%s3 + $0x48] sm:$0xf]
      %v842 = vld [vmem:[%s3 + $0x4c] sm:$0xf]
      %v843 = vld [vmem:[%s3 + $0x50] sm:$0xf]
      %v844 = vld [vmem:[%s3 + $0x54] sm:$0xf]
      %v845 = vld [vmem:[%s3 + $0x58] sm:$0xf]
      %v846 = vld [vmem:[%s3 + $0x5c] sm:$0xf]
      %v847 = vld [vmem:[%s3 + $0x60] sm:$0xf]
      %v848 = vld [vmem:[%s3 + $0x64] sm:$0xf]
      %v849 = vld [vmem:[%s3 + $0x68] sm:$0xf]
      %v850 = vld [vmem:[%s3 + $0x6c] sm:$0xf]
      %v851 = vld [vmem:[%s3 + $0x70] sm:$0xf]
      %v852 = vld [vmem:[%s3 + $0x74] sm:$0xf]
      %v853 = vld [vmem:[%s3 + $0x78] sm:$0xf]
      %v854 = vld [vmem:[%s3 + $0x7c] sm:$0xf]
      %v855 = vld [vmem:[%s3 + $0x80] sm:$0xf]
      %v856 = vld [vmem:[%s3 + $0x84] sm:$0xf]
      %v857 = vld [vmem:[%s3 + $0x88] sm:$0xf]
      %v858 = vld [vmem:[%s3 + $0x8c] sm:$0xf]
      %v859 = vld [vmem:[%s3 + $0x90] sm:$0xf]
      %v860 = vld [vmem:[%s3 + $0x94] sm:$0xf]
      %v861 = vld [vmem:[%s3 + $0x98] sm:$0xf]
      %v862 = vld [vmem:[%s3 + $0x9c] sm:$0xf]
      %v863 = vld [vmem:[%s3 + $0xa0] sm:$0xf]
      %v864 = vld [vmem:[%s3 + $0xa4] sm:$0xf]
      %v865 = vld [vmem:[%s3 + $0xa8] sm:$0xf]
      %v866 = vld [vmem:[%s3 + $0xac] sm:$0xf]
      %v867 = vld [vmem:[%s3 + $0xb0] sm:$0xf]
      %v868 = vld [vmem:[%s3 + $0xb4] sm:$0xf]
      %v869 = vld [vmem:[%s3 + $0xb8] sm:$0xf]
      %v870 = vld [vmem:[%s3 + $0xbc] sm:$0xf]
      %v871 = vld [vmem:[%s3 + $0xc0] sm:$0xf]
      %v872 = vld [vmem:[%s3 + $0xc4] sm:$0xf]
      %v873 = vld [vmem:[%s3 + $0xc8] sm:$0xf]
      %v874 = vld [vmem:[%s3 + $0xcc] sm:$0xf]
      %v875 = vld [vmem:[%s3 + $0xd0] sm:$0xf]
      %v876 = vld [vmem:[%s3 + $0xd4] sm:$0xf]
      %v877 = vld [vmem:[%s3 + $0xd8] sm:$0xf]
      %v878 = vld [vmem:[%s3 + $0xdc] sm:$0xf]
      %v879 = vld [vmem:[%s3 + $0xe0] sm:$0xf]
      %v880 = vld [vmem:[%s3 + $0xe4] sm:$0xf]
      %v881 = vld [vmem:[%s3 + $0xe8] sm:$0xf]
      %v882 = vld [vmem:[%s3 + $0xec] sm:$0xf]
      %v883 = vld [vmem:[%s3 + $0xf0] sm:$0xf]
      %v884 = vld [vmem:[%s3 + $0xf4] sm:$0xf]
      %v885 = vld [vmem:[%s3 + $0xf8] sm:$0xf]
      %v886 = vld [vmem:[%s3 + $0xfc] sm:$0xf]
      %v887 = vld [vmem:[%s4] sm:$0x1]
      %v889 = vperm.slane %v887, 0
      %v955 = vunpack.c.l.b16 %v823
      %v956 = vunpack.c.l.b16 %v824
      %v957 = vunpack.c.l.b16 %v825
      %v958 = vunpack.c.l.b16 %v826
      %v959 = vunpack.c.l.b16 %v827
      %v960 = vunpack.c.l.b16 %v828
      %v961 = vunpack.c.l.b16 %v829
      %v962 = vunpack.c.l.b16 %v830
      %v963 = vunpack.c.l.b16 %v831
      %v964 = vunpack.c.l.b16 %v832
      %v965 = vunpack.c.l.b16 %v833
      %v966 = vunpack.c.l.b16 %v834
      %v967 = vunpack.c.l.b16 %v835
      %v968 = vunpack.c.l.b16 %v836
      %v969 = vunpack.c.l.b16 %v837
      %v970 = vunpack.c.l.b16 %v838
      %v971 = vunpack.c.l.b16 %v839
      %v972 = vunpack.c.l.b16 %v840
      %v973 = vunpack.c.l.b16 %v841
      %v974 = vunpack.c.l.b16 %v842
      %v975 = vunpack.c.l.b16 %v843
      %v976 = vunpack.c.l.b16 %v844
      %v977 = vunpack.c.l.b16 %v845
      %v978 = vunpack.c.l.b16 %v846
      %v979 = vunpack.c.l.b16 %v847
      %v980 = vunpack.c.l.b16 %v848
      %v981 = vunpack.c.l.b16 %v849
      %v982 = vunpack.c.l.b16 %v850
      %v983 = vunpack.c.l.b16 %v851
      %v984 = vunpack.c.l.b16 %v852
      %v985 = vunpack.c.l.b16 %v853
      %v986 = vunpack.c.l.b16 %v854
      %v987 = vunpack.c.l.b16 %v855
      %v988 = vunpack.c.l.b16 %v856
      %v989 = vunpack.c.l.b16 %v857
      %v990 = vunpack.c.l.b16 %v858
      %v991 = vunpack.c.l.b16 %v859
      %v992 = vunpack.c.l.b16 %v860
      %v993 = vunpack.c.l.b16 %v861
      %v994 = vunpack.c.l.b16 %v862
      %v995 = vunpack.c.l.b16 %v863
      %v996 = vunpack.c.l.b16 %v864
      %v997 = vunpack.c.l.b16 %v865
      %v998 = vunpack.c.l.b16 %v866
      %v999 = vunpack.c.l.b16 %v867
      %v1000 = vunpack.c.l.b16 %v868
      %v1001 = vunpack.c.l.b16 %v869
      %v1002 = vunpack.c.l.b16 %v870
      %v1003 = vunpack.c.l.b16 %v871
      %v1004 = vunpack.c.l.b16 %v872
      %v1005 = vunpack.c.l.b16 %v873
      %v1006 = vunpack.c.l.b16 %v874
      %v1007 = vunpack.c.l.b16 %v875
      %v1008 = vunpack.c.l.b16 %v876
      %v1009 = vunpack.c.l.b16 %v877
      %v1010 = vunpack.c.l.b16 %v878
      %v1011 = vunpack.c.l.b16 %v879
      %v1012 = vunpack.c.l.b16 %v880
      %v1013 = vunpack.c.l.b16 %v881
      %v1014 = vunpack.c.l.b16 %v882
      %v1015 = vunpack.c.l.b16 %v883
      %v1016 = vunpack.c.l.b16 %v884
      %v1017 = vunpack.c.l.b16 %v885
      %v1018 = vunpack.c.l.b16 %v886
      %v1019 = vpack.c.b16 %v956, %v955
      %v1020 = vpack.c.b16 %v958, %v957
      %v1021 = vpack.c.b16 %v960, %v959
      %v1022 = vpack.c.b16 %v962, %v961
      %v1023 = vpack.c.b16 %v964, %v963
      %v1024 = vpack.c.b16 %v966, %v965
      %v1025 = vpack.c.b16 %v968, %v967
      %v1026 = vpack.c.b16 %v970, %v969
      %v1027 = vpack.c.b16 %v972, %v971
      %v1028 = vpack.c.b16 %v974, %v973
      %v1029 = vpack.c.b16 %v976, %v975
      %v1030 = vpack.c.b16 %v978, %v977
      %v1031 = vpack.c.b16 %v980, %v979
      %v1032 = vpack.c.b16 %v982, %v981
      %v1033 = vpack.c.b16 %v984, %v983
      %v1034 = vpack.c.b16 %v986, %v985
      %v1035 = vpack.c.b16 %v988, %v987
      %v1036 = vpack.c.b16 %v990, %v989
      %v1037 = vpack.c.b16 %v992, %v991
      %v1038 = vpack.c.b16 %v994, %v993
      %v1039 = vpack.c.b16 %v996, %v995
      %v1040 = vpack.c.b16 %v998, %v997
      %v1041 = vpack.c.b16 %v1000, %v999
      %v1042 = vpack.c.b16 %v1002, %v1001
      %v1043 = vpack.c.b16 %v1004, %v1003
      %v1044 = vpack.c.b16 %v1006, %v1005
      %v1045 = vpack.c.b16 %v1008, %v1007
      %v1046 = vpack.c.b16 %v1010, %v1009
      %v1047 = vpack.c.b16 %v1012, %v1011
      %v1048 = vpack.c.b16 %v1014, %v1013
      %v1049 = vpack.c.b16 %v1016, %v1015
      %v1050 = vpack.c.b16 %v1018, %v1017
      %1083 = vmatpush.bf16.msra.mxu0 %v1026
      %1084 = vmatpush.bf16.msra.mxu0 %v1025
      %1085 = vmatpush.bf16.msra.mxu0 %v1024
      %1086 = vmatpush.bf16.msra.mxu0 %v1023
      %1087 = vmatpush.bf16.msra.mxu0 %v1022
      %1088 = vmatpush.bf16.msra.mxu0 %v1021
      %1089 = vmatpush.bf16.msra.mxu0 %v1020
      %1090 = vmatpush.bf16.msra.mxu0 %v1019
      %1091 = vmatmul.bf16.gmra.mxu0 %v819
      %v1092 = vpop.f32.mrf.mxu0
      %v1093 = vadd.f32 %v889, %v1092
      %v1094 = vpop.f32.mrf.mxu0
      %v1095 = vadd.f32 %v889, %v1094
      %1096 = vdwg.mxu0
      %1097 = vmatpush.bf16.msra.mxu0 %v1034
      %1098 = vmatpush.bf16.msra.mxu0 %v1033
      %1099 = vmatpush.bf16.msra.mxu0 %v1032
      %1100 = vmatpush.bf16.msra.mxu0 %v1031
      %1101 = vmatpush.bf16.msra.mxu0 %v1030
      %1102 = vmatpush.bf16.msra.mxu0 %v1029
      %1103 = vmatpush.bf16.msra.mxu0 %v1028
      %1104 = vmatpush.bf16.msra.mxu0 %v1027
      %1105 = vmatmul.bf16.gmra.mxu0 %v820
      %v1106 = vpop.f32.mrf.mxu0
      %v1107 = vadd.f32 %v1093, %v1106
      %v1108 = vpop.f32.mrf.mxu0
      %v1109 = vadd.f32 %v1095, %v1108
      %1110 = vdwg.mxu0
      %1111 = vmatpush.bf16.msra.mxu0 %v1042
      %1112 = vmatpush.bf16.msra.mxu0 %v1041
      %1113 = vmatpush.bf16.msra.mxu0 %v1040
      %1114 = vmatpush.bf16.msra.mxu0 %v1039
      %1115 = vmatpush.bf16.msra.mxu0 %v1038
      %1116 = vmatpush.bf16.msra.mxu0 %v1037
      %1117 = vmatpush.bf16.msra.mxu0 %v1036
      %1118 = vmatpush.bf16.msra.mxu0 %v1035
      %1119 = vmatmul.bf16.gmra.mxu0 %v821
      %v1120 = vpop.f32.mrf.mxu0
      %v1121 = vadd.f32 %v1107, %v1120
      %v1122 = vpop.f32.mrf.mxu0
      %v1123 = vadd.f32 %v1109, %v1122
      %1124 = vdwg.mxu0
      %1125 = vmatpush.bf16.msra.mxu0 %v1050
      %1126 = vmatpush.bf16.msra.mxu0 %v1049
      %1127 = vmatpush.bf16.msra.mxu0 %v1048
      %1128 = vmatpush.bf16.msra.mxu0 %v1047
      %1129 = vmatpush.bf16.msra.mxu0 %v1046
      %1130 = vmatpush.bf16.msra.mxu0 %v1045
      %1131 = vmatpush.bf16.msra.mxu0 %v1044
      %1132 = vmatpush.bf16.msra.mxu0 %v1043
      %1133 = vmatmul.bf16.gmra.mxu0 %v822
      %v1134 = vpop.f32.mrf.mxu0
      %v1135 = vadd.f32 %v1121, %v1134
      %v1136 = vpop.f32.mrf.mxu0
      %v1137 = vadd.f32 %v1123, %v1136
      %1138 = vdwg.mxu0
      %v1139 = vmax.f32 %v1135, 0.0
      %v1140 = vmax.f32 %v1137, 0.0
      %1141 = vst.msk [vmem:[#allocation3] sm:$0xff] %vm810, %v1139
      %vm1142 = vcmask 516096
      %1143 = vst.msk [vmem:[#allocation3 + $0x8] sm:$0x1] %vm1142, %v1140
      %v1144 = vld [vmem:[#allocation2 + $0x14] sm:$0xff]
      %v1145 = vld [vmem:[#allocation2 + $0x1c] sm:$0x3]
      %v1146 = vld [vmem:[#allocation2 + $0x1e] sm:$0xff]
      %v1147 = vld [vmem:[#allocation2 + $0x26] sm:$0x3]
      %v1148 = vld [vmem:[#allocation2 + $0x28] sm:$0xff]
      %v1149 = vld [vmem:[#allocation2 + $0x30] sm:$0x3]
      %v1150 = vld [vmem:[#allocation2 + $0x32] sm:$0xff]
      %v1151 = vld [vmem:[#allocation2 + $0x3a] sm:$0x3]
      %v1154 = vrot.slane %v1144, 1
      %v1155 = vrot.slane %v1145, 1
      %v1156 = vsel %vm767, %v1154, %v1155
      %1157 = vrot.lane.b32.xlu0 %v1156, 64
      %v1158 = vpop.permute.xlu0 %1157
      %1159 = vrot.lane.b32.xlu0 %v1155, 64
      %v1160 = vpop.permute.xlu0 %1159
      %v1165 = vrot.slane %v1146, 1
      %v1166 = vrot.slane %v1147, 1
      %v1167 = vsel %vm767, %v1165, %v1166
      %1168 = vrot.lane.b32.xlu0 %v1167, 64
      %v1169 = vpop.permute.xlu0 %1168
      %1170 = vrot.lane.b32.xlu0 %v1166, 64
      %v1171 = vpop.permute.xlu0 %1170
      %v1176 = vrot.slane %v1148, 1
      %v1177 = vrot.slane %v1149, 1
      %v1178 = vsel %vm767, %v1176, %v1177
      %1179 = vrot.lane.b32.xlu0 %v1178, 64
      %v1180 = vpop.permute.xlu0 %1179
      %1181 = vrot.lane.b32.xlu0 %v1177, 64
      %v1182 = vpop.permute.xlu0 %1181
      %v1187 = vrot.slane %v1150, 1
      %v1188 = vrot.slane %v1151, 1
      %v1189 = vsel %vm767, %v1187, %v1188
      %1190 = vrot.lane.b32.xlu0 %v1189, 64
      %v1191 = vpop.permute.xlu0 %1190
      %1192 = vrot.lane.b32.xlu0 %v1188, 64
      %v1193 = vpop.permute.xlu0 %1192
      %v1196 = vsel %vm810, %v1144, %v1158
      %v1197 = vsel %vm810, %v1145, %v1160
      %v1198 = vsel %vm810, %v1146, %v1169
      %v1199 = vsel %vm810, %v1147, %v1171
      %v1200 = vsel %vm810, %v1148, %v1180
      %v1201 = vsel %vm810, %v1149, %v1182
      %v1202 = vsel %vm810, %v1150, %v1191
      %v1203 = vsel %vm810, %v1151, %v1193
      %v1204 = vpack.c.bf16 %v1197, %v1196
      %v1205 = vpack.c.bf16 %v1199, %v1198
      %v1206 = vpack.c.bf16 %v1201, %v1200
      %v1207 = vpack.c.bf16 %v1203, %v1202
      %v1208 = vld [vmem:[%s3] sm:$0xf]
      %v1209 = vld [vmem:[%s3 + $0x4] sm:$0xf]
      %v1210 = vld [vmem:[%s3 + $0x8] sm:$0xf]
      %v1211 = vld [vmem:[%s3 + $0xc] sm:$0xf]
      %v1212 = vld [vmem:[%s3 + $0x10] sm:$0xf]
      %v1213 = vld [vmem:[%s3 + $0x14] sm:$0xf]
      %v1214 = vld [vmem:[%s3 + $0x18] sm:$0xf]
      %v1215 = vld [vmem:[%s3 + $0x1c] sm:$0xf]
      %v1216 = vld [vmem:[%s3 + $0x20] sm:$0xf]
      %v1217 = vld [vmem:[%s3 + $0x24] sm:$0xf]
      %v1218 = vld [vmem:[%s3 + $0x28] sm:$0xf]
      %v1219 = vld [vmem:[%s3 + $0x2c] sm:$0xf]
      %v1220 = vld [vmem:[%s3 + $0x30] sm:$0xf]
      %v1221 = vld [vmem:[%s3 + $0x34] sm:$0xf]
      %v1222 = vld [vmem:[%s3 + $0x38] sm:$0xf]
      %v1223 = vld [vmem:[%s3 + $0x3c] sm:$0xf]
      %v1224 = vld [vmem:[%s3 + $0x40] sm:$0xf]
      %v1225 = vld [vmem:[%s3 + $0x44] sm:$0xf]
      %v1226 = vld [vmem:[%s3 + $0x48] sm:$0xf]
      %v1227 = vld [vmem:[%s3 + $0x4c] sm:$0xf]
      %v1228 = vld [vmem:[%s3 + $0x50] sm:$0xf]
      %v1229 = vld [vmem:[%s3 + $0x54] sm:$0xf]
      %v1230 = vld [vmem:[%s3 + $0x58] sm:$0xf]
      %v1231 = vld [vmem:[%s3 + $0x5c] sm:$0xf]
      %v1232 = vld [vmem:[%s3 + $0x60] sm:$0xf]
      %v1233 = vld [vmem:[%s3 + $0x64] sm:$0xf]
      %v1234 = vld [vmem:[%s3 + $0x68] sm:$0xf]
      %v1235 = vld [vmem:[%s3 + $0x6c] sm:$0xf]
      %v1236 = vld [vmem:[%s3 + $0x70] sm:$0xf]
      %v1237 = vld [vmem:[%s3 + $0x74] sm:$0xf]
      %v1238 = vld [vmem:[%s3 + $0x78] sm:$0xf]
      %v1239 = vld [vmem:[%s3 + $0x7c] sm:$0xf]
      %v1240 = vld [vmem:[%s3 + $0x80] sm:$0xf]
      %v1241 = vld [vmem:[%s3 + $0x84] sm:$0xf]
      %v1242 = vld [vmem:[%s3 + $0x88] sm:$0xf]
      %v1243 = vld [vmem:[%s3 + $0x8c] sm:$0xf]
      %v1244 = vld [vmem:[%s3 + $0x90] sm:$0xf]
      %v1245 = vld [vmem:[%s3 + $0x94] sm:$0xf]
      %v1246 = vld [vmem:[%s3 + $0x98] sm:$0xf]
      %v1247 = vld [vmem:[%s3 + $0x9c] sm:$0xf]
      %v1248 = vld [vmem:[%s3 + $0xa0] sm:$0xf]
      %v1249 = vld [vmem:[%s3 + $0xa4] sm:$0xf]
      %v1250 = vld [vmem:[%s3 + $0xa8] sm:$0xf]
      %v1251 = vld [vmem:[%s3 + $0xac] sm:$0xf]
      %v1252 = vld [vmem:[%s3 + $0xb0] sm:$0xf]
      %v1253 = vld [vmem:[%s3 + $0xb4] sm:$0xf]
      %v1254 = vld [vmem:[%s3 + $0xb8] sm:$0xf]
      %v1255 = vld [vmem:[%s3 + $0xbc] sm:$0xf]
      %v1256 = vld [vmem:[%s3 + $0xc0] sm:$0xf]
      %v1257 = vld [vmem:[%s3 + $0xc4] sm:$0xf]
      %v1258 = vld [vmem:[%s3 + $0xc8] sm:$0xf]
      %v1259 = vld [vmem:[%s3 + $0xcc] sm:$0xf]
      %v1260 = vld [vmem:[%s3 + $0xd0] sm:$0xf]
      %v1261 = vld [vmem:[%s3 + $0xd4] sm:$0xf]
      %v1262 = vld [vmem:[%s3 + $0xd8] sm:$0xf]
      %v1263 = vld [vmem:[%s3 + $0xdc] sm:$0xf]
      %v1264 = vld [vmem:[%s3 + $0xe0] sm:$0xf]
      %v1265 = vld [vmem:[%s3 + $0xe4] sm:$0xf]
      %v1266 = vld [vmem:[%s3 + $0xe8] sm:$0xf]
      %v1267 = vld [vmem:[%s3 + $0xec] sm:$0xf]
      %v1268 = vld [vmem:[%s3 + $0xf0] sm:$0xf]
      %v1269 = vld [vmem:[%s3 + $0xf4] sm:$0xf]
      %v1270 = vld [vmem:[%s3 + $0xf8] sm:$0xf]
      %v1271 = vld [vmem:[%s3 + $0xfc] sm:$0xf]
      %v1272 = vld [vmem:[%s4] sm:$0x1]
      %v1274 = vperm.slane %v1272, 0
      %v1340 = vunpack.c.l.b16 %v1208
      %v1341 = vunpack.c.l.b16 %v1209
      %v1342 = vunpack.c.l.b16 %v1210
      %v1343 = vunpack.c.l.b16 %v1211
      %v1344 = vunpack.c.l.b16 %v1212
      %v1345 = vunpack.c.l.b16 %v1213
      %v1346 = vunpack.c.l.b16 %v1214
      %v1347 = vunpack.c.l.b16 %v1215
      %v1348 = vunpack.c.l.b16 %v1216
      %v1349 = vunpack.c.l.b16 %v1217
      %v1350 = vunpack.c.l.b16 %v1218
      %v1351 = vunpack.c.l.b16 %v1219
      %v1352 = vunpack.c.l.b16 %v1220
      %v1353 = vunpack.c.l.b16 %v1221
      %v1354 = vunpack.c.l.b16 %v1222
      %v1355 = vunpack.c.l.b16 %v1223
      %v1356 = vunpack.c.l.b16 %v1224
      %v1357 = vunpack.c.l.b16 %v1225
      %v1358 = vunpack.c.l.b16 %v1226
      %v1359 = vunpack.c.l.b16 %v1227
      %v1360 = vunpack.c.l.b16 %v1228
      %v1361 = vunpack.c.l.b16 %v1229
      %v1362 = vunpack.c.l.b16 %v1230
      %v1363 = vunpack.c.l.b16 %v1231
      %v1364 = vunpack.c.l.b16 %v1232
      %v1365 = vunpack.c.l.b16 %v1233
      %v1366 = vunpack.c.l.b16 %v1234
      %v1367 = vunpack.c.l.b16 %v1235
      %v1368 = vunpack.c.l.b16 %v1236
      %v1369 = vunpack.c.l.b16 %v1237
      %v1370 = vunpack.c.l.b16 %v1238
      %v1371 = vunpack.c.l.b16 %v1239
      %v1372 = vunpack.c.l.b16 %v1240
      %v1373 = vunpack.c.l.b16 %v1241
      %v1374 = vunpack.c.l.b16 %v1242
      %v1375 = vunpack.c.l.b16 %v1243
      %v1376 = vunpack.c.l.b16 %v1244
      %v1377 = vunpack.c.l.b16 %v1245
      %v1378 = vunpack.c.l.b16 %v1246
      %v1379 = vunpack.c.l.b16 %v1247
      %v1380 = vunpack.c.l.b16 %v1248
      %v1381 = vunpack.c.l.b16 %v1249
      %v1382 = vunpack.c.l.b16 %v1250
      %v1383 = vunpack.c.l.b16 %v1251
      %v1384 = vunpack.c.l.b16 %v1252
      %v1385 = vunpack.c.l.b16 %v1253
      %v1386 = vunpack.c.l.b16 %v1254
      %v1387 = vunpack.c.l.b16 %v1255
      %v1388 = vunpack.c.l.b16 %v1256
      %v1389 = vunpack.c.l.b16 %v1257
      %v1390 = vunpack.c.l.b16 %v1258
      %v1391 = vunpack.c.l.b16 %v1259
      %v1392 = vunpack.c.l.b16 %v1260
      %v1393 = vunpack.c.l.b16 %v1261
      %v1394 = vunpack.c.l.b16 %v1262
      %v1395 = vunpack.c.l.b16 %v1263
      %v1396 = vunpack.c.l.b16 %v1264
      %v1397 = vunpack.c.l.b16 %v1265
      %v1398 = vunpack.c.l.b16 %v1266
      %v1399 = vunpack.c.l.b16 %v1267
      %v1400 = vunpack.c.l.b16 %v1268
      %v1401 = vunpack.c.l.b16 %v1269
      %v1402 = vunpack.c.l.b16 %v1270
      %v1403 = vunpack.c.l.b16 %v1271
      %v1404 = vpack.c.b16 %v1341, %v1340
      %v1405 = vpack.c.b16 %v1343, %v1342
      %v1406 = vpack.c.b16 %v1345, %v1344
      %v1407 = vpack.c.b16 %v1347, %v1346
      %v1408 = vpack.c.b16 %v1349, %v1348
      %v1409 = vpack.c.b16 %v1351, %v1350
      %v1410 = vpack.c.b16 %v1353, %v1352
      %v1411 = vpack.c.b16 %v1355, %v1354
      %v1412 = vpack.c.b16 %v1357, %v1356
      %v1413 = vpack.c.b16 %v1359, %v1358
      %v1414 = vpack.c.b16 %v1361, %v1360
      %v1415 = vpack.c.b16 %v1363, %v1362
      %v1416 = vpack.c.b16 %v1365, %v1364
      %v1417 = vpack.c.b16 %v1367, %v1366
      %v1418 = vpack.c.b16 %v1369, %v1368
      %v1419 = vpack.c.b16 %v1371, %v1370
      %v1420 = vpack.c.b16 %v1373, %v1372
      %v1421 = vpack.c.b16 %v1375, %v1374
      %v1422 = vpack.c.b16 %v1377, %v1376
      %v1423 = vpack.c.b16 %v1379, %v1378
      %v1424 = vpack.c.b16 %v1381, %v1380
      %v1425 = vpack.c.b16 %v1383, %v1382
      %v1426 = vpack.c.b16 %v1385, %v1384
      %v1427 = vpack.c.b16 %v1387, %v1386
      %v1428 = vpack.c.b16 %v1389, %v1388
      %v1429 = vpack.c.b16 %v1391, %v1390
      %v1430 = vpack.c.b16 %v1393, %v1392
      %v1431 = vpack.c.b16 %v1395, %v1394
      %v1432 = vpack.c.b16 %v1397, %v1396
      %v1433 = vpack.c.b16 %v1399, %v1398
      %v1434 = vpack.c.b16 %v1401, %v1400
      %v1435 = vpack.c.b16 %v1403, %v1402
      %1468 = vmatpush.bf16.msra.mxu0 %v1411
      %1469 = vmatpush.bf16.msra.mxu0 %v1410
      %1470 = vmatpush.bf16.msra.mxu0 %v1409
      %1471 = vmatpush.bf16.msra.mxu0 %v1408
      %1472 = vmatpush.bf16.msra.mxu0 %v1407
      %1473 = vmatpush.bf16.msra.mxu0 %v1406
      %1474 = vmatpush.bf16.msra.mxu0 %v1405
      %1475 = vmatpush.bf16.msra.mxu0 %v1404
      %1476 = vmatmul.bf16.gmra.mxu0 %v1204
      %v1477 = vpop.f32.mrf.mxu0
      %v1478 = vadd.f32 %v1274, %v1477
      %v1479 = vpop.f32.mrf.mxu0
      %v1480 = vadd.f32 %v1274, %v1479
      %1481 = vdwg.mxu0
      %1482 = vmatpush.bf16.msra.mxu0 %v1419
      %1483 = vmatpush.bf16.msra.mxu0 %v1418
      %1484 = vmatpush.bf16.msra.mxu0 %v1417
      %1485 = vmatpush.bf16.msra.mxu0 %v1416
      %1486 = vmatpush.bf16.msra.mxu0 %v1415
      %1487 = vmatpush.bf16.msra.mxu0 %v1414
      %1488 = vmatpush.bf16.msra.mxu0 %v1413
      %1489 = vmatpush.bf16.msra.mxu0 %v1412
      %1490 = vmatmul.bf16.gmra.mxu0 %v1205
      %v1491 = vpop.f32.mrf.mxu0
      %v1492 = vadd.f32 %v1478, %v1491
      %v1493 = vpop.f32.mrf.mxu0
      %v1494 = vadd.f32 %v1480, %v1493
      %1495 = vdwg.mxu0
      %1496 = vmatpush.bf16.msra.mxu0 %v1427
      %1497 = vmatpush.bf16.msra.mxu0 %v1426
      %1498 = vmatpush.bf16.msra.mxu0 %v1425
      %1499 = vmatpush.bf16.msra.mxu0 %v1424
      %1500 = vmatpush.bf16.msra.mxu0 %v1423
      %1501 = vmatpush.bf16.msra.mxu0 %v1422
      %1502 = vmatpush.bf16.msra.mxu0 %v1421
      %1503 = vmatpush.bf16.msra.mxu0 %v1420
      %1504 = vmatmul.bf16.gmra.mxu0 %v1206
      %v1505 = vpop.f32.mrf.mxu0
      %v1506 = vadd.f32 %v1492, %v1505
      %v1507 = vpop.f32.mrf.mxu0
      %v1508 = vadd.f32 %v1494, %v1507
      %1509 = vdwg.mxu0
      %1510 = vmatpush.bf16.msra.mxu0 %v1435
      %1511 = vmatpush.bf16.msra.mxu0 %v1434
      %1512 = vmatpush.bf16.msra.mxu0 %v1433
      %1513 = vmatpush.bf16.msra.mxu0 %v1432
      %1514 = vmatpush.bf16.msra.mxu0 %v1431
      %1515 = vmatpush.bf16.msra.mxu0 %v1430
      %1516 = vmatpush.bf16.msra.mxu0 %v1429
      %1517 = vmatpush.bf16.msra.mxu0 %v1428
      %1518 = vmatmul.bf16.gmra.mxu0 %v1207
      %v1519 = vpop.f32.mrf.mxu0
      %v1520 = vadd.f32 %v1506, %v1519
      %v1521 = vpop.f32.mrf.mxu0
      %v1522 = vadd.f32 %v1508, %v1521
      %1523 = vdwg.mxu0
      %v1524 = vmax.f32 %v1520, 0.0
      %v1525 = vmax.f32 %v1522, 0.0
      %1526 = vst.msk [vmem:[#allocation3 + $0x9] sm:$0xff] %vm810, %v1524
      %1527 = vst.msk [vmem:[#allocation3 + $0x11] sm:$0x1] %vm1142, %v1525
      %v1528 = vld [vmem:[#allocation2 + $0x28] sm:$0xff]
      %v1529 = vld [vmem:[#allocation2 + $0x30] sm:$0x3]
      %v1530 = vld [vmem:[#allocation2 + $0x32] sm:$0xff]
      %v1531 = vld [vmem:[#allocation2 + $0x3a] sm:$0x3]
      %v1532 = vld [vmem:[#allocation2 + $0x3c] sm:$0xff]
      %v1533 = vld [vmem:[#allocation2 + $0x44] sm:$0x3]
      %v1534 = vld [vmem:[#allocation2 + $0x46] sm:$0xff]
      %v1535 = vld [vmem:[#allocation2 + $0x4e] sm:$0x3]
      %v1538 = vrot.slane %v1528, 1
      %v1539 = vrot.slane %v1529, 1
      %v1540 = vsel %vm767, %v1538, %v1539
      %1541 = vrot.lane.b32.xlu0 %v1540, 64
      %v1542 = vpop.permute.xlu0 %1541
      %1543 = vrot.lane.b32.xlu0 %v1539, 64
      %v1544 = vpop.permute.xlu0 %1543
      %v1549 = vrot.slane %v1530, 1
      %v1550 = vrot.slane %v1531, 1
      %v1551 = vsel %vm767, %v1549, %v1550
      %1552 = vrot.lane.b32.xlu0 %v1551, 64
      %v1553 = vpop.permute.xlu0 %1552
      %1554 = vrot.lane.b32.xlu0 %v1550, 64
      %v1555 = vpop.permute.xlu0 %1554
      %v1560 = vrot.slane %v1532, 1
      %v1561 = vrot.slane %v1533, 1
      %v1562 = vsel %vm767, %v1560, %v1561
      %1563 = vrot.lane.b32.xlu0 %v1562, 64
      %v1564 = vpop.permute.xlu0 %1563
      %1565 = vrot.lane.b32.xlu0 %v1561, 64
      %v1566 = vpop.permute.xlu0 %1565
      %v1571 = vrot.slane %v1534, 1
      %v1572 = vrot.slane %v1535, 1
      %v1573 = vsel %vm767, %v1571, %v1572
      %1574 = vrot.lane.b32.xlu0 %v1573, 64
      %v1575 = vpop.permute.xlu0 %1574
      %1576 = vrot.lane.b32.xlu0 %v1572, 64
      %v1577 = vpop.permute.xlu0 %1576
      %v1580 = vsel %vm810, %v1528, %v1542
      %v1581 = vsel %vm810, %v1529, %v1544
      %v1582 = vsel %vm810, %v1530, %v1553
      %v1583 = vsel %vm810, %v1531, %v1555
      %v1584 = vsel %vm810, %v1532, %v1564
      %v1585 = vsel %vm810, %v1533, %v1566
      %v1586 = vsel %vm810, %v1534, %v1575
      %v1587 = vsel %vm810, %v1535, %v1577
      %v1588 = vpack.c.bf16 %v1581, %v1580
      %v1589 = vpack.c.bf16 %v1583, %v1582
      %v1590 = vpack.c.bf16 %v1585, %v1584
      %v1591 = vpack.c.bf16 %v1587, %v1586
      %v1592 = vld [vmem:[%s3] sm:$0xf]
      %v1593 = vld [vmem:[%s3 + $0x4] sm:$0xf]
      %v1594 = vld [vmem:[%s3 + $0x8] sm:$0xf]
      %v1595 = vld [vmem:[%s3 + $0xc] sm:$0xf]
      %v1596 = vld [vmem:[%s3 + $0x10] sm:$0xf]
      %v1597 = vld [vmem:[%s3 + $0x14] sm:$0xf]
      %v1598 = vld [vmem:[%s3 + $0x18] sm:$0xf]
      %v1599 = vld [vmem:[%s3 + $0x1c] sm:$0xf]
      %v1600 = vld [vmem:[%s3 + $0x20] sm:$0xf]
      %v1601 = vld [vmem:[%s3 + $0x24] sm:$0xf]
      %v1602 = vld [vmem:[%s3 + $0x28] sm:$0xf]
      %v1603 = vld [vmem:[%s3 + $0x2c] sm:$0xf]
      %v1604 = vld [vmem:[%s3 + $0x30] sm:$0xf]
      %v1605 = vld [vmem:[%s3 + $0x34] sm:$0xf]
      %v1606 = vld [vmem:[%s3 + $0x38] sm:$0xf]
      %v1607 = vld [vmem:[%s3 + $0x3c] sm:$0xf]
      %v1608 = vld [vmem:[%s3 + $0x40] sm:$0xf]
      %v1609 = vld [vmem:[%s3 + $0x44] sm:$0xf]
      %v1610 = vld [vmem:[%s3 + $0x48] sm:$0xf]
      %v1611 = vld [vmem:[%s3 + $0x4c] sm:$0xf]
      %v1612 = vld [vmem:[%s3 + $0x50] sm:$0xf]
      %v1613 = vld [vmem:[%s3 + $0x54] sm:$0xf]
      %v1614 = vld [vmem:[%s3 + $0x58] sm:$0xf]
      %v1615 = vld [vmem:[%s3 + $0x5c] sm:$0xf]
      %v1616 = vld [vmem:[%s3 + $0x60] sm:$0xf]
      %v1617 = vld [vmem:[%s3 + $0x64] sm:$0xf]
      %v1618 = vld [vmem:[%s3 + $0x68] sm:$0xf]
      %v1619 = vld [vmem:[%s3 + $0x6c] sm:$0xf]
      %v1620 = vld [vmem:[%s3 + $0x70] sm:$0xf]
      %v1621 = vld [vmem:[%s3 + $0x74] sm:$0xf]
      %v1622 = vld [vmem:[%s3 + $0x78] sm:$0xf]
      %v1623 = vld [vmem:[%s3 + $0x7c] sm:$0xf]
      %v1624 = vld [vmem:[%s3 + $0x80] sm:$0xf]
      %v1625 = vld [vmem:[%s3 + $0x84] sm:$0xf]
      %v1626 = vld [vmem:[%s3 + $0x88] sm:$0xf]
      %v1627 = vld [vmem:[%s3 + $0x8c] sm:$0xf]
      %v1628 = vld [vmem:[%s3 + $0x90] sm:$0xf]
      %v1629 = vld [vmem:[%s3 + $0x94] sm:$0xf]
      %v1630 = vld [vmem:[%s3 + $0x98] sm:$0xf]
      %v1631 = vld [vmem:[%s3 + $0x9c] sm:$0xf]
      %v1632 = vld [vmem:[%s3 + $0xa0] sm:$0xf]
      %v1633 = vld [vmem:[%s3 + $0xa4] sm:$0xf]
      %v1634 = vld [vmem:[%s3 + $0xa8] sm:$0xf]
      %v1635 = vld [vmem:[%s3 + $0xac] sm:$0xf]
      %v1636 = vld [vmem:[%s3 + $0xb0] sm:$0xf]
      %v1637 = vld [vmem:[%s3 + $0xb4] sm:$0xf]
      %v1638 = vld [vmem:[%s3 + $0xb8] sm:$0xf]
      %v1639 = vld [vmem:[%s3 + $0xbc] sm:$0xf]
      %v1640 = vld [vmem:[%s3 + $0xc0] sm:$0xf]
      %v1641 = vld [vmem:[%s3 + $0xc4] sm:$0xf]
      %v1642 = vld [vmem:[%s3 + $0xc8] sm:$0xf]
      %v1643 = vld [vmem:[%s3 + $0xcc] sm:$0xf]
      %v1644 = vld [vmem:[%s3 + $0xd0] sm:$0xf]
      %v1645 = vld [vmem:[%s3 + $0xd4] sm:$0xf]
      %v1646 = vld [vmem:[%s3 + $0xd8] sm:$0xf]
      %v1647 = vld [vmem:[%s3 + $0xdc] sm:$0xf]
      %v1648 = vld [vmem:[%s3 + $0xe0] sm:$0xf]
      %v1649 = vld [vmem:[%s3 + $0xe4] sm:$0xf]
      %v1650 = vld [vmem:[%s3 + $0xe8] sm:$0xf]
      %v1651 = vld [vmem:[%s3 + $0xec] sm:$0xf]
      %v1652 = vld [vmem:[%s3 + $0xf0] sm:$0xf]
      %v1653 = vld [vmem:[%s3 + $0xf4] sm:$0xf]
      %v1654 = vld [vmem:[%s3 + $0xf8] sm:$0xf]
      %v1655 = vld [vmem:[%s3 + $0xfc] sm:$0xf]
      %v1656 = vld [vmem:[%s4] sm:$0x1]
      %v1658 = vperm.slane %v1656, 0
      %v1724 = vunpack.c.l.b16 %v1592
      %v1725 = vunpack.c.l.b16 %v1593
      %v1726 = vunpack.c.l.b16 %v1594
      %v1727 = vunpack.c.l.b16 %v1595
      %v1728 = vunpack.c.l.b16 %v1596
      %v1729 = vunpack.c.l.b16 %v1597
      %v1730 = vunpack.c.l.b16 %v1598
      %v1731 = vunpack.c.l.b16 %v1599
      %v1732 = vunpack.c.l.b16 %v1600
      %v1733 = vunpack.c.l.b16 %v1601
      %v1734 = vunpack.c.l.b16 %v1602
      %v1735 = vunpack.c.l.b16 %v1603
      %v1736 = vunpack.c.l.b16 %v1604
      %v1737 = vunpack.c.l.b16 %v1605
      %v1738 = vunpack.c.l.b16 %v1606
      %v1739 = vunpack.c.l.b16 %v1607
      %v1740 = vunpack.c.l.b16 %v1608
      %v1741 = vunpack.c.l.b16 %v1609
      %v1742 = vunpack.c.l.b16 %v1610
      %v1743 = vunpack.c.l.b16 %v1611
      %v1744 = vunpack.c.l.b16 %v1612
      %v1745 = vunpack.c.l.b16 %v1613
      %v1746 = vunpack.c.l.b16 %v1614
      %v1747 = vunpack.c.l.b16 %v1615
      %v1748 = vunpack.c.l.b16 %v1616
      %v1749 = vunpack.c.l.b16 %v1617
      %v1750 = vunpack.c.l.b16 %v1618
      %v1751 = vunpack.c.l.b16 %v1619
      %v1752 = vunpack.c.l.b16 %v1620
      %v1753 = vunpack.c.l.b16 %v1621
      %v1754 = vunpack.c.l.b16 %v1622
      %v1755 = vunpack.c.l.b16 %v1623
      %v1756 = vunpack.c.l.b16 %v1624
      %v1757 = vunpack.c.l.b16 %v1625
      %v1758 = vunpack.c.l.b16 %v1626
      %v1759 = vunpack.c.l.b16 %v1627
      %v1760 = vunpack.c.l.b16 %v1628
      %v1761 = vunpack.c.l.b16 %v1629
      %v1762 = vunpack.c.l.b16 %v1630
      %v1763 = vunpack.c.l.b16 %v1631
      %v1764 = vunpack.c.l.b16 %v1632
      %v1765 = vunpack.c.l.b16 %v1633
      %v1766 = vunpack.c.l.b16 %v1634
      %v1767 = vunpack.c.l.b16 %v1635
      %v1768 = vunpack.c.l.b16 %v1636
      %v1769 = vunpack.c.l.b16 %v1637
      %v1770 = vunpack.c.l.b16 %v1638
      %v1771 = vunpack.c.l.b16 %v1639
      %v1772 = vunpack.c.l.b16 %v1640
      %v1773 = vunpack.c.l.b16 %v1641
      %v1774 = vunpack.c.l.b16 %v1642
      %v1775 = vunpack.c.l.b16 %v1643
      %v1776 = vunpack.c.l.b16 %v1644
      %v1777 = vunpack.c.l.b16 %v1645
      %v1778 = vunpack.c.l.b16 %v1646
      %v1779 = vunpack.c.l.b16 %v1647
      %v1780 = vunpack.c.l.b16 %v1648
      %v1781 = vunpack.c.l.b16 %v1649
      %v1782 = vunpack.c.l.b16 %v1650
      %v1783 = vunpack.c.l.b16 %v1651
      %v1784 = vunpack.c.l.b16 %v1652
      %v1785 = vunpack.c.l.b16 %v1653
      %v1786 = vunpack.c.l.b16 %v1654
      %v1787 = vunpack.c.l.b16 %v1655
      %v1788 = vpack.c.b16 %v1725, %v1724
      %v1789 = vpack.c.b16 %v1727, %v1726
      %v1790 = vpack.c.b16 %v1729, %v1728
      %v1791 = vpack.c.b16 %v1731, %v1730
      %v1792 = vpack.c.b16 %v1733, %v1732
      %v1793 = vpack.c.b16 %v1735, %v1734
      %v1794 = vpack.c.b16 %v1737, %v1736
      %v1795 = vpack.c.b16 %v1739, %v1738
      %v1796 = vpack.c.b16 %v1741, %v1740
      %v1797 = vpack.c.b16 %v1743, %v1742
      %v1798 = vpack.c.b16 %v1745, %v1744
      %v1799 = vpack.c.b16 %v1747, %v1746
      %v1800 = vpack.c.b16 %v1749, %v1748
      %v1801 = vpack.c.b16 %v1751, %v1750
      %v1802 = vpack.c.b16 %v1753, %v1752
      %v1803 = vpack.c.b16 %v1755, %v1754
      %v1804 = vpack.c.b16 %v1757, %v1756
      %v1805 = vpack.c.b16 %v1759, %v1758
      %v1806 = vpack.c.b16 %v1761, %v1760
      %v1807 = vpack.c.b16 %v1763, %v1762
      %v1808 = vpack.c.b16 %v1765, %v1764
      %v1809 = vpack.c.b16 %v1767, %v1766
      %v1810 = vpack.c.b16 %v1769, %v1768
      %v1811 = vpack.c.b16 %v1771, %v1770
      %v1812 = vpack.c.b16 %v1773, %v1772
      %v1813 = vpack.c.b16 %v1775, %v1774
      %v1814 = vpack.c.b16 %v1777, %v1776
      %v1815 = vpack.c.b16 %v1779, %v1778
      %v1816 = vpack.c.b16 %v1781, %v1780
      %v1817 = vpack.c.b16 %v1783, %v1782
      %v1818 = vpack.c.b16 %v1785, %v1784
      %v1819 = vpack.c.b16 %v1787, %v1786
      %1852 = vmatpush.bf16.msra.mxu0 %v1795
      %1853 = vmatpush.bf16.msra.mxu0 %v1794
      %1854 = vmatpush.bf16.msra.mxu0 %v1793
      %1855 = vmatpush.bf16.msra.mxu0 %v1792
      %1856 = vmatpush.bf16.msra.mxu0 %v1791
      %1857 = vmatpush.bf16.msra.mxu0 %v1790
      %1858 = vmatpush.bf16.msra.mxu0 %v1789
      %1859 = vmatpush.bf16.msra.mxu0 %v1788
      %1860 = vmatmul.bf16.gmra.mxu0 %v1588
      %v1861 = vpop.f32.mrf.mxu0
      %v1862 = vadd.f32 %v1658, %v1861
      %v1863 = vpop.f32.mrf.mxu0
      %v1864 = vadd.f32 %v1658, %v1863
      %1865 = vdwg.mxu0
      %1866 = vmatpush.bf16.msra.mxu0 %v1803
      %1867 = vmatpush.bf16.msra.mxu0 %v1802
      %1868 = vmatpush.bf16.msra.mxu0 %v1801
      %1869 = vmatpush.bf16.msra.mxu0 %v1800
      %1870 = vmatpush.bf16.msra.mxu0 %v1799
      %1871 = vmatpush.bf16.msra.mxu0 %v1798
      %1872 = vmatpush.bf16.msra.mxu0 %v1797
      %1873 = vmatpush.bf16.msra.mxu0 %v1796
      %1874 = vmatmul.bf16.gmra.mxu0 %v1589
      %v1875 = vpop.f32.mrf.mxu0
      %v1876 = vadd.f32 %v1862, %v1875
      %v1877 = vpop.f32.mrf.mxu0
      %v1878 = vadd.f32 %v1864, %v1877
      %1879 = vdwg.mxu0
      %1880 = vmatpush.bf16.msra.mxu0 %v1811
      %1881 = vmatpush.bf16.msra.mxu0 %v1810
      %1882 = vmatpush.bf16.msra.mxu0 %v1809
      %1883 = vmatpush.bf16.msra.mxu0 %v1808
      %1884 = vmatpush.bf16.msra.mxu0 %v1807
      %1885 = vmatpush.bf16.msra.mxu0 %v1806
      %1886 = vmatpush.bf16.msra.mxu0 %v1805
      %1887 = vmatpush.bf16.msra.mxu0 %v1804
      %1888 = vmatmul.bf16.gmra.mxu0 %v1590
      %v1889 = vpop.f32.mrf.mxu0
      %v1890 = vadd.f32 %v1876, %v1889
      %v1891 = vpop.f32.mrf.mxu0
      %v1892 = vadd.f32 %v1878, %v1891
      %1893 = vdwg.mxu0
      %1894 = vmatpush.bf16.msra.mxu0 %v1819
      %1895 = vmatpush.bf16.msra.mxu0 %v1818
      %1896 = vmatpush.bf16.msra.mxu0 %v1817
      %1897 = vmatpush.bf16.msra.mxu0 %v1816
      %1898 = vmatpush.bf16.msra.mxu0 %v1815
      %1899 = vmatpush.bf16.msra.mxu0 %v1814
      %1900 = vmatpush.bf16.msra.mxu0 %v1813
      %1901 = vmatpush.bf16.msra.mxu0 %v1812
      %1902 = vmatmul.bf16.gmra.mxu0 %v1591
      %v1903 = vpop.f32.mrf.mxu0
      %v1904 = vadd.f32 %v1890, %v1903
      %v1905 = vpop.f32.mrf.mxu0
      %v1906 = vadd.f32 %v1892, %v1905
      %1907 = vdwg.mxu0
      %v1908 = vmax.f32 %v1904, 0.0
      %v1909 = vmax.f32 %v1906, 0.0
      %1910 = vst.msk [vmem:[#allocation3 + $0x12] sm:$0xff] %vm810, %v1908
      %1911 = vst.msk [vmem:[#allocation3 + $0x1a] sm:$0x1] %vm1142, %v1909
      %v1912 = vld [vmem:[#allocation2 + $0x3c] sm:$0xff]
      %v1913 = vld [vmem:[#allocation2 + $0x44] sm:$0x3]
      %v1914 = vld [vmem:[#allocation2 + $0x46] sm:$0xff]
      %v1915 = vld [vmem:[#allocation2 + $0x4e] sm:$0x3]
      %v1916 = vld [vmem:[#allocation2 + $0x50] sm:$0xff]
      %v1917 = vld [vmem:[#allocation2 + $0x58] sm:$0x3]
      %v1918 = vld [vmem:[#allocation2 + $0x5a] sm:$0xff]
      %v1919 = vld [vmem:[#allocation2 + $0x62] sm:$0x3]
      %v1922 = vrot.slane %v1912, 1
      %v1923 = vrot.slane %v1913, 1
      %v1924 = vsel %vm767, %v1922, %v1923
      %1925 = vrot.lane.b32.xlu0 %v1924, 64
      %v1926 = vpop.permute.xlu0 %1925
      %1927 = vrot.lane.b32.xlu0 %v1923, 64
      %v1928 = vpop.permute.xlu0 %1927
      %v1933 = vrot.slane %v1914, 1
      %v1934 = vrot.slane %v1915, 1
      %v1935 = vsel %vm767, %v1933, %v1934
      %1936 = vrot.lane.b32.xlu0 %v1935, 64
      %v1937 = vpop.permute.xlu0 %1936
      %1938 = vrot.lane.b32.xlu0 %v1934, 64
      %v1939 = vpop.permute.xlu0 %1938
      %v1944 = vrot.slane %v1916, 1
      %v1945 = vrot.slane %v1917, 1
      %v1946 = vsel %vm767, %v1944, %v1945
      %1947 = vrot.lane.b32.xlu0 %v1946, 64
      %v1948 = vpop.permute.xlu0 %1947
      %1949 = vrot.lane.b32.xlu0 %v1945, 64
      %v1950 = vpop.permute.xlu0 %1949
      %v1955 = vrot.slane %v1918, 1
      %v1956 = vrot.slane %v1919, 1
      %v1957 = vsel %vm767, %v1955, %v1956
      %1958 = vrot.lane.b32.xlu0 %v1957, 64
      %v1959 = vpop.permute.xlu0 %1958
      %1960 = vrot.lane.b32.xlu0 %v1956, 64
      %v1961 = vpop.permute.xlu0 %1960
      %v1964 = vsel %vm810, %v1912, %v1926
      %v1965 = vsel %vm810, %v1913, %v1928
      %v1966 = vsel %vm810, %v1914, %v1937
      %v1967 = vsel %vm810, %v1915, %v1939
      %v1968 = vsel %vm810, %v1916, %v1948
      %v1969 = vsel %vm810, %v1917, %v1950
      %v1970 = vsel %vm810, %v1918, %v1959
      %v1971 = vsel %vm810, %v1919, %v1961
      %v1972 = vpack.c.bf16 %v1965, %v1964
      %v1973 = vpack.c.bf16 %v1967, %v1966
      %v1974 = vpack.c.bf16 %v1969, %v1968
      %v1975 = vpack.c.bf16 %v1971, %v1970
      %v1976 = vld [vmem:[%s3] sm:$0xf]
      %v1977 = vld [vmem:[%s3 + $0x4] sm:$0xf]
      %v1978 = vld [vmem:[%s3 + $0x8] sm:$0xf]
      %v1979 = vld [vmem:[%s3 + $0xc] sm:$0xf]
      %v1980 = vld [vmem:[%s3 + $0x10] sm:$0xf]
      %v1981 = vld [vmem:[%s3 + $0x14] sm:$0xf]
      %v1982 = vld [vmem:[%s3 + $0x18] sm:$0xf]
      %v1983 = vld [vmem:[%s3 + $0x1c] sm:$0xf]
      %v1984 = vld [vmem:[%s3 + $0x20] sm:$0xf]
      %v1985 = vld [vmem:[%s3 + $0x24] sm:$0xf]
      %v1986 = vld [vmem:[%s3 + $0x28] sm:$0xf]
      %v1987 = vld [vmem:[%s3 + $0x2c] sm:$0xf]
      %v1988 = vld [vmem:[%s3 + $0x30] sm:$0xf]
      %v1989 = vld [vmem:[%s3 + $0x34] sm:$0xf]
      %v1990 = vld [vmem:[%s3 + $0x38] sm:$0xf]
      %v1991 = vld [vmem:[%s3 + $0x3c] sm:$0xf]
      %v1992 = vld [vmem:[%s3 + $0x40] sm:$0xf]
      %v1993 = vld [vmem:[%s3 + $0x44] sm:$0xf]
      %v1994 = vld [vmem:[%s3 + $0x48] sm:$0xf]
      %v1995 = vld [vmem:[%s3 + $0x4c] sm:$0xf]
      %v1996 = vld [vmem:[%s3 + $0x50] sm:$0xf]
      %v1997 = vld [vmem:[%s3 + $0x54] sm:$0xf]
      %v1998 = vld [vmem:[%s3 + $0x58] sm:$0xf]
      %v1999 = vld [vmem:[%s3 + $0x5c] sm:$0xf]
      %v2000 = vld [vmem:[%s3 + $0x60] sm:$0xf]
      %v2001 = vld [vmem:[%s3 + $0x64] sm:$0xf]
      %v2002 = vld [vmem:[%s3 + $0x68] sm:$0xf]
      %v2003 = vld [vmem:[%s3 + $0x6c] sm:$0xf]
      %v2004 = vld [vmem:[%s3 + $0x70] sm:$0xf]
      %v2005 = vld [vmem:[%s3 + $0x74] sm:$0xf]
      %v2006 = vld [vmem:[%s3 + $0x78] sm:$0xf]
      %v2007 = vld [vmem:[%s3 + $0x7c] sm:$0xf]
      %v2008 = vld [vmem:[%s3 + $0x80] sm:$0xf]
      %v2009 = vld [vmem:[%s3 + $0x84] sm:$0xf]
      %v2010 = vld [vmem:[%s3 + $0x88] sm:$0xf]
      %v2011 = vld [vmem:[%s3 + $0x8c] sm:$0xf]
      %v2012 = vld [vmem:[%s3 + $0x90] sm:$0xf]
      %v2013 = vld [vmem:[%s3 + $0x94] sm:$0xf]
      %v2014 = vld [vmem:[%s3 + $0x98] sm:$0xf]
      %v2015 = vld [vmem:[%s3 + $0x9c] sm:$0xf]
      %v2016 = vld [vmem:[%s3 + $0xa0] sm:$0xf]
      %v2017 = vld [vmem:[%s3 + $0xa4] sm:$0xf]
      %v2018 = vld [vmem:[%s3 + $0xa8] sm:$0xf]
      %v2019 = vld [vmem:[%s3 + $0xac] sm:$0xf]
      %v2020 = vld [vmem:[%s3 + $0xb0] sm:$0xf]
      %v2021 = vld [vmem:[%s3 + $0xb4] sm:$0xf]
      %v2022 = vld [vmem:[%s3 + $0xb8] sm:$0xf]
      %v2023 = vld [vmem:[%s3 + $0xbc] sm:$0xf]
      %v2024 = vld [vmem:[%s3 + $0xc0] sm:$0xf]
      %v2025 = vld [vmem:[%s3 + $0xc4] sm:$0xf]
      %v2026 = vld [vmem:[%s3 + $0xc8] sm:$0xf]
      %v2027 = vld [vmem:[%s3 + $0xcc] sm:$0xf]
      %v2028 = vld [vmem:[%s3 + $0xd0] sm:$0xf]
      %v2029 = vld [vmem:[%s3 + $0xd4] sm:$0xf]
      %v2030 = vld [vmem:[%s3 + $0xd8] sm:$0xf]
      %v2031 = vld [vmem:[%s3 + $0xdc] sm:$0xf]
      %v2032 = vld [vmem:[%s3 + $0xe0] sm:$0xf]
      %v2033 = vld [vmem:[%s3 + $0xe4] sm:$0xf]
      %v2034 = vld [vmem:[%s3 + $0xe8] sm:$0xf]
      %v2035 = vld [vmem:[%s3 + $0xec] sm:$0xf]
      %v2036 = vld [vmem:[%s3 + $0xf0] sm:$0xf]
      %v2037 = vld [vmem:[%s3 + $0xf4] sm:$0xf]
      %v2038 = vld [vmem:[%s3 + $0xf8] sm:$0xf]
      %v2039 = vld [vmem:[%s3 + $0xfc] sm:$0xf]
      %v2040 = vld [vmem:[%s4] sm:$0x1]
      %v2042 = vperm.slane %v2040, 0
      %v2108 = vunpack.c.l.b16 %v1976
      %v2109 = vunpack.c.l.b16 %v1977
      %v2110 = vunpack.c.l.b16 %v1978
      %v2111 = vunpack.c.l.b16 %v1979
      %v2112 = vunpack.c.l.b16 %v1980
      %v2113 = vunpack.c.l.b16 %v1981
      %v2114 = vunpack.c.l.b16 %v1982
      %v2115 = vunpack.c.l.b16 %v1983
      %v2116 = vunpack.c.l.b16 %v1984
      %v2117 = vunpack.c.l.b16 %v1985
      %v2118 = vunpack.c.l.b16 %v1986
      %v2119 = vunpack.c.l.b16 %v1987
      %v2120 = vunpack.c.l.b16 %v1988
      %v2121 = vunpack.c.l.b16 %v1989
      %v2122 = vunpack.c.l.b16 %v1990
      %v2123 = vunpack.c.l.b16 %v1991
      %v2124 = vunpack.c.l.b16 %v1992
      %v2125 = vunpack.c.l.b16 %v1993
      %v2126 = vunpack.c.l.b16 %v1994
      %v2127 = vunpack.c.l.b16 %v1995
      %v2128 = vunpack.c.l.b16 %v1996
      %v2129 = vunpack.c.l.b16 %v1997
      %v2130 = vunpack.c.l.b16 %v1998
      %v2131 = vunpack.c.l.b16 %v1999
      %v2132 = vunpack.c.l.b16 %v2000
      %v2133 = vunpack.c.l.b16 %v2001
      %v2134 = vunpack.c.l.b16 %v2002
      %v2135 = vunpack.c.l.b16 %v2003
      %v2136 = vunpack.c.l.b16 %v2004
      %v2137 = vunpack.c.l.b16 %v2005
      %v2138 = vunpack.c.l.b16 %v2006
      %v2139 = vunpack.c.l.b16 %v2007
      %v2140 = vunpack.c.l.b16 %v2008
      %v2141 = vunpack.c.l.b16 %v2009
      %v2142 = vunpack.c.l.b16 %v2010
      %v2143 = vunpack.c.l.b16 %v2011
      %v2144 = vunpack.c.l.b16 %v2012
      %v2145 = vunpack.c.l.b16 %v2013
      %v2146 = vunpack.c.l.b16 %v2014
      %v2147 = vunpack.c.l.b16 %v2015
      %v2148 = vunpack.c.l.b16 %v2016
      %v2149 = vunpack.c.l.b16 %v2017
      %v2150 = vunpack.c.l.b16 %v2018
      %v2151 = vunpack.c.l.b16 %v2019
      %v2152 = vunpack.c.l.b16 %v2020
      %v2153 = vunpack.c.l.b16 %v2021
      %v2154 = vunpack.c.l.b16 %v2022
      %v2155 = vunpack.c.l.b16 %v2023
      %v2156 = vunpack.c.l.b16 %v2024
      %v2157 = vunpack.c.l.b16 %v2025
      %v2158 = vunpack.c.l.b16 %v2026
      %v2159 = vunpack.c.l.b16 %v2027
      %v2160 = vunpack.c.l.b16 %v2028
      %v2161 = vunpack.c.l.b16 %v2029
      %v2162 = vunpack.c.l.b16 %v2030
      %v2163 = vunpack.c.l.b16 %v2031
      %v2164 = vunpack.c.l.b16 %v2032
      %v2165 = vunpack.c.l.b16 %v2033
      %v2166 = vunpack.c.l.b16 %v2034
      %v2167 = vunpack.c.l.b16 %v2035
      %v2168 = vunpack.c.l.b16 %v2036
      %v2169 = vunpack.c.l.b16 %v2037
      %v2170 = vunpack.c.l.b16 %v2038
      %v2171 = vunpack.c.l.b16 %v2039
      %v2172 = vpack.c.b16 %v2109, %v2108
      %v2173 = vpack.c.b16 %v2111, %v2110
      %v2174 = vpack.c.b16 %v2113, %v2112
      %v2175 = vpack.c.b16 %v2115, %v2114
      %v2176 = vpack.c.b16 %v2117, %v2116
      %v2177 = vpack.c.b16 %v2119, %v2118
      %v2178 = vpack.c.b16 %v2121, %v2120
      %v2179 = vpack.c.b16 %v2123, %v2122
      %v2180 = vpack.c.b16 %v2125, %v2124
      %v2181 = vpack.c.b16 %v2127, %v2126
      %v2182 = vpack.c.b16 %v2129, %v2128
      %v2183 = vpack.c.b16 %v2131, %v2130
      %v2184 = vpack.c.b16 %v2133, %v2132
      %v2185 = vpack.c.b16 %v2135, %v2134
      %v2186 = vpack.c.b16 %v2137, %v2136
      %v2187 = vpack.c.b16 %v2139, %v2138
      %v2188 = vpack.c.b16 %v2141, %v2140
      %v2189 = vpack.c.b16 %v2143, %v2142
      %v2190 = vpack.c.b16 %v2145, %v2144
      %v2191 = vpack.c.b16 %v2147, %v2146
      %v2192 = vpack.c.b16 %v2149, %v2148
      %v2193 = vpack.c.b16 %v2151, %v2150
      %v2194 = vpack.c.b16 %v2153, %v2152
      %v2195 = vpack.c.b16 %v2155, %v2154
      %v2196 = vpack.c.b16 %v2157, %v2156
      %v2197 = vpack.c.b16 %v2159, %v2158
      %v2198 = vpack.c.b16 %v2161, %v2160
      %v2199 = vpack.c.b16 %v2163, %v2162
      %v2200 = vpack.c.b16 %v2165, %v2164
      %v2201 = vpack.c.b16 %v2167, %v2166
      %v2202 = vpack.c.b16 %v2169, %v2168
      %v2203 = vpack.c.b16 %v2171, %v2170
      %2236 = vmatpush.bf16.msra.mxu0 %v2179
      %2237 = vmatpush.bf16.msra.mxu0 %v2178
      %2238 = vmatpush.bf16.msra.mxu0 %v2177
      %2239 = vmatpush.bf16.msra.mxu0 %v2176
      %2240 = vmatpush.bf16.msra.mxu0 %v2175
      %2241 = vmatpush.bf16.msra.mxu0 %v2174
      %2242 = vmatpush.bf16.msra.mxu0 %v2173
      %2243 = vmatpush.bf16.msra.mxu0 %v2172
      %2244 = vmatmul.bf16.gmra.mxu0 %v1972
      %v2245 = vpop.f32.mrf.mxu0
      %v2246 = vadd.f32 %v2042, %v2245
      %v2247 = vpop.f32.mrf.mxu0
      %v2248 = vadd.f32 %v2042, %v2247
      %2249 = vdwg.mxu0
      %2250 = vmatpush.bf16.msra.mxu0 %v2187
      %2251 = vmatpush.bf16.msra.mxu0 %v2186
      %2252 = vmatpush.bf16.msra.mxu0 %v2185
      %2253 = vmatpush.bf16.msra.mxu0 %v2184
      %2254 = vmatpush.bf16.msra.mxu0 %v2183
      %2255 = vmatpush.bf16.msra.mxu0 %v2182
      %2256 = vmatpush.bf16.msra.mxu0 %v2181
      %2257 = vmatpush.bf16.msra.mxu0 %v2180
      %2258 = vmatmul.bf16.gmra.mxu0 %v1973
      %v2259 = vpop.f32.mrf.mxu0
      %v2260 = vadd.f32 %v2246, %v2259
      %v2261 = vpop.f32.mrf.mxu0
      %v2262 = vadd.f32 %v2248, %v2261
      %2263 = vdwg.mxu0
      %2264 = vmatpush.bf16.msra.mxu0 %v2195
      %2265 = vmatpush.bf16.msra.mxu0 %v2194
      %2266 = vmatpush.bf16.msra.mxu0 %v2193
      %2267 = vmatpush.bf16.msra.mxu0 %v2192
      %2268 = vmatpush.bf16.msra.mxu0 %v2191
      %2269 = vmatpush.bf16.msra.mxu0 %v2190
      %2270 = vmatpush.bf16.msra.mxu0 %v2189
      %2271 = vmatpush.bf16.msra.mxu0 %v2188
      %2272 = vmatmul.bf16.gmra.mxu0 %v1974
      %v2273 = vpop.f32.mrf.mxu0
      %v2274 = vadd.f32 %v2260, %v2273
      %v2275 = vpop.f32.mrf.mxu0
      %v2276 = vadd.f32 %v2262, %v2275
      %2277 = vdwg.mxu0
      %2278 = vmatpush.bf16.msra.mxu0 %v2203
      %2279 = vmatpush.bf16.msra.mxu0 %v2202
      %2280 = vmatpush.bf16.msra.mxu0 %v2201
      %2281 = vmatpush.bf16.msra.mxu0 %v2200
      %2282 = vmatpush.bf16.msra.mxu0 %v2199
      %2283 = vmatpush.bf16.msra.mxu0 %v2198
      %2284 = vmatpush.bf16.msra.mxu0 %v2197
      %2285 = vmatpush.bf16.msra.mxu0 %v2196
      %2286 = vmatmul.bf16.gmra.mxu0 %v1975
      %v2287 = vpop.f32.mrf.mxu0
      %v2288 = vadd.f32 %v2274, %v2287
      %v2289 = vpop.f32.mrf.mxu0
      %v2290 = vadd.f32 %v2276, %v2289
      %2291 = vdwg.mxu0
      %v2292 = vmax.f32 %v2288, 0.0
      %v2293 = vmax.f32 %v2290, 0.0
      %2294 = vst.msk [vmem:[#allocation3 + $0x1b] sm:$0xff] %vm810, %v2292
      %2295 = vst.msk [vmem:[#allocation3 + $0x23] sm:$0x1] %vm1142, %v2293
      %v2296 = vld [vmem:[#allocation2 + $0x50] sm:$0xff]
      %v2297 = vld [vmem:[#allocation2 + $0x58] sm:$0x3]
      %v2298 = vld [vmem:[#allocation2 + $0x5a] sm:$0xff]
      %v2299 = vld [vmem:[#allocation2 + $0x62] sm:$0x3]
      %v2300 = vld [vmem:[#allocation2 + $0x64] sm:$0xff]
      %v2301 = vld [vmem:[#allocation2 + $0x6c] sm:$0x3]
      %v2302 = vld [vmem:[#allocation2 + $0x6e] sm:$0xff]
      %v2303 = vld [vmem:[#allocation2 + $0x76] sm:$0x3]
      %v2306 = vrot.slane %v2296, 1
      %v2307 = vrot.slane %v2297, 1
      %v2308 = vsel %vm767, %v2306, %v2307
      %2309 = vrot.lane.b32.xlu0 %v2308, 64
      %v2310 = vpop.permute.xlu0 %2309
      %2311 = vrot.lane.b32.xlu0 %v2307, 64
      %v2312 = vpop.permute.xlu0 %2311
      %v2317 = vrot.slane %v2298, 1
      %v2318 = vrot.slane %v2299, 1
      %v2319 = vsel %vm767, %v2317, %v2318
      %2320 = vrot.lane.b32.xlu0 %v2319, 64
      %v2321 = vpop.permute.xlu0 %2320
      %2322 = vrot.lane.b32.xlu0 %v2318, 64
      %v2323 = vpop.permute.xlu0 %2322
      %v2328 = vrot.slane %v2300, 1
      %v2329 = vrot.slane %v2301, 1
      %v2330 = vsel %vm767, %v2328, %v2329
      %2331 = vrot.lane.b32.xlu0 %v2330, 64
      %v2332 = vpop.permute.xlu0 %2331
      %2333 = vrot.lane.b32.xlu0 %v2329, 64
      %v2334 = vpop.permute.xlu0 %2333
      %v2339 = vrot.slane %v2302, 1
      %v2340 = vrot.slane %v2303, 1
      %v2341 = vsel %vm767, %v2339, %v2340
      %2342 = vrot.lane.b32.xlu0 %v2341, 64
      %v2343 = vpop.permute.xlu0 %2342
      %2344 = vrot.lane.b32.xlu0 %v2340, 64
      %v2345 = vpop.permute.xlu0 %2344
      %v2348 = vsel %vm810, %v2296, %v2310
      %v2349 = vsel %vm810, %v2297, %v2312
      %v2350 = vsel %vm810, %v2298, %v2321
      %v2351 = vsel %vm810, %v2299, %v2323
      %v2352 = vsel %vm810, %v2300, %v2332
      %v2353 = vsel %vm810, %v2301, %v2334
      %v2354 = vsel %vm810, %v2302, %v2343
      %v2355 = vsel %vm810, %v2303, %v2345
      %v2356 = vpack.c.bf16 %v2349, %v2348
      %v2357 = vpack.c.bf16 %v2351, %v2350
      %v2358 = vpack.c.bf16 %v2353, %v2352
      %v2359 = vpack.c.bf16 %v2355, %v2354
      %v2360 = vld [vmem:[%s3] sm:$0xf]
      %v2361 = vld [vmem:[%s3 + $0x4] sm:$0xf]
      %v2362 = vld [vmem:[%s3 + $0x8] sm:$0xf]
      %v2363 = vld [vmem:[%s3 + $0xc] sm:$0xf]
      %v2364 = vld [vmem:[%s3 + $0x10] sm:$0xf]
      %v2365 = vld [vmem:[%s3 + $0x14] sm:$0xf]
      %v2366 = vld [vmem:[%s3 + $0x18] sm:$0xf]
      %v2367 = vld [vmem:[%s3 + $0x1c] sm:$0xf]
      %v2368 = vld [vmem:[%s3 + $0x20] sm:$0xf]
      %v2369 = vld [vmem:[%s3 + $0x24] sm:$0xf]
      %v2370 = vld [vmem:[%s3 + $0x28] sm:$0xf]
      %v2371 = vld [vmem:[%s3 + $0x2c] sm:$0xf]
      %v2372 = vld [vmem:[%s3 + $0x30] sm:$0xf]
      %v2373 = vld [vmem:[%s3 + $0x34] sm:$0xf]
      %v2374 = vld [vmem:[%s3 + $0x38] sm:$0xf]
      %v2375 = vld [vmem:[%s3 + $0x3c] sm:$0xf]
      %v2376 = vld [vmem:[%s3 + $0x40] sm:$0xf]
      %v2377 = vld [vmem:[%s3 + $0x44] sm:$0xf]
      %v2378 = vld [vmem:[%s3 + $0x48] sm:$0xf]
      %v2379 = vld [vmem:[%s3 + $0x4c] sm:$0xf]
      %v2380 = vld [vmem:[%s3 + $0x50] sm:$0xf]
      %v2381 = vld [vmem:[%s3 + $0x54] sm:$0xf]
      %v2382 = vld [vmem:[%s3 + $0x58] sm:$0xf]
      %v2383 = vld [vmem:[%s3 + $0x5c] sm:$0xf]
      %v2384 = vld [vmem:[%s3 + $0x60] sm:$0xf]
      %v2385 = vld [vmem:[%s3 + $0x64] sm:$0xf]
      %v2386 = vld [vmem:[%s3 + $0x68] sm:$0xf]
      %v2387 = vld [vmem:[%s3 + $0x6c] sm:$0xf]
      %v2388 = vld [vmem:[%s3 + $0x70] sm:$0xf]
      %v2389 = vld [vmem:[%s3 + $0x74] sm:$0xf]
      %v2390 = vld [vmem:[%s3 + $0x78] sm:$0xf]
      %v2391 = vld [vmem:[%s3 + $0x7c] sm:$0xf]
      %v2392 = vld [vmem:[%s3 + $0x80] sm:$0xf]
      %v2393 = vld [vmem:[%s3 + $0x84] sm:$0xf]
      %v2394 = vld [vmem:[%s3 + $0x88] sm:$0xf]
      %v2395 = vld [vmem:[%s3 + $0x8c] sm:$0xf]
      %v2396 = vld [vmem:[%s3 + $0x90] sm:$0xf]
      %v2397 = vld [vmem:[%s3 + $0x94] sm:$0xf]
      %v2398 = vld [vmem:[%s3 + $0x98] sm:$0xf]
      %v2399 = vld [vmem:[%s3 + $0x9c] sm:$0xf]
      %v2400 = vld [vmem:[%s3 + $0xa0] sm:$0xf]
      %v2401 = vld [vmem:[%s3 + $0xa4] sm:$0xf]
      %v2402 = vld [vmem:[%s3 + $0xa8] sm:$0xf]
      %v2403 = vld [vmem:[%s3 + $0xac] sm:$0xf]
      %v2404 = vld [vmem:[%s3 + $0xb0] sm:$0xf]
      %v2405 = vld [vmem:[%s3 + $0xb4] sm:$0xf]
      %v2406 = vld [vmem:[%s3 + $0xb8] sm:$0xf]
      %v2407 = vld [vmem:[%s3 + $0xbc] sm:$0xf]
      %v2408 = vld [vmem:[%s3 + $0xc0] sm:$0xf]
      %v2409 = vld [vmem:[%s3 + $0xc4] sm:$0xf]
      %v2410 = vld [vmem:[%s3 + $0xc8] sm:$0xf]
      %v2411 = vld [vmem:[%s3 + $0xcc] sm:$0xf]
      %v2412 = vld [vmem:[%s3 + $0xd0] sm:$0xf]
      %v2413 = vld [vmem:[%s3 + $0xd4] sm:$0xf]
      %v2414 = vld [vmem:[%s3 + $0xd8] sm:$0xf]
      %v2415 = vld [vmem:[%s3 + $0xdc] sm:$0xf]
      %v2416 = vld [vmem:[%s3 + $0xe0] sm:$0xf]
      %v2417 = vld [vmem:[%s3 + $0xe4] sm:$0xf]
      %v2418 = vld [vmem:[%s3 + $0xe8] sm:$0xf]
      %v2419 = vld [vmem:[%s3 + $0xec] sm:$0xf]
      %v2420 = vld [vmem:[%s3 + $0xf0] sm:$0xf]
      %v2421 = vld [vmem:[%s3 + $0xf4] sm:$0xf]
      %v2422 = vld [vmem:[%s3 + $0xf8] sm:$0xf]
      %v2423 = vld [vmem:[%s3 + $0xfc] sm:$0xf]
      %v2424 = vld [vmem:[%s4] sm:$0x1]
      %v2426 = vperm.slane %v2424, 0
      %v2492 = vunpack.c.l.b16 %v2360
      %v2493 = vunpack.c.l.b16 %v2361
      %v2494 = vunpack.c.l.b16 %v2362
      %v2495 = vunpack.c.l.b16 %v2363
      %v2496 = vunpack.c.l.b16 %v2364
      %v2497 = vunpack.c.l.b16 %v2365
      %v2498 = vunpack.c.l.b16 %v2366
      %v2499 = vunpack.c.l.b16 %v2367
      %v2500 = vunpack.c.l.b16 %v2368
      %v2501 = vunpack.c.l.b16 %v2369
      %v2502 = vunpack.c.l.b16 %v2370
      %v2503 = vunpack.c.l.b16 %v2371
      %v2504 = vunpack.c.l.b16 %v2372
      %v2505 = vunpack.c.l.b16 %v2373
      %v2506 = vunpack.c.l.b16 %v2374
      %v2507 = vunpack.c.l.b16 %v2375
      %v2508 = vunpack.c.l.b16 %v2376
      %v2509 = vunpack.c.l.b16 %v2377
      %v2510 = vunpack.c.l.b16 %v2378
      %v2511 = vunpack.c.l.b16 %v2379
      %v2512 = vunpack.c.l.b16 %v2380
      %v2513 = vunpack.c.l.b16 %v2381
      %v2514 = vunpack.c.l.b16 %v2382
      %v2515 = vunpack.c.l.b16 %v2383
      %v2516 = vunpack.c.l.b16 %v2384
      %v2517 = vunpack.c.l.b16 %v2385
      %v2518 = vunpack.c.l.b16 %v2386
      %v2519 = vunpack.c.l.b16 %v2387
      %v2520 = vunpack.c.l.b16 %v2388
      %v2521 = vunpack.c.l.b16 %v2389
      %v2522 = vunpack.c.l.b16 %v2390
      %v2523 = vunpack.c.l.b16 %v2391
      %v2524 = vunpack.c.l.b16 %v2392
      %v2525 = vunpack.c.l.b16 %v2393
      %v2526 = vunpack.c.l.b16 %v2394
      %v2527 = vunpack.c.l.b16 %v2395
      %v2528 = vunpack.c.l.b16 %v2396
      %v2529 = vunpack.c.l.b16 %v2397
      %v2530 = vunpack.c.l.b16 %v2398
      %v2531 = vunpack.c.l.b16 %v2399
      %v2532 = vunpack.c.l.b16 %v2400
      %v2533 = vunpack.c.l.b16 %v2401
      %v2534 = vunpack.c.l.b16 %v2402
      %v2535 = vunpack.c.l.b16 %v2403
      %v2536 = vunpack.c.l.b16 %v2404
      %v2537 = vunpack.c.l.b16 %v2405
      %v2538 = vunpack.c.l.b16 %v2406
      %v2539 = vunpack.c.l.b16 %v2407
      %v2540 = vunpack.c.l.b16 %v2408
      %v2541 = vunpack.c.l.b16 %v2409
      %v2542 = vunpack.c.l.b16 %v2410
      %v2543 = vunpack.c.l.b16 %v2411
      %v2544 = vunpack.c.l.b16 %v2412
      %v2545 = vunpack.c.l.b16 %v2413
      %v2546 = vunpack.c.l.b16 %v2414
      %v2547 = vunpack.c.l.b16 %v2415
      %v2548 = vunpack.c.l.b16 %v2416
      %v2549 = vunpack.c.l.b16 %v2417
      %v2550 = vunpack.c.l.b16 %v2418
      %v2551 = vunpack.c.l.b16 %v2419
      %v2552 = vunpack.c.l.b16 %v2420
      %v2553 = vunpack.c.l.b16 %v2421
      %v2554 = vunpack.c.l.b16 %v2422
      %v2555 = vunpack.c.l.b16 %v2423
      %v2556 = vpack.c.b16 %v2493, %v2492
      %v2557 = vpack.c.b16 %v2495, %v2494
      %v2558 = vpack.c.b16 %v2497, %v2496
      %v2559 = vpack.c.b16 %v2499, %v2498
      %v2560 = vpack.c.b16 %v2501, %v2500
      %v2561 = vpack.c.b16 %v2503, %v2502
      %v2562 = vpack.c.b16 %v2505, %v2504
      %v2563 = vpack.c.b16 %v2507, %v2506
      %v2564 = vpack.c.b16 %v2509, %v2508
      %v2565 = vpack.c.b16 %v2511, %v2510
      %v2566 = vpack.c.b16 %v2513, %v2512
      %v2567 = vpack.c.b16 %v2515, %v2514
      %v2568 = vpack.c.b16 %v2517, %v2516
      %v2569 = vpack.c.b16 %v2519, %v2518
      %v2570 = vpack.c.b16 %v2521, %v2520
      %v2571 = vpack.c.b16 %v2523, %v2522
      %v2572 = vpack.c.b16 %v2525, %v2524
      %v2573 = vpack.c.b16 %v2527, %v2526
      %v2574 = vpack.c.b16 %v2529, %v2528
      %v2575 = vpack.c.b16 %v2531, %v2530
      %v2576 = vpack.c.b16 %v2533, %v2532
      %v2577 = vpack.c.b16 %v2535, %v2534
      %v2578 = vpack.c.b16 %v2537, %v2536
      %v2579 = vpack.c.b16 %v2539, %v2538
      %v2580 = vpack.c.b16 %v2541, %v2540
      %v2581 = vpack.c.b16 %v2543, %v2542
      %v2582 = vpack.c.b16 %v2545, %v2544
      %v2583 = vpack.c.b16 %v2547, %v2546
      %v2584 = vpack.c.b16 %v2549, %v2548
      %v2585 = vpack.c.b16 %v2551, %v2550
      %v2586 = vpack.c.b16 %v2553, %v2552
      %v2587 = vpack.c.b16 %v2555, %v2554
      %2620 = vmatpush.bf16.msra.mxu0 %v2563
      %2621 = vmatpush.bf16.msra.mxu0 %v2562
      %2622 = vmatpush.bf16.msra.mxu0 %v2561
      %2623 = vmatpush.bf16.msra.mxu0 %v2560
      %2624 = vmatpush.bf16.msra.mxu0 %v2559
      %2625 = vmatpush.bf16.msra.mxu0 %v2558
      %2626 = vmatpush.bf16.msra.mxu0 %v2557
      %2627 = vmatpush.bf16.msra.mxu0 %v2556
      %2628 = vmatmul.bf16.gmra.mxu0 %v2356
      %v2629 = vpop.f32.mrf.mxu0
      %v2630 = vadd.f32 %v2426, %v2629
      %v2631 = vpop.f32.mrf.mxu0
      %v2632 = vadd.f32 %v2426, %v2631
      %2633 = vdwg.mxu0
      %2634 = vmatpush.bf16.msra.mxu0 %v2571
      %2635 = vmatpush.bf16.msra.mxu0 %v2570
      %2636 = vmatpush.bf16.msra.mxu0 %v2569
      %2637 = vmatpush.bf16.msra.mxu0 %v2568
      %2638 = vmatpush.bf16.msra.mxu0 %v2567
      %2639 = vmatpush.bf16.msra.mxu0 %v2566
      %2640 = vmatpush.bf16.msra.mxu0 %v2565
      %2641 = vmatpush.bf16.msra.mxu0 %v2564
      %2642 = vmatmul.bf16.gmra.mxu0 %v2357
      %v2643 = vpop.f32.mrf.mxu0
      %v2644 = vadd.f32 %v2630, %v2643
      %v2645 = vpop.f32.mrf.mxu0
      %v2646 = vadd.f32 %v2632, %v2645
      %2647 = vdwg.mxu0
      %2648 = vmatpush.bf16.msra.mxu0 %v2579
      %2649 = vmatpush.bf16.msra.mxu0 %v2578
      %2650 = vmatpush.bf16.msra.mxu0 %v2577
      %2651 = vmatpush.bf16.msra.mxu0 %v2576
      %2652 = vmatpush.bf16.msra.mxu0 %v2575
      %2653 = vmatpush.bf16.msra.mxu0 %v2574
      %2654 = vmatpush.bf16.msra.mxu0 %v2573
      %2655 = vmatpush.bf16.msra.mxu0 %v2572
      %2656 = vmatmul.bf16.gmra.mxu0 %v2358
      %v2657 = vpop.f32.mrf.mxu0
      %v2658 = vadd.f32 %v2644, %v2657
      %v2659 = vpop.f32.mrf.mxu0
      %v2660 = vadd.f32 %v2646, %v2659
      %2661 = vdwg.mxu0
      %2662 = vmatpush.bf16.msra.mxu0 %v2587
      %2663 = vmatpush.bf16.msra.mxu0 %v2586
      %2664 = vmatpush.bf16.msra.mxu0 %v2585
      %2665 = vmatpush.bf16.msra.mxu0 %v2584
      %2666 = vmatpush.bf16.msra.mxu0 %v2583
      %2667 = vmatpush.bf16.msra.mxu0 %v2582
      %2668 = vmatpush.bf16.msra.mxu0 %v2581
      %2669 = vmatpush.bf16.msra.mxu0 %v2580
      %2670 = vmatmul.bf16.gmra.mxu0 %v2359
      %v2671 = vpop.f32.mrf.mxu0
      %v2672 = vadd.f32 %v2658, %v2671
      %v2673 = vpop.f32.mrf.mxu0
      %v2674 = vadd.f32 %v2660, %v2673
      %2675 = vdwg.mxu0
      %v2676 = vmax.f32 %v2672, 0.0
      %v2677 = vmax.f32 %v2674, 0.0
      %2678 = vst.msk [vmem:[#allocation3 + $0x24] sm:$0xff] %vm810, %v2676
      %2679 = vst.msk [vmem:[#allocation3 + $0x2c] sm:$0x1] %vm1142, %v2677
      %v2680 = vld [vmem:[#allocation2 + $0x64] sm:$0xff]
      %v2681 = vld [vmem:[#allocation2 + $0x6c] sm:$0x3]
      %v2682 = vld [vmem:[#allocation2 + $0x6e] sm:$0xff]
      %v2683 = vld [vmem:[#allocation2 + $0x76] sm:$0x3]
      %v2684 = vld [vmem:[#allocation2 + $0x78] sm:$0xff]
      %v2685 = vld [vmem:[#allocation2 + $0x80] sm:$0x3]
      %v2686 = vld [vmem:[#allocation2 + $0x82] sm:$0xff]
      %v2687 = vld [vmem:[#allocation2 + $0x8a] sm:$0x3]
      %v2690 = vrot.slane %v2680, 1
      %v2691 = vrot.slane %v2681, 1
      %v2692 = vsel %vm767, %v2690, %v2691
      %2693 = vrot.lane.b32.xlu0 %v2692, 64
      %v2694 = vpop.permute.xlu0 %2693
      %2695 = vrot.lane.b32.xlu0 %v2691, 64
      %v2696 = vpop.permute.xlu0 %2695
      %v2701 = vrot.slane %v2682, 1
      %v2702 = vrot.slane %v2683, 1
      %v2703 = vsel %vm767, %v2701, %v2702
      %2704 = vrot.lane.b32.xlu0 %v2703, 64
      %v2705 = vpop.permute.xlu0 %2704
      %2706 = vrot.lane.b32.xlu0 %v2702, 64
      %v2707 = vpop.permute.xlu0 %2706
      %v2712 = vrot.slane %v2684, 1
      %v2713 = vrot.slane %v2685, 1
      %v2714 = vsel %vm767, %v2712, %v2713
      %2715 = vrot.lane.b32.xlu0 %v2714, 64
      %v2716 = vpop.permute.xlu0 %2715
      %2717 = vrot.lane.b32.xlu0 %v2713, 64
      %v2718 = vpop.permute.xlu0 %2717
      %v2723 = vrot.slane %v2686, 1
      %v2724 = vrot.slane %v2687, 1
      %v2725 = vsel %vm767, %v2723, %v2724
      %2726 = vrot.lane.b32.xlu0 %v2725, 64
      %v2727 = vpop.permute.xlu0 %2726
      %2728 = vrot.lane.b32.xlu0 %v2724, 64
      %v2729 = vpop.permute.xlu0 %2728
      %v2732 = vsel %vm810, %v2680, %v2694
      %v2733 = vsel %vm810, %v2681, %v2696
      %v2734 = vsel %vm810, %v2682, %v2705
      %v2735 = vsel %vm810, %v2683, %v2707
      %v2736 = vsel %vm810, %v2684, %v2716
      %v2737 = vsel %vm810, %v2685, %v2718
      %v2738 = vsel %vm810, %v2686, %v2727
      %v2739 = vsel %vm810, %v2687, %v2729
      %v2740 = vpack.c.bf16 %v2733, %v2732
      %v2741 = vpack.c.bf16 %v2735, %v2734
      %v2742 = vpack.c.bf16 %v2737, %v2736
      %v2743 = vpack.c.bf16 %v2739, %v2738
      %v2744 = vld [vmem:[%s3] sm:$0xf]
      %v2745 = vld [vmem:[%s3 + $0x4] sm:$0xf]
      %v2746 = vld [vmem:[%s3 + $0x8] sm:$0xf]
      %v2747 = vld [vmem:[%s3 + $0xc] sm:$0xf]
      %v2748 = vld [vmem:[%s3 + $0x10] sm:$0xf]
      %v2749 = vld [vmem:[%s3 + $0x14] sm:$0xf]
      %v2750 = vld [vmem:[%s3 + $0x18] sm:$0xf]
      %v2751 = vld [vmem:[%s3 + $0x1c] sm:$0xf]
      %v2752 = vld [vmem:[%s3 + $0x20] sm:$0xf]
      %v2753 = vld [vmem:[%s3 + $0x24] sm:$0xf]
      %v2754 = vld [vmem:[%s3 + $0x28] sm:$0xf]
      %v2755 = vld [vmem:[%s3 + $0x2c] sm:$0xf]
      %v2756 = vld [vmem:[%s3 + $0x30] sm:$0xf]
      %v2757 = vld [vmem:[%s3 + $0x34] sm:$0xf]
      %v2758 = vld [vmem:[%s3 + $0x38] sm:$0xf]
      %v2759 = vld [vmem:[%s3 + $0x3c] sm:$0xf]
      %v2760 = vld [vmem:[%s3 + $0x40] sm:$0xf]
      %v2761 = vld [vmem:[%s3 + $0x44] sm:$0xf]
      %v2762 = vld [vmem:[%s3 + $0x48] sm:$0xf]
      %v2763 = vld [vmem:[%s3 + $0x4c] sm:$0xf]
      %v2764 = vld [vmem:[%s3 + $0x50] sm:$0xf]
      %v2765 = vld [vmem:[%s3 + $0x54] sm:$0xf]
      %v2766 = vld [vmem:[%s3 + $0x58] sm:$0xf]
      %v2767 = vld [vmem:[%s3 + $0x5c] sm:$0xf]
      %v2768 = vld [vmem:[%s3 + $0x60] sm:$0xf]
      %v2769 = vld [vmem:[%s3 + $0x64] sm:$0xf]
      %v2770 = vld [vmem:[%s3 + $0x68] sm:$0xf]
      %v2771 = vld [vmem:[%s3 + $0x6c] sm:$0xf]
      %v2772 = vld [vmem:[%s3 + $0x70] sm:$0xf]
      %v2773 = vld [vmem:[%s3 + $0x74] sm:$0xf]
      %v2774 = vld [vmem:[%s3 + $0x78] sm:$0xf]
      %v2775 = vld [vmem:[%s3 + $0x7c] sm:$0xf]
      %v2776 = vld [vmem:[%s3 + $0x80] sm:$0xf]
      %v2777 = vld [vmem:[%s3 + $0x84] sm:$0xf]
      %v2778 = vld [vmem:[%s3 + $0x88] sm:$0xf]
      %v2779 = vld [vmem:[%s3 + $0x8c] sm:$0xf]
      %v2780 = vld [vmem:[%s3 + $0x90] sm:$0xf]
      %v2781 = vld [vmem:[%s3 + $0x94] sm:$0xf]
      %v2782 = vld [vmem:[%s3 + $0x98] sm:$0xf]
      %v2783 = vld [vmem:[%s3 + $0x9c] sm:$0xf]
      %v2784 = vld [vmem:[%s3 + $0xa0] sm:$0xf]
      %v2785 = vld [vmem:[%s3 + $0xa4] sm:$0xf]
      %v2786 = vld [vmem:[%s3 + $0xa8] sm:$0xf]
      %v2787 = vld [vmem:[%s3 + $0xac] sm:$0xf]
      %v2788 = vld [vmem:[%s3 + $0xb0] sm:$0xf]
      %v2789 = vld [vmem:[%s3 + $0xb4] sm:$0xf]
      %v2790 = vld [vmem:[%s3 + $0xb8] sm:$0xf]
      %v2791 = vld [vmem:[%s3 + $0xbc] sm:$0xf]
      %v2792 = vld [vmem:[%s3 + $0xc0] sm:$0xf]
      %v2793 = vld [vmem:[%s3 + $0xc4] sm:$0xf]
      %v2794 = vld [vmem:[%s3 + $0xc8] sm:$0xf]
      %v2795 = vld [vmem:[%s3 + $0xcc] sm:$0xf]
      %v2796 = vld [vmem:[%s3 + $0xd0] sm:$0xf]
      %v2797 = vld [vmem:[%s3 + $0xd4] sm:$0xf]
      %v2798 = vld [vmem:[%s3 + $0xd8] sm:$0xf]
      %v2799 = vld [vmem:[%s3 + $0xdc] sm:$0xf]
      %v2800 = vld [vmem:[%s3 + $0xe0] sm:$0xf]
      %v2801 = vld [vmem:[%s3 + $0xe4] sm:$0xf]
      %v2802 = vld [vmem:[%s3 + $0xe8] sm:$0xf]
      %v2803 = vld [vmem:[%s3 + $0xec] sm:$0xf]
      %v2804 = vld [vmem:[%s3 + $0xf0] sm:$0xf]
      %v2805 = vld [vmem:[%s3 + $0xf4] sm:$0xf]
      %v2806 = vld [vmem:[%s3 + $0xf8] sm:$0xf]
      %v2807 = vld [vmem:[%s3 + $0xfc] sm:$0xf]
      %v2808 = vld [vmem:[%s4] sm:$0x1]
      %v2810 = vperm.slane %v2808, 0
      %v2876 = vunpack.c.l.b16 %v2744
      %v2877 = vunpack.c.l.b16 %v2745
      %v2878 = vunpack.c.l.b16 %v2746
      %v2879 = vunpack.c.l.b16 %v2747
      %v2880 = vunpack.c.l.b16 %v2748
      %v2881 = vunpack.c.l.b16 %v2749
      %v2882 = vunpack.c.l.b16 %v2750
      %v2883 = vunpack.c.l.b16 %v2751
      %v2884 = vunpack.c.l.b16 %v2752
      %v2885 = vunpack.c.l.b16 %v2753
      %v2886 = vunpack.c.l.b16 %v2754
      %v2887 = vunpack.c.l.b16 %v2755
      %v2888 = vunpack.c.l.b16 %v2756
      %v2889 = vunpack.c.l.b16 %v2757
      %v2890 = vunpack.c.l.b16 %v2758
      %v2891 = vunpack.c.l.b16 %v2759
      %v2892 = vunpack.c.l.b16 %v2760
      %v2893 = vunpack.c.l.b16 %v2761
      %v2894 = vunpack.c.l.b16 %v2762
      %v2895 = vunpack.c.l.b16 %v2763
      %v2896 = vunpack.c.l.b16 %v2764
      %v2897 = vunpack.c.l.b16 %v2765
      %v2898 = vunpack.c.l.b16 %v2766
      %v2899 = vunpack.c.l.b16 %v2767
      %v2900 = vunpack.c.l.b16 %v2768
      %v2901 = vunpack.c.l.b16 %v2769
      %v2902 = vunpack.c.l.b16 %v2770
      %v2903 = vunpack.c.l.b16 %v2771
      %v2904 = vunpack.c.l.b16 %v2772
      %v2905 = vunpack.c.l.b16 %v2773
      %v2906 = vunpack.c.l.b16 %v2774
      %v2907 = vunpack.c.l.b16 %v2775
      %v2908 = vunpack.c.l.b16 %v2776
      %v2909 = vunpack.c.l.b16 %v2777
      %v2910 = vunpack.c.l.b16 %v2778
      %v2911 = vunpack.c.l.b16 %v2779
      %v2912 = vunpack.c.l.b16 %v2780
      %v2913 = vunpack.c.l.b16 %v2781
      %v2914 = vunpack.c.l.b16 %v2782
      %v2915 = vunpack.c.l.b16 %v2783
      %v2916 = vunpack.c.l.b16 %v2784
      %v2917 = vunpack.c.l.b16 %v2785
      %v2918 = vunpack.c.l.b16 %v2786
      %v2919 = vunpack.c.l.b16 %v2787
      %v2920 = vunpack.c.l.b16 %v2788
      %v2921 = vunpack.c.l.b16 %v2789
      %v2922 = vunpack.c.l.b16 %v2790
      %v2923 = vunpack.c.l.b16 %v2791
      %v2924 = vunpack.c.l.b16 %v2792
      %v2925 = vunpack.c.l.b16 %v2793
      %v2926 = vunpack.c.l.b16 %v2794
      %v2927 = vunpack.c.l.b16 %v2795
      %v2928 = vunpack.c.l.b16 %v2796
      %v2929 = vunpack.c.l.b16 %v2797
      %v2930 = vunpack.c.l.b16 %v2798
      %v2931 = vunpack.c.l.b16 %v2799
      %v2932 = vunpack.c.l.b16 %v2800
      %v2933 = vunpack.c.l.b16 %v2801
      %v2934 = vunpack.c.l.b16 %v2802
      %v2935 = vunpack.c.l.b16 %v2803
      %v2936 = vunpack.c.l.b16 %v2804
      %v2937 = vunpack.c.l.b16 %v2805
      %v2938 = vunpack.c.l.b16 %v2806
      %v2939 = vunpack.c.l.b16 %v2807
      %v2940 = vpack.c.b16 %v2877, %v2876
      %v2941 = vpack.c.b16 %v2879, %v2878
      %v2942 = vpack.c.b16 %v2881, %v2880
      %v2943 = vpack.c.b16 %v2883, %v2882
      %v2944 = vpack.c.b16 %v2885, %v2884
      %v2945 = vpack.c.b16 %v2887, %v2886
      %v2946 = vpack.c.b16 %v2889, %v2888
      %v2947 = vpack.c.b16 %v2891, %v2890
      %v2948 = vpack.c.b16 %v2893, %v2892
      %v2949 = vpack.c.b16 %v2895, %v2894
      %v2950 = vpack.c.b16 %v2897, %v2896
      %v2951 = vpack.c.b16 %v2899, %v2898
      %v2952 = vpack.c.b16 %v2901, %v2900
      %v2953 = vpack.c.b16 %v2903, %v2902
      %v2954 = vpack.c.b16 %v2905, %v2904
      %v2955 = vpack.c.b16 %v2907, %v2906
      %v2956 = vpack.c.b16 %v2909, %v2908
      %v2957 = vpack.c.b16 %v2911, %v2910
      %v2958 = vpack.c.b16 %v2913, %v2912
      %v2959 = vpack.c.b16 %v2915, %v2914
      %v2960 = vpack.c.b16 %v2917, %v2916
      %v2961 = vpack.c.b16 %v2919, %v2918
      %v2962 = vpack.c.b16 %v2921, %v2920
      %v2963 = vpack.c.b16 %v2923, %v2922
      %v2964 = vpack.c.b16 %v2925, %v2924
      %v2965 = vpack.c.b16 %v2927, %v2926
      %v2966 = vpack.c.b16 %v2929, %v2928
      %v2967 = vpack.c.b16 %v2931, %v2930
      %v2968 = vpack.c.b16 %v2933, %v2932
      %v2969 = vpack.c.b16 %v2935, %v2934
      %v2970 = vpack.c.b16 %v2937, %v2936
      %v2971 = vpack.c.b16 %v2939, %v2938
      %3004 = vmatpush.bf16.msra.mxu0 %v2947
      %3005 = vmatpush.bf16.msra.mxu0 %v2946
      %3006 = vmatpush.bf16.msra.mxu0 %v2945
      %3007 = vmatpush.bf16.msra.mxu0 %v2944
      %3008 = vmatpush.bf16.msra.mxu0 %v2943
      %3009 = vmatpush.bf16.msra.mxu0 %v2942
      %3010 = vmatpush.bf16.msra.mxu0 %v2941
      %3011 = vmatpush.bf16.msra.mxu0 %v2940
      %3012 = vmatmul.bf16.gmra.mxu0 %v2740
      %v3013 = vpop.f32.mrf.mxu0
      %v3014 = vadd.f32 %v2810, %v3013
      %v3015 = vpop.f32.mrf.mxu0
      %v3016 = vadd.f32 %v2810, %v3015
      %3017 = vdwg.mxu0
      %3018 = vmatpush.bf16.msra.mxu0 %v2955
      %3019 = vmatpush.bf16.msra.mxu0 %v2954
      %3020 = vmatpush.bf16.msra.mxu0 %v2953
      %3021 = vmatpush.bf16.msra.mxu0 %v2952
      %3022 = vmatpush.bf16.msra.mxu0 %v2951
      %3023 = vmatpush.bf16.msra.mxu0 %v2950
      %3024 = vmatpush.bf16.msra.mxu0 %v2949
      %3025 = vmatpush.bf16.msra.mxu0 %v2948
      %3026 = vmatmul.bf16.gmra.mxu0 %v2741
      %v3027 = vpop.f32.mrf.mxu0
      %v3028 = vadd.f32 %v3014, %v3027
      %v3029 = vpop.f32.mrf.mxu0
      %v3030 = vadd.f32 %v3016, %v3029
      %3031 = vdwg.mxu0
      %3032 = vmatpush.bf16.msra.mxu0 %v2963
      %3033 = vmatpush.bf16.msra.mxu0 %v2962
      %3034 = vmatpush.bf16.msra.mxu0 %v2961
      %3035 = vmatpush.bf16.msra.mxu0 %v2960
      %3036 = vmatpush.bf16.msra.mxu0 %v2959
      %3037 = vmatpush.bf16.msra.mxu0 %v2958
      %3038 = vmatpush.bf16.msra.mxu0 %v2957
      %3039 = vmatpush.bf16.msra.mxu0 %v2956
      %3040 = vmatmul.bf16.gmra.mxu0 %v2742
      %v3041 = vpop.f32.mrf.mxu0
      %v3042 = vadd.f32 %v3028, %v3041
      %v3043 = vpop.f32.mrf.mxu0
      %v3044 = vadd.f32 %v3030, %v3043
      %3045 = vdwg.mxu0
      %3046 = vmatpush.bf16.msra.mxu0 %v2971
      %3047 = vmatpush.bf16.msra.mxu0 %v2970
      %3048 = vmatpush.bf16.msra.mxu0 %v2969
      %3049 = vmatpush.bf16.msra.mxu0 %v2968
      %3050 = vmatpush.bf16.msra.mxu0 %v2967
      %3051 = vmatpush.bf16.msra.mxu0 %v2966
      %3052 = vmatpush.bf16.msra.mxu0 %v2965
      %3053 = vmatpush.bf16.msra.mxu0 %v2964
      %3054 = vmatmul.bf16.gmra.mxu0 %v2743
      %v3055 = vpop.f32.mrf.mxu0
      %v3056 = vadd.f32 %v3042, %v3055
      %v3057 = vpop.f32.mrf.mxu0
      %v3058 = vadd.f32 %v3044, %v3057
      %3059 = vdwg.mxu0
      %v3060 = vmax.f32 %v3056, 0.0
      %v3061 = vmax.f32 %v3058, 0.0
      %3062 = vst.msk [vmem:[#allocation3 + $0x2d] sm:$0xff] %vm810, %v3060
      %3063 = vst.msk [vmem:[#allocation3 + $0x35] sm:$0x1] %vm1142, %v3061
      %v3064 = vld [vmem:[#allocation2 + $0x78] sm:$0xff]
      %v3065 = vld [vmem:[#allocation2 + $0x80] sm:$0x3]
      %v3066 = vld [vmem:[#allocation2 + $0x82] sm:$0xff]
      %v3067 = vld [vmem:[#allocation2 + $0x8a] sm:$0x3]
      %v3068 = vld [vmem:[#allocation2 + $0x8c] sm:$0xff]
      %v3069 = vld [vmem:[#allocation2 + $0x94] sm:$0x3]
      %v3070 = vld [vmem:[#allocation2 + $0x96] sm:$0xff]
      %v3071 = vld [vmem:[#allocation2 + $0x9e] sm:$0x3]
      %v3074 = vrot.slane %v3064, 1
      %v3075 = vrot.slane %v3065, 1
      %v3076 = vsel %vm767, %v3074, %v3075
      %3077 = vrot.lane.b32.xlu0 %v3076, 64
      %v3078 = vpop.permute.xlu0 %3077
      %3079 = vrot.lane.b32.xlu0 %v3075, 64
      %v3080 = vpop.permute.xlu0 %3079
      %v3085 = vrot.slane %v3066, 1
      %v3086 = vrot.slane %v3067, 1
      %v3087 = vsel %vm767, %v3085, %v3086
      %3088 = vrot.lane.b32.xlu0 %v3087, 64
      %v3089 = vpop.permute.xlu0 %3088
      %3090 = vrot.lane.b32.xlu0 %v3086, 64
      %v3091 = vpop.permute.xlu0 %3090
      %v3096 = vrot.slane %v3068, 1
      %v3097 = vrot.slane %v3069, 1
      %v3098 = vsel %vm767, %v3096, %v3097
      %3099 = vrot.lane.b32.xlu0 %v3098, 64
      %v3100 = vpop.permute.xlu0 %3099
      %3101 = vrot.lane.b32.xlu0 %v3097, 64
      %v3102 = vpop.permute.xlu0 %3101
      %v3107 = vrot.slane %v3070, 1
      %v3108 = vrot.slane %v3071, 1
      %v3109 = vsel %vm767, %v3107, %v3108
      %3110 = vrot.lane.b32.xlu0 %v3109, 64
      %v3111 = vpop.permute.xlu0 %3110
      %3112 = vrot.lane.b32.xlu0 %v3108, 64
      %v3113 = vpop.permute.xlu0 %3112
      %v3116 = vsel %vm810, %v3064, %v3078
      %v3117 = vsel %vm810, %v3065, %v3080
      %v3118 = vsel %vm810, %v3066, %v3089
      %v3119 = vsel %vm810, %v3067, %v3091
      %v3120 = vsel %vm810, %v3068, %v3100
      %v3121 = vsel %vm810, %v3069, %v3102
      %v3122 = vsel %vm810, %v3070, %v3111
      %v3123 = vsel %vm810, %v3071, %v3113
      %v3124 = vpack.c.bf16 %v3117, %v3116
      %v3125 = vpack.c.bf16 %v3119, %v3118
      %v3126 = vpack.c.bf16 %v3121, %v3120
      %v3127 = vpack.c.bf16 %v3123, %v3122
      %v3128 = vld [vmem:[%s3] sm:$0xf]
      %v3129 = vld [vmem:[%s3 + $0x4] sm:$0xf]
      %v3130 = vld [vmem:[%s3 + $0x8] sm:$0xf]
      %v3131 = vld [vmem:[%s3 + $0xc] sm:$0xf]
      %v3132 = vld [vmem:[%s3 + $0x10] sm:$0xf]
      %v3133 = vld [vmem:[%s3 + $0x14] sm:$0xf]
      %v3134 = vld [vmem:[%s3 + $0x18] sm:$0xf]
      %v3135 = vld [vmem:[%s3 + $0x1c] sm:$0xf]
      %v3136 = vld [vmem:[%s3 + $0x20] sm:$0xf]
      %v3137 = vld [vmem:[%s3 + $0x24] sm:$0xf]
      %v3138 = vld [vmem:[%s3 + $0x28] sm:$0xf]
      %v3139 = vld [vmem:[%s3 + $0x2c] sm:$0xf]
      %v3140 = vld [vmem:[%s3 + $0x30] sm:$0xf]
      %v3141 = vld [vmem:[%s3 + $0x34] sm:$0xf]
      %v3142 = vld [vmem:[%s3 + $0x38] sm:$0xf]
      %v3143 = vld [vmem:[%s3 + $0x3c] sm:$0xf]
      %v3144 = vld [vmem:[%s3 + $0x40] sm:$0xf]
      %v3145 = vld [vmem:[%s3 + $0x44] sm:$0xf]
      %v3146 = vld [vmem:[%s3 + $0x48] sm:$0xf]
      %v3147 = vld [vmem:[%s3 + $0x4c] sm:$0xf]
      %v3148 = vld [vmem:[%s3 + $0x50] sm:$0xf]
      %v3149 = vld [vmem:[%s3 + $0x54] sm:$0xf]
      %v3150 = vld [vmem:[%s3 + $0x58] sm:$0xf]
      %v3151 = vld [vmem:[%s3 + $0x5c] sm:$0xf]
      %v3152 = vld [vmem:[%s3 + $0x60] sm:$0xf]
      %v3153 = vld [vmem:[%s3 + $0x64] sm:$0xf]
      %v3154 = vld [vmem:[%s3 + $0x68] sm:$0xf]
      %v3155 = vld [vmem:[%s3 + $0x6c] sm:$0xf]
      %v3156 = vld [vmem:[%s3 + $0x70] sm:$0xf]
      %v3157 = vld [vmem:[%s3 + $0x74] sm:$0xf]
      %v3158 = vld [vmem:[%s3 + $0x78] sm:$0xf]
      %v3159 = vld [vmem:[%s3 + $0x7c] sm:$0xf]
      %v3160 = vld [vmem:[%s3 + $0x80] sm:$0xf]
      %v3161 = vld [vmem:[%s3 + $0x84] sm:$0xf]
      %v3162 = vld [vmem:[%s3 + $0x88] sm:$0xf]
      %v3163 = vld [vmem:[%s3 + $0x8c] sm:$0xf]
      %v3164 = vld [vmem:[%s3 + $0x90] sm:$0xf]
      %v3165 = vld [vmem:[%s3 + $0x94] sm:$0xf]
      %v3166 = vld [vmem:[%s3 + $0x98] sm:$0xf]
      %v3167 = vld [vmem:[%s3 + $0x9c] sm:$0xf]
      %v3168 = vld [vmem:[%s3 + $0xa0] sm:$0xf]
      %v3169 = vld [vmem:[%s3 + $0xa4] sm:$0xf]
      %v3170 = vld [vmem:[%s3 + $0xa8] sm:$0xf]
      %v3171 = vld [vmem:[%s3 + $0xac] sm:$0xf]
      %v3172 = vld [vmem:[%s3 + $0xb0] sm:$0xf]
      %v3173 = vld [vmem:[%s3 + $0xb4] sm:$0xf]
      %v3174 = vld [vmem:[%s3 + $0xb8] sm:$0xf]
      %v3175 = vld [vmem:[%s3 + $0xbc] sm:$0xf]
      %v3176 = vld [vmem:[%s3 + $0xc0] sm:$0xf]
      %v3177 = vld [vmem:[%s3 + $0xc4] sm:$0xf]
      %v3178 = vld [vmem:[%s3 + $0xc8] sm:$0xf]
      %v3179 = vld [vmem:[%s3 + $0xcc] sm:$0xf]
      %v3180 = vld [vmem:[%s3 + $0xd0] sm:$0xf]
      %v3181 = vld [vmem:[%s3 + $0xd4] sm:$0xf]
      %v3182 = vld [vmem:[%s3 + $0xd8] sm:$0xf]
      %v3183 = vld [vmem:[%s3 + $0xdc] sm:$0xf]
      %v3184 = vld [vmem:[%s3 + $0xe0] sm:$0xf]
      %v3185 = vld [vmem:[%s3 + $0xe4] sm:$0xf]
      %v3186 = vld [vmem:[%s3 + $0xe8] sm:$0xf]
      %v3187 = vld [vmem:[%s3 + $0xec] sm:$0xf]
      %v3188 = vld [vmem:[%s3 + $0xf0] sm:$0xf]
      %v3189 = vld [vmem:[%s3 + $0xf4] sm:$0xf]
      %v3190 = vld [vmem:[%s3 + $0xf8] sm:$0xf]
      %v3191 = vld [vmem:[%s3 + $0xfc] sm:$0xf]
      %v3192 = vld [vmem:[%s4] sm:$0x1]
      %v3194 = vperm.slane %v3192, 0
      %v3260 = vunpack.c.l.b16 %v3128
      %v3261 = vunpack.c.l.b16 %v3129
      %v3262 = vunpack.c.l.b16 %v3130
      %v3263 = vunpack.c.l.b16 %v3131
      %v3264 = vunpack.c.l.b16 %v3132
      %v3265 = vunpack.c.l.b16 %v3133
      %v3266 = vunpack.c.l.b16 %v3134
      %v3267 = vunpack.c.l.b16 %v3135
      %v3268 = vunpack.c.l.b16 %v3136
      %v3269 = vunpack.c.l.b16 %v3137
      %v3270 = vunpack.c.l.b16 %v3138
      %v3271 = vunpack.c.l.b16 %v3139
      %v3272 = vunpack.c.l.b16 %v3140
      %v3273 = vunpack.c.l.b16 %v3141
      %v3274 = vunpack.c.l.b16 %v3142
      %v3275 = vunpack.c.l.b16 %v3143
      %v3276 = vunpack.c.l.b16 %v3144
      %v3277 = vunpack.c.l.b16 %v3145
      %v3278 = vunpack.c.l.b16 %v3146
      %v3279 = vunpack.c.l.b16 %v3147
      %v3280 = vunpack.c.l.b16 %v3148
      %v3281 = vunpack.c.l.b16 %v3149
      %v3282 = vunpack.c.l.b16 %v3150
      %v3283 = vunpack.c.l.b16 %v3151
      %v3284 = vunpack.c.l.b16 %v3152
      %v3285 = vunpack.c.l.b16 %v3153
      %v3286 = vunpack.c.l.b16 %v3154
      %v3287 = vunpack.c.l.b16 %v3155
      %v3288 = vunpack.c.l.b16 %v3156
      %v3289 = vunpack.c.l.b16 %v3157
      %v3290 = vunpack.c.l.b16 %v3158
      %v3291 = vunpack.c.l.b16 %v3159
      %v3292 = vunpack.c.l.b16 %v3160
      %v3293 = vunpack.c.l.b16 %v3161
      %v3294 = vunpack.c.l.b16 %v3162
      %v3295 = vunpack.c.l.b16 %v3163
      %v3296 = vunpack.c.l.b16 %v3164
      %v3297 = vunpack.c.l.b16 %v3165
      %v3298 = vunpack.c.l.b16 %v3166
      %v3299 = vunpack.c.l.b16 %v3167
      %v3300 = vunpack.c.l.b16 %v3168
      %v3301 = vunpack.c.l.b16 %v3169
      %v3302 = vunpack.c.l.b16 %v3170
      %v3303 = vunpack.c.l.b16 %v3171
      %v3304 = vunpack.c.l.b16 %v3172
      %v3305 = vunpack.c.l.b16 %v3173
      %v3306 = vunpack.c.l.b16 %v3174
      %v3307 = vunpack.c.l.b16 %v3175
      %v3308 = vunpack.c.l.b16 %v3176
      %v3309 = vunpack.c.l.b16 %v3177
      %v3310 = vunpack.c.l.b16 %v3178
      %v3311 = vunpack.c.l.b16 %v3179
      %v3312 = vunpack.c.l.b16 %v3180
      %v3313 = vunpack.c.l.b16 %v3181
      %v3314 = vunpack.c.l.b16 %v3182
      %v3315 = vunpack.c.l.b16 %v3183
      %v3316 = vunpack.c.l.b16 %v3184
      %v3317 = vunpack.c.l.b16 %v3185
      %v3318 = vunpack.c.l.b16 %v3186
      %v3319 = vunpack.c.l.b16 %v3187
      %v3320 = vunpack.c.l.b16 %v3188
      %v3321 = vunpack.c.l.b16 %v3189
      %v3322 = vunpack.c.l.b16 %v3190
      %v3323 = vunpack.c.l.b16 %v3191
      %v3324 = vpack.c.b16 %v3261, %v3260
      %v3325 = vpack.c.b16 %v3263, %v3262
      %v3326 = vpack.c.b16 %v3265, %v3264
      %v3327 = vpack.c.b16 %v3267, %v3266
      %v3328 = vpack.c.b16 %v3269, %v3268
      %v3329 = vpack.c.b16 %v3271, %v3270
      %v3330 = vpack.c.b16 %v3273, %v3272
      %v3331 = vpack.c.b16 %v3275, %v3274
      %v3332 = vpack.c.b16 %v3277, %v3276
      %v3333 = vpack.c.b16 %v3279, %v3278
      %v3334 = vpack.c.b16 %v3281, %v3280
      %v3335 = vpack.c.b16 %v3283, %v3282
      %v3336 = vpack.c.b16 %v3285, %v3284
      %v3337 = vpack.c.b16 %v3287, %v3286
      %v3338 = vpack.c.b16 %v3289, %v3288
      %v3339 = vpack.c.b16 %v3291, %v3290
      %v3340 = vpack.c.b16 %v3293, %v3292
      %v3341 = vpack.c.b16 %v3295, %v3294
      %v3342 = vpack.c.b16 %v3297, %v3296
      %v3343 = vpack.c.b16 %v3299, %v3298
      %v3344 = vpack.c.b16 %v3301, %v3300
      %v3345 = vpack.c.b16 %v3303, %v3302
      %v3346 = vpack.c.b16 %v3305, %v3304
      %v3347 = vpack.c.b16 %v3307, %v3306
      %v3348 = vpack.c.b16 %v3309, %v3308
      %v3349 = vpack.c.b16 %v3311, %v3310
      %v3350 = vpack.c.b16 %v3313, %v3312
      %v3351 = vpack.c.b16 %v3315, %v3314
      %v3352 = vpack.c.b16 %v3317, %v3316
      %v3353 = vpack.c.b16 %v3319, %v3318
      %v3354 = vpack.c.b16 %v3321, %v3320
      %v3355 = vpack.c.b16 %v3323, %v3322
      %3388 = vmatpush.bf16.msra.mxu0 %v3331
      %3389 = vmatpush.bf16.msra.mxu0 %v3330
      %3390 = vmatpush.bf16.msra.mxu0 %v3329
      %3391 = vmatpush.bf16.msra.mxu0 %v3328
      %3392 = vmatpush.bf16.msra.mxu0 %v3327
      %3393 = vmatpush.bf16.msra.mxu0 %v3326
      %3394 = vmatpush.bf16.msra.mxu0 %v3325
      %3395 = vmatpush.bf16.msra.mxu0 %v3324
      %3396 = vmatmul.bf16.gmra.mxu0 %v3124
      %v3397 = vpop.f32.mrf.mxu0
      %v3398 = vadd.f32 %v3194, %v3397
      %v3399 = vpop.f32.mrf.mxu0
      %v3400 = vadd.f32 %v3194, %v3399
      %3401 = vdwg.mxu0
      %3402 = vmatpush.bf16.msra.mxu0 %v3339
      %3403 = vmatpush.bf16.msra.mxu0 %v3338
      %3404 = vmatpush.bf16.msra.mxu0 %v3337
      %3405 = vmatpush.bf16.msra.mxu0 %v3336
      %3406 = vmatpush.bf16.msra.mxu0 %v3335
      %3407 = vmatpush.bf16.msra.mxu0 %v3334
      %3408 = vmatpush.bf16.msra.mxu0 %v3333
      %3409 = vmatpush.bf16.msra.mxu0 %v3332
      %3410 = vmatmul.bf16.gmra.mxu0 %v3125
      %v3411 = vpop.f32.mrf.mxu0
      %v3412 = vadd.f32 %v3398, %v3411
      %v3413 = vpop.f32.mrf.mxu0
      %v3414 = vadd.f32 %v3400, %v3413
      %3415 = vdwg.mxu0
      %3416 = vmatpush.bf16.msra.mxu0 %v3347
      %3417 = vmatpush.bf16.msra.mxu0 %v3346
      %3418 = vmatpush.bf16.msra.mxu0 %v3345
      %3419 = vmatpush.bf16.msra.mxu0 %v3344
      %3420 = vmatpush.bf16.msra.mxu0 %v3343
      %3421 = vmatpush.bf16.msra.mxu0 %v3342
      %3422 = vmatpush.bf16.msra.mxu0 %v3341
      %3423 = vmatpush.bf16.msra.mxu0 %v3340
      %3424 = vmatmul.bf16.gmra.mxu0 %v3126
      %v3425 = vpop.f32.mrf.mxu0
      %v3426 = vadd.f32 %v3412, %v3425
      %v3427 = vpop.f32.mrf.mxu0
      %v3428 = vadd.f32 %v3414, %v3427
      %3429 = vdwg.mxu0
      %3430 = vmatpush.bf16.msra.mxu0 %v3355
      %3431 = vmatpush.bf16.msra.mxu0 %v3354
      %3432 = vmatpush.bf16.msra.mxu0 %v3353
      %3433 = vmatpush.bf16.msra.mxu0 %v3352
      %3434 = vmatpush.bf16.msra.mxu0 %v3351
      %3435 = vmatpush.bf16.msra.mxu0 %v3350
      %3436 = vmatpush.bf16.msra.mxu0 %v3349
      %3437 = vmatpush.bf16.msra.mxu0 %v3348
      %3438 = vmatmul.bf16.gmra.mxu0 %v3127
      %v3439 = vpop.f32.mrf.mxu0
      %v3440 = vadd.f32 %v3426, %v3439
      %v3441 = vpop.f32.mrf.mxu0
      %v3442 = vadd.f32 %v3428, %v3441
      %3443 = vdwg.mxu0
      %v3444 = vmax.f32 %v3440, 0.0
      %v3445 = vmax.f32 %v3442, 0.0
      %3446 = vst.msk [vmem:[#allocation3 + $0x36] sm:$0xff] %vm810, %v3444
      %3447 = vst.msk [vmem:[#allocation3 + $0x3e] sm:$0x1] %vm1142, %v3445
      %v3448 = vld [vmem:[#allocation2 + $0x8c] sm:$0xff]
      %v3449 = vld [vmem:[#allocation2 + $0x94] sm:$0x3]
      %v3450 = vld [vmem:[#allocation2 + $0x96] sm:$0xff]
      %v3451 = vld [vmem:[#allocation2 + $0x9e] sm:$0x3]
      %v3452 = vld [vmem:[#allocation2 + $0xa0] sm:$0xff]
      %v3453 = vld [vmem:[#allocation2 + $0xa8] sm:$0x3]
      %v3454 = vld [vmem:[#allocation2 + $0xaa] sm:$0xff]
      %v3455 = vld [vmem:[#allocation2 + $0xb2] sm:$0x3]
      %v3458 = vrot.slane %v3448, 1
      %v3459 = vrot.slane %v3449, 1
      %v3460 = vsel %vm767, %v3458, %v3459
      %3461 = vrot.lane.b32.xlu0 %v3460, 64
      %v3462 = vpop.permute.xlu0 %3461
      %3463 = vrot.lane.b32.xlu0 %v3459, 64
      %v3464 = vpop.permute.xlu0 %3463
      %v3469 = vrot.slane %v3450, 1
      %v3470 = vrot.slane %v3451, 1
      %v3471 = vsel %vm767, %v3469, %v3470
      %3472 = vrot.lane.b32.xlu0 %v3471, 64
      %v3473 = vpop.permute.xlu0 %3472
      %3474 = vrot.lane.b32.xlu0 %v3470, 64
      %v3475 = vpop.permute.xlu0 %3474
      %v3480 = vrot.slane %v3452, 1
      %v3481 = vrot.slane %v3453, 1
      %v3482 = vsel %vm767, %v3480, %v3481
      %3483 = vrot.lane.b32.xlu0 %v3482, 64
      %v3484 = vpop.permute.xlu0 %3483
      %3485 = vrot.lane.b32.xlu0 %v3481, 64
      %v3486 = vpop.permute.xlu0 %3485
      %v3491 = vrot.slane %v3454, 1
      %v3492 = vrot.slane %v3455, 1
      %v3493 = vsel %vm767, %v3491, %v3492
      %3494 = vrot.lane.b32.xlu0 %v3493, 64
      %v3495 = vpop.permute.xlu0 %3494
      %3496 = vrot.lane.b32.xlu0 %v3492, 64
      %v3497 = vpop.permute.xlu0 %3496
      %v3500 = vsel %vm810, %v3448, %v3462
      %v3501 = vsel %vm810, %v3449, %v3464
      %v3502 = vsel %vm810, %v3450, %v3473
      %v3503 = vsel %vm810, %v3451, %v3475
      %v3504 = vsel %vm810, %v3452, %v3484
      %v3505 = vsel %vm810, %v3453, %v3486
      %v3506 = vsel %vm810, %v3454, %v3495
      %v3507 = vsel %vm810, %v3455, %v3497
      %v3508 = vpack.c.bf16 %v3501, %v3500
      %v3509 = vpack.c.bf16 %v3503, %v3502
      %v3510 = vpack.c.bf16 %v3505, %v3504
      %v3511 = vpack.c.bf16 %v3507, %v3506
      %v3512 = vld [vmem:[%s3] sm:$0xf]
      %v3513 = vld [vmem:[%s3 + $0x4] sm:$0xf]
      %v3514 = vld [vmem:[%s3 + $0x8] sm:$0xf]
      %v3515 = vld [vmem:[%s3 + $0xc] sm:$0xf]
      %v3516 = vld [vmem:[%s3 + $0x10] sm:$0xf]
      %v3517 = vld [vmem:[%s3 + $0x14] sm:$0xf]
      %v3518 = vld [vmem:[%s3 + $0x18] sm:$0xf]
      %v3519 = vld [vmem:[%s3 + $0x1c] sm:$0xf]
      %v3520 = vld [vmem:[%s3 + $0x20] sm:$0xf]
      %v3521 = vld [vmem:[%s3 + $0x24] sm:$0xf]
      %v3522 = vld [vmem:[%s3 + $0x28] sm:$0xf]
      %v3523 = vld [vmem:[%s3 + $0x2c] sm:$0xf]
      %v3524 = vld [vmem:[%s3 + $0x30] sm:$0xf]
      %v3525 = vld [vmem:[%s3 + $0x34] sm:$0xf]
      %v3526 = vld [vmem:[%s3 + $0x38] sm:$0xf]
      %v3527 = vld [vmem:[%s3 + $0x3c] sm:$0xf]
      %v3528 = vld [vmem:[%s3 + $0x40] sm:$0xf]
      %v3529 = vld [vmem:[%s3 + $0x44] sm:$0xf]
      %v3530 = vld [vmem:[%s3 + $0x48] sm:$0xf]
      %v3531 = vld [vmem:[%s3 + $0x4c] sm:$0xf]
      %v3532 = vld [vmem:[%s3 + $0x50] sm:$0xf]
      %v3533 = vld [vmem:[%s3 + $0x54] sm:$0xf]
      %v3534 = vld [vmem:[%s3 + $0x58] sm:$0xf]
      %v3535 = vld [vmem:[%s3 + $0x5c] sm:$0xf]
      %v3536 = vld [vmem:[%s3 + $0x60] sm:$0xf]
      %v3537 = vld [vmem:[%s3 + $0x64] sm:$0xf]
      %v3538 = vld [vmem:[%s3 + $0x68] sm:$0xf]
      %v3539 = vld [vmem:[%s3 + $0x6c] sm:$0xf]
      %v3540 = vld [vmem:[%s3 + $0x70] sm:$0xf]
      %v3541 = vld [vmem:[%s3 + $0x74] sm:$0xf]
      %v3542 = vld [vmem:[%s3 + $0x78] sm:$0xf]
      %v3543 = vld [vmem:[%s3 + $0x7c] sm:$0xf]
      %v3544 = vld [vmem:[%s3 + $0x80] sm:$0xf]
      %v3545 = vld [vmem:[%s3 + $0x84] sm:$0xf]
      %v3546 = vld [vmem:[%s3 + $0x88] sm:$0xf]
      %v3547 = vld [vmem:[%s3 + $0x8c] sm:$0xf]
      %v3548 = vld [vmem:[%s3 + $0x90] sm:$0xf]
      %v3549 = vld [vmem:[%s3 + $0x94] sm:$0xf]
      %v3550 = vld [vmem:[%s3 + $0x98] sm:$0xf]
      %v3551 = vld [vmem:[%s3 + $0x9c] sm:$0xf]
      %v3552 = vld [vmem:[%s3 + $0xa0] sm:$0xf]
      %v3553 = vld [vmem:[%s3 + $0xa4] sm:$0xf]
      %v3554 = vld [vmem:[%s3 + $0xa8] sm:$0xf]
      %v3555 = vld [vmem:[%s3 + $0xac] sm:$0xf]
      %v3556 = vld [vmem:[%s3 + $0xb0] sm:$0xf]
      %v3557 = vld [vmem:[%s3 + $0xb4] sm:$0xf]
      %v3558 = vld [vmem:[%s3 + $0xb8] sm:$0xf]
      %v3559 = vld [vmem:[%s3 + $0xbc] sm:$0xf]
      %v3560 = vld [vmem:[%s3 + $0xc0] sm:$0xf]
      %v3561 = vld [vmem:[%s3 + $0xc4] sm:$0xf]
      %v3562 = vld [vmem:[%s3 + $0xc8] sm:$0xf]
      %v3563 = vld [vmem:[%s3 + $0xcc] sm:$0xf]
      %v3564 = vld [vmem:[%s3 + $0xd0] sm:$0xf]
      %v3565 = vld [vmem:[%s3 + $0xd4] sm:$0xf]
      %v3566 = vld [vmem:[%s3 + $0xd8] sm:$0xf]
      %v3567 = vld [vmem:[%s3 + $0xdc] sm:$0xf]
      %v3568 = vld [vmem:[%s3 + $0xe0] sm:$0xf]
      %v3569 = vld [vmem:[%s3 + $0xe4] sm:$0xf]
      %v3570 = vld [vmem:[%s3 + $0xe8] sm:$0xf]
      %v3571 = vld [vmem:[%s3 + $0xec] sm:$0xf]
      %v3572 = vld [vmem:[%s3 + $0xf0] sm:$0xf]
      %v3573 = vld [vmem:[%s3 + $0xf4] sm:$0xf]
      %v3574 = vld [vmem:[%s3 + $0xf8] sm:$0xf]
      %v3575 = vld [vmem:[%s3 + $0xfc] sm:$0xf]
      %v3576 = vld [vmem:[%s4] sm:$0x1]
      %v3578 = vperm.slane %v3576, 0
      %v3644 = vunpack.c.l.b16 %v3512
      %v3645 = vunpack.c.l.b16 %v3513
      %v3646 = vunpack.c.l.b16 %v3514
      %v3647 = vunpack.c.l.b16 %v3515
      %v3648 = vunpack.c.l.b16 %v3516
      %v3649 = vunpack.c.l.b16 %v3517
      %v3650 = vunpack.c.l.b16 %v3518
      %v3651 = vunpack.c.l.b16 %v3519
      %v3652 = vunpack.c.l.b16 %v3520
      %v3653 = vunpack.c.l.b16 %v3521
      %v3654 = vunpack.c.l.b16 %v3522
      %v3655 = vunpack.c.l.b16 %v3523
      %v3656 = vunpack.c.l.b16 %v3524
      %v3657 = vunpack.c.l.b16 %v3525
      %v3658 = vunpack.c.l.b16 %v3526
      %v3659 = vunpack.c.l.b16 %v3527
      %v3660 = vunpack.c.l.b16 %v3528
      %v3661 = vunpack.c.l.b16 %v3529
      %v3662 = vunpack.c.l.b16 %v3530
      %v3663 = vunpack.c.l.b16 %v3531
      %v3664 = vunpack.c.l.b16 %v3532
      %v3665 = vunpack.c.l.b16 %v3533
      %v3666 = vunpack.c.l.b16 %v3534
      %v3667 = vunpack.c.l.b16 %v3535
      %v3668 = vunpack.c.l.b16 %v3536
      %v3669 = vunpack.c.l.b16 %v3537
      %v3670 = vunpack.c.l.b16 %v3538
      %v3671 = vunpack.c.l.b16 %v3539
      %v3672 = vunpack.c.l.b16 %v3540
      %v3673 = vunpack.c.l.b16 %v3541
      %v3674 = vunpack.c.l.b16 %v3542
      %v3675 = vunpack.c.l.b16 %v3543
      %v3676 = vunpack.c.l.b16 %v3544
      %v3677 = vunpack.c.l.b16 %v3545
      %v3678 = vunpack.c.l.b16 %v3546
      %v3679 = vunpack.c.l.b16 %v3547
      %v3680 = vunpack.c.l.b16 %v3548
      %v3681 = vunpack.c.l.b16 %v3549
      %v3682 = vunpack.c.l.b16 %v3550
      %v3683 = vunpack.c.l.b16 %v3551
      %v3684 = vunpack.c.l.b16 %v3552
      %v3685 = vunpack.c.l.b16 %v3553
      %v3686 = vunpack.c.l.b16 %v3554
      %v3687 = vunpack.c.l.b16 %v3555
      %v3688 = vunpack.c.l.b16 %v3556
      %v3689 = vunpack.c.l.b16 %v3557
      %v3690 = vunpack.c.l.b16 %v3558
      %v3691 = vunpack.c.l.b16 %v3559
      %v3692 = vunpack.c.l.b16 %v3560
      %v3693 = vunpack.c.l.b16 %v3561
      %v3694 = vunpack.c.l.b16 %v3562
      %v3695 = vunpack.c.l.b16 %v3563
      %v3696 = vunpack.c.l.b16 %v3564
      %v3697 = vunpack.c.l.b16 %v3565
      %v3698 = vunpack.c.l.b16 %v3566
      %v3699 = vunpack.c.l.b16 %v3567
      %v3700 = vunpack.c.l.b16 %v3568
      %v3701 = vunpack.c.l.b16 %v3569
      %v3702 = vunpack.c.l.b16 %v3570
      %v3703 = vunpack.c.l.b16 %v3571
      %v3704 = vunpack.c.l.b16 %v3572
      %v3705 = vunpack.c.l.b16 %v3573
      %v3706 = vunpack.c.l.b16 %v3574
      %v3707 = vunpack.c.l.b16 %v3575
      %v3708 = vpack.c.b16 %v3645, %v3644
      %v3709 = vpack.c.b16 %v3647, %v3646
      %v3710 = vpack.c.b16 %v3649, %v3648
      %v3711 = vpack.c.b16 %v3651, %v3650
      %v3712 = vpack.c.b16 %v3653, %v3652
      %v3713 = vpack.c.b16 %v3655, %v3654
      %v3714 = vpack.c.b16 %v3657, %v3656
      %v3715 = vpack.c.b16 %v3659, %v3658
      %v3716 = vpack.c.b16 %v3661, %v3660
      %v3717 = vpack.c.b16 %v3663, %v3662
      %v3718 = vpack.c.b16 %v3665, %v3664
      %v3719 = vpack.c.b16 %v3667, %v3666
      %v3720 = vpack.c.b16 %v3669, %v3668
      %v3721 = vpack.c.b16 %v3671, %v3670
      %v3722 = vpack.c.b16 %v3673, %v3672
      %v3723 = vpack.c.b16 %v3675, %v3674
      %v3724 = vpack.c.b16 %v3677, %v3676
      %v3725 = vpack.c.b16 %v3679, %v3678
      %v3726 = vpack.c.b16 %v3681, %v3680
      %v3727 = vpack.c.b16 %v3683, %v3682
      %v3728 = vpack.c.b16 %v3685, %v3684
      %v3729 = vpack.c.b16 %v3687, %v3686
      %v3730 = vpack.c.b16 %v3689, %v3688
      %v3731 = vpack.c.b16 %v3691, %v3690
      %v3732 = vpack.c.b16 %v3693, %v3692
      %v3733 = vpack.c.b16 %v3695, %v3694
      %v3734 = vpack.c.b16 %v3697, %v3696
      %v3735 = vpack.c.b16 %v3699, %v3698
      %v3736 = vpack.c.b16 %v3701, %v3700
      %v3737 = vpack.c.b16 %v3703, %v3702
      %v3738 = vpack.c.b16 %v3705, %v3704
      %v3739 = vpack.c.b16 %v3707, %v3706
      %3772 = vmatpush.bf16.msra.mxu0 %v3715
      %3773 = vmatpush.bf16.msra.mxu0 %v3714
      %3774 = vmatpush.bf16.msra.mxu0 %v3713
      %3775 = vmatpush.bf16.msra.mxu0 %v3712
      %3776 = vmatpush.bf16.msra.mxu0 %v3711
      %3777 = vmatpush.bf16.msra.mxu0 %v3710
      %3778 = vmatpush.bf16.msra.mxu0 %v3709
      %3779 = vmatpush.bf16.msra.mxu0 %v3708
      %3780 = vmatmul.bf16.gmra.mxu0 %v3508
      %v3781 = vpop.f32.mrf.mxu0
      %v3782 = vadd.f32 %v3578, %v3781
      %v3783 = vpop.f32.mrf.mxu0
      %v3784 = vadd.f32 %v3578, %v3783
      %3785 = vdwg.mxu0
      %3786 = vmatpush.bf16.msra.mxu0 %v3723
      %3787 = vmatpush.bf16.msra.mxu0 %v3722
      %3788 = vmatpush.bf16.msra.mxu0 %v3721
      %3789 = vmatpush.bf16.msra.mxu0 %v3720
      %3790 = vmatpush.bf16.msra.mxu0 %v3719
      %3791 = vmatpush.bf16.msra.mxu0 %v3718
      %3792 = vmatpush.bf16.msra.mxu0 %v3717
      %3793 = vmatpush.bf16.msra.mxu0 %v3716
      %3794 = vmatmul.bf16.gmra.mxu0 %v3509
      %v3795 = vpop.f32.mrf.mxu0
      %v3796 = vadd.f32 %v3782, %v3795
      %v3797 = vpop.f32.mrf.mxu0
      %v3798 = vadd.f32 %v3784, %v3797
      %3799 = vdwg.mxu0
      %3800 = vmatpush.bf16.msra.mxu0 %v3731
      %3801 = vmatpush.bf16.msra.mxu0 %v3730
      %3802 = vmatpush.bf16.msra.mxu0 %v3729
      %3803 = vmatpush.bf16.msra.mxu0 %v3728
      %3804 = vmatpush.bf16.msra.mxu0 %v3727
      %3805 = vmatpush.bf16.msra.mxu0 %v3726
      %3806 = vmatpush.bf16.msra.mxu0 %v3725
      %3807 = vmatpush.bf16.msra.mxu0 %v3724
      %3808 = vmatmul.bf16.gmra.mxu0 %v3510
      %v3809 = vpop.f32.mrf.mxu0
      %v3810 = vadd.f32 %v3796, %v3809
      %v3811 = vpop.f32.mrf.mxu0
      %v3812 = vadd.f32 %v3798, %v3811
      %3813 = vdwg.mxu0
      %3814 = vmatpush.bf16.msra.mxu0 %v3739
      %3815 = vmatpush.bf16.msra.mxu0 %v3738
      %3816 = vmatpush.bf16.msra.mxu0 %v3737
      %3817 = vmatpush.bf16.msra.mxu0 %v3736
      %3818 = vmatpush.bf16.msra.mxu0 %v3735
      %3819 = vmatpush.bf16.msra.mxu0 %v3734
      %3820 = vmatpush.bf16.msra.mxu0 %v3733
      %3821 = vmatpush.bf16.msra.mxu0 %v3732
      %3822 = vmatmul.bf16.gmra.mxu0 %v3511
      %v3823 = vpop.f32.mrf.mxu0
      %v3824 = vadd.f32 %v3810, %v3823
      %v3825 = vpop.f32.mrf.mxu0
      %v3826 = vadd.f32 %v3812, %v3825
      %3827 = vdwg.mxu0
      %v3828 = vmax.f32 %v3824, 0.0
      %v3829 = vmax.f32 %v3826, 0.0
      %3830 = vst.msk [vmem:[#allocation3 + $0x3f] sm:$0xff] %vm810, %v3828
      %3831 = vst.msk [vmem:[#allocation3 + $0x47] sm:$0x1] %vm1142, %v3829
      %v3832 = vld [vmem:[#allocation2 + $0xa0] sm:$0xff]
      %v3833 = vld [vmem:[#allocation2 + $0xa8] sm:$0x3]
      %v3834 = vld [vmem:[#allocation2 + $0xaa] sm:$0xff]
      %v3835 = vld [vmem:[#allocation2 + $0xb2] sm:$0x3]
      %v3836 = vld [vmem:[#allocation2 + $0xb4] sm:$0xff]
      %v3837 = vld [vmem:[#allocation2 + $0xbc] sm:$0x3]
      %v3838 = vld [vmem:[#allocation2 + $0xbe] sm:$0xff]
      %v3839 = vld [vmem:[#allocation2 + $0xc6] sm:$0x3]
      %v3842 = vrot.slane %v3832, 1
      %v3843 = vrot.slane %v3833, 1
      %v3844 = vsel %vm767, %v3842, %v3843
      %3845 = vrot.lane.b32.xlu0 %v3844, 64
      %v3846 = vpop.permute.xlu0 %3845
      %3847 = vrot.lane.b32.xlu0 %v3843, 64
      %v3848 = vpop.permute.xlu0 %3847
      %v3853 = vrot.slane %v3834, 1
      %v3854 = vrot.slane %v3835, 1
      %v3855 = vsel %vm767, %v3853, %v3854
      %3856 = vrot.lane.b32.xlu0 %v3855, 64
      %v3857 = vpop.permute.xlu0 %3856
      %3858 = vrot.lane.b32.xlu0 %v3854, 64
      %v3859 = vpop.permute.xlu0 %3858
      %v3864 = vrot.slane %v3836, 1
      %v3865 = vrot.slane %v3837, 1
      %v3866 = vsel %vm767, %v3864, %v3865
      %3867 = vrot.lane.b32.xlu0 %v3866, 64
      %v3868 = vpop.permute.xlu0 %3867
      %3869 = vrot.lane.b32.xlu0 %v3865, 64
      %v3870 = vpop.permute.xlu0 %3869
      %v3875 = vrot.slane %v3838, 1
      %v3876 = vrot.slane %v3839, 1
      %v3877 = vsel %vm767, %v3875, %v3876
      %3878 = vrot.lane.b32.xlu0 %v3877, 64
      %v3879 = vpop.permute.xlu0 %3878
      %3880 = vrot.lane.b32.xlu0 %v3876, 64
      %v3881 = vpop.permute.xlu0 %3880
      %v3884 = vsel %vm810, %v3832, %v3846
      %v3885 = vsel %vm810, %v3833, %v3848
      %v3886 = vsel %vm810, %v3834, %v3857
      %v3887 = vsel %vm810, %v3835, %v3859
      %v3888 = vsel %vm810, %v3836, %v3868
      %v3889 = vsel %vm810, %v3837, %v3870
      %v3890 = vsel %vm810, %v3838, %v3879
      %v3891 = vsel %vm810, %v3839, %v3881
      %v3892 = vpack.c.bf16 %v3885, %v3884
      %v3893 = vpack.c.bf16 %v3887, %v3886
      %v3894 = vpack.c.bf16 %v3889, %v3888
      %v3895 = vpack.c.bf16 %v3891, %v3890
      %v3896 = vld [vmem:[%s3] sm:$0xf]
      %v3897 = vld [vmem:[%s3 + $0x4] sm:$0xf]
      %v3898 = vld [vmem:[%s3 + $0x8] sm:$0xf]
      %v3899 = vld [vmem:[%s3 + $0xc] sm:$0xf]
      %v3900 = vld [vmem:[%s3 + $0x10] sm:$0xf]
      %v3901 = vld [vmem:[%s3 + $0x14] sm:$0xf]
      %v3902 = vld [vmem:[%s3 + $0x18] sm:$0xf]
      %v3903 = vld [vmem:[%s3 + $0x1c] sm:$0xf]
      %v3904 = vld [vmem:[%s3 + $0x20] sm:$0xf]
      %v3905 = vld [vmem:[%s3 + $0x24] sm:$0xf]
      %v3906 = vld [vmem:[%s3 + $0x28] sm:$0xf]
      %v3907 = vld [vmem:[%s3 + $0x2c] sm:$0xf]
      %v3908 = vld [vmem:[%s3 + $0x30] sm:$0xf]
      %v3909 = vld [vmem:[%s3 + $0x34] sm:$0xf]
      %v3910 = vld [vmem:[%s3 + $0x38] sm:$0xf]
      %v3911 = vld [vmem:[%s3 + $0x3c] sm:$0xf]
      %v3912 = vld [vmem:[%s3 + $0x40] sm:$0xf]
      %v3913 = vld [vmem:[%s3 + $0x44] sm:$0xf]
      %v3914 = vld [vmem:[%s3 + $0x48] sm:$0xf]
      %v3915 = vld [vmem:[%s3 + $0x4c] sm:$0xf]
      %v3916 = vld [vmem:[%s3 + $0x50] sm:$0xf]
      %v3917 = vld [vmem:[%s3 + $0x54] sm:$0xf]
      %v3918 = vld [vmem:[%s3 + $0x58] sm:$0xf]
      %v3919 = vld [vmem:[%s3 + $0x5c] sm:$0xf]
      %v3920 = vld [vmem:[%s3 + $0x60] sm:$0xf]
      %v3921 = vld [vmem:[%s3 + $0x64] sm:$0xf]
      %v3922 = vld [vmem:[%s3 + $0x68] sm:$0xf]
      %v3923 = vld [vmem:[%s3 + $0x6c] sm:$0xf]
      %v3924 = vld [vmem:[%s3 + $0x70] sm:$0xf]
      %v3925 = vld [vmem:[%s3 + $0x74] sm:$0xf]
      %v3926 = vld [vmem:[%s3 + $0x78] sm:$0xf]
      %v3927 = vld [vmem:[%s3 + $0x7c] sm:$0xf]
      %v3928 = vld [vmem:[%s3 + $0x80] sm:$0xf]
      %v3929 = vld [vmem:[%s3 + $0x84] sm:$0xf]
      %v3930 = vld [vmem:[%s3 + $0x88] sm:$0xf]
      %v3931 = vld [vmem:[%s3 + $0x8c] sm:$0xf]
      %v3932 = vld [vmem:[%s3 + $0x90] sm:$0xf]
      %v3933 = vld [vmem:[%s3 + $0x94] sm:$0xf]
      %v3934 = vld [vmem:[%s3 + $0x98] sm:$0xf]
      %v3935 = vld [vmem:[%s3 + $0x9c] sm:$0xf]
      %v3936 = vld [vmem:[%s3 + $0xa0] sm:$0xf]
      %v3937 = vld [vmem:[%s3 + $0xa4] sm:$0xf]
      %v3938 = vld [vmem:[%s3 + $0xa8] sm:$0xf]
      %v3939 = vld [vmem:[%s3 + $0xac] sm:$0xf]
      %v3940 = vld [vmem:[%s3 + $0xb0] sm:$0xf]
      %v3941 = vld [vmem:[%s3 + $0xb4] sm:$0xf]
      %v3942 = vld [vmem:[%s3 + $0xb8] sm:$0xf]
      %v3943 = vld [vmem:[%s3 + $0xbc] sm:$0xf]
      %v3944 = vld [vmem:[%s3 + $0xc0] sm:$0xf]
      %v3945 = vld [vmem:[%s3 + $0xc4] sm:$0xf]
      %v3946 = vld [vmem:[%s3 + $0xc8] sm:$0xf]
      %v3947 = vld [vmem:[%s3 + $0xcc] sm:$0xf]
      %v3948 = vld [vmem:[%s3 + $0xd0] sm:$0xf]
      %v3949 = vld [vmem:[%s3 + $0xd4] sm:$0xf]
      %v3950 = vld [vmem:[%s3 + $0xd8] sm:$0xf]
      %v3951 = vld [vmem:[%s3 + $0xdc] sm:$0xf]
      %v3952 = vld [vmem:[%s3 + $0xe0] sm:$0xf]
      %v3953 = vld [vmem:[%s3 + $0xe4] sm:$0xf]
      %v3954 = vld [vmem:[%s3 + $0xe8] sm:$0xf]
      %v3955 = vld [vmem:[%s3 + $0xec] sm:$0xf]
      %v3956 = vld [vmem:[%s3 + $0xf0] sm:$0xf]
      %v3957 = vld [vmem:[%s3 + $0xf4] sm:$0xf]
      %v3958 = vld [vmem:[%s3 + $0xf8] sm:$0xf]
      %v3959 = vld [vmem:[%s3 + $0xfc] sm:$0xf]
      %v3960 = vld [vmem:[%s4] sm:$0x1]
      %v3962 = vperm.slane %v3960, 0
      %v4028 = vunpack.c.l.b16 %v3896
      %v4029 = vunpack.c.l.b16 %v3897
      %v4030 = vunpack.c.l.b16 %v3898
      %v4031 = vunpack.c.l.b16 %v3899
      %v4032 = vunpack.c.l.b16 %v3900
      %v4033 = vunpack.c.l.b16 %v3901
      %v4034 = vunpack.c.l.b16 %v3902
      %v4035 = vunpack.c.l.b16 %v3903
      %v4036 = vunpack.c.l.b16 %v3904
      %v4037 = vunpack.c.l.b16 %v3905
      %v4038 = vunpack.c.l.b16 %v3906
      %v4039 = vunpack.c.l.b16 %v3907
      %v4040 = vunpack.c.l.b16 %v3908
      %v4041 = vunpack.c.l.b16 %v3909
      %v4042 = vunpack.c.l.b16 %v3910
      %v4043 = vunpack.c.l.b16 %v3911
      %v4044 = vunpack.c.l.b16 %v3912
      %v4045 = vunpack.c.l.b16 %v3913
      %v4046 = vunpack.c.l.b16 %v3914
      %v4047 = vunpack.c.l.b16 %v3915
      %v4048 = vunpack.c.l.b16 %v3916
      %v4049 = vunpack.c.l.b16 %v3917
      %v4050 = vunpack.c.l.b16 %v3918
      %v4051 = vunpack.c.l.b16 %v3919
      %v4052 = vunpack.c.l.b16 %v3920
      %v4053 = vunpack.c.l.b16 %v3921
      %v4054 = vunpack.c.l.b16 %v3922
      %v4055 = vunpack.c.l.b16 %v3923
      %v4056 = vunpack.c.l.b16 %v3924
      %v4057 = vunpack.c.l.b16 %v3925
      %v4058 = vunpack.c.l.b16 %v3926
      %v4059 = vunpack.c.l.b16 %v3927
      %v4060 = vunpack.c.l.b16 %v3928
      %v4061 = vunpack.c.l.b16 %v3929
      %v4062 = vunpack.c.l.b16 %v3930
      %v4063 = vunpack.c.l.b16 %v3931
      %v4064 = vunpack.c.l.b16 %v3932
      %v4065 = vunpack.c.l.b16 %v3933
      %v4066 = vunpack.c.l.b16 %v3934
      %v4067 = vunpack.c.l.b16 %v3935
      %v4068 = vunpack.c.l.b16 %v3936
      %v4069 = vunpack.c.l.b16 %v3937
      %v4070 = vunpack.c.l.b16 %v3938
      %v4071 = vunpack.c.l.b16 %v3939
      %v4072 = vunpack.c.l.b16 %v3940
      %v4073 = vunpack.c.l.b16 %v3941
      %v4074 = vunpack.c.l.b16 %v3942
      %v4075 = vunpack.c.l.b16 %v3943
      %v4076 = vunpack.c.l.b16 %v3944
      %v4077 = vunpack.c.l.b16 %v3945
      %v4078 = vunpack.c.l.b16 %v3946
      %v4079 = vunpack.c.l.b16 %v3947
      %v4080 = vunpack.c.l.b16 %v3948
      %v4081 = vunpack.c.l.b16 %v3949
      %v4082 = vunpack.c.l.b16 %v3950
      %v4083 = vunpack.c.l.b16 %v3951
      %v4084 = vunpack.c.l.b16 %v3952
      %v4085 = vunpack.c.l.b16 %v3953
      %v4086 = vunpack.c.l.b16 %v3954
      %v4087 = vunpack.c.l.b16 %v3955
      %v4088 = vunpack.c.l.b16 %v3956
      %v4089 = vunpack.c.l.b16 %v3957
      %v4090 = vunpack.c.l.b16 %v3958
      %v4091 = vunpack.c.l.b16 %v3959
      %v4092 = vpack.c.b16 %v4029, %v4028
      %v4093 = vpack.c.b16 %v4031, %v4030
      %v4094 = vpack.c.b16 %v4033, %v4032
      %v4095 = vpack.c.b16 %v4035, %v4034
      %v4096 = vpack.c.b16 %v4037, %v4036
      %v4097 = vpack.c.b16 %v4039, %v4038
      %v4098 = vpack.c.b16 %v4041, %v4040
      %v4099 = vpack.c.b16 %v4043, %v4042
      %v4100 = vpack.c.b16 %v4045, %v4044
      %v4101 = vpack.c.b16 %v4047, %v4046
      %v4102 = vpack.c.b16 %v4049, %v4048
      %v4103 = vpack.c.b16 %v4051, %v4050
      %v4104 = vpack.c.b16 %v4053, %v4052
      %v4105 = vpack.c.b16 %v4055, %v4054
      %v4106 = vpack.c.b16 %v4057, %v4056
      %v4107 = vpack.c.b16 %v4059, %v4058
      %v4108 = vpack.c.b16 %v4061, %v4060
      %v4109 = vpack.c.b16 %v4063, %v4062
      %v4110 = vpack.c.b16 %v4065, %v4064
      %v4111 = vpack.c.b16 %v4067, %v4066
      %v4112 = vpack.c.b16 %v4069, %v4068
      %v4113 = vpack.c.b16 %v4071, %v4070
      %v4114 = vpack.c.b16 %v4073, %v4072
      %v4115 = vpack.c.b16 %v4075, %v4074
      %v4116 = vpack.c.b16 %v4077, %v4076
      %v4117 = vpack.c.b16 %v4079, %v4078
      %v4118 = vpack.c.b16 %v4081, %v4080
      %v4119 = vpack.c.b16 %v4083, %v4082
      %v4120 = vpack.c.b16 %v4085, %v4084
      %v4121 = vpack.c.b16 %v4087, %v4086
      %v4122 = vpack.c.b16 %v4089, %v4088
      %v4123 = vpack.c.b16 %v4091, %v4090
      %4156 = vmatpush.bf16.msra.mxu0 %v4099
      %4157 = vmatpush.bf16.msra.mxu0 %v4098
      %4158 = vmatpush.bf16.msra.mxu0 %v4097
      %4159 = vmatpush.bf16.msra.mxu0 %v4096
      %4160 = vmatpush.bf16.msra.mxu0 %v4095
      %4161 = vmatpush.bf16.msra.mxu0 %v4094
      %4162 = vmatpush.bf16.msra.mxu0 %v4093
      %4163 = vmatpush.bf16.msra.mxu0 %v4092
      %4164 = vmatmul.bf16.gmra.mxu0 %v3892
      %v4165 = vpop.f32.mrf.mxu0
      %v4166 = vadd.f32 %v3962, %v4165
      %v4167 = vpop.f32.mrf.mxu0
      %v4168 = vadd.f32 %v3962, %v4167
      %4169 = vdwg.mxu0
      %4170 = vmatpush.bf16.msra.mxu0 %v4107
      %4171 = vmatpush.bf16.msra.mxu0 %v4106
      %4172 = vmatpush.bf16.msra.mxu0 %v4105
      %4173 = vmatpush.bf16.msra.mxu0 %v4104
      %4174 = vmatpush.bf16.msra.mxu0 %v4103
      %4175 = vmatpush.bf16.msra.mxu0 %v4102
      %4176 = vmatpush.bf16.msra.mxu0 %v4101
      %4177 = vmatpush.bf16.msra.mxu0 %v4100
      %4178 = vmatmul.bf16.gmra.mxu0 %v3893
      %v4179 = vpop.f32.mrf.mxu0
      %v4180 = vadd.f32 %v4166, %v4179
      %v4181 = vpop.f32.mrf.mxu0
      %v4182 = vadd.f32 %v4168, %v4181
      %4183 = vdwg.mxu0
      %4184 = vmatpush.bf16.msra.mxu0 %v4115
      %4185 = vmatpush.bf16.msra.mxu0 %v4114
      %4186 = vmatpush.bf16.msra.mxu0 %v4113
      %4187 = vmatpush.bf16.msra.mxu0 %v4112
      %4188 = vmatpush.bf16.msra.mxu0 %v4111
      %4189 = vmatpush.bf16.msra.mxu0 %v4110
      %4190 = vmatpush.bf16.msra.mxu0 %v4109
      %4191 = vmatpush.bf16.msra.mxu0 %v4108
      %4192 = vmatmul.bf16.gmra.mxu0 %v3894
      %v4193 = vpop.f32.mrf.mxu0
      %v4194 = vadd.f32 %v4180, %v4193
      %v4195 = vpop.f32.mrf.mxu0
      %v4196 = vadd.f32 %v4182, %v4195
      %4197 = vdwg.mxu0
      %4198 = vmatpush.bf16.msra.mxu0 %v4123
      %4199 = vmatpush.bf16.msra.mxu0 %v4122
      %4200 = vmatpush.bf16.msra.mxu0 %v4121
      %4201 = vmatpush.bf16.msra.mxu0 %v4120
      %4202 = vmatpush.bf16.msra.mxu0 %v4119
      %4203 = vmatpush.bf16.msra.mxu0 %v4118
      %4204 = vmatpush.bf16.msra.mxu0 %v4117
      %4205 = vmatpush.bf16.msra.mxu0 %v4116
      %4206 = vmatmul.bf16.gmra.mxu0 %v3895
      %v4207 = vpop.f32.mrf.mxu0
      %v4208 = vadd.f32 %v4194, %v4207
      %v4209 = vpop.f32.mrf.mxu0
      %v4210 = vadd.f32 %v4196, %v4209
      %4211 = vdwg.mxu0
      %v4212 = vmax.f32 %v4208, 0.0
      %v4213 = vmax.f32 %v4210, 0.0
      %4214 = vst.msk [vmem:[#allocation3 + $0x48] sm:$0xff] %vm810, %v4212
      %4215 = vst.msk [vmem:[#allocation3 + $0x50] sm:$0x1] %vm1142, %v4213
      %v4216 = vld [vmem:[#allocation3] sm:$0xff]
      %v4217 = vld [vmem:[#allocation3 + $0x8] sm:$0x1]
      %v4218 = vld [vmem:[#allocation3 + $0x9] sm:$0xff]
      %v4219 = vld [vmem:[#allocation3 + $0x11] sm:$0x1]
      %v4220 = vld [vmem:[#allocation3 + $0x12] sm:$0xff]
      %v4221 = vld [vmem:[#allocation3 + $0x1a] sm:$0x1]
      %v4223 = vrot.slane %v4216, 1
      %4224 = vrot.lane.b32.xlu0 %v4223, 64
      %v4225 = vpop.permute.xlu0 %4224
      %vm4228 = vcmask 1045504
      %v4229 = vrot.slane %v4216, 2
      %v4230 = vrot.slane %v4217, 2
      %v4231 = vsel %vm4228, %v4229, %v4230
      %4234 = vrot.lane.b32.xlu0 %v4218, 64
      %v4235 = vpop.permute.xlu0 %4234
      %v4237 = vrot.slane %v4218, 1
      %v4240 = vrot.slane %v4218, 2
      %v4241 = vrot.slane %v4219, 2
      %v4242 = vsel %vm4228, %v4240, %v4241
      %4243 = vrot.lane.b32.xlu0 %v4242, 64
      %v4244 = vpop.permute.xlu0 %4243
      %v4247 = vrot.slane %v4220, 1
      %4248 = vrot.lane.b32.xlu0 %v4247, 64
      %v4249 = vpop.permute.xlu0 %4248
      %v4252 = vrot.slane %v4220, 2
      %v4253 = vrot.slane %v4221, 2
      %v4254 = vsel %vm4228, %v4252, %v4253
      %v4256 = vsel %vm810, %v4216, %v4225
      %v4257 = vsel %vm810, %v4231, %v4235
      %v4258 = vsel %vm810, %v4237, %v4244
      %v4259 = vsel %vm810, %v4220, %v4249
      %v4260 = vpack.c.bf16 %v4256, %v4256
      %v4261 = vpack.c.bf16 %v4257, %v4257
      %v4262 = vpack.c.bf16 %v4258, %v4258
      %v4263 = vpack.c.bf16 %v4259, %v4259
      %v4264 = vpack.c.bf16 %v4254, %v4254
      %v4265 = vld [vmem:[%s5] sm:$0xf]
      %v4266 = vld [vmem:[%s5 + $0x4] sm:$0xf]
      %v4267 = vld [vmem:[%s5 + $0x8] sm:$0xf]
      %v4268 = vld [vmem:[%s5 + $0xc] sm:$0xf]
      %v4269 = vld [vmem:[%s5 + $0x10] sm:$0xf]
      %v4270 = vld [vmem:[%s5 + $0x14] sm:$0xf]
      %v4271 = vld [vmem:[%s5 + $0x18] sm:$0xf]
      %v4272 = vld [vmem:[%s5 + $0x1c] sm:$0xf]
      %v4273 = vld [vmem:[%s5 + $0x20] sm:$0xf]
      %v4274 = vld [vmem:[%s5 + $0x24] sm:$0xf]
      %v4275 = vld [vmem:[%s5 + $0x28] sm:$0xf]
      %v4276 = vld [vmem:[%s5 + $0x2c] sm:$0xf]
      %v4277 = vld [vmem:[%s5 + $0x30] sm:$0xf]
      %v4278 = vld [vmem:[%s5 + $0x34] sm:$0xf]
      %v4279 = vld [vmem:[%s5 + $0x38] sm:$0xf]
      %v4280 = vld [vmem:[%s5 + $0x3c] sm:$0xf]
      %v4281 = vld [vmem:[%s5 + $0x40] sm:$0xf]
      %v4282 = vld [vmem:[%s5 + $0x44] sm:$0xf]
      %v4283 = vld [vmem:[%s5 + $0x48] sm:$0xf]
      %v4284 = vld [vmem:[%s5 + $0x4c] sm:$0xf]
      %v4285 = vld [vmem:[%s5 + $0x50] sm:$0xf]
      %v4286 = vld [vmem:[%s5 + $0x54] sm:$0xf]
      %v4287 = vld [vmem:[%s5 + $0x58] sm:$0xf]
      %v4288 = vld [vmem:[%s5 + $0x5c] sm:$0xf]
      %v4289 = vld [vmem:[%s5 + $0x60] sm:$0xf]
      %v4290 = vld [vmem:[%s5 + $0x64] sm:$0xf]
      %v4291 = vld [vmem:[%s5 + $0x68] sm:$0xf]
      %v4292 = vld [vmem:[%s5 + $0x6c] sm:$0xf]
      %v4293 = vld [vmem:[%s5 + $0x70] sm:$0xf]
      %v4294 = vld [vmem:[%s5 + $0x74] sm:$0xf]
      %v4295 = vld [vmem:[%s5 + $0x78] sm:$0xf]
      %v4296 = vld [vmem:[%s5 + $0x7c] sm:$0xf]
      %v4297 = vld [vmem:[%s5 + $0x80] sm:$0xf]
      %v4298 = vld [vmem:[%s5 + $0x84] sm:$0xf]
      %v4299 = vld [vmem:[%s5 + $0x88] sm:$0xf]
      %v4300 = vld [vmem:[%s5 + $0x8c] sm:$0xf]
      %v4301 = vld [vmem:[%s5 + $0x90] sm:$0xf]
      %v4302 = vld [vmem:[%s5 + $0x94] sm:$0xf]
      %v4303 = vld [vmem:[%s5 + $0x98] sm:$0xf]
      %v4304 = vld [vmem:[%s5 + $0x9c] sm:$0xf]
      %v4305 = vld [vmem:[%s5 + $0xa0] sm:$0xf]
      %v4306 = vld [vmem:[%s5 + $0xa4] sm:$0xf]
      %v4307 = vld [vmem:[%s5 + $0xa8] sm:$0xf]
      %v4308 = vld [vmem:[%s5 + $0xac] sm:$0xf]
      %v4309 = vld [vmem:[%s5 + $0xb0] sm:$0xf]
      %v4310 = vld [vmem:[%s5 + $0xb4] sm:$0xf]
      %v4311 = vld [vmem:[%s5 + $0xb8] sm:$0xf]
      %v4312 = vld [vmem:[%s5 + $0xbc] sm:$0xf]
      %v4313 = vld [vmem:[%s5 + $0xc0] sm:$0xf]
      %v4314 = vld [vmem:[%s5 + $0xc4] sm:$0xf]
      %v4315 = vld [vmem:[%s5 + $0xc8] sm:$0xf]
      %v4316 = vld [vmem:[%s5 + $0xcc] sm:$0xf]
      %v4317 = vld [vmem:[%s5 + $0xd0] sm:$0xf]
      %v4318 = vld [vmem:[%s5 + $0xd4] sm:$0xf]
      %v4319 = vld [vmem:[%s5 + $0xd8] sm:$0xf]
      %v4320 = vld [vmem:[%s5 + $0xdc] sm:$0xf]
      %v4321 = vld [vmem:[%s5 + $0xe0] sm:$0xf]
      %v4322 = vld [vmem:[%s5 + $0xe4] sm:$0xf]
      %v4323 = vld [vmem:[%s5 + $0xe8] sm:$0xf]
      %v4324 = vld [vmem:[%s5 + $0xec] sm:$0xf]
      %v4325 = vld [vmem:[%s5 + $0xf0] sm:$0xf]
      %v4326 = vld [vmem:[%s5 + $0xf4] sm:$0xf]
      %v4327 = vld [vmem:[%s5 + $0xf8] sm:$0xf]
      %v4328 = vld [vmem:[%s5 + $0xfc] sm:$0xf]
      %v4329 = vld [vmem:[%s5 + $0x100] sm:$0xf]
      %v4330 = vld [vmem:[%s5 + $0x104] sm:$0xf]
      %v4331 = vld [vmem:[%s5 + $0x108] sm:$0xf]
      %v4332 = vld [vmem:[%s5 + $0x10c] sm:$0xf]
      %v4333 = vld [vmem:[%s5 + $0x110] sm:$0xf]
      %v4334 = vld [vmem:[%s5 + $0x114] sm:$0xf]
      %v4335 = vld [vmem:[%s5 + $0x118] sm:$0xf]
      %v4336 = vld [vmem:[%s5 + $0x11c] sm:$0xf]
      %v4337 = vld [vmem:[%s6] sm:$0x1]
      %v4339 = vperm.slane %v4337, 0
      %v4413 = vunpack.c.l.b16 %v4265
      %v4414 = vunpack.c.l.b16 %v4266
      %v4415 = vunpack.c.l.b16 %v4267
      %v4416 = vunpack.c.l.b16 %v4268
      %v4417 = vunpack.c.l.b16 %v4269
      %v4418 = vunpack.c.l.b16 %v4270
      %v4419 = vunpack.c.l.b16 %v4271
      %v4420 = vunpack.c.l.b16 %v4272
      %v4421 = vunpack.c.l.b16 %v4273
      %v4422 = vunpack.c.l.b16 %v4274
      %v4423 = vunpack.c.l.b16 %v4275
      %v4424 = vunpack.c.l.b16 %v4276
      %v4425 = vunpack.c.l.b16 %v4277
      %v4426 = vunpack.c.l.b16 %v4278
      %v4427 = vunpack.c.l.b16 %v4279
      %v4428 = vunpack.c.l.b16 %v4280
      %v4429 = vunpack.c.l.b16 %v4281
      %v4430 = vunpack.c.l.b16 %v4282
      %v4431 = vunpack.c.l.b16 %v4283
      %v4432 = vunpack.c.l.b16 %v4284
      %v4433 = vunpack.c.l.b16 %v4285
      %v4434 = vunpack.c.l.b16 %v4286
      %v4435 = vunpack.c.l.b16 %v4287
      %v4436 = vunpack.c.l.b16 %v4288
      %v4437 = vunpack.c.l.b16 %v4289
      %v4438 = vunpack.c.l.b16 %v4290
      %v4439 = vunpack.c.l.b16 %v4291
      %v4440 = vunpack.c.l.b16 %v4292
      %v4441 = vunpack.c.l.b16 %v4293
      %v4442 = vunpack.c.l.b16 %v4294
      %v4443 = vunpack.c.l.b16 %v4295
      %v4444 = vunpack.c.l.b16 %v4296
      %v4445 = vunpack.c.l.b16 %v4297
      %v4446 = vunpack.c.l.b16 %v4298
      %v4447 = vunpack.c.l.b16 %v4299
      %v4448 = vunpack.c.l.b16 %v4300
      %v4449 = vunpack.c.l.b16 %v4301
      %v4450 = vunpack.c.l.b16 %v4302
      %v4451 = vunpack.c.l.b16 %v4303
      %v4452 = vunpack.c.l.b16 %v4304
      %v4453 = vunpack.c.l.b16 %v4305
      %v4454 = vunpack.c.l.b16 %v4306
      %v4455 = vunpack.c.l.b16 %v4307
      %v4456 = vunpack.c.l.b16 %v4308
      %v4457 = vunpack.c.l.b16 %v4309
      %v4458 = vunpack.c.l.b16 %v4310
      %v4459 = vunpack.c.l.b16 %v4311
      %v4460 = vunpack.c.l.b16 %v4312
      %v4461 = vunpack.c.l.b16 %v4313
      %v4462 = vunpack.c.l.b16 %v4314
      %v4463 = vunpack.c.l.b16 %v4315
      %v4464 = vunpack.c.l.b16 %v4316
      %v4465 = vunpack.c.l.b16 %v4317
      %v4466 = vunpack.c.l.b16 %v4318
      %v4467 = vunpack.c.l.b16 %v4319
      %v4468 = vunpack.c.l.b16 %v4320
      %v4469 = vunpack.c.l.b16 %v4321
      %v4470 = vunpack.c.l.b16 %v4322
      %v4471 = vunpack.c.l.b16 %v4323
      %v4472 = vunpack.c.l.b16 %v4324
      %v4473 = vunpack.c.l.b16 %v4325
      %v4474 = vunpack.c.l.b16 %v4326
      %v4475 = vunpack.c.l.b16 %v4327
      %v4476 = vunpack.c.l.b16 %v4328
      %v4477 = vunpack.c.l.b16 %v4329
      %v4478 = vunpack.c.l.b16 %v4330
      %v4479 = vunpack.c.l.b16 %v4331
      %v4480 = vunpack.c.l.b16 %v4332
      %v4481 = vunpack.c.l.b16 %v4333
      %v4482 = vunpack.c.l.b16 %v4334
      %v4483 = vunpack.c.l.b16 %v4335
      %v4484 = vunpack.c.l.b16 %v4336
      %v4485 = vpack.c.b16 %v4414, %v4413
      %v4486 = vpack.c.b16 %v4416, %v4415
      %v4487 = vpack.c.b16 %v4418, %v4417
      %v4488 = vpack.c.b16 %v4420, %v4419
      %v4489 = vpack.c.b16 %v4422, %v4421
      %v4490 = vpack.c.b16 %v4424, %v4423
      %v4491 = vpack.c.b16 %v4426, %v4425
      %v4492 = vpack.c.b16 %v4428, %v4427
      %v4493 = vpack.c.b16 %v4430, %v4429
      %v4494 = vpack.c.b16 %v4432, %v4431
      %v4495 = vpack.c.b16 %v4434, %v4433
      %v4496 = vpack.c.b16 %v4436, %v4435
      %v4497 = vpack.c.b16 %v4438, %v4437
      %v4498 = vpack.c.b16 %v4440, %v4439
      %v4499 = vpack.c.b16 %v4442, %v4441
      %v4500 = vpack.c.b16 %v4444, %v4443
      %v4501 = vpack.c.b16 %v4446, %v4445
      %v4502 = vpack.c.b16 %v4448, %v4447
      %v4503 = vpack.c.b16 %v4450, %v4449
      %v4504 = vpack.c.b16 %v4452, %v4451
      %v4505 = vpack.c.b16 %v4454, %v4453
      %v4506 = vpack.c.b16 %v4456, %v4455
      %v4507 = vpack.c.b16 %v4458, %v4457
      %v4508 = vpack.c.b16 %v4460, %v4459
      %v4509 = vpack.c.b16 %v4462, %v4461
      %v4510 = vpack.c.b16 %v4464, %v4463
      %v4511 = vpack.c.b16 %v4466, %v4465
      %v4512 = vpack.c.b16 %v4468, %v4467
      %v4513 = vpack.c.b16 %v4470, %v4469
      %v4514 = vpack.c.b16 %v4472, %v4471
      %v4515 = vpack.c.b16 %v4474, %v4473
      %v4516 = vpack.c.b16 %v4476, %v4475
      %v4517 = vpack.c.b16 %v4478, %v4477
      %v4518 = vpack.c.b16 %v4480, %v4479
      %v4519 = vpack.c.b16 %v4482, %v4481
      %v4520 = vpack.c.b16 %v4484, %v4483
      %v4558 = vsel %vm810, %v4264, 0
      %4560 = vmatpush.bf16.msra.mxu0 %v4492
      %4561 = vmatpush.bf16.msra.mxu0 %v4491
      %4562 = vmatpush.bf16.msra.mxu0 %v4490
      %4563 = vmatpush.bf16.msra.mxu0 %v4489
      %4564 = vmatpush.bf16.msra.mxu0 %v4488
      %4565 = vmatpush.bf16.msra.mxu0 %v4487
      %4566 = vmatpush.bf16.msra.mxu0 %v4486
      %4567 = vmatpush.bf16.msra.mxu0 %v4485
      %4568 = vmatmul.bf16.gmra.mxu0 %v4260
      %v4569 = vpop.f32.mrf.mxu0
      %v4570 = vadd.f32 %v4339, %v4569
      %v4571 = vpop.f32.mrf.mxu0
      %4572 = vdwg.mxu0
      %4573 = vmatpush.bf16.msra.mxu0 %v4500
      %4574 = vmatpush.bf16.msra.mxu0 %v4499
      %4575 = vmatpush.bf16.msra.mxu0 %v4498
      %4576 = vmatpush.bf16.msra.mxu0 %v4497
      %4577 = vmatpush.bf16.msra.mxu0 %v4496
      %4578 = vmatpush.bf16.msra.mxu0 %v4495
      %4579 = vmatpush.bf16.msra.mxu0 %v4494
      %4580 = vmatpush.bf16.msra.mxu0 %v4493
      %4581 = vmatmul.bf16.gmra.mxu0 %v4261
      %v4582 = vpop.f32.mrf.mxu0
      %v4583 = vadd.f32 %v4570, %v4582
      %v4584 = vpop.f32.mrf.mxu0
      %4585 = vdwg.mxu0
      %4586 = vmatpush.bf16.msra.mxu0 %v4508
      %4587 = vmatpush.bf16.msra.mxu0 %v4507
      %4588 = vmatpush.bf16.msra.mxu0 %v4506
      %4589 = vmatpush.bf16.msra.mxu0 %v4505
      %4590 = vmatpush.bf16.msra.mxu0 %v4504
      %4591 = vmatpush.bf16.msra.mxu0 %v4503
      %4592 = vmatpush.bf16.msra.mxu0 %v4502
      %4593 = vmatpush.bf16.msra.mxu0 %v4501
      %4594 = vmatmul.bf16.gmra.mxu0 %v4262
      %v4595 = vpop.f32.mrf.mxu0
      %v4596 = vadd.f32 %v4583, %v4595
      %v4597 = vpop.f32.mrf.mxu0
      %4598 = vdwg.mxu0
      %4599 = vmatpush.bf16.msra.mxu0 %v4516
      %4600 = vmatpush.bf16.msra.mxu0 %v4515
      %4601 = vmatpush.bf16.msra.mxu0 %v4514
      %4602 = vmatpush.bf16.msra.mxu0 %v4513
      %4603 = vmatpush.bf16.msra.mxu0 %v4512
      %4604 = vmatpush.bf16.msra.mxu0 %v4511
      %4605 = vmatpush.bf16.msra.mxu0 %v4510
      %4606 = vmatpush.bf16.msra.mxu0 %v4509
      %4607 = vmatmul.bf16.gmra.mxu0 %v4263
      %v4608 = vpop.f32.mrf.mxu0
      %v4609 = vadd.f32 %v4596, %v4608
      %v4610 = vpop.f32.mrf.mxu0
      %4611 = vdwg.mxu0
      %4612 = vmatpush.bf16.msra.mxu0 0
      %4613 = vmatpush.bf16.msra.mxu0 0
      %4614 = vmatpush.bf16.msra.mxu0 0
      %4615 = vmatpush.bf16.msra.mxu0 0
      %4616 = vmatpush.bf16.msra.mxu0 %v4520
      %4617 = vmatpush.bf16.msra.mxu0 %v4519
      %4618 = vmatpush.bf16.msra.mxu0 %v4518
      %4619 = vmatpush.bf16.msra.mxu0 %v4517
      %4620 = vmatmul.bf16.gmra.mxu0 %v4558
      %v4621 = vpop.f32.mrf.mxu0
      %v4622 = vadd.f32 %v4609, %v4621
      %v4623 = vpop.f32.mrf.mxu0
      %4624 = vdwg.mxu0
      %v4625 = vmax.f32 %v4622, 0.0
      %vm4626 = vcmask 522240
      %4627 = vst.msk [vmem:[%s278] sm:$0x7f] %vm4626, %v4625
      %v4628 = vld [vmem:[#allocation3 + $0x9] sm:$0xff]
      %v4629 = vld [vmem:[#allocation3 + $0x11] sm:$0x1]
      %v4630 = vld [vmem:[#allocation3 + $0x12] sm:$0xff]
      %v4631 = vld [vmem:[#allocation3 + $0x1a] sm:$0x1]
      %v4632 = vld [vmem:[#allocation3 + $0x1b] sm:$0xff]
      %v4633 = vld [vmem:[#allocation3 + $0x23] sm:$0x1]
      %v4635 = vrot.slane %v4628, 1
      %4636 = vrot.lane.b32.xlu0 %v4635, 64
      %v4637 = vpop.permute.xlu0 %4636
      %v4640 = vrot.slane %v4628, 2
      %v4641 = vrot.slane %v4629, 2
      %v4642 = vsel %vm4228, %v4640, %v4641
      %4645 = vrot.lane.b32.xlu0 %v4630, 64
      %v4646 = vpop.permute.xlu0 %4645
      %v4648 = vrot.slane %v4630, 1
      %v4651 = vrot.slane %v4630, 2
      %v4652 = vrot.slane %v4631, 2
      %v4653 = vsel %vm4228, %v4651, %v4652
      %4654 = vrot.lane.b32.xlu0 %v4653, 64
      %v4655 = vpop.permute.xlu0 %4654
      %v4658 = vrot.slane %v4632, 1
      %4659 = vrot.lane.b32.xlu0 %v4658, 64
      %v4660 = vpop.permute.xlu0 %4659
      %v4663 = vrot.slane %v4632, 2
      %v4664 = vrot.slane %v4633, 2
      %v4665 = vsel %vm4228, %v4663, %v4664
      %v4667 = vsel %vm810, %v4628, %v4637
      %v4668 = vsel %vm810, %v4642, %v4646
      %v4669 = vsel %vm810, %v4648, %v4655
      %v4670 = vsel %vm810, %v4632, %v4660
      %v4671 = vpack.c.bf16 %v4667, %v4667
      %v4672 = vpack.c.bf16 %v4668, %v4668
      %v4673 = vpack.c.bf16 %v4669, %v4669
      %v4674 = vpack.c.bf16 %v4670, %v4670
      %v4675 = vpack.c.bf16 %v4665, %v4665
      %v4676 = vld [vmem:[%s5] sm:$0xf]
      %v4677 = vld [vmem:[%s5 + $0x4] sm:$0xf]
      %v4678 = vld [vmem:[%s5 + $0x8] sm:$0xf]
      %v4679 = vld [vmem:[%s5 + $0xc] sm:$0xf]
      %v4680 = vld [vmem:[%s5 + $0x10] sm:$0xf]
      %v4681 = vld [vmem:[%s5 + $0x14] sm:$0xf]
      %v4682 = vld [vmem:[%s5 + $0x18] sm:$0xf]
      %v4683 = vld [vmem:[%s5 + $0x1c] sm:$0xf]
      %v4684 = vld [vmem:[%s5 + $0x20] sm:$0xf]
      %v4685 = vld [vmem:[%s5 + $0x24] sm:$0xf]
      %v4686 = vld [vmem:[%s5 + $0x28] sm:$0xf]
      %v4687 = vld [vmem:[%s5 + $0x2c] sm:$0xf]
      %v4688 = vld [vmem:[%s5 + $0x30] sm:$0xf]
      %v4689 = vld [vmem:[%s5 + $0x34] sm:$0xf]
      %v4690 = vld [vmem:[%s5 + $0x38] sm:$0xf]
      %v4691 = vld [vmem:[%s5 + $0x3c] sm:$0xf]
      %v4692 = vld [vmem:[%s5 + $0x40] sm:$0xf]
      %v4693 = vld [vmem:[%s5 + $0x44] sm:$0xf]
      %v4694 = vld [vmem:[%s5 + $0x48] sm:$0xf]
      %v4695 = vld [vmem:[%s5 + $0x4c] sm:$0xf]
      %v4696 = vld [vmem:[%s5 + $0x50] sm:$0xf]
      %v4697 = vld [vmem:[%s5 + $0x54] sm:$0xf]
      %v4698 = vld [vmem:[%s5 + $0x58] sm:$0xf]
      %v4699 = vld [vmem:[%s5 + $0x5c] sm:$0xf]
      %v4700 = vld [vmem:[%s5 + $0x60] sm:$0xf]
      %v4701 = vld [vmem:[%s5 + $0x64] sm:$0xf]
      %v4702 = vld [vmem:[%s5 + $0x68] sm:$0xf]
      %v4703 = vld [vmem:[%s5 + $0x6c] sm:$0xf]
      %v4704 = vld [vmem:[%s5 + $0x70] sm:$0xf]
      %v4705 = vld [vmem:[%s5 + $0x74] sm:$0xf]
      %v4706 = vld [vmem:[%s5 + $0x78] sm:$0xf]
      %v4707 = vld [vmem:[%s5 + $0x7c] sm:$0xf]
      %v4708 = vld [vmem:[%s5 + $0x80] sm:$0xf]
      %v4709 = vld [vmem:[%s5 + $0x84] sm:$0xf]
      %v4710 = vld [vmem:[%s5 + $0x88] sm:$0xf]
      %v4711 = vld [vmem:[%s5 + $0x8c] sm:$0xf]
      %v4712 = vld [vmem:[%s5 + $0x90] sm:$0xf]
      %v4713 = vld [vmem:[%s5 + $0x94] sm:$0xf]
      %v4714 = vld [vmem:[%s5 + $0x98] sm:$0xf]
      %v4715 = vld [vmem:[%s5 + $0x9c] sm:$0xf]
      %v4716 = vld [vmem:[%s5 + $0xa0] sm:$0xf]
      %v4717 = vld [vmem:[%s5 + $0xa4] sm:$0xf]
      %v4718 = vld [vmem:[%s5 + $0xa8] sm:$0xf]
      %v4719 = vld [vmem:[%s5 + $0xac] sm:$0xf]
      %v4720 = vld [vmem:[%s5 + $0xb0] sm:$0xf]
      %v4721 = vld [vmem:[%s5 + $0xb4] sm:$0xf]
      %v4722 = vld [vmem:[%s5 + $0xb8] sm:$0xf]
      %v4723 = vld [vmem:[%s5 + $0xbc] sm:$0xf]
      %v4724 = vld [vmem:[%s5 + $0xc0] sm:$0xf]
      %v4725 = vld [vmem:[%s5 + $0xc4] sm:$0xf]
      %v4726 = vld [vmem:[%s5 + $0xc8] sm:$0xf]
      %v4727 = vld [vmem:[%s5 + $0xcc] sm:$0xf]
      %v4728 = vld [vmem:[%s5 + $0xd0] sm:$0xf]
      %v4729 = vld [vmem:[%s5 + $0xd4] sm:$0xf]
      %v4730 = vld [vmem:[%s5 + $0xd8] sm:$0xf]
      %v4731 = vld [vmem:[%s5 + $0xdc] sm:$0xf]
      %v4732 = vld [vmem:[%s5 + $0xe0] sm:$0xf]
      %v4733 = vld [vmem:[%s5 + $0xe4] sm:$0xf]
      %v4734 = vld [vmem:[%s5 + $0xe8] sm:$0xf]
      %v4735 = vld [vmem:[%s5 + $0xec] sm:$0xf]
      %v4736 = vld [vmem:[%s5 + $0xf0] sm:$0xf]
      %v4737 = vld [vmem:[%s5 + $0xf4] sm:$0xf]
      %v4738 = vld [vmem:[%s5 + $0xf8] sm:$0xf]
      %v4739 = vld [vmem:[%s5 + $0xfc] sm:$0xf]
      %v4740 = vld [vmem:[%s5 + $0x100] sm:$0xf]
      %v4741 = vld [vmem:[%s5 + $0x104] sm:$0xf]
      %v4742 = vld [vmem:[%s5 + $0x108] sm:$0xf]
      %v4743 = vld [vmem:[%s5 + $0x10c] sm:$0xf]
      %v4744 = vld [vmem:[%s5 + $0x110] sm:$0xf]
      %v4745 = vld [vmem:[%s5 + $0x114] sm:$0xf]
      %v4746 = vld [vmem:[%s5 + $0x118] sm:$0xf]
      %v4747 = vld [vmem:[%s5 + $0x11c] sm:$0xf]
      %v4748 = vld [vmem:[%s6] sm:$0x1]
      %v4750 = vperm.slane %v4748, 0
      %v4824 = vunpack.c.l.b16 %v4676
      %v4825 = vunpack.c.l.b16 %v4677
      %v4826 = vunpack.c.l.b16 %v4678
      %v4827 = vunpack.c.l.b16 %v4679
      %v4828 = vunpack.c.l.b16 %v4680
      %v4829 = vunpack.c.l.b16 %v4681
      %v4830 = vunpack.c.l.b16 %v4682
      %v4831 = vunpack.c.l.b16 %v4683
      %v4832 = vunpack.c.l.b16 %v4684
      %v4833 = vunpack.c.l.b16 %v4685
      %v4834 = vunpack.c.l.b16 %v4686
      %v4835 = vunpack.c.l.b16 %v4687
      %v4836 = vunpack.c.l.b16 %v4688
      %v4837 = vunpack.c.l.b16 %v4689
      %v4838 = vunpack.c.l.b16 %v4690
      %v4839 = vunpack.c.l.b16 %v4691
      %v4840 = vunpack.c.l.b16 %v4692
      %v4841 = vunpack.c.l.b16 %v4693
      %v4842 = vunpack.c.l.b16 %v4694
      %v4843 = vunpack.c.l.b16 %v4695
      %v4844 = vunpack.c.l.b16 %v4696
      %v4845 = vunpack.c.l.b16 %v4697
      %v4846 = vunpack.c.l.b16 %v4698
      %v4847 = vunpack.c.l.b16 %v4699
      %v4848 = vunpack.c.l.b16 %v4700
      %v4849 = vunpack.c.l.b16 %v4701
      %v4850 = vunpack.c.l.b16 %v4702
      %v4851 = vunpack.c.l.b16 %v4703
      %v4852 = vunpack.c.l.b16 %v4704
      %v4853 = vunpack.c.l.b16 %v4705
      %v4854 = vunpack.c.l.b16 %v4706
      %v4855 = vunpack.c.l.b16 %v4707
      %v4856 = vunpack.c.l.b16 %v4708
      %v4857 = vunpack.c.l.b16 %v4709
      %v4858 = vunpack.c.l.b16 %v4710
      %v4859 = vunpack.c.l.b16 %v4711
      %v4860 = vunpack.c.l.b16 %v4712
      %v4861 = vunpack.c.l.b16 %v4713
      %v4862 = vunpack.c.l.b16 %v4714
      %v4863 = vunpack.c.l.b16 %v4715
      %v4864 = vunpack.c.l.b16 %v4716
      %v4865 = vunpack.c.l.b16 %v4717
      %v4866 = vunpack.c.l.b16 %v4718
      %v4867 = vunpack.c.l.b16 %v4719
      %v4868 = vunpack.c.l.b16 %v4720
      %v4869 = vunpack.c.l.b16 %v4721
      %v4870 = vunpack.c.l.b16 %v4722
      %v4871 = vunpack.c.l.b16 %v4723
      %v4872 = vunpack.c.l.b16 %v4724
      %v4873 = vunpack.c.l.b16 %v4725
      %v4874 = vunpack.c.l.b16 %v4726
      %v4875 = vunpack.c.l.b16 %v4727
      %v4876 = vunpack.c.l.b16 %v4728
      %v4877 = vunpack.c.l.b16 %v4729
      %v4878 = vunpack.c.l.b16 %v4730
      %v4879 = vunpack.c.l.b16 %v4731
      %v4880 = vunpack.c.l.b16 %v4732
      %v4881 = vunpack.c.l.b16 %v4733
      %v4882 = vunpack.c.l.b16 %v4734
      %v4883 = vunpack.c.l.b16 %v4735
      %v4884 = vunpack.c.l.b16 %v4736
      %v4885 = vunpack.c.l.b16 %v4737
      %v4886 = vunpack.c.l.b16 %v4738
      %v4887 = vunpack.c.l.b16 %v4739
      %v4888 = vunpack.c.l.b16 %v4740
      %v4889 = vunpack.c.l.b16 %v4741
      %v4890 = vunpack.c.l.b16 %v4742
      %v4891 = vunpack.c.l.b16 %v4743
      %v4892 = vunpack.c.l.b16 %v4744
      %v4893 = vunpack.c.l.b16 %v4745
      %v4894 = vunpack.c.l.b16 %v4746
      %v4895 = vunpack.c.l.b16 %v4747
      %v4896 = vpack.c.b16 %v4825, %v4824
      %v4897 = vpack.c.b16 %v4827, %v4826
      %v4898 = vpack.c.b16 %v4829, %v4828
      %v4899 = vpack.c.b16 %v4831, %v4830
      %v4900 = vpack.c.b16 %v4833, %v4832
      %v4901 = vpack.c.b16 %v4835, %v4834
      %v4902 = vpack.c.b16 %v4837, %v4836
      %v4903 = vpack.c.b16 %v4839, %v4838
      %v4904 = vpack.c.b16 %v4841, %v4840
      %v4905 = vpack.c.b16 %v4843, %v4842
      %v4906 = vpack.c.b16 %v4845, %v4844
      %v4907 = vpack.c.b16 %v4847, %v4846
      %v4908 = vpack.c.b16 %v4849, %v4848
      %v4909 = vpack.c.b16 %v4851, %v4850
      %v4910 = vpack.c.b16 %v4853, %v4852
      %v4911 = vpack.c.b16 %v4855, %v4854
      %v4912 = vpack.c.b16 %v4857, %v4856
      %v4913 = vpack.c.b16 %v4859, %v4858
      %v4914 = vpack.c.b16 %v4861, %v4860
      %v4915 = vpack.c.b16 %v4863, %v4862
      %v4916 = vpack.c.b16 %v4865, %v4864
      %v4917 = vpack.c.b16 %v4867, %v4866
      %v4918 = vpack.c.b16 %v4869, %v4868
      %v4919 = vpack.c.b16 %v4871, %v4870
      %v4920 = vpack.c.b16 %v4873, %v4872
      %v4921 = vpack.c.b16 %v4875, %v4874
      %v4922 = vpack.c.b16 %v4877, %v4876
      %v4923 = vpack.c.b16 %v4879, %v4878
      %v4924 = vpack.c.b16 %v4881, %v4880
      %v4925 = vpack.c.b16 %v4883, %v4882
      %v4926 = vpack.c.b16 %v4885, %v4884
      %v4927 = vpack.c.b16 %v4887, %v4886
      %v4928 = vpack.c.b16 %v4889, %v4888
      %v4929 = vpack.c.b16 %v4891, %v4890
      %v4930 = vpack.c.b16 %v4893, %v4892
      %v4931 = vpack.c.b16 %v4895, %v4894
      %v4969 = vsel %vm810, %v4675, 0
      %4971 = vmatpush.bf16.msra.mxu0 %v4903
      %4972 = vmatpush.bf16.msra.mxu0 %v4902
      %4973 = vmatpush.bf16.msra.mxu0 %v4901
      %4974 = vmatpush.bf16.msra.mxu0 %v4900
      %4975 = vmatpush.bf16.msra.mxu0 %v4899
      %4976 = vmatpush.bf16.msra.mxu0 %v4898
      %4977 = vmatpush.bf16.msra.mxu0 %v4897
      %4978 = vmatpush.bf16.msra.mxu0 %v4896
      %4979 = vmatmul.bf16.gmra.mxu0 %v4671
      %v4980 = vpop.f32.mrf.mxu0
      %v4981 = vadd.f32 %v4750, %v4980
      %v4982 = vpop.f32.mrf.mxu0
      %4983 = vdwg.mxu0
      %4984 = vmatpush.bf16.msra.mxu0 %v4911
      %4985 = vmatpush.bf16.msra.mxu0 %v4910
      %4986 = vmatpush.bf16.msra.mxu0 %v4909
      %4987 = vmatpush.bf16.msra.mxu0 %v4908
      %4988 = vmatpush.bf16.msra.mxu0 %v4907
      %4989 = vmatpush.bf16.msra.mxu0 %v4906
      %4990 = vmatpush.bf16.msra.mxu0 %v4905
      %4991 = vmatpush.bf16.msra.mxu0 %v4904
      %4992 = vmatmul.bf16.gmra.mxu0 %v4672
      %v4993 = vpop.f32.mrf.mxu0
      %v4994 = vadd.f32 %v4981, %v4993
      %v4995 = vpop.f32.mrf.mxu0
      %4996 = vdwg.mxu0
      %4997 = vmatpush.bf16.msra.mxu0 %v4919
      %4998 = vmatpush.bf16.msra.mxu0 %v4918
      %4999 = vmatpush.bf16.msra.mxu0 %v4917
      %5000 = vmatpush.bf16.msra.mxu0 %v4916
      %5001 = vmatpush.bf16.msra.mxu0 %v4915
      %5002 = vmatpush.bf16.msra.mxu0 %v4914
      %5003 = vmatpush.bf16.msra.mxu0 %v4913
      %5004 = vmatpush.bf16.msra.mxu0 %v4912
      %5005 = vmatmul.bf16.gmra.mxu0 %v4673
      %v5006 = vpop.f32.mrf.mxu0
      %v5007 = vadd.f32 %v4994, %v5006
      %v5008 = vpop.f32.mrf.mxu0
      %5009 = vdwg.mxu0
      %5010 = vmatpush.bf16.msra.mxu0 %v4927
      %5011 = vmatpush.bf16.msra.mxu0 %v4926
      %5012 = vmatpush.bf16.msra.mxu0 %v4925
      %5013 = vmatpush.bf16.msra.mxu0 %v4924
      %5014 = vmatpush.bf16.msra.mxu0 %v4923
      %5015 = vmatpush.bf16.msra.mxu0 %v4922
      %5016 = vmatpush.bf16.msra.mxu0 %v4921
      %5017 = vmatpush.bf16.msra.mxu0 %v4920
      %5018 = vmatmul.bf16.gmra.mxu0 %v4674
      %v5019 = vpop.f32.mrf.mxu0
      %v5020 = vadd.f32 %v5007, %v5019
      %v5021 = vpop.f32.mrf.mxu0
      %5022 = vdwg.mxu0
      %5023 = vmatpush.bf16.msra.mxu0 0
      %5024 = vmatpush.bf16.msra.mxu0 0
      %5025 = vmatpush.bf16.msra.mxu0 0
      %5026 = vmatpush.bf16.msra.mxu0 0
      %5027 = vmatpush.bf16.msra.mxu0 %v4931
      %5028 = vmatpush.bf16.msra.mxu0 %v4930
      %5029 = vmatpush.bf16.msra.mxu0 %v4929
      %5030 = vmatpush.bf16.msra.mxu0 %v4928
      %5031 = vmatmul.bf16.gmra.mxu0 %v4969
      %v5032 = vpop.f32.mrf.mxu0
      %v5033 = vadd.f32 %v5020, %v5032
      %v5034 = vpop.f32.mrf.mxu0
      %5035 = vdwg.mxu0
      %v5036 = vmax.f32 %v5033, 0.0
      %5037 = vst.msk [vmem:[%s278 + $0x7] sm:$0x7f] %vm4626, %v5036
      %v5038 = vld [vmem:[#allocation3 + $0x12] sm:$0xff]
      %v5039 = vld [vmem:[#allocation3 + $0x1a] sm:$0x1]
      %v5040 = vld [vmem:[#allocation3 + $0x1b] sm:$0xff]
      %v5041 = vld [vmem:[#allocation3 + $0x23] sm:$0x1]
      %v5042 = vld [vmem:[#allocation3 + $0x24] sm:$0xff]
      %v5043 = vld [vmem:[#allocation3 + $0x2c] sm:$0x1]
      %v5045 = vrot.slane %v5038, 1
      %5046 = vrot.lane.b32.xlu0 %v5045, 64
      %v5047 = vpop.permute.xlu0 %5046
      %v5050 = vrot.slane %v5038, 2
      %v5051 = vrot.slane %v5039, 2
      %v5052 = vsel %vm4228, %v5050, %v5051
      %5055 = vrot.lane.b32.xlu0 %v5040, 64
      %v5056 = vpop.permute.xlu0 %5055
      %v5058 = vrot.slane %v5040, 1
      %v5061 = vrot.slane %v5040, 2
      %v5062 = vrot.slane %v5041, 2
      %v5063 = vsel %vm4228, %v5061, %v5062
      %5064 = vrot.lane.b32.xlu0 %v5063, 64
      %v5065 = vpop.permute.xlu0 %5064
      %v5068 = vrot.slane %v5042, 1
      %5069 = vrot.lane.b32.xlu0 %v5068, 64
      %v5070 = vpop.permute.xlu0 %5069
      %v5073 = vrot.slane %v5042, 2
      %v5074 = vrot.slane %v5043, 2
      %v5075 = vsel %vm4228, %v5073, %v5074
      %v5077 = vsel %vm810, %v5038, %v5047
      %v5078 = vsel %vm810, %v5052, %v5056
      %v5079 = vsel %vm810, %v5058, %v5065
      %v5080 = vsel %vm810, %v5042, %v5070
      %v5081 = vpack.c.bf16 %v5077, %v5077
      %v5082 = vpack.c.bf16 %v5078, %v5078
      %v5083 = vpack.c.bf16 %v5079, %v5079
      %v5084 = vpack.c.bf16 %v5080, %v5080
      %v5085 = vpack.c.bf16 %v5075, %v5075
      %v5086 = vld [vmem:[%s5] sm:$0xf]
      %v5087 = vld [vmem:[%s5 + $0x4] sm:$0xf]
      %v5088 = vld [vmem:[%s5 + $0x8] sm:$0xf]
      %v5089 = vld [vmem:[%s5 + $0xc] sm:$0xf]
      %v5090 = vld [vmem:[%s5 + $0x10] sm:$0xf]
      %v5091 = vld [vmem:[%s5 + $0x14] sm:$0xf]
      %v5092 = vld [vmem:[%s5 + $0x18] sm:$0xf]
      %v5093 = vld [vmem:[%s5 + $0x1c] sm:$0xf]
      %v5094 = vld [vmem:[%s5 + $0x20] sm:$0xf]
      %v5095 = vld [vmem:[%s5 + $0x24] sm:$0xf]
      %v5096 = vld [vmem:[%s5 + $0x28] sm:$0xf]
      %v5097 = vld [vmem:[%s5 + $0x2c] sm:$0xf]
      %v5098 = vld [vmem:[%s5 + $0x30] sm:$0xf]
      %v5099 = vld [vmem:[%s5 + $0x34] sm:$0xf]
      %v5100 = vld [vmem:[%s5 + $0x38] sm:$0xf]
      %v5101 = vld [vmem:[%s5 + $0x3c] sm:$0xf]
      %v5102 = vld [vmem:[%s5 + $0x40] sm:$0xf]
      %v5103 = vld [vmem:[%s5 + $0x44] sm:$0xf]
      %v5104 = vld [vmem:[%s5 + $0x48] sm:$0xf]
      %v5105 = vld [vmem:[%s5 + $0x4c] sm:$0xf]
      %v5106 = vld [vmem:[%s5 + $0x50] sm:$0xf]
      %v5107 = vld [vmem:[%s5 + $0x54] sm:$0xf]
      %v5108 = vld [vmem:[%s5 + $0x58] sm:$0xf]
      %v5109 = vld [vmem:[%s5 + $0x5c] sm:$0xf]
      %v5110 = vld [vmem:[%s5 + $0x60] sm:$0xf]
      %v5111 = vld [vmem:[%s5 + $0x64] sm:$0xf]
      %v5112 = vld [vmem:[%s5 + $0x68] sm:$0xf]
      %v5113 = vld [vmem:[%s5 + $0x6c] sm:$0xf]
      %v5114 = vld [vmem:[%s5 + $0x70] sm:$0xf]
      %v5115 = vld [vmem:[%s5 + $0x74] sm:$0xf]
      %v5116 = vld [vmem:[%s5 + $0x78] sm:$0xf]
      %v5117 = vld [vmem:[%s5 + $0x7c] sm:$0xf]
      %v5118 = vld [vmem:[%s5 + $0x80] sm:$0xf]
      %v5119 = vld [vmem:[%s5 + $0x84] sm:$0xf]
      %v5120 = vld [vmem:[%s5 + $0x88] sm:$0xf]
      %v5121 = vld [vmem:[%s5 + $0x8c] sm:$0xf]
      %v5122 = vld [vmem:[%s5 + $0x90] sm:$0xf]
      %v5123 = vld [vmem:[%s5 + $0x94] sm:$0xf]
      %v5124 = vld [vmem:[%s5 + $0x98] sm:$0xf]
      %v5125 = vld [vmem:[%s5 + $0x9c] sm:$0xf]
      %v5126 = vld [vmem:[%s5 + $0xa0] sm:$0xf]
      %v5127 = vld [vmem:[%s5 + $0xa4] sm:$0xf]
      %v5128 = vld [vmem:[%s5 + $0xa8] sm:$0xf]
      %v5129 = vld [vmem:[%s5 + $0xac] sm:$0xf]
      %v5130 = vld [vmem:[%s5 + $0xb0] sm:$0xf]
      %v5131 = vld [vmem:[%s5 + $0xb4] sm:$0xf]
      %v5132 = vld [vmem:[%s5 + $0xb8] sm:$0xf]
      %v5133 = vld [vmem:[%s5 + $0xbc] sm:$0xf]
      %v5134 = vld [vmem:[%s5 + $0xc0] sm:$0xf]
      %v5135 = vld [vmem:[%s5 + $0xc4] sm:$0xf]
      %v5136 = vld [vmem:[%s5 + $0xc8] sm:$0xf]
      %v5137 = vld [vmem:[%s5 + $0xcc] sm:$0xf]
      %v5138 = vld [vmem:[%s5 + $0xd0] sm:$0xf]
      %v5139 = vld [vmem:[%s5 + $0xd4] sm:$0xf]
      %v5140 = vld [vmem:[%s5 + $0xd8] sm:$0xf]
      %v5141 = vld [vmem:[%s5 + $0xdc] sm:$0xf]
      %v5142 = vld [vmem:[%s5 + $0xe0] sm:$0xf]
      %v5143 = vld [vmem:[%s5 + $0xe4] sm:$0xf]
      %v5144 = vld [vmem:[%s5 + $0xe8] sm:$0xf]
      %v5145 = vld [vmem:[%s5 + $0xec] sm:$0xf]
      %v5146 = vld [vmem:[%s5 + $0xf0] sm:$0xf]
      %v5147 = vld [vmem:[%s5 + $0xf4] sm:$0xf]
      %v5148 = vld [vmem:[%s5 + $0xf8] sm:$0xf]
      %v5149 = vld [vmem:[%s5 + $0xfc] sm:$0xf]
      %v5150 = vld [vmem:[%s5 + $0x100] sm:$0xf]
      %v5151 = vld [vmem:[%s5 + $0x104] sm:$0xf]
      %v5152 = vld [vmem:[%s5 + $0x108] sm:$0xf]
      %v5153 = vld [vmem:[%s5 + $0x10c] sm:$0xf]
      %v5154 = vld [vmem:[%s5 + $0x110] sm:$0xf]
      %v5155 = vld [vmem:[%s5 + $0x114] sm:$0xf]
      %v5156 = vld [vmem:[%s5 + $0x118] sm:$0xf]
      %v5157 = vld [vmem:[%s5 + $0x11c] sm:$0xf]
      %v5158 = vld [vmem:[%s6] sm:$0x1]
      %v5160 = vperm.slane %v5158, 0
      %v5234 = vunpack.c.l.b16 %v5086
      %v5235 = vunpack.c.l.b16 %v5087
      %v5236 = vunpack.c.l.b16 %v5088
      %v5237 = vunpack.c.l.b16 %v5089
      %v5238 = vunpack.c.l.b16 %v5090
      %v5239 = vunpack.c.l.b16 %v5091
      %v5240 = vunpack.c.l.b16 %v5092
      %v5241 = vunpack.c.l.b16 %v5093
      %v5242 = vunpack.c.l.b16 %v5094
      %v5243 = vunpack.c.l.b16 %v5095
      %v5244 = vunpack.c.l.b16 %v5096
      %v5245 = vunpack.c.l.b16 %v5097
      %v5246 = vunpack.c.l.b16 %v5098
      %v5247 = vunpack.c.l.b16 %v5099
      %v5248 = vunpack.c.l.b16 %v5100
      %v5249 = vunpack.c.l.b16 %v5101
      %v5250 = vunpack.c.l.b16 %v5102
      %v5251 = vunpack.c.l.b16 %v5103
      %v5252 = vunpack.c.l.b16 %v5104
      %v5253 = vunpack.c.l.b16 %v5105
      %v5254 = vunpack.c.l.b16 %v5106
      %v5255 = vunpack.c.l.b16 %v5107
      %v5256 = vunpack.c.l.b16 %v5108
      %v5257 = vunpack.c.l.b16 %v5109
      %v5258 = vunpack.c.l.b16 %v5110
      %v5259 = vunpack.c.l.b16 %v5111
      %v5260 = vunpack.c.l.b16 %v5112
      %v5261 = vunpack.c.l.b16 %v5113
      %v5262 = vunpack.c.l.b16 %v5114
      %v5263 = vunpack.c.l.b16 %v5115
      %v5264 = vunpack.c.l.b16 %v5116
      %v5265 = vunpack.c.l.b16 %v5117
      %v5266 = vunpack.c.l.b16 %v5118
      %v5267 = vunpack.c.l.b16 %v5119
      %v5268 = vunpack.c.l.b16 %v5120
      %v5269 = vunpack.c.l.b16 %v5121
      %v5270 = vunpack.c.l.b16 %v5122
      %v5271 = vunpack.c.l.b16 %v5123
      %v5272 = vunpack.c.l.b16 %v5124
      %v5273 = vunpack.c.l.b16 %v5125
      %v5274 = vunpack.c.l.b16 %v5126
      %v5275 = vunpack.c.l.b16 %v5127
      %v5276 = vunpack.c.l.b16 %v5128
      %v5277 = vunpack.c.l.b16 %v5129
      %v5278 = vunpack.c.l.b16 %v5130
      %v5279 = vunpack.c.l.b16 %v5131
      %v5280 = vunpack.c.l.b16 %v5132
      %v5281 = vunpack.c.l.b16 %v5133
      %v5282 = vunpack.c.l.b16 %v5134
      %v5283 = vunpack.c.l.b16 %v5135
      %v5284 = vunpack.c.l.b16 %v5136
      %v5285 = vunpack.c.l.b16 %v5137
      %v5286 = vunpack.c.l.b16 %v5138
      %v5287 = vunpack.c.l.b16 %v5139
      %v5288 = vunpack.c.l.b16 %v5140
      %v5289 = vunpack.c.l.b16 %v5141
      %v5290 = vunpack.c.l.b16 %v5142
      %v5291 = vunpack.c.l.b16 %v5143
      %v5292 = vunpack.c.l.b16 %v5144
      %v5293 = vunpack.c.l.b16 %v5145
      %v5294 = vunpack.c.l.b16 %v5146
      %v5295 = vunpack.c.l.b16 %v5147
      %v5296 = vunpack.c.l.b16 %v5148
      %v5297 = vunpack.c.l.b16 %v5149
      %v5298 = vunpack.c.l.b16 %v5150
      %v5299 = vunpack.c.l.b16 %v5151
      %v5300 = vunpack.c.l.b16 %v5152
      %v5301 = vunpack.c.l.b16 %v5153
      %v5302 = vunpack.c.l.b16 %v5154
      %v5303 = vunpack.c.l.b16 %v5155
      %v5304 = vunpack.c.l.b16 %v5156
      %v5305 = vunpack.c.l.b16 %v5157
      %v5306 = vpack.c.b16 %v5235, %v5234
      %v5307 = vpack.c.b16 %v5237, %v5236
      %v5308 = vpack.c.b16 %v5239, %v5238
      %v5309 = vpack.c.b16 %v5241, %v5240
      %v5310 = vpack.c.b16 %v5243, %v5242
      %v5311 = vpack.c.b16 %v5245, %v5244
      %v5312 = vpack.c.b16 %v5247, %v5246
      %v5313 = vpack.c.b16 %v5249, %v5248
      %v5314 = vpack.c.b16 %v5251, %v5250
      %v5315 = vpack.c.b16 %v5253, %v5252
      %v5316 = vpack.c.b16 %v5255, %v5254
      %v5317 = vpack.c.b16 %v5257, %v5256
      %v5318 = vpack.c.b16 %v5259, %v5258
      %v5319 = vpack.c.b16 %v5261, %v5260
      %v5320 = vpack.c.b16 %v5263, %v5262
      %v5321 = vpack.c.b16 %v5265, %v5264
      %v5322 = vpack.c.b16 %v5267, %v5266
      %v5323 = vpack.c.b16 %v5269, %v5268
      %v5324 = vpack.c.b16 %v5271, %v5270
      %v5325 = vpack.c.b16 %v5273, %v5272
      %v5326 = vpack.c.b16 %v5275, %v5274
      %v5327 = vpack.c.b16 %v5277, %v5276
      %v5328 = vpack.c.b16 %v5279, %v5278
      %v5329 = vpack.c.b16 %v5281, %v5280
      %v5330 = vpack.c.b16 %v5283, %v5282
      %v5331 = vpack.c.b16 %v5285, %v5284
      %v5332 = vpack.c.b16 %v5287, %v5286
      %v5333 = vpack.c.b16 %v5289, %v5288
      %v5334 = vpack.c.b16 %v5291, %v5290
      %v5335 = vpack.c.b16 %v5293, %v5292
      %v5336 = vpack.c.b16 %v5295, %v5294
      %v5337 = vpack.c.b16 %v5297, %v5296
      %v5338 = vpack.c.b16 %v5299, %v5298
      %v5339 = vpack.c.b16 %v5301, %v5300
      %v5340 = vpack.c.b16 %v5303, %v5302
      %v5341 = vpack.c.b16 %v5305, %v5304
      %v5379 = vsel %vm810, %v5085, 0
      %5381 = vmatpush.bf16.msra.mxu0 %v5313
      %5382 = vmatpush.bf16.msra.mxu0 %v5312
      %5383 = vmatpush.bf16.msra.mxu0 %v5311
      %5384 = vmatpush.bf16.msra.mxu0 %v5310
      %5385 = vmatpush.bf16.msra.mxu0 %v5309
      %5386 = vmatpush.bf16.msra.mxu0 %v5308
      %5387 = vmatpush.bf16.msra.mxu0 %v5307
      %5388 = vmatpush.bf16.msra.mxu0 %v5306
      %5389 = vmatmul.bf16.gmra.mxu0 %v5081
      %v5390 = vpop.f32.mrf.mxu0
      %v5391 = vadd.f32 %v5160, %v5390
      %v5392 = vpop.f32.mrf.mxu0
      %5393 = vdwg.mxu0
      %5394 = vmatpush.bf16.msra.mxu0 %v5321
      %5395 = vmatpush.bf16.msra.mxu0 %v5320
      %5396 = vmatpush.bf16.msra.mxu0 %v5319
      %5397 = vmatpush.bf16.msra.mxu0 %v5318
      %5398 = vmatpush.bf16.msra.mxu0 %v5317
      %5399 = vmatpush.bf16.msra.mxu0 %v5316
      %5400 = vmatpush.bf16.msra.mxu0 %v5315
      %5401 = vmatpush.bf16.msra.mxu0 %v5314
      %5402 = vmatmul.bf16.gmra.mxu0 %v5082
      %v5403 = vpop.f32.mrf.mxu0
      %v5404 = vadd.f32 %v5391, %v5403
      %v5405 = vpop.f32.mrf.mxu0
      %5406 = vdwg.mxu0
      %5407 = vmatpush.bf16.msra.mxu0 %v5329
      %5408 = vmatpush.bf16.msra.mxu0 %v5328
      %5409 = vmatpush.bf16.msra.mxu0 %v5327
      %5410 = vmatpush.bf16.msra.mxu0 %v5326
      %5411 = vmatpush.bf16.msra.mxu0 %v5325
      %5412 = vmatpush.bf16.msra.mxu0 %v5324
      %5413 = vmatpush.bf16.msra.mxu0 %v5323
      %5414 = vmatpush.bf16.msra.mxu0 %v5322
      %5415 = vmatmul.bf16.gmra.mxu0 %v5083
      %v5416 = vpop.f32.mrf.mxu0
      %v5417 = vadd.f32 %v5404, %v5416
      %v5418 = vpop.f32.mrf.mxu0
      %5419 = vdwg.mxu0
      %5420 = vmatpush.bf16.msra.mxu0 %v5337
      %5421 = vmatpush.bf16.msra.mxu0 %v5336
      %5422 = vmatpush.bf16.msra.mxu0 %v5335
      %5423 = vmatpush.bf16.msra.mxu0 %v5334
      %5424 = vmatpush.bf16.msra.mxu0 %v5333
      %5425 = vmatpush.bf16.msra.mxu0 %v5332
      %5426 = vmatpush.bf16.msra.mxu0 %v5331
      %5427 = vmatpush.bf16.msra.mxu0 %v5330
      %5428 = vmatmul.bf16.gmra.mxu0 %v5084
      %v5429 = vpop.f32.mrf.mxu0
      %v5430 = vadd.f32 %v5417, %v5429
      %v5431 = vpop.f32.mrf.mxu0
      %5432 = vdwg.mxu0
      %5433 = vmatpush.bf16.msra.mxu0 0
      %5434 = vmatpush.bf16.msra.mxu0 0
      %5435 = vmatpush.bf16.msra.mxu0 0
      %5436 = vmatpush.bf16.msra.mxu0 0
      %5437 = vmatpush.bf16.msra.mxu0 %v5341
      %5438 = vmatpush.bf16.msra.mxu0 %v5340
      %5439 = vmatpush.bf16.msra.mxu0 %v5339
      %5440 = vmatpush.bf16.msra.mxu0 %v5338
      %5441 = vmatmul.bf16.gmra.mxu0 %v5379
      %v5442 = vpop.f32.mrf.mxu0
      %v5443 = vadd.f32 %v5430, %v5442
      %v5444 = vpop.f32.mrf.mxu0
      %5445 = vdwg.mxu0
      %v5446 = vmax.f32 %v5443, 0.0
      %5447 = vst.msk [vmem:[%s278 + $0xe] sm:$0x7f] %vm4626, %v5446
      %v5448 = vld [vmem:[#allocation3 + $0x1b] sm:$0xff]
      %v5449 = vld [vmem:[#allocation3 + $0x23] sm:$0x1]
      %v5450 = vld [vmem:[#allocation3 + $0x24] sm:$0xff]
      %v5451 = vld [vmem:[#allocation3 + $0x2c] sm:$0x1]
      %v5452 = vld [vmem:[#allocation3 + $0x2d] sm:$0xff]
      %v5453 = vld [vmem:[#allocation3 + $0x35] sm:$0x1]
      %v5455 = vrot.slane %v5448, 1
      %5456 = vrot.lane.b32.xlu0 %v5455, 64
      %v5457 = vpop.permute.xlu0 %5456
      %v5460 = vrot.slane %v5448, 2
      %v5461 = vrot.slane %v5449, 2
      %v5462 = vsel %vm4228, %v5460, %v5461
      %5465 = vrot.lane.b32.xlu0 %v5450, 64
      %v5466 = vpop.permute.xlu0 %5465
      %v5468 = vrot.slane %v5450, 1
      %v5471 = vrot.slane %v5450, 2
      %v5472 = vrot.slane %v5451, 2
      %v5473 = vsel %vm4228, %v5471, %v5472
      %5474 = vrot.lane.b32.xlu0 %v5473, 64
      %v5475 = vpop.permute.xlu0 %5474
      %v5478 = vrot.slane %v5452, 1
      %5479 = vrot.lane.b32.xlu0 %v5478, 64
      %v5480 = vpop.permute.xlu0 %5479
      %v5483 = vrot.slane %v5452, 2
      %v5484 = vrot.slane %v5453, 2
      %v5485 = vsel %vm4228, %v5483, %v5484
      %v5487 = vsel %vm810, %v5448, %v5457
      %v5488 = vsel %vm810, %v5462, %v5466
      %v5489 = vsel %vm810, %v5468, %v5475
      %v5490 = vsel %vm810, %v5452, %v5480
      %v5491 = vpack.c.bf16 %v5487, %v5487
      %v5492 = vpack.c.bf16 %v5488, %v5488
      %v5493 = vpack.c.bf16 %v5489, %v5489
      %v5494 = vpack.c.bf16 %v5490, %v5490
      %v5495 = vpack.c.bf16 %v5485, %v5485
      %v5496 = vld [vmem:[%s5] sm:$0xf]
      %v5497 = vld [vmem:[%s5 + $0x4] sm:$0xf]
      %v5498 = vld [vmem:[%s5 + $0x8] sm:$0xf]
      %v5499 = vld [vmem:[%s5 + $0xc] sm:$0xf]
      %v5500 = vld [vmem:[%s5 + $0x10] sm:$0xf]
      %v5501 = vld [vmem:[%s5 + $0x14] sm:$0xf]
      %v5502 = vld [vmem:[%s5 + $0x18] sm:$0xf]
      %v5503 = vld [vmem:[%s5 + $0x1c] sm:$0xf]
      %v5504 = vld [vmem:[%s5 + $0x20] sm:$0xf]
      %v5505 = vld [vmem:[%s5 + $0x24] sm:$0xf]
      %v5506 = vld [vmem:[%s5 + $0x28] sm:$0xf]
      %v5507 = vld [vmem:[%s5 + $0x2c] sm:$0xf]
      %v5508 = vld [vmem:[%s5 + $0x30] sm:$0xf]
      %v5509 = vld [vmem:[%s5 + $0x34] sm:$0xf]
      %v5510 = vld [vmem:[%s5 + $0x38] sm:$0xf]
      %v5511 = vld [vmem:[%s5 + $0x3c] sm:$0xf]
      %v5512 = vld [vmem:[%s5 + $0x40] sm:$0xf]
      %v5513 = vld [vmem:[%s5 + $0x44] sm:$0xf]
      %v5514 = vld [vmem:[%s5 + $0x48] sm:$0xf]
      %v5515 = vld [vmem:[%s5 + $0x4c] sm:$0xf]
      %v5516 = vld [vmem:[%s5 + $0x50] sm:$0xf]
      %v5517 = vld [vmem:[%s5 + $0x54] sm:$0xf]
      %v5518 = vld [vmem:[%s5 + $0x58] sm:$0xf]
      %v5519 = vld [vmem:[%s5 + $0x5c] sm:$0xf]
      %v5520 = vld [vmem:[%s5 + $0x60] sm:$0xf]
      %v5521 = vld [vmem:[%s5 + $0x64] sm:$0xf]
      %v5522 = vld [vmem:[%s5 + $0x68] sm:$0xf]
      %v5523 = vld [vmem:[%s5 + $0x6c] sm:$0xf]
      %v5524 = vld [vmem:[%s5 + $0x70] sm:$0xf]
      %v5525 = vld [vmem:[%s5 + $0x74] sm:$0xf]
      %v5526 = vld [vmem:[%s5 + $0x78] sm:$0xf]
      %v5527 = vld [vmem:[%s5 + $0x7c] sm:$0xf]
      %v5528 = vld [vmem:[%s5 + $0x80] sm:$0xf]
      %v5529 = vld [vmem:[%s5 + $0x84] sm:$0xf]
      %v5530 = vld [vmem:[%s5 + $0x88] sm:$0xf]
      %v5531 = vld [vmem:[%s5 + $0x8c] sm:$0xf]
      %v5532 = vld [vmem:[%s5 + $0x90] sm:$0xf]
      %v5533 = vld [vmem:[%s5 + $0x94] sm:$0xf]
      %v5534 = vld [vmem:[%s5 + $0x98] sm:$0xf]
      %v5535 = vld [vmem:[%s5 + $0x9c] sm:$0xf]
      %v5536 = vld [vmem:[%s5 + $0xa0] sm:$0xf]
      %v5537 = vld [vmem:[%s5 + $0xa4] sm:$0xf]
      %v5538 = vld [vmem:[%s5 + $0xa8] sm:$0xf]
      %v5539 = vld [vmem:[%s5 + $0xac] sm:$0xf]
      %v5540 = vld [vmem:[%s5 + $0xb0] sm:$0xf]
      %v5541 = vld [vmem:[%s5 + $0xb4] sm:$0xf]
      %v5542 = vld [vmem:[%s5 + $0xb8] sm:$0xf]
      %v5543 = vld [vmem:[%s5 + $0xbc] sm:$0xf]
      %v5544 = vld [vmem:[%s5 + $0xc0] sm:$0xf]
      %v5545 = vld [vmem:[%s5 + $0xc4] sm:$0xf]
      %v5546 = vld [vmem:[%s5 + $0xc8] sm:$0xf]
      %v5547 = vld [vmem:[%s5 + $0xcc] sm:$0xf]
      %v5548 = vld [vmem:[%s5 + $0xd0] sm:$0xf]
      %v5549 = vld [vmem:[%s5 + $0xd4] sm:$0xf]
      %v5550 = vld [vmem:[%s5 + $0xd8] sm:$0xf]
      %v5551 = vld [vmem:[%s5 + $0xdc] sm:$0xf]
      %v5552 = vld [vmem:[%s5 + $0xe0] sm:$0xf]
      %v5553 = vld [vmem:[%s5 + $0xe4] sm:$0xf]
      %v5554 = vld [vmem:[%s5 + $0xe8] sm:$0xf]
      %v5555 = vld [vmem:[%s5 + $0xec] sm:$0xf]
      %v5556 = vld [vmem:[%s5 + $0xf0] sm:$0xf]
      %v5557 = vld [vmem:[%s5 + $0xf4] sm:$0xf]
      %v5558 = vld [vmem:[%s5 + $0xf8] sm:$0xf]
      %v5559 = vld [vmem:[%s5 + $0xfc] sm:$0xf]
      %v5560 = vld [vmem:[%s5 + $0x100] sm:$0xf]
      %v5561 = vld [vmem:[%s5 + $0x104] sm:$0xf]
      %v5562 = vld [vmem:[%s5 + $0x108] sm:$0xf]
      %v5563 = vld [vmem:[%s5 + $0x10c] sm:$0xf]
      %v5564 = vld [vmem:[%s5 + $0x110] sm:$0xf]
      %v5565 = vld [vmem:[%s5 + $0x114] sm:$0xf]
      %v5566 = vld [vmem:[%s5 + $0x118] sm:$0xf]
      %v5567 = vld [vmem:[%s5 + $0x11c] sm:$0xf]
      %v5568 = vld [vmem:[%s6] sm:$0x1]
      %v5570 = vperm.slane %v5568, 0
      %v5644 = vunpack.c.l.b16 %v5496
      %v5645 = vunpack.c.l.b16 %v5497
      %v5646 = vunpack.c.l.b16 %v5498
      %v5647 = vunpack.c.l.b16 %v5499
      %v5648 = vunpack.c.l.b16 %v5500
      %v5649 = vunpack.c.l.b16 %v5501
      %v5650 = vunpack.c.l.b16 %v5502
      %v5651 = vunpack.c.l.b16 %v5503
      %v5652 = vunpack.c.l.b16 %v5504
      %v5653 = vunpack.c.l.b16 %v5505
      %v5654 = vunpack.c.l.b16 %v5506
      %v5655 = vunpack.c.l.b16 %v5507
      %v5656 = vunpack.c.l.b16 %v5508
      %v5657 = vunpack.c.l.b16 %v5509
      %v5658 = vunpack.c.l.b16 %v5510
      %v5659 = vunpack.c.l.b16 %v5511
      %v5660 = vunpack.c.l.b16 %v5512
      %v5661 = vunpack.c.l.b16 %v5513
      %v5662 = vunpack.c.l.b16 %v5514
      %v5663 = vunpack.c.l.b16 %v5515
      %v5664 = vunpack.c.l.b16 %v5516
      %v5665 = vunpack.c.l.b16 %v5517
      %v5666 = vunpack.c.l.b16 %v5518
      %v5667 = vunpack.c.l.b16 %v5519
      %v5668 = vunpack.c.l.b16 %v5520
      %v5669 = vunpack.c.l.b16 %v5521
      %v5670 = vunpack.c.l.b16 %v5522
      %v5671 = vunpack.c.l.b16 %v5523
      %v5672 = vunpack.c.l.b16 %v5524
      %v5673 = vunpack.c.l.b16 %v5525
      %v5674 = vunpack.c.l.b16 %v5526
      %v5675 = vunpack.c.l.b16 %v5527
      %v5676 = vunpack.c.l.b16 %v5528
      %v5677 = vunpack.c.l.b16 %v5529
      %v5678 = vunpack.c.l.b16 %v5530
      %v5679 = vunpack.c.l.b16 %v5531
      %v5680 = vunpack.c.l.b16 %v5532
      %v5681 = vunpack.c.l.b16 %v5533
      %v5682 = vunpack.c.l.b16 %v5534
      %v5683 = vunpack.c.l.b16 %v5535
      %v5684 = vunpack.c.l.b16 %v5536
      %v5685 = vunpack.c.l.b16 %v5537
      %v5686 = vunpack.c.l.b16 %v5538
      %v5687 = vunpack.c.l.b16 %v5539
      %v5688 = vunpack.c.l.b16 %v5540
      %v5689 = vunpack.c.l.b16 %v5541
      %v5690 = vunpack.c.l.b16 %v5542
      %v5691 = vunpack.c.l.b16 %v5543
      %v5692 = vunpack.c.l.b16 %v5544
      %v5693 = vunpack.c.l.b16 %v5545
      %v5694 = vunpack.c.l.b16 %v5546
      %v5695 = vunpack.c.l.b16 %v5547
      %v5696 = vunpack.c.l.b16 %v5548
      %v5697 = vunpack.c.l.b16 %v5549
      %v5698 = vunpack.c.l.b16 %v5550
      %v5699 = vunpack.c.l.b16 %v5551
      %v5700 = vunpack.c.l.b16 %v5552
      %v5701 = vunpack.c.l.b16 %v5553
      %v5702 = vunpack.c.l.b16 %v5554
      %v5703 = vunpack.c.l.b16 %v5555
      %v5704 = vunpack.c.l.b16 %v5556
      %v5705 = vunpack.c.l.b16 %v5557
      %v5706 = vunpack.c.l.b16 %v5558
      %v5707 = vunpack.c.l.b16 %v5559
      %v5708 = vunpack.c.l.b16 %v5560
      %v5709 = vunpack.c.l.b16 %v5561
      %v5710 = vunpack.c.l.b16 %v5562
      %v5711 = vunpack.c.l.b16 %v5563
      %v5712 = vunpack.c.l.b16 %v5564
      %v5713 = vunpack.c.l.b16 %v5565
      %v5714 = vunpack.c.l.b16 %v5566
      %v5715 = vunpack.c.l.b16 %v5567
      %v5716 = vpack.c.b16 %v5645, %v5644
      %v5717 = vpack.c.b16 %v5647, %v5646
      %v5718 = vpack.c.b16 %v5649, %v5648
      %v5719 = vpack.c.b16 %v5651, %v5650
      %v5720 = vpack.c.b16 %v5653, %v5652
      %v5721 = vpack.c.b16 %v5655, %v5654
      %v5722 = vpack.c.b16 %v5657, %v5656
      %v5723 = vpack.c.b16 %v5659, %v5658
      %v5724 = vpack.c.b16 %v5661, %v5660
      %v5725 = vpack.c.b16 %v5663, %v5662
      %v5726 = vpack.c.b16 %v5665, %v5664
      %v5727 = vpack.c.b16 %v5667, %v5666
      %v5728 = vpack.c.b16 %v5669, %v5668
      %v5729 = vpack.c.b16 %v5671, %v5670
      %v5730 = vpack.c.b16 %v5673, %v5672
      %v5731 = vpack.c.b16 %v5675, %v5674
      %v5732 = vpack.c.b16 %v5677, %v5676
      %v5733 = vpack.c.b16 %v5679, %v5678
      %v5734 = vpack.c.b16 %v5681, %v5680
      %v5735 = vpack.c.b16 %v5683, %v5682
      %v5736 = vpack.c.b16 %v5685, %v5684
      %v5737 = vpack.c.b16 %v5687, %v5686
      %v5738 = vpack.c.b16 %v5689, %v5688
      %v5739 = vpack.c.b16 %v5691, %v5690
      %v5740 = vpack.c.b16 %v5693, %v5692
      %v5741 = vpack.c.b16 %v5695, %v5694
      %v5742 = vpack.c.b16 %v5697, %v5696
      %v5743 = vpack.c.b16 %v5699, %v5698
      %v5744 = vpack.c.b16 %v5701, %v5700
      %v5745 = vpack.c.b16 %v5703, %v5702
      %v5746 = vpack.c.b16 %v5705, %v5704
      %v5747 = vpack.c.b16 %v5707, %v5706
      %v5748 = vpack.c.b16 %v5709, %v5708
      %v5749 = vpack.c.b16 %v5711, %v5710
      %v5750 = vpack.c.b16 %v5713, %v5712
      %v5751 = vpack.c.b16 %v5715, %v5714
      %v5789 = vsel %vm810, %v5495, 0
      %5791 = vmatpush.bf16.msra.mxu0 %v5723
      %5792 = vmatpush.bf16.msra.mxu0 %v5722
      %5793 = vmatpush.bf16.msra.mxu0 %v5721
      %5794 = vmatpush.bf16.msra.mxu0 %v5720
      %5795 = vmatpush.bf16.msra.mxu0 %v5719
      %5796 = vmatpush.bf16.msra.mxu0 %v5718
      %5797 = vmatpush.bf16.msra.mxu0 %v5717
      %5798 = vmatpush.bf16.msra.mxu0 %v5716
      %5799 = vmatmul.bf16.gmra.mxu0 %v5491
      %v5800 = vpop.f32.mrf.mxu0
      %v5801 = vadd.f32 %v5570, %v5800
      %v5802 = vpop.f32.mrf.mxu0
      %5803 = vdwg.mxu0
      %5804 = vmatpush.bf16.msra.mxu0 %v5731
      %5805 = vmatpush.bf16.msra.mxu0 %v5730
      %5806 = vmatpush.bf16.msra.mxu0 %v5729
      %5807 = vmatpush.bf16.msra.mxu0 %v5728
      %5808 = vmatpush.bf16.msra.mxu0 %v5727
      %5809 = vmatpush.bf16.msra.mxu0 %v5726
      %5810 = vmatpush.bf16.msra.mxu0 %v5725
      %5811 = vmatpush.bf16.msra.mxu0 %v5724
      %5812 = vmatmul.bf16.gmra.mxu0 %v5492
      %v5813 = vpop.f32.mrf.mxu0
      %v5814 = vadd.f32 %v5801, %v5813
      %v5815 = vpop.f32.mrf.mxu0
      %5816 = vdwg.mxu0
      %5817 = vmatpush.bf16.msra.mxu0 %v5739
      %5818 = vmatpush.bf16.msra.mxu0 %v5738
      %5819 = vmatpush.bf16.msra.mxu0 %v5737
      %5820 = vmatpush.bf16.msra.mxu0 %v5736
      %5821 = vmatpush.bf16.msra.mxu0 %v5735
      %5822 = vmatpush.bf16.msra.mxu0 %v5734
      %5823 = vmatpush.bf16.msra.mxu0 %v5733
      %5824 = vmatpush.bf16.msra.mxu0 %v5732
      %5825 = vmatmul.bf16.gmra.mxu0 %v5493
      %v5826 = vpop.f32.mrf.mxu0
      %v5827 = vadd.f32 %v5814, %v5826
      %v5828 = vpop.f32.mrf.mxu0
      %5829 = vdwg.mxu0
      %5830 = vmatpush.bf16.msra.mxu0 %v5747
      %5831 = vmatpush.bf16.msra.mxu0 %v5746
      %5832 = vmatpush.bf16.msra.mxu0 %v5745
      %5833 = vmatpush.bf16.msra.mxu0 %v5744
      %5834 = vmatpush.bf16.msra.mxu0 %v5743
      %5835 = vmatpush.bf16.msra.mxu0 %v5742
      %5836 = vmatpush.bf16.msra.mxu0 %v5741
      %5837 = vmatpush.bf16.msra.mxu0 %v5740
      %5838 = vmatmul.bf16.gmra.mxu0 %v5494
      %v5839 = vpop.f32.mrf.mxu0
      %v5840 = vadd.f32 %v5827, %v5839
      %v5841 = vpop.f32.mrf.mxu0
      %5842 = vdwg.mxu0
      %5843 = vmatpush.bf16.msra.mxu0 0
      %5844 = vmatpush.bf16.msra.mxu0 0
      %5845 = vmatpush.bf16.msra.mxu0 0
      %5846 = vmatpush.bf16.msra.mxu0 0
      %5847 = vmatpush.bf16.msra.mxu0 %v5751
      %5848 = vmatpush.bf16.msra.mxu0 %v5750
      %5849 = vmatpush.bf16.msra.mxu0 %v5749
      %5850 = vmatpush.bf16.msra.mxu0 %v5748
      %5851 = vmatmul.bf16.gmra.mxu0 %v5789
      %v5852 = vpop.f32.mrf.mxu0
      %v5853 = vadd.f32 %v5840, %v5852
      %v5854 = vpop.f32.mrf.mxu0
      %5855 = vdwg.mxu0
      %v5856 = vmax.f32 %v5853, 0.0
      %5857 = vst.msk [vmem:[%s278 + $0x15] sm:$0x7f] %vm4626, %v5856
      %v5858 = vld [vmem:[#allocation3 + $0x24] sm:$0xff]
      %v5859 = vld [vmem:[#allocation3 + $0x2c] sm:$0x1]
      %v5860 = vld [vmem:[#allocation3 + $0x2d] sm:$0xff]
      %v5861 = vld [vmem:[#allocation3 + $0x35] sm:$0x1]
      %v5862 = vld [vmem:[#allocation3 + $0x36] sm:$0xff]
      %v5863 = vld [vmem:[#allocation3 + $0x3e] sm:$0x1]
      %v5865 = vrot.slane %v5858, 1
      %5866 = vrot.lane.b32.xlu0 %v5865, 64
      %v5867 = vpop.permute.xlu0 %5866
      %v5870 = vrot.slane %v5858, 2
      %v5871 = vrot.slane %v5859, 2
      %v5872 = vsel %vm4228, %v5870, %v5871
      %5875 = vrot.lane.b32.xlu0 %v5860, 64
      %v5876 = vpop.permute.xlu0 %5875
      %v5878 = vrot.slane %v5860, 1
      %v5881 = vrot.slane %v5860, 2
      %v5882 = vrot.slane %v5861, 2
      %v5883 = vsel %vm4228, %v5881, %v5882
      %5884 = vrot.lane.b32.xlu0 %v5883, 64
      %v5885 = vpop.permute.xlu0 %5884
      %v5888 = vrot.slane %v5862, 1
      %5889 = vrot.lane.b32.xlu0 %v5888, 64
      %v5890 = vpop.permute.xlu0 %5889
      %v5893 = vrot.slane %v5862, 2
      %v5894 = vrot.slane %v5863, 2
      %v5895 = vsel %vm4228, %v5893, %v5894
      %v5897 = vsel %vm810, %v5858, %v5867
      %v5898 = vsel %vm810, %v5872, %v5876
      %v5899 = vsel %vm810, %v5878, %v5885
      %v5900 = vsel %vm810, %v5862, %v5890
      %v5901 = vpack.c.bf16 %v5897, %v5897
      %v5902 = vpack.c.bf16 %v5898, %v5898
      %v5903 = vpack.c.bf16 %v5899, %v5899
      %v5904 = vpack.c.bf16 %v5900, %v5900
      %v5905 = vpack.c.bf16 %v5895, %v5895
      %v5906 = vld [vmem:[%s5] sm:$0xf]
      %v5907 = vld [vmem:[%s5 + $0x4] sm:$0xf]
      %v5908 = vld [vmem:[%s5 + $0x8] sm:$0xf]
      %v5909 = vld [vmem:[%s5 + $0xc] sm:$0xf]
      %v5910 = vld [vmem:[%s5 + $0x10] sm:$0xf]
      %v5911 = vld [vmem:[%s5 + $0x14] sm:$0xf]
      %v5912 = vld [vmem:[%s5 + $0x18] sm:$0xf]
      %v5913 = vld [vmem:[%s5 + $0x1c] sm:$0xf]
      %v5914 = vld [vmem:[%s5 + $0x20] sm:$0xf]
      %v5915 = vld [vmem:[%s5 + $0x24] sm:$0xf]
      %v5916 = vld [vmem:[%s5 + $0x28] sm:$0xf]
      %v5917 = vld [vmem:[%s5 + $0x2c] sm:$0xf]
      %v5918 = vld [vmem:[%s5 + $0x30] sm:$0xf]
      %v5919 = vld [vmem:[%s5 + $0x34] sm:$0xf]
      %v5920 = vld [vmem:[%s5 + $0x38] sm:$0xf]
      %v5921 = vld [vmem:[%s5 + $0x3c] sm:$0xf]
      %v5922 = vld [vmem:[%s5 + $0x40] sm:$0xf]
      %v5923 = vld [vmem:[%s5 + $0x44] sm:$0xf]
      %v5924 = vld [vmem:[%s5 + $0x48] sm:$0xf]
      %v5925 = vld [vmem:[%s5 + $0x4c] sm:$0xf]
      %v5926 = vld [vmem:[%s5 + $0x50] sm:$0xf]
      %v5927 = vld [vmem:[%s5 + $0x54] sm:$0xf]
      %v5928 = vld [vmem:[%s5 + $0x58] sm:$0xf]
      %v5929 = vld [vmem:[%s5 + $0x5c] sm:$0xf]
      %v5930 = vld [vmem:[%s5 + $0x60] sm:$0xf]
      %v5931 = vld [vmem:[%s5 + $0x64] sm:$0xf]
      %v5932 = vld [vmem:[%s5 + $0x68] sm:$0xf]
      %v5933 = vld [vmem:[%s5 + $0x6c] sm:$0xf]
      %v5934 = vld [vmem:[%s5 + $0x70] sm:$0xf]
      %v5935 = vld [vmem:[%s5 + $0x74] sm:$0xf]
      %v5936 = vld [vmem:[%s5 + $0x78] sm:$0xf]
      %v5937 = vld [vmem:[%s5 + $0x7c] sm:$0xf]
      %v5938 = vld [vmem:[%s5 + $0x80] sm:$0xf]
      %v5939 = vld [vmem:[%s5 + $0x84] sm:$0xf]
      %v5940 = vld [vmem:[%s5 + $0x88] sm:$0xf]
      %v5941 = vld [vmem:[%s5 + $0x8c] sm:$0xf]
      %v5942 = vld [vmem:[%s5 + $0x90] sm:$0xf]
      %v5943 = vld [vmem:[%s5 + $0x94] sm:$0xf]
      %v5944 = vld [vmem:[%s5 + $0x98] sm:$0xf]
      %v5945 = vld [vmem:[%s5 + $0x9c] sm:$0xf]
      %v5946 = vld [vmem:[%s5 + $0xa0] sm:$0xf]
      %v5947 = vld [vmem:[%s5 + $0xa4] sm:$0xf]
      %v5948 = vld [vmem:[%s5 + $0xa8] sm:$0xf]
      %v5949 = vld [vmem:[%s5 + $0xac] sm:$0xf]
      %v5950 = vld [vmem:[%s5 + $0xb0] sm:$0xf]
      %v5951 = vld [vmem:[%s5 + $0xb4] sm:$0xf]
      %v5952 = vld [vmem:[%s5 + $0xb8] sm:$0xf]
      %v5953 = vld [vmem:[%s5 + $0xbc] sm:$0xf]
      %v5954 = vld [vmem:[%s5 + $0xc0] sm:$0xf]
      %v5955 = vld [vmem:[%s5 + $0xc4] sm:$0xf]
      %v5956 = vld [vmem:[%s5 + $0xc8] sm:$0xf]
      %v5957 = vld [vmem:[%s5 + $0xcc] sm:$0xf]
      %v5958 = vld [vmem:[%s5 + $0xd0] sm:$0xf]
      %v5959 = vld [vmem:[%s5 + $0xd4] sm:$0xf]
      %v5960 = vld [vmem:[%s5 + $0xd8] sm:$0xf]
      %v5961 = vld [vmem:[%s5 + $0xdc] sm:$0xf]
      %v5962 = vld [vmem:[%s5 + $0xe0] sm:$0xf]
      %v5963 = vld [vmem:[%s5 + $0xe4] sm:$0xf]
      %v5964 = vld [vmem:[%s5 + $0xe8] sm:$0xf]
      %v5965 = vld [vmem:[%s5 + $0xec] sm:$0xf]
      %v5966 = vld [vmem:[%s5 + $0xf0] sm:$0xf]
      %v5967 = vld [vmem:[%s5 + $0xf4] sm:$0xf]
      %v5968 = vld [vmem:[%s5 + $0xf8] sm:$0xf]
      %v5969 = vld [vmem:[%s5 + $0xfc] sm:$0xf]
      %v5970 = vld [vmem:[%s5 + $0x100] sm:$0xf]
      %v5971 = vld [vmem:[%s5 + $0x104] sm:$0xf]
      %v5972 = vld [vmem:[%s5 + $0x108] sm:$0xf]
      %v5973 = vld [vmem:[%s5 + $0x10c] sm:$0xf]
      %v5974 = vld [vmem:[%s5 + $0x110] sm:$0xf]
      %v5975 = vld [vmem:[%s5 + $0x114] sm:$0xf]
      %v5976 = vld [vmem:[%s5 + $0x118] sm:$0xf]
      %v5977 = vld [vmem:[%s5 + $0x11c] sm:$0xf]
      %v5978 = vld [vmem:[%s6] sm:$0x1]
      %v5980 = vperm.slane %v5978, 0
      %v6054 = vunpack.c.l.b16 %v5906
      %v6055 = vunpack.c.l.b16 %v5907
      %v6056 = vunpack.c.l.b16 %v5908
      %v6057 = vunpack.c.l.b16 %v5909
      %v6058 = vunpack.c.l.b16 %v5910
      %v6059 = vunpack.c.l.b16 %v5911
      %v6060 = vunpack.c.l.b16 %v5912
      %v6061 = vunpack.c.l.b16 %v5913
      %v6062 = vunpack.c.l.b16 %v5914
      %v6063 = vunpack.c.l.b16 %v5915
      %v6064 = vunpack.c.l.b16 %v5916
      %v6065 = vunpack.c.l.b16 %v5917
      %v6066 = vunpack.c.l.b16 %v5918
      %v6067 = vunpack.c.l.b16 %v5919
      %v6068 = vunpack.c.l.b16 %v5920
      %v6069 = vunpack.c.l.b16 %v5921
      %v6070 = vunpack.c.l.b16 %v5922
      %v6071 = vunpack.c.l.b16 %v5923
      %v6072 = vunpack.c.l.b16 %v5924
      %v6073 = vunpack.c.l.b16 %v5925
      %v6074 = vunpack.c.l.b16 %v5926
      %v6075 = vunpack.c.l.b16 %v5927
      %v6076 = vunpack.c.l.b16 %v5928
      %v6077 = vunpack.c.l.b16 %v5929
      %v6078 = vunpack.c.l.b16 %v5930
      %v6079 = vunpack.c.l.b16 %v5931
      %v6080 = vunpack.c.l.b16 %v5932
      %v6081 = vunpack.c.l.b16 %v5933
      %v6082 = vunpack.c.l.b16 %v5934
      %v6083 = vunpack.c.l.b16 %v5935
      %v6084 = vunpack.c.l.b16 %v5936
      %v6085 = vunpack.c.l.b16 %v5937
      %v6086 = vunpack.c.l.b16 %v5938
      %v6087 = vunpack.c.l.b16 %v5939
      %v6088 = vunpack.c.l.b16 %v5940
      %v6089 = vunpack.c.l.b16 %v5941
      %v6090 = vunpack.c.l.b16 %v5942
      %v6091 = vunpack.c.l.b16 %v5943
      %v6092 = vunpack.c.l.b16 %v5944
      %v6093 = vunpack.c.l.b16 %v5945
      %v6094 = vunpack.c.l.b16 %v5946
      %v6095 = vunpack.c.l.b16 %v5947
      %v6096 = vunpack.c.l.b16 %v5948
      %v6097 = vunpack.c.l.b16 %v5949
      %v6098 = vunpack.c.l.b16 %v5950
      %v6099 = vunpack.c.l.b16 %v5951
      %v6100 = vunpack.c.l.b16 %v5952
      %v6101 = vunpack.c.l.b16 %v5953
      %v6102 = vunpack.c.l.b16 %v5954
      %v6103 = vunpack.c.l.b16 %v5955
      %v6104 = vunpack.c.l.b16 %v5956
      %v6105 = vunpack.c.l.b16 %v5957
      %v6106 = vunpack.c.l.b16 %v5958
      %v6107 = vunpack.c.l.b16 %v5959
      %v6108 = vunpack.c.l.b16 %v5960
      %v6109 = vunpack.c.l.b16 %v5961
      %v6110 = vunpack.c.l.b16 %v5962
      %v6111 = vunpack.c.l.b16 %v5963
      %v6112 = vunpack.c.l.b16 %v5964
      %v6113 = vunpack.c.l.b16 %v5965
      %v6114 = vunpack.c.l.b16 %v5966
      %v6115 = vunpack.c.l.b16 %v5967
      %v6116 = vunpack.c.l.b16 %v5968
      %v6117 = vunpack.c.l.b16 %v5969
      %v6118 = vunpack.c.l.b16 %v5970
      %v6119 = vunpack.c.l.b16 %v5971
      %v6120 = vunpack.c.l.b16 %v5972
      %v6121 = vunpack.c.l.b16 %v5973
      %v6122 = vunpack.c.l.b16 %v5974
      %v6123 = vunpack.c.l.b16 %v5975
      %v6124 = vunpack.c.l.b16 %v5976
      %v6125 = vunpack.c.l.b16 %v5977
      %v6126 = vpack.c.b16 %v6055, %v6054
      %v6127 = vpack.c.b16 %v6057, %v6056
      %v6128 = vpack.c.b16 %v6059, %v6058
      %v6129 = vpack.c.b16 %v6061, %v6060
      %v6130 = vpack.c.b16 %v6063, %v6062
      %v6131 = vpack.c.b16 %v6065, %v6064
      %v6132 = vpack.c.b16 %v6067, %v6066
      %v6133 = vpack.c.b16 %v6069, %v6068
      %v6134 = vpack.c.b16 %v6071, %v6070
      %v6135 = vpack.c.b16 %v6073, %v6072
      %v6136 = vpack.c.b16 %v6075, %v6074
      %v6137 = vpack.c.b16 %v6077, %v6076
      %v6138 = vpack.c.b16 %v6079, %v6078
      %v6139 = vpack.c.b16 %v6081, %v6080
      %v6140 = vpack.c.b16 %v6083, %v6082
      %v6141 = vpack.c.b16 %v6085, %v6084
      %v6142 = vpack.c.b16 %v6087, %v6086
      %v6143 = vpack.c.b16 %v6089, %v6088
      %v6144 = vpack.c.b16 %v6091, %v6090
      %v6145 = vpack.c.b16 %v6093, %v6092
      %v6146 = vpack.c.b16 %v6095, %v6094
      %v6147 = vpack.c.b16 %v6097, %v6096
      %v6148 = vpack.c.b16 %v6099, %v6098
      %v6149 = vpack.c.b16 %v6101, %v6100
      %v6150 = vpack.c.b16 %v6103, %v6102
      %v6151 = vpack.c.b16 %v6105, %v6104
      %v6152 = vpack.c.b16 %v6107, %v6106
      %v6153 = vpack.c.b16 %v6109, %v6108
      %v6154 = vpack.c.b16 %v6111, %v6110
      %v6155 = vpack.c.b16 %v6113, %v6112
      %v6156 = vpack.c.b16 %v6115, %v6114
      %v6157 = vpack.c.b16 %v6117, %v6116
      %v6158 = vpack.c.b16 %v6119, %v6118
      %v6159 = vpack.c.b16 %v6121, %v6120
      %v6160 = vpack.c.b16 %v6123, %v6122
      %v6161 = vpack.c.b16 %v6125, %v6124
      %v6199 = vsel %vm810, %v5905, 0
      %6201 = vmatpush.bf16.msra.mxu0 %v6133
      %6202 = vmatpush.bf16.msra.mxu0 %v6132
      %6203 = vmatpush.bf16.msra.mxu0 %v6131
      %6204 = vmatpush.bf16.msra.mxu0 %v6130
      %6205 = vmatpush.bf16.msra.mxu0 %v6129
      %6206 = vmatpush.bf16.msra.mxu0 %v6128
      %6207 = vmatpush.bf16.msra.mxu0 %v6127
      %6208 = vmatpush.bf16.msra.mxu0 %v6126
      %6209 = vmatmul.bf16.gmra.mxu0 %v5901
      %v6210 = vpop.f32.mrf.mxu0
      %v6211 = vadd.f32 %v5980, %v6210
      %v6212 = vpop.f32.mrf.mxu0
      %6213 = vdwg.mxu0
      %6214 = vmatpush.bf16.msra.mxu0 %v6141
      %6215 = vmatpush.bf16.msra.mxu0 %v6140
      %6216 = vmatpush.bf16.msra.mxu0 %v6139
      %6217 = vmatpush.bf16.msra.mxu0 %v6138
      %6218 = vmatpush.bf16.msra.mxu0 %v6137
      %6219 = vmatpush.bf16.msra.mxu0 %v6136
      %6220 = vmatpush.bf16.msra.mxu0 %v6135
      %6221 = vmatpush.bf16.msra.mxu0 %v6134
      %6222 = vmatmul.bf16.gmra.mxu0 %v5902
      %v6223 = vpop.f32.mrf.mxu0
      %v6224 = vadd.f32 %v6211, %v6223
      %v6225 = vpop.f32.mrf.mxu0
      %6226 = vdwg.mxu0
      %6227 = vmatpush.bf16.msra.mxu0 %v6149
      %6228 = vmatpush.bf16.msra.mxu0 %v6148
      %6229 = vmatpush.bf16.msra.mxu0 %v6147
      %6230 = vmatpush.bf16.msra.mxu0 %v6146
      %6231 = vmatpush.bf16.msra.mxu0 %v6145
      %6232 = vmatpush.bf16.msra.mxu0 %v6144
      %6233 = vmatpush.bf16.msra.mxu0 %v6143
      %6234 = vmatpush.bf16.msra.mxu0 %v6142
      %6235 = vmatmul.bf16.gmra.mxu0 %v5903
      %v6236 = vpop.f32.mrf.mxu0
      %v6237 = vadd.f32 %v6224, %v6236
      %v6238 = vpop.f32.mrf.mxu0
      %6239 = vdwg.mxu0
      %6240 = vmatpush.bf16.msra.mxu0 %v6157
      %6241 = vmatpush.bf16.msra.mxu0 %v6156
      %6242 = vmatpush.bf16.msra.mxu0 %v6155
      %6243 = vmatpush.bf16.msra.mxu0 %v6154
      %6244 = vmatpush.bf16.msra.mxu0 %v6153
      %6245 = vmatpush.bf16.msra.mxu0 %v6152
      %6246 = vmatpush.bf16.msra.mxu0 %v6151
      %6247 = vmatpush.bf16.msra.mxu0 %v6150
      %6248 = vmatmul.bf16.gmra.mxu0 %v5904
      %v6249 = vpop.f32.mrf.mxu0
      %v6250 = vadd.f32 %v6237, %v6249
      %v6251 = vpop.f32.mrf.mxu0
      %6252 = vdwg.mxu0
      %6253 = vmatpush.bf16.msra.mxu0 0
      %6254 = vmatpush.bf16.msra.mxu0 0
      %6255 = vmatpush.bf16.msra.mxu0 0
      %6256 = vmatpush.bf16.msra.mxu0 0
      %6257 = vmatpush.bf16.msra.mxu0 %v6161
      %6258 = vmatpush.bf16.msra.mxu0 %v6160
      %6259 = vmatpush.bf16.msra.mxu0 %v6159
      %6260 = vmatpush.bf16.msra.mxu0 %v6158
      %6261 = vmatmul.bf16.gmra.mxu0 %v6199
      %v6262 = vpop.f32.mrf.mxu0
      %v6263 = vadd.f32 %v6250, %v6262
      %v6264 = vpop.f32.mrf.mxu0
      %6265 = vdwg.mxu0
      %v6266 = vmax.f32 %v6263, 0.0
      %6267 = vst.msk [vmem:[%s278 + $0x1c] sm:$0x7f] %vm4626, %v6266
      %v6268 = vld [vmem:[#allocation3 + $0x2d] sm:$0xff]
      %v6269 = vld [vmem:[#allocation3 + $0x35] sm:$0x1]
      %v6270 = vld [vmem:[#allocation3 + $0x36] sm:$0xff]
      %v6271 = vld [vmem:[#allocation3 + $0x3e] sm:$0x1]
      %v6272 = vld [vmem:[#allocation3 + $0x3f] sm:$0xff]
      %v6273 = vld [vmem:[#allocation3 + $0x47] sm:$0x1]
      %v6275 = vrot.slane %v6268, 1
      %6276 = vrot.lane.b32.xlu0 %v6275, 64
      %v6277 = vpop.permute.xlu0 %6276
      %v6280 = vrot.slane %v6268, 2
      %v6281 = vrot.slane %v6269, 2
      %v6282 = vsel %vm4228, %v6280, %v6281
      %6285 = vrot.lane.b32.xlu0 %v6270, 64
      %v6286 = vpop.permute.xlu0 %6285
      %v6288 = vrot.slane %v6270, 1
      %v6291 = vrot.slane %v6270, 2
      %v6292 = vrot.slane %v6271, 2
      %v6293 = vsel %vm4228, %v6291, %v6292
      %6294 = vrot.lane.b32.xlu0 %v6293, 64
      %v6295 = vpop.permute.xlu0 %6294
      %v6298 = vrot.slane %v6272, 1
      %6299 = vrot.lane.b32.xlu0 %v6298, 64
      %v6300 = vpop.permute.xlu0 %6299
      %v6303 = vrot.slane %v6272, 2
      %v6304 = vrot.slane %v6273, 2
      %v6305 = vsel %vm4228, %v6303, %v6304
      %v6307 = vsel %vm810, %v6268, %v6277
      %v6308 = vsel %vm810, %v6282, %v6286
      %v6309 = vsel %vm810, %v6288, %v6295
      %v6310 = vsel %vm810, %v6272, %v6300
      %v6311 = vpack.c.bf16 %v6307, %v6307
      %v6312 = vpack.c.bf16 %v6308, %v6308
      %v6313 = vpack.c.bf16 %v6309, %v6309
      %v6314 = vpack.c.bf16 %v6310, %v6310
      %v6315 = vpack.c.bf16 %v6305, %v6305
      %v6316 = vld [vmem:[%s5] sm:$0xf]
      %v6317 = vld [vmem:[%s5 + $0x4] sm:$0xf]
      %v6318 = vld [vmem:[%s5 + $0x8] sm:$0xf]
      %v6319 = vld [vmem:[%s5 + $0xc] sm:$0xf]
      %v6320 = vld [vmem:[%s5 + $0x10] sm:$0xf]
      %v6321 = vld [vmem:[%s5 + $0x14] sm:$0xf]
      %v6322 = vld [vmem:[%s5 + $0x18] sm:$0xf]
      %v6323 = vld [vmem:[%s5 + $0x1c] sm:$0xf]
      %v6324 = vld [vmem:[%s5 + $0x20] sm:$0xf]
      %v6325 = vld [vmem:[%s5 + $0x24] sm:$0xf]
      %v6326 = vld [vmem:[%s5 + $0x28] sm:$0xf]
      %v6327 = vld [vmem:[%s5 + $0x2c] sm:$0xf]
      %v6328 = vld [vmem:[%s5 + $0x30] sm:$0xf]
      %v6329 = vld [vmem:[%s5 + $0x34] sm:$0xf]
      %v6330 = vld [vmem:[%s5 + $0x38] sm:$0xf]
      %v6331 = vld [vmem:[%s5 + $0x3c] sm:$0xf]
      %v6332 = vld [vmem:[%s5 + $0x40] sm:$0xf]
      %v6333 = vld [vmem:[%s5 + $0x44] sm:$0xf]
      %v6334 = vld [vmem:[%s5 + $0x48] sm:$0xf]
      %v6335 = vld [vmem:[%s5 + $0x4c] sm:$0xf]
      %v6336 = vld [vmem:[%s5 + $0x50] sm:$0xf]
      %v6337 = vld [vmem:[%s5 + $0x54] sm:$0xf]
      %v6338 = vld [vmem:[%s5 + $0x58] sm:$0xf]
      %v6339 = vld [vmem:[%s5 + $0x5c] sm:$0xf]
      %v6340 = vld [vmem:[%s5 + $0x60] sm:$0xf]
      %v6341 = vld [vmem:[%s5 + $0x64] sm:$0xf]
      %v6342 = vld [vmem:[%s5 + $0x68] sm:$0xf]
      %v6343 = vld [vmem:[%s5 + $0x6c] sm:$0xf]
      %v6344 = vld [vmem:[%s5 + $0x70] sm:$0xf]
      %v6345 = vld [vmem:[%s5 + $0x74] sm:$0xf]
      %v6346 = vld [vmem:[%s5 + $0x78] sm:$0xf]
      %v6347 = vld [vmem:[%s5 + $0x7c] sm:$0xf]
      %v6348 = vld [vmem:[%s5 + $0x80] sm:$0xf]
      %v6349 = vld [vmem:[%s5 + $0x84] sm:$0xf]
      %v6350 = vld [vmem:[%s5 + $0x88] sm:$0xf]
      %v6351 = vld [vmem:[%s5 + $0x8c] sm:$0xf]
      %v6352 = vld [vmem:[%s5 + $0x90] sm:$0xf]
      %v6353 = vld [vmem:[%s5 + $0x94] sm:$0xf]
      %v6354 = vld [vmem:[%s5 + $0x98] sm:$0xf]
      %v6355 = vld [vmem:[%s5 + $0x9c] sm:$0xf]
      %v6356 = vld [vmem:[%s5 + $0xa0] sm:$0xf]
      %v6357 = vld [vmem:[%s5 + $0xa4] sm:$0xf]
      %v6358 = vld [vmem:[%s5 + $0xa8] sm:$0xf]
      %v6359 = vld [vmem:[%s5 + $0xac] sm:$0xf]
      %v6360 = vld [vmem:[%s5 + $0xb0] sm:$0xf]
      %v6361 = vld [vmem:[%s5 + $0xb4] sm:$0xf]
      %v6362 = vld [vmem:[%s5 + $0xb8] sm:$0xf]
      %v6363 = vld [vmem:[%s5 + $0xbc] sm:$0xf]
      %v6364 = vld [vmem:[%s5 + $0xc0] sm:$0xf]
      %v6365 = vld [vmem:[%s5 + $0xc4] sm:$0xf]
      %v6366 = vld [vmem:[%s5 + $0xc8] sm:$0xf]
      %v6367 = vld [vmem:[%s5 + $0xcc] sm:$0xf]
      %v6368 = vld [vmem:[%s5 + $0xd0] sm:$0xf]
      %v6369 = vld [vmem:[%s5 + $0xd4] sm:$0xf]
      %v6370 = vld [vmem:[%s5 + $0xd8] sm:$0xf]
      %v6371 = vld [vmem:[%s5 + $0xdc] sm:$0xf]
      %v6372 = vld [vmem:[%s5 + $0xe0] sm:$0xf]
      %v6373 = vld [vmem:[%s5 + $0xe4] sm:$0xf]
      %v6374 = vld [vmem:[%s5 + $0xe8] sm:$0xf]
      %v6375 = vld [vmem:[%s5 + $0xec] sm:$0xf]
      %v6376 = vld [vmem:[%s5 + $0xf0] sm:$0xf]
      %v6377 = vld [vmem:[%s5 + $0xf4] sm:$0xf]
      %v6378 = vld [vmem:[%s5 + $0xf8] sm:$0xf]
      %v6379 = vld [vmem:[%s5 + $0xfc] sm:$0xf]
      %v6380 = vld [vmem:[%s5 + $0x100] sm:$0xf]
      %v6381 = vld [vmem:[%s5 + $0x104] sm:$0xf]
      %v6382 = vld [vmem:[%s5 + $0x108] sm:$0xf]
      %v6383 = vld [vmem:[%s5 + $0x10c] sm:$0xf]
      %v6384 = vld [vmem:[%s5 + $0x110] sm:$0xf]
      %v6385 = vld [vmem:[%s5 + $0x114] sm:$0xf]
      %v6386 = vld [vmem:[%s5 + $0x118] sm:$0xf]
      %v6387 = vld [vmem:[%s5 + $0x11c] sm:$0xf]
      %v6388 = vld [vmem:[%s6] sm:$0x1]
      %v6390 = vperm.slane %v6388, 0
      %v6464 = vunpack.c.l.b16 %v6316
      %v6465 = vunpack.c.l.b16 %v6317
      %v6466 = vunpack.c.l.b16 %v6318
      %v6467 = vunpack.c.l.b16 %v6319
      %v6468 = vunpack.c.l.b16 %v6320
      %v6469 = vunpack.c.l.b16 %v6321
      %v6470 = vunpack.c.l.b16 %v6322
      %v6471 = vunpack.c.l.b16 %v6323
      %v6472 = vunpack.c.l.b16 %v6324
      %v6473 = vunpack.c.l.b16 %v6325
      %v6474 = vunpack.c.l.b16 %v6326
      %v6475 = vunpack.c.l.b16 %v6327
      %v6476 = vunpack.c.l.b16 %v6328
      %v6477 = vunpack.c.l.b16 %v6329
      %v6478 = vunpack.c.l.b16 %v6330
      %v6479 = vunpack.c.l.b16 %v6331
      %v6480 = vunpack.c.l.b16 %v6332
      %v6481 = vunpack.c.l.b16 %v6333
      %v6482 = vunpack.c.l.b16 %v6334
      %v6483 = vunpack.c.l.b16 %v6335
      %v6484 = vunpack.c.l.b16 %v6336
      %v6485 = vunpack.c.l.b16 %v6337
      %v6486 = vunpack.c.l.b16 %v6338
      %v6487 = vunpack.c.l.b16 %v6339
      %v6488 = vunpack.c.l.b16 %v6340
      %v6489 = vunpack.c.l.b16 %v6341
      %v6490 = vunpack.c.l.b16 %v6342
      %v6491 = vunpack.c.l.b16 %v6343
      %v6492 = vunpack.c.l.b16 %v6344
      %v6493 = vunpack.c.l.b16 %v6345
      %v6494 = vunpack.c.l.b16 %v6346
      %v6495 = vunpack.c.l.b16 %v6347
      %v6496 = vunpack.c.l.b16 %v6348
      %v6497 = vunpack.c.l.b16 %v6349
      %v6498 = vunpack.c.l.b16 %v6350
      %v6499 = vunpack.c.l.b16 %v6351
      %v6500 = vunpack.c.l.b16 %v6352
      %v6501 = vunpack.c.l.b16 %v6353
      %v6502 = vunpack.c.l.b16 %v6354
      %v6503 = vunpack.c.l.b16 %v6355
      %v6504 = vunpack.c.l.b16 %v6356
      %v6505 = vunpack.c.l.b16 %v6357
      %v6506 = vunpack.c.l.b16 %v6358
      %v6507 = vunpack.c.l.b16 %v6359
      %v6508 = vunpack.c.l.b16 %v6360
      %v6509 = vunpack.c.l.b16 %v6361
      %v6510 = vunpack.c.l.b16 %v6362
      %v6511 = vunpack.c.l.b16 %v6363
      %v6512 = vunpack.c.l.b16 %v6364
      %v6513 = vunpack.c.l.b16 %v6365
      %v6514 = vunpack.c.l.b16 %v6366
      %v6515 = vunpack.c.l.b16 %v6367
      %v6516 = vunpack.c.l.b16 %v6368
      %v6517 = vunpack.c.l.b16 %v6369
      %v6518 = vunpack.c.l.b16 %v6370
      %v6519 = vunpack.c.l.b16 %v6371
      %v6520 = vunpack.c.l.b16 %v6372
      %v6521 = vunpack.c.l.b16 %v6373
      %v6522 = vunpack.c.l.b16 %v6374
      %v6523 = vunpack.c.l.b16 %v6375
      %v6524 = vunpack.c.l.b16 %v6376
      %v6525 = vunpack.c.l.b16 %v6377
      %v6526 = vunpack.c.l.b16 %v6378
      %v6527 = vunpack.c.l.b16 %v6379
      %v6528 = vunpack.c.l.b16 %v6380
      %v6529 = vunpack.c.l.b16 %v6381
      %v6530 = vunpack.c.l.b16 %v6382
      %v6531 = vunpack.c.l.b16 %v6383
      %v6532 = vunpack.c.l.b16 %v6384
      %v6533 = vunpack.c.l.b16 %v6385
      %v6534 = vunpack.c.l.b16 %v6386
      %v6535 = vunpack.c.l.b16 %v6387
      %v6536 = vpack.c.b16 %v6465, %v6464
      %v6537 = vpack.c.b16 %v6467, %v6466
      %v6538 = vpack.c.b16 %v6469, %v6468
      %v6539 = vpack.c.b16 %v6471, %v6470
      %v6540 = vpack.c.b16 %v6473, %v6472
      %v6541 = vpack.c.b16 %v6475, %v6474
      %v6542 = vpack.c.b16 %v6477, %v6476
      %v6543 = vpack.c.b16 %v6479, %v6478
      %v6544 = vpack.c.b16 %v6481, %v6480
      %v6545 = vpack.c.b16 %v6483, %v6482
      %v6546 = vpack.c.b16 %v6485, %v6484
      %v6547 = vpack.c.b16 %v6487, %v6486
      %v6548 = vpack.c.b16 %v6489, %v6488
      %v6549 = vpack.c.b16 %v6491, %v6490
      %v6550 = vpack.c.b16 %v6493, %v6492
      %v6551 = vpack.c.b16 %v6495, %v6494
      %v6552 = vpack.c.b16 %v6497, %v6496
      %v6553 = vpack.c.b16 %v6499, %v6498
      %v6554 = vpack.c.b16 %v6501, %v6500
      %v6555 = vpack.c.b16 %v6503, %v6502
      %v6556 = vpack.c.b16 %v6505, %v6504
      %v6557 = vpack.c.b16 %v6507, %v6506
      %v6558 = vpack.c.b16 %v6509, %v6508
      %v6559 = vpack.c.b16 %v6511, %v6510
      %v6560 = vpack.c.b16 %v6513, %v6512
      %v6561 = vpack.c.b16 %v6515, %v6514
      %v6562 = vpack.c.b16 %v6517, %v6516
      %v6563 = vpack.c.b16 %v6519, %v6518
      %v6564 = vpack.c.b16 %v6521, %v6520
      %v6565 = vpack.c.b16 %v6523, %v6522
      %v6566 = vpack.c.b16 %v6525, %v6524
      %v6567 = vpack.c.b16 %v6527, %v6526
      %v6568 = vpack.c.b16 %v6529, %v6528
      %v6569 = vpack.c.b16 %v6531, %v6530
      %v6570 = vpack.c.b16 %v6533, %v6532
      %v6571 = vpack.c.b16 %v6535, %v6534
      %v6609 = vsel %vm810, %v6315, 0
      %6611 = vmatpush.bf16.msra.mxu0 %v6543
      %6612 = vmatpush.bf16.msra.mxu0 %v6542
      %6613 = vmatpush.bf16.msra.mxu0 %v6541
      %6614 = vmatpush.bf16.msra.mxu0 %v6540
      %6615 = vmatpush.bf16.msra.mxu0 %v6539
      %6616 = vmatpush.bf16.msra.mxu0 %v6538
      %6617 = vmatpush.bf16.msra.mxu0 %v6537
      %6618 = vmatpush.bf16.msra.mxu0 %v6536
      %6619 = vmatmul.bf16.gmra.mxu0 %v6311
      %v6620 = vpop.f32.mrf.mxu0
      %v6621 = vadd.f32 %v6390, %v6620
      %v6622 = vpop.f32.mrf.mxu0
      %6623 = vdwg.mxu0
      %6624 = vmatpush.bf16.msra.mxu0 %v6551
      %6625 = vmatpush.bf16.msra.mxu0 %v6550
      %6626 = vmatpush.bf16.msra.mxu0 %v6549
      %6627 = vmatpush.bf16.msra.mxu0 %v6548
      %6628 = vmatpush.bf16.msra.mxu0 %v6547
      %6629 = vmatpush.bf16.msra.mxu0 %v6546
      %6630 = vmatpush.bf16.msra.mxu0 %v6545
      %6631 = vmatpush.bf16.msra.mxu0 %v6544
      %6632 = vmatmul.bf16.gmra.mxu0 %v6312
      %v6633 = vpop.f32.mrf.mxu0
      %v6634 = vadd.f32 %v6621, %v6633
      %v6635 = vpop.f32.mrf.mxu0
      %6636 = vdwg.mxu0
      %6637 = vmatpush.bf16.msra.mxu0 %v6559
      %6638 = vmatpush.bf16.msra.mxu0 %v6558
      %6639 = vmatpush.bf16.msra.mxu0 %v6557
      %6640 = vmatpush.bf16.msra.mxu0 %v6556
      %6641 = vmatpush.bf16.msra.mxu0 %v6555
      %6642 = vmatpush.bf16.msra.mxu0 %v6554
      %6643 = vmatpush.bf16.msra.mxu0 %v6553
      %6644 = vmatpush.bf16.msra.mxu0 %v6552
      %6645 = vmatmul.bf16.gmra.mxu0 %v6313
      %v6646 = vpop.f32.mrf.mxu0
      %v6647 = vadd.f32 %v6634, %v6646
      %v6648 = vpop.f32.mrf.mxu0
      %6649 = vdwg.mxu0
      %6650 = vmatpush.bf16.msra.mxu0 %v6567
      %6651 = vmatpush.bf16.msra.mxu0 %v6566
      %6652 = vmatpush.bf16.msra.mxu0 %v6565
      %6653 = vmatpush.bf16.msra.mxu0 %v6564
      %6654 = vmatpush.bf16.msra.mxu0 %v6563
      %6655 = vmatpush.bf16.msra.mxu0 %v6562
      %6656 = vmatpush.bf16.msra.mxu0 %v6561
      %6657 = vmatpush.bf16.msra.mxu0 %v6560
      %6658 = vmatmul.bf16.gmra.mxu0 %v6314
      %v6659 = vpop.f32.mrf.mxu0
      %v6660 = vadd.f32 %v6647, %v6659
      %v6661 = vpop.f32.mrf.mxu0
      %6662 = vdwg.mxu0
      %6663 = vmatpush.bf16.msra.mxu0 0
      %6664 = vmatpush.bf16.msra.mxu0 0
      %6665 = vmatpush.bf16.msra.mxu0 0
      %6666 = vmatpush.bf16.msra.mxu0 0
      %6667 = vmatpush.bf16.msra.mxu0 %v6571
      %6668 = vmatpush.bf16.msra.mxu0 %v6570
      %6669 = vmatpush.bf16.msra.mxu0 %v6569
      %6670 = vmatpush.bf16.msra.mxu0 %v6568
      %6671 = vmatmul.bf16.gmra.mxu0 %v6609
      %v6672 = vpop.f32.mrf.mxu0
      %v6673 = vadd.f32 %v6660, %v6672
      %v6674 = vpop.f32.mrf.mxu0
      %6675 = vdwg.mxu0
      %v6676 = vmax.f32 %v6673, 0.0
      %6677 = vst.msk [vmem:[%s278 + $0x23] sm:$0x7f] %vm4626, %v6676
      %v6678 = vld [vmem:[#allocation3 + $0x36] sm:$0xff]
      %v6679 = vld [vmem:[#allocation3 + $0x3e] sm:$0x1]
      %v6680 = vld [vmem:[#allocation3 + $0x3f] sm:$0xff]
      %v6681 = vld [vmem:[#allocation3 + $0x47] sm:$0x1]
      %v6682 = vld [vmem:[#allocation3 + $0x48] sm:$0xff]
      %v6683 = vld [vmem:[#allocation3 + $0x50] sm:$0x1]
      %v6685 = vrot.slane %v6678, 1
      %6686 = vrot.lane.b32.xlu0 %v6685, 64
      %v6687 = vpop.permute.xlu0 %6686
      %v6690 = vrot.slane %v6678, 2
      %v6691 = vrot.slane %v6679, 2
      %v6692 = vsel %vm4228, %v6690, %v6691
      %6695 = vrot.lane.b32.xlu0 %v6680, 64
      %v6696 = vpop.permute.xlu0 %6695
      %v6698 = vrot.slane %v6680, 1
      %v6701 = vrot.slane %v6680, 2
      %v6702 = vrot.slane %v6681, 2
      %v6703 = vsel %vm4228, %v6701, %v6702
      %6704 = vrot.lane.b32.xlu0 %v6703, 64
      %v6705 = vpop.permute.xlu0 %6704
      %v6708 = vrot.slane %v6682, 1
      %6709 = vrot.lane.b32.xlu0 %v6708, 64
      %v6710 = vpop.permute.xlu0 %6709
      %v6713 = vrot.slane %v6682, 2
      %v6714 = vrot.slane %v6683, 2
      %v6715 = vsel %vm4228, %v6713, %v6714
      %v6717 = vsel %vm810, %v6678, %v6687
      %v6718 = vsel %vm810, %v6692, %v6696
      %v6719 = vsel %vm810, %v6698, %v6705
      %v6720 = vsel %vm810, %v6682, %v6710
      %v6721 = vpack.c.bf16 %v6717, %v6717
      %v6722 = vpack.c.bf16 %v6718, %v6718
      %v6723 = vpack.c.bf16 %v6719, %v6719
      %v6724 = vpack.c.bf16 %v6720, %v6720
      %v6725 = vpack.c.bf16 %v6715, %v6715
      %v6726 = vld [vmem:[%s5] sm:$0xf]
      %v6727 = vld [vmem:[%s5 + $0x4] sm:$0xf]
      %v6728 = vld [vmem:[%s5 + $0x8] sm:$0xf]
      %v6729 = vld [vmem:[%s5 + $0xc] sm:$0xf]
      %v6730 = vld [vmem:[%s5 + $0x10] sm:$0xf]
      %v6731 = vld [vmem:[%s5 + $0x14] sm:$0xf]
      %v6732 = vld [vmem:[%s5 + $0x18] sm:$0xf]
      %v6733 = vld [vmem:[%s5 + $0x1c] sm:$0xf]
      %v6734 = vld [vmem:[%s5 + $0x20] sm:$0xf]
      %v6735 = vld [vmem:[%s5 + $0x24] sm:$0xf]
      %v6736 = vld [vmem:[%s5 + $0x28] sm:$0xf]
      %v6737 = vld [vmem:[%s5 + $0x2c] sm:$0xf]
      %v6738 = vld [vmem:[%s5 + $0x30] sm:$0xf]
      %v6739 = vld [vmem:[%s5 + $0x34] sm:$0xf]
      %v6740 = vld [vmem:[%s5 + $0x38] sm:$0xf]
      %v6741 = vld [vmem:[%s5 + $0x3c] sm:$0xf]
      %v6742 = vld [vmem:[%s5 + $0x40] sm:$0xf]
      %v6743 = vld [vmem:[%s5 + $0x44] sm:$0xf]
      %v6744 = vld [vmem:[%s5 + $0x48] sm:$0xf]
      %v6745 = vld [vmem:[%s5 + $0x4c] sm:$0xf]
      %v6746 = vld [vmem:[%s5 + $0x50] sm:$0xf]
      %v6747 = vld [vmem:[%s5 + $0x54] sm:$0xf]
      %v6748 = vld [vmem:[%s5 + $0x58] sm:$0xf]
      %v6749 = vld [vmem:[%s5 + $0x5c] sm:$0xf]
      %v6750 = vld [vmem:[%s5 + $0x60] sm:$0xf]
      %v6751 = vld [vmem:[%s5 + $0x64] sm:$0xf]
      %v6752 = vld [vmem:[%s5 + $0x68] sm:$0xf]
      %v6753 = vld [vmem:[%s5 + $0x6c] sm:$0xf]
      %v6754 = vld [vmem:[%s5 + $0x70] sm:$0xf]
      %v6755 = vld [vmem:[%s5 + $0x74] sm:$0xf]
      %v6756 = vld [vmem:[%s5 + $0x78] sm:$0xf]
      %v6757 = vld [vmem:[%s5 + $0x7c] sm:$0xf]
      %v6758 = vld [vmem:[%s5 + $0x80] sm:$0xf]
      %v6759 = vld [vmem:[%s5 + $0x84] sm:$0xf]
      %v6760 = vld [vmem:[%s5 + $0x88] sm:$0xf]
      %v6761 = vld [vmem:[%s5 + $0x8c] sm:$0xf]
      %v6762 = vld [vmem:[%s5 + $0x90] sm:$0xf]
      %v6763 = vld [vmem:[%s5 + $0x94] sm:$0xf]
      %v6764 = vld [vmem:[%s5 + $0x98] sm:$0xf]
      %v6765 = vld [vmem:[%s5 + $0x9c] sm:$0xf]
      %v6766 = vld [vmem:[%s5 + $0xa0] sm:$0xf]
      %v6767 = vld [vmem:[%s5 + $0xa4] sm:$0xf]
      %v6768 = vld [vmem:[%s5 + $0xa8] sm:$0xf]
      %v6769 = vld [vmem:[%s5 + $0xac] sm:$0xf]
      %v6770 = vld [vmem:[%s5 + $0xb0] sm:$0xf]
      %v6771 = vld [vmem:[%s5 + $0xb4] sm:$0xf]
      %v6772 = vld [vmem:[%s5 + $0xb8] sm:$0xf]
      %v6773 = vld [vmem:[%s5 + $0xbc] sm:$0xf]
      %v6774 = vld [vmem:[%s5 + $0xc0] sm:$0xf]
      %v6775 = vld [vmem:[%s5 + $0xc4] sm:$0xf]
      %v6776 = vld [vmem:[%s5 + $0xc8] sm:$0xf]
      %v6777 = vld [vmem:[%s5 + $0xcc] sm:$0xf]
      %v6778 = vld [vmem:[%s5 + $0xd0] sm:$0xf]
      %v6779 = vld [vmem:[%s5 + $0xd4] sm:$0xf]
      %v6780 = vld [vmem:[%s5 + $0xd8] sm:$0xf]
      %v6781 = vld [vmem:[%s5 + $0xdc] sm:$0xf]
      %v6782 = vld [vmem:[%s5 + $0xe0] sm:$0xf]
      %v6783 = vld [vmem:[%s5 + $0xe4] sm:$0xf]
      %v6784 = vld [vmem:[%s5 + $0xe8] sm:$0xf]
      %v6785 = vld [vmem:[%s5 + $0xec] sm:$0xf]
      %v6786 = vld [vmem:[%s5 + $0xf0] sm:$0xf]
      %v6787 = vld [vmem:[%s5 + $0xf4] sm:$0xf]
      %v6788 = vld [vmem:[%s5 + $0xf8] sm:$0xf]
      %v6789 = vld [vmem:[%s5 + $0xfc] sm:$0xf]
      %v6790 = vld [vmem:[%s5 + $0x100] sm:$0xf]
      %v6791 = vld [vmem:[%s5 + $0x104] sm:$0xf]
      %v6792 = vld [vmem:[%s5 + $0x108] sm:$0xf]
      %v6793 = vld [vmem:[%s5 + $0x10c] sm:$0xf]
      %v6794 = vld [vmem:[%s5 + $0x110] sm:$0xf]
      %v6795 = vld [vmem:[%s5 + $0x114] sm:$0xf]
      %v6796 = vld [vmem:[%s5 + $0x118] sm:$0xf]
      %v6797 = vld [vmem:[%s5 + $0x11c] sm:$0xf]
      %v6798 = vld [vmem:[%s6] sm:$0x1]
      %v6800 = vperm.slane %v6798, 0
      %v6874 = vunpack.c.l.b16 %v6726
      %v6875 = vunpack.c.l.b16 %v6727
      %v6876 = vunpack.c.l.b16 %v6728
      %v6877 = vunpack.c.l.b16 %v6729
      %v6878 = vunpack.c.l.b16 %v6730
      %v6879 = vunpack.c.l.b16 %v6731
      %v6880 = vunpack.c.l.b16 %v6732
      %v6881 = vunpack.c.l.b16 %v6733
      %v6882 = vunpack.c.l.b16 %v6734
      %v6883 = vunpack.c.l.b16 %v6735
      %v6884 = vunpack.c.l.b16 %v6736
      %v6885 = vunpack.c.l.b16 %v6737
      %v6886 = vunpack.c.l.b16 %v6738
      %v6887 = vunpack.c.l.b16 %v6739
      %v6888 = vunpack.c.l.b16 %v6740
      %v6889 = vunpack.c.l.b16 %v6741
      %v6890 = vunpack.c.l.b16 %v6742
      %v6891 = vunpack.c.l.b16 %v6743
      %v6892 = vunpack.c.l.b16 %v6744
      %v6893 = vunpack.c.l.b16 %v6745
      %v6894 = vunpack.c.l.b16 %v6746
      %v6895 = vunpack.c.l.b16 %v6747
      %v6896 = vunpack.c.l.b16 %v6748
      %v6897 = vunpack.c.l.b16 %v6749
      %v6898 = vunpack.c.l.b16 %v6750
      %v6899 = vunpack.c.l.b16 %v6751
      %v6900 = vunpack.c.l.b16 %v6752
      %v6901 = vunpack.c.l.b16 %v6753
      %v6902 = vunpack.c.l.b16 %v6754
      %v6903 = vunpack.c.l.b16 %v6755
      %v6904 = vunpack.c.l.b16 %v6756
      %v6905 = vunpack.c.l.b16 %v6757
      %v6906 = vunpack.c.l.b16 %v6758
      %v6907 = vunpack.c.l.b16 %v6759
      %v6908 = vunpack.c.l.b16 %v6760
      %v6909 = vunpack.c.l.b16 %v6761
      %v6910 = vunpack.c.l.b16 %v6762
      %v6911 = vunpack.c.l.b16 %v6763
      %v6912 = vunpack.c.l.b16 %v6764
      %v6913 = vunpack.c.l.b16 %v6765
      %v6914 = vunpack.c.l.b16 %v6766
      %v6915 = vunpack.c.l.b16 %v6767
      %v6916 = vunpack.c.l.b16 %v6768
      %v6917 = vunpack.c.l.b16 %v6769
      %v6918 = vunpack.c.l.b16 %v6770
      %v6919 = vunpack.c.l.b16 %v6771
      %v6920 = vunpack.c.l.b16 %v6772
      %v6921 = vunpack.c.l.b16 %v6773
      %v6922 = vunpack.c.l.b16 %v6774
      %v6923 = vunpack.c.l.b16 %v6775
      %v6924 = vunpack.c.l.b16 %v6776
      %v6925 = vunpack.c.l.b16 %v6777
      %v6926 = vunpack.c.l.b16 %v6778
      %v6927 = vunpack.c.l.b16 %v6779
      %v6928 = vunpack.c.l.b16 %v6780
      %v6929 = vunpack.c.l.b16 %v6781
      %v6930 = vunpack.c.l.b16 %v6782
      %v6931 = vunpack.c.l.b16 %v6783
      %v6932 = vunpack.c.l.b16 %v6784
      %v6933 = vunpack.c.l.b16 %v6785
      %v6934 = vunpack.c.l.b16 %v6786
      %v6935 = vunpack.c.l.b16 %v6787
      %v6936 = vunpack.c.l.b16 %v6788
      %v6937 = vunpack.c.l.b16 %v6789
      %v6938 = vunpack.c.l.b16 %v6790
      %v6939 = vunpack.c.l.b16 %v6791
      %v6940 = vunpack.c.l.b16 %v6792
      %v6941 = vunpack.c.l.b16 %v6793
      %v6942 = vunpack.c.l.b16 %v6794
      %v6943 = vunpack.c.l.b16 %v6795
      %v6944 = vunpack.c.l.b16 %v6796
      %v6945 = vunpack.c.l.b16 %v6797
      %v6946 = vpack.c.b16 %v6875, %v6874
      %v6947 = vpack.c.b16 %v6877, %v6876
      %v6948 = vpack.c.b16 %v6879, %v6878
      %v6949 = vpack.c.b16 %v6881, %v6880
      %v6950 = vpack.c.b16 %v6883, %v6882
      %v6951 = vpack.c.b16 %v6885, %v6884
      %v6952 = vpack.c.b16 %v6887, %v6886
      %v6953 = vpack.c.b16 %v6889, %v6888
      %v6954 = vpack.c.b16 %v6891, %v6890
      %v6955 = vpack.c.b16 %v6893, %v6892
      %v6956 = vpack.c.b16 %v6895, %v6894
      %v6957 = vpack.c.b16 %v6897, %v6896
      %v6958 = vpack.c.b16 %v6899, %v6898
      %v6959 = vpack.c.b16 %v6901, %v6900
      %v6960 = vpack.c.b16 %v6903, %v6902
      %v6961 = vpack.c.b16 %v6905, %v6904
      %v6962 = vpack.c.b16 %v6907, %v6906
      %v6963 = vpack.c.b16 %v6909, %v6908
      %v6964 = vpack.c.b16 %v6911, %v6910
      %v6965 = vpack.c.b16 %v6913, %v6912
      %v6966 = vpack.c.b16 %v6915, %v6914
      %v6967 = vpack.c.b16 %v6917, %v6916
      %v6968 = vpack.c.b16 %v6919, %v6918
      %v6969 = vpack.c.b16 %v6921, %v6920
      %v6970 = vpack.c.b16 %v6923, %v6922
      %v6971 = vpack.c.b16 %v6925, %v6924
      %v6972 = vpack.c.b16 %v6927, %v6926
      %v6973 = vpack.c.b16 %v6929, %v6928
      %v6974 = vpack.c.b16 %v6931, %v6930
      %v6975 = vpack.c.b16 %v6933, %v6932
      %v6976 = vpack.c.b16 %v6935, %v6934
      %v6977 = vpack.c.b16 %v6937, %v6936
      %v6978 = vpack.c.b16 %v6939, %v6938
      %v6979 = vpack.c.b16 %v6941, %v6940
      %v6980 = vpack.c.b16 %v6943, %v6942
      %v6981 = vpack.c.b16 %v6945, %v6944
      %v7019 = vsel %vm810, %v6725, 0
      %7021 = vmatpush.bf16.msra.mxu0 %v6953
      %7022 = vmatpush.bf16.msra.mxu0 %v6952
      %7023 = vmatpush.bf16.msra.mxu0 %v6951
      %7024 = vmatpush.bf16.msra.mxu0 %v6950
      %7025 = vmatpush.bf16.msra.mxu0 %v6949
      %7026 = vmatpush.bf16.msra.mxu0 %v6948
      %7027 = vmatpush.bf16.msra.mxu0 %v6947
      %7028 = vmatpush.bf16.msra.mxu0 %v6946
      %7029 = vmatmul.bf16.gmra.mxu0 %v6721
      %v7030 = vpop.f32.mrf.mxu0
      %v7031 = vadd.f32 %v6800, %v7030
      %v7032 = vpop.f32.mrf.mxu0
      %7033 = vdwg.mxu0
      %7034 = vmatpush.bf16.msra.mxu0 %v6961
      %7035 = vmatpush.bf16.msra.mxu0 %v6960
      %7036 = vmatpush.bf16.msra.mxu0 %v6959
      %7037 = vmatpush.bf16.msra.mxu0 %v6958
      %7038 = vmatpush.bf16.msra.mxu0 %v6957
      %7039 = vmatpush.bf16.msra.mxu0 %v6956
      %7040 = vmatpush.bf16.msra.mxu0 %v6955
      %7041 = vmatpush.bf16.msra.mxu0 %v6954
      %7042 = vmatmul.bf16.gmra.mxu0 %v6722
      %v7043 = vpop.f32.mrf.mxu0
      %v7044 = vadd.f32 %v7031, %v7043
      %v7045 = vpop.f32.mrf.mxu0
      %7046 = vdwg.mxu0
      %7047 = vmatpush.bf16.msra.mxu0 %v6969
      %7048 = vmatpush.bf16.msra.mxu0 %v6968
      %7049 = vmatpush.bf16.msra.mxu0 %v6967
      %7050 = vmatpush.bf16.msra.mxu0 %v6966
      %7051 = vmatpush.bf16.msra.mxu0 %v6965
      %7052 = vmatpush.bf16.msra.mxu0 %v6964
      %7053 = vmatpush.bf16.msra.mxu0 %v6963
      %7054 = vmatpush.bf16.msra.mxu0 %v6962
      %7055 = vmatmul.bf16.gmra.mxu0 %v6723
      %v7056 = vpop.f32.mrf.mxu0
      %v7057 = vadd.f32 %v7044, %v7056
      %v7058 = vpop.f32.mrf.mxu0
      %7059 = vdwg.mxu0
      %7060 = vmatpush.bf16.msra.mxu0 %v6977
      %7061 = vmatpush.bf16.msra.mxu0 %v6976
      %7062 = vmatpush.bf16.msra.mxu0 %v6975
      %7063 = vmatpush.bf16.msra.mxu0 %v6974
      %7064 = vmatpush.bf16.msra.mxu0 %v6973
      %7065 = vmatpush.bf16.msra.mxu0 %v6972
      %7066 = vmatpush.bf16.msra.mxu0 %v6971
      %7067 = vmatpush.bf16.msra.mxu0 %v6970
      %7068 = vmatmul.bf16.gmra.mxu0 %v6724
      %v7069 = vpop.f32.mrf.mxu0
      %v7070 = vadd.f32 %v7057, %v7069
      %v7071 = vpop.f32.mrf.mxu0
      %7072 = vdwg.mxu0
      %7073 = vmatpush.bf16.msra.mxu0 0
      %7074 = vmatpush.bf16.msra.mxu0 0
      %7075 = vmatpush.bf16.msra.mxu0 0
      %7076 = vmatpush.bf16.msra.mxu0 0
      %7077 = vmatpush.bf16.msra.mxu0 %v6981
      %7078 = vmatpush.bf16.msra.mxu0 %v6980
      %7079 = vmatpush.bf16.msra.mxu0 %v6979
      %7080 = vmatpush.bf16.msra.mxu0 %v6978
      %7081 = vmatmul.bf16.gmra.mxu0 %v7019
      %v7082 = vpop.f32.mrf.mxu0
      %v7083 = vadd.f32 %v7070, %v7082
      %v7084 = vpop.f32.mrf.mxu0
      %7085 = vdwg.mxu0
      %v7086 = vmax.f32 %v7083, 0.0
      %7087 = vst.msk [vmem:[%s278 + $0x2a] sm:$0x7f] %vm4626, %v7086
      %p7088 = scmp.lt.s32.totalorder %s18, 1
      %s7089 = scalar_select %p7088, %s18, 1
      %s7090 = smul.addr %s7089, 7
      %s7091 = smul.addr %s7090, 8
      %s7092 = scalar_lea.vmem %s7, %s7091
      // Predicated region
      $region56: #{cnn_forward.2} parent=47 // pred_check
        %p7093 = pneg %p188
      $region57: #{cnn_forward.2} parent=47 // pred_check_branch
        %7095 = sbr.rel (%p7093) target = $region59
      $region58: #{cnn_forward.2} parent=47 // pred_region
        _
      $region59: #{cnn_forward.2} parent=47 // pred_fallthru
        _
    $region48: #{cnn_forward.2} parent=5 // pred_fallthru
      _
    %p7096 = scmp.le.s32.totalorder 2, %s13
    // Predicated region
    $region60: #{cnn_forward.2} parent=5 // pred_check
      %p7097 = pneg %p7096
    $region61: #{cnn_forward.2} parent=5 // pred_check_branch
      %7099 = sbr.rel (%p7097) target = $region63
    $region62: #{cnn_forward.2} parent=5 // pred_region
      %s7100 = ssub.s32 %s13, 2
      // Predicated region
      $region64: #{cnn_forward.2} parent=62 // pred_check
        %p7101 = pneg %p194
      $region65: #{cnn_forward.2} parent=62 // pred_check_branch
        %7103 = sbr.rel (%p7101) target = $region67
      $region66: #{cnn_forward.2} parent=62 // pred_region
        %p7104 = scmp.lt.s32.totalorder %s19, 1
        %s7105 = scalar_select %p7104, %s19, 1
        %s7106 = smul.addr %s7105, 7
        %s7107 = smul.addr %s7106, 8
        %s7108 = scalar_lea.vmem %s7, %s7107
      $region67: #{cnn_forward.2} parent=62 // pred_fallthru
        _
    $region63: #{cnn_forward.2} parent=5 // pred_fallthru
      _
  $region6: #{cnn_forward.2} parent=0 // loop_footer
    %s17 = sadd.s32 1, %s13
  $region7: #{cnn_forward.2} parent=0 // loop_footer_branch
    %12 = sbr.rel target = $region3
  $region8: #{cnn_forward.2} parent=0 // loop_exit
    _

</llo_original>
